<compile_context>
chip_gen: v5e
topology: v5e:2x2
jax: 0.10.0
libtpu: 0.0.40
codegen_flags: <defaults>
</compile_context>

<pallas_src>
import functools

import numpy as np
import jax
import jax.numpy as jnp
from jax.experimental import pallas as pl
from jax.experimental.pallas import tpu as pltpu

# ---- static configuration (domain + default args) ---------------------------
NUM_ENT = 7                       # domain.num_ent()
NUM_ENT_PAD = 8                   # entity axis padded to a power of two
DIM_ENT = 4                       # domain.dim_ent()
NEMBED_CTX = 32                   # args.nembed_ctx
PROP_IN = 2                       # 2 * len(properties_include)
REL_IN = 2 * 2 + DIM_ENT + 1      # 9
PROP_OUT = NEMBED_CTX // 2        # 16
REL_OUT = NEMBED_CTX - PROP_OUT   # 16

FLAT_IN = 32                      # ctx (28) + ones lane (1) + zero pad (3)
GROUP = NUM_ENT_PAD * REL_OUT     # 128 lanes per entity-i group: (partner j, r)
NLANES = NUM_ENT_PAD * GROUP      # 1024 relation-tile lanes
DLANES = NUM_ENT_PAD * NUM_ENT_PAD  # 64 pairwise-distance lanes (i*8 + j)
K_IN = FLAT_IN + DLANES           # 96: fused GEMM contraction dim [ctx | dist]
OUT_LANES = NUM_ENT_PAD * NEMBED_CTX  # 256 lane-dense output row per example

BLOCK_B = 512                     # batch elements per grid step (~10 MiB VMEM)

_PREC = jax.lax.Precision.HIGHEST  # match the f32 reference; MXU has slack here


def _round_up(x, m):
    return ((x + m - 1) // m) * m


# -----------------------------------------------------------------------------
# Kernel: one batch tile of TB examples, everything 2-D (rows = batch).
# -----------------------------------------------------------------------------
def _ctx_encoder_kernel(x_ref, wdx_ref, wdy_ref, w1_ref, pool_ref, out_ref):
    """x_ref    : (TB, 32)    [ctx(28) | 1.0 | 0 0 0]
       wdx_ref  : (32, 64)    x_i - x_j selector, lane i*8+j
       wdy_ref  : (32, 64)    y_i - y_j selector
       w1_ref   : (96, 1024)  fused relation+property weights (biases folded)
       pool_ref : (1024, 256) j!=i mean-pool + property scatter -> output lanes
       out_ref  : (TB, 256)   lane-dense output rows: entity i at lanes i*32.."""
    x = x_ref[...]                                                   # (TB, 32)

    # pairwise coordinate differences, dense over lanes (i*8 + j)
    dx = jnp.dot(x, wdx_ref[...], precision=_PREC,
                 preferred_element_type=jnp.float32)                 # (TB, 64)
    dy = jnp.dot(x, wdy_ref[...], precision=_PREC,
                 preferred_element_type=jnp.float32)                 # (TB, 64)
    dist = jnp.sqrt(dx * dx + dy * dy)                               # (TB, 64)

    # fused relation + property GEMM:
    #   lane i*128 + j*16 + r : A_i + B_j + dist_ij*w_dist + b_rel
    #   lane i*128 + 112 + p  : app_i @ w_prop + b_prop
    xd = jnp.concatenate([x, dist], axis=-1)                         # (TB, 96)
    logits = jnp.dot(xd, w1_ref[...], precision=_PREC,
                     preferred_element_type=jnp.float32)             # (TB, 1024)
    rel = jnp.maximum(logits, 0.0)                                   # ReLU (dropout = id)

    # pool GEMM: per entity i, mean over the 6 partners j != i (1/6 folded into
    # the matrix) into lanes i*32+16.., and the property block into i*32+0..15.
    out = jnp.dot(rel, pool_ref[...], precision=_PREC,
                  preferred_element_type=jnp.float32)                # (TB, 256)
    out_ref[...] = out.astype(out_ref.dtype)                         # dense store


# -----------------------------------------------------------------------------
# Weight packing (hoisted out of the jitted forward; call once per parameter set)
# -----------------------------------------------------------------------------
def _make_static_mats():
    """Constant selector / pooling matrices (independent of module weights)."""
    wdx = np.zeros((FLAT_IN, DLANES), np.float32)
    wdy = np.zeros((FLAT_IN, DLANES), np.float32)
    for i in range(NUM_ENT):
        for j in range(NUM_ENT):
            c = i * NUM_ENT_PAD + j
            wdx[i * DIM_ENT + 0, c] += 1.0
            wdx[j * DIM_ENT + 0, c] -= 1.0
            wdy[i * DIM_ENT + 1, c] += 1.0
            wdy[j * DIM_ENT + 1, c] -= 1.0

    pool = np.zeros((NLANES, OUT_LANES), np.float32)
    inv = 1.0 / (NUM_ENT - 1)
    for i in range(NUM_ENT):
        for p in range(PROP_OUT):                       # property block (j == 7 slot)
            pool[i * GROUP + NUM_ENT * REL_OUT + p, i * NEMBED_CTX + p] = 1.0
        for j in range(NUM_ENT):                        # mean over partners j != i
            if j == i:
                continue
            for r in range(REL_OUT):
                pool[i * GROUP + j * REL_OUT + r, i * NEMBED_CTX + PROP_OUT + r] = inv
    return jnp.asarray(wdx), jnp.asarray(wdy), jnp.asarray(pool)


_WDX_CONST, _WDY_CONST, _POOL_CONST = _make_static_mats()


def pack_params(w_rel, b_rel, w_prop, b_prop):
    """Packs both Linear layers into the fused (96, 1024) weight matrix.

    w_rel rows follow the feature order of `single_difference`:
      [appearance_i (2), appearance_j (2), ent_i - ent_j (4), dist (1)]
    so feat @ w_rel + b_rel == A_i + B_j + dist_ij * w_dist + b_rel with
      A_i = ent_i @ W_A, B_j = ent_j @ W_B.
    """
    f32 = jnp.float32
    w_rel = w_rel.astype(f32)
    b_rel = b_rel.astype(f32)
    w_prop = w_prop.astype(f32)
    b_prop = b_prop.astype(f32)

    w_app_i, w_app_j = w_rel[0:2], w_rel[2:4]
    w_diff, w_dist = w_rel[4:8], w_rel[8]

    # ent = [x, y, a0, a1]
    w_a = jnp.concatenate([w_diff[0:2], w_diff[2:4] + w_app_i], axis=0)   # (4, 16)
    w_b = jnp.concatenate([-w_diff[0:2], w_app_j - w_diff[2:4]], axis=0)  # (4, 16)

    eye_n = jnp.eye(NUM_ENT, dtype=f32)
    b_block = jnp.kron(eye_n, w_b)                         # (28, 112)  B_j per partner j
    d_block = jnp.kron(eye_n, w_dist[None, :])             # (7, 112)   dist row per j
    bias_row = jnp.concatenate([jnp.tile(b_rel, NUM_ENT), b_prop])       # (128,)
    prop_cols = jnp.concatenate([jnp.zeros((2, PROP_OUT), f32), w_prop], axis=0)  # (4,16)
    a_sec = jnp.concatenate([jnp.tile(w_a, (1, NUM_ENT)), prop_cols], axis=1)     # (4,128)

    groups = []
    for i in range(NUM_ENT):
        blk = jnp.zeros((K_IN, GROUP), f32)
        blk = blk.at[i * DIM_ENT:(i + 1) * DIM_ENT, :].add(a_sec)          # A_i + prop
        blk = blk.at[0:NUM_ENT * DIM_ENT, 0:NUM_ENT * REL_OUT].add(b_block)  # B_j
        blk = blk.at[FLAT_IN - 4, :].add(bias_row)                         # ones lane (28)
        blk = blk.at[FLAT_IN + i * NUM_ENT_PAD:
                     FLAT_IN + i * NUM_ENT_PAD + NUM_ENT,
                     0:NUM_ENT * REL_OUT].add(d_block)                      # dist * w_dist
        groups.append(blk)
    groups.append(jnp.zeros((K_IN, GROUP), f32))           # padded entity group i = 7
    w1 = jnp.concatenate(groups, axis=1)                   # (96, 1024)

    return (_WDX_CONST, _WDY_CONST, w1, _POOL_CONST)


# -----------------------------------------------------------------------------
# Forward wrapper
# -----------------------------------------------------------------------------
@functools.partial(jax.jit, static_argnames=("block_b",))
def ctx_encoder_forward(ctx, packed, block_b=BLOCK_B):
    """ctx: (B, NUM_ENT*DIM_ENT) float32 -> (B, NUM_ENT, NEMBED_CTX)."""
    wdx, wdy, w1, pool = packed
    B = ctx.shape[0]
    ctx = ctx.reshape(B, NUM_ENT * DIM_ENT).astype(jnp.float32)

    tb = _round_up(max(8, min(block_b, _round_up(B, 8))), 8)
    b_pad = _round_up(B, tb)

    # single input stream: [ctx (28) | 1.0 (bias lane) | 0 0 0]
    x = jnp.concatenate(
        [ctx,
         jnp.ones((B, 1), jnp.float32),
         jnp.zeros((B, FLAT_IN - NUM_ENT * DIM_ENT - 1), jnp.float32)], axis=1)
    if b_pad != B:
        x = jnp.pad(x, ((0, b_pad - B), (0, 0)))

    full = lambda b: (0, 0)
    out = pl.pallas_call(
        _ctx_encoder_kernel,
        out_shape=jax.ShapeDtypeStruct((b_pad, OUT_LANES), jnp.float32),
        grid=(b_pad // tb,),
        in_specs=[
            pl.BlockSpec((tb, FLAT_IN), lambda b: (b, 0)),
            pl.BlockSpec((FLAT_IN, DLANES), full),
            pl.BlockSpec((FLAT_IN, DLANES), full),
            pl.BlockSpec((K_IN, NLANES), full),
            pl.BlockSpec((NLANES, OUT_LANES), full),
        ],
        out_specs=pl.BlockSpec((tb, OUT_LANES), lambda b: (b, 0)),
        compiler_params=pltpu.CompilerParams(
            dimension_semantics=("parallel",),
            vmem_limit_bytes=32 * 1024 * 1024,
        ),
    )(x, wdx, wdy, w1, pool)

    # free reshape (same bytes); trim padded batch rows and the padded entity 8
    return out.reshape(b_pad, NUM_ENT_PAD, NEMBED_CTX)[:B, :NUM_ENT, :]


# -----------------------------------------------------------------------------
# Pure-JAX transcription of the PyTorch forward (sanity check)
# -----------------------------------------------------------------------------
def _reference(ctx, w_rel, b_rel, w_prop, b_prop):
    B = ctx.shape[0]
    ents = ctx.reshape(B, NUM_ENT, DIM_ENT).astype(jnp.float32)
    app = ents[..., 2:4]
    diff = ents[:, :, None, :] - ents[:, None, :, :]
    dist = jnp.sqrt(diff[..., 0] ** 2 + diff[..., 1] ** 2)
    feat = jnp.concatenate(
        [jnp.broadcast_to(app[:, :, None, :], (B, NUM_ENT, NUM_ENT, 2)),
         jnp.broadcast_to(app[:, None, :, :], (B, NUM_ENT, NUM_ENT, 2)),
         diff, dist[..., None]], axis=-1)                               # (B,N,N,9)
    rel = jax.nn.relu(
        jnp.matmul(feat, w_rel, precision=jax.lax.Precision.HIGHEST) + b_rel)
    mask = (1.0 - jnp.eye(NUM_ENT))[None, :, :, None]
    rel_pooled = (rel * mask).sum(2) / (NUM_ENT - 1)
    prop = jax.nn.relu(
        jnp.matmul(app, w_prop, precision=jax.lax.Precision.HIGHEST) + b_prop)
    return jnp.concatenate([prop, rel_pooled], axis=-1)


if __name__ == "__main__":
    key = jax.random.PRNGKey(0)
    k_ctx, k_wr, k_br, k_wp, k_bp, k_ctx2 = jax.random.split(key, 6)

    B = 2
    ctx = jax.random.normal(k_ctx, (B, NUM_ENT * DIM_ENT), dtype=jnp.float32)

    # deterministic synthetic parameters (shapes from the nn.Linear definitions)
    w_rel = 0.2 * jax.random.normal(k_wr, (REL_IN, REL_OUT), dtype=jnp.float32)
    b_rel = 0.1 * jax.random.normal(k_br, (REL_OUT,), dtype=jnp.float32)
    w_prop = 0.2 * jax.random.normal(k_wp, (PROP_IN, PROP_OUT), dtype=jnp.float32)
    b_prop = 0.1 * jax.random.normal(k_bp, (PROP_OUT,), dtype=jnp.float32)

    packed = pack_params(w_rel, b_rel, w_prop, b_prop)   # hoisted, built once

    out = jax.block_until_ready(ctx_encoder_forward(ctx, packed))
    ref = _reference(ctx, w_rel, b_rel, w_prop, b_prop)
    assert out.shape == (B, NUM_ENT, NEMBED_CTX), out.shape
    np.testing.assert_allclose(np.asarray(out), np.asarray(ref), rtol=5e-4, atol=2e-5)

    # second check: exercises the multi-step grid + batch-padding path
    B2 = 50
    ctx_big = jax.random.normal(k_ctx2, (B2, NUM_ENT * DIM_ENT), dtype=jnp.float32)
    out2 = jax.block_until_ready(ctx_encoder_forward(ctx_big, packed, block_b=16))
    ref2 = _reference(ctx_big, w_rel, b_rel, w_prop, b_prop)
    np.testing.assert_allclose(np.asarray(out2), np.asarray(ref2), rtol=5e-4, atol=2e-5)

    print("KERNEL_OK")
</pallas_src>

<mosaic_0001>
module attributes {stable_mosaic.version = 11 : i64} {
  func.func @_ctx_encoder_kernel(%arg0: i32, %arg1: memref<8x32xf32, #tpu.memory_space<vmem>>, %arg2: memref<32x64xf32, #tpu.memory_space<vmem>>, %arg3: memref<32x64xf32, #tpu.memory_space<vmem>>, %arg4: memref<96x1024xf32, #tpu.memory_space<vmem>>, %arg5: memref<1024x256xf32, #tpu.memory_space<vmem>>, %arg6: memref<8x256xf32, #tpu.memory_space<vmem>>) attributes {dimension_semantics = [#tpu.dimension_semantics<parallel>], iteration_bounds = array<i64: 1>, scalar_prefetch = 0 : i64, scratch_operands = 0 : i64, tpu.core_type = #tpu.core_type<tc>, window_params = [{transform_indices = @transform_0, window_bounds = array<i64: 8, 32>}, {pipeline_mode = #tpu.pipeline_mode<synchronous>, transform_indices = @transform_1, window_bounds = array<i64: 32, 64>}, {pipeline_mode = #tpu.pipeline_mode<synchronous>, transform_indices = @transform_2, window_bounds = array<i64: 32, 64>}, {pipeline_mode = #tpu.pipeline_mode<synchronous>, transform_indices = @transform_3, window_bounds = array<i64: 96, 1024>}, {pipeline_mode = #tpu.pipeline_mode<synchronous>, transform_indices = @transform_4, window_bounds = array<i64: 1024, 256>}, {transform_indices = @transform_5, window_bounds = array<i64: 8, 256>}]} {
    %c0 = arith.constant 0 : index
    %c0_0 = arith.constant 0 : index
    %0 = vector.load %arg1[%c0, %c0_0] : memref<8x32xf32, #tpu.memory_space<vmem>>, vector<8x32xf32>
    %c0_1 = arith.constant 0 : index
    %c0_2 = arith.constant 0 : index
    %1 = vector.load %arg2[%c0_1, %c0_2] : memref<32x64xf32, #tpu.memory_space<vmem>>, vector<32x64xf32>
    %cst = arith.constant dense<0.000000e+00> : vector<8x64xf32>
    %2 = tpu.matmul %0, %1, %cst {dimension_numbers = #tpu.dot_dimension_numbers<[1], [0], [0], [1], [0, 0, 1, 1], [], []>, precision = #tpu.contract_precision<fp32>} : vector<8x32xf32>, vector<32x64xf32>, vector<8x64xf32> -> vector<8x64xf32>
    %c0_3 = arith.constant 0 : index
    %c0_4 = arith.constant 0 : index
    %3 = vector.load %arg3[%c0_3, %c0_4] : memref<32x64xf32, #tpu.memory_space<vmem>>, vector<32x64xf32>
    %cst_5 = arith.constant dense<0.000000e+00> : vector<8x64xf32>
    %4 = tpu.matmul %0, %3, %cst_5 {dimension_numbers = #tpu.dot_dimension_numbers<[1], [0], [0], [1], [0, 0, 1, 1], [], []>, precision = #tpu.contract_precision<fp32>} : vector<8x32xf32>, vector<32x64xf32>, vector<8x64xf32> -> vector<8x64xf32>
    %5 = arith.mulf %2, %2 : vector<8x64xf32>
    %6 = arith.mulf %4, %4 : vector<8x64xf32>
    %7 = arith.addf %5, %6 : vector<8x64xf32>
    %8 = math.sqrt %7 : vector<8x64xf32>
    %9 = tpu.concatenate %0, %8 in 1 : vector<8x32xf32>, vector<8x64xf32> -> vector<8x96xf32>
    %c0_6 = arith.constant 0 : index
    %c0_7 = arith.constant 0 : index
    %10 = vector.load %arg4[%c0_6, %c0_7] : memref<96x1024xf32, #tpu.memory_space<vmem>>, vector<96x1024xf32>
    %cst_8 = arith.constant dense<0.000000e+00> : vector<8x1024xf32>
    %11 = tpu.matmul %9, %10, %cst_8 {dimension_numbers = #tpu.dot_dimension_numbers<[1], [0], [0], [1], [0, 0, 1, 1], [], []>, precision = #tpu.contract_precision<fp32>} : vector<8x96xf32>, vector<96x1024xf32>, vector<8x1024xf32> -> vector<8x1024xf32>
    %cst_9 = arith.constant 0.000000e+00 : f32
    %12 = vector.broadcast %cst_9 : f32 to vector<8x1024xf32>
    %13 = arith.maximumf %11, %12 : vector<8x1024xf32>
    %c0_10 = arith.constant 0 : index
    %c0_11 = arith.constant 0 : index
    %14 = vector.load %arg5[%c0_10, %c0_11] : memref<1024x256xf32, #tpu.memory_space<vmem>>, vector<1024x256xf32>
    %cst_12 = arith.constant dense<0.000000e+00> : vector<8x256xf32>
    %15 = tpu.matmul %13, %14, %cst_12 {dimension_numbers = #tpu.dot_dimension_numbers<[1], [0], [0], [1], [0, 0, 1, 1], [], []>, precision = #tpu.contract_precision<fp32>} : vector<8x1024xf32>, vector<1024x256xf32>, vector<8x256xf32> -> vector<8x256xf32>
    %c0_13 = arith.constant 0 : index
    %c0_14 = arith.constant 0 : index
    %16 = vector.load %arg6[%c0_13, %c0_14] : memref<8x256xf32, #tpu.memory_space<vmem>>, vector<8x256xf32>
    tpu.vector_store %arg6[%c0_13, %c0_14], %15 {strides = array<i32>} : memref<8x256xf32, #tpu.memory_space<vmem>>, vector<8x256xf32>,
    return
  }
  func.func @transform_0(%arg0: i32) -> (i32, i32) {
    %c0_i32 = arith.constant 0 : i32
    %c0_i32_0 = arith.constant 0 : i32
    return %arg0, %c0_i32 : i32, i32
  }
  func.func @transform_1(%arg0: i32) -> (i32, i32) {
    %c0_i32 = arith.constant 0 : i32
    %c0_i32_0 = arith.constant 0 : i32
    %c0_i32_1 = arith.constant 0 : i32
    return %c0_i32, %c0_i32_0 : i32, i32
  }
  func.func @transform_2(%arg0: i32) -> (i32, i32) {
    %c0_i32 = arith.constant 0 : i32
    %c0_i32_0 = arith.constant 0 : i32
    %c0_i32_1 = arith.constant 0 : i32
    return %c0_i32, %c0_i32_0 : i32, i32
  }
  func.func @transform_3(%arg0: i32) -> (i32, i32) {
    %c0_i32 = arith.constant 0 : i32
    %c0_i32_0 = arith.constant 0 : i32
    %c0_i32_1 = arith.constant 0 : i32
    return %c0_i32, %c0_i32_0 : i32, i32
  }
  func.func @transform_4(%arg0: i32) -> (i32, i32) {
    %c0_i32 = arith.constant 0 : i32
    %c0_i32_0 = arith.constant 0 : i32
    %c0_i32_1 = arith.constant 0 : i32
    return %c0_i32, %c0_i32_0 : i32, i32
  }
  func.func @transform_5(%arg0: i32) -> (i32, i32) {
    %c0_i32 = arith.constant 0 : i32
    %c0_i32_0 = arith.constant 0 : i32
    return %arg0, %c0_i32 : i32, i32
  }
}

</mosaic_0001>

<llo_original>
// kernel: ctx_encoder_forward.1
$region0: #{ctx_encoder_forward.1}
  #allocation0 [shape = 'u32[]', space=smem, size = 0x4, offset = 0x4, fixed_abs, tag = 'smem constant byte address 0x4 - core index']
  #allocation1 [shape = 'u32[72,128]{1,0:T(1,128)}', space=vmem, size = 0x9000, scoped, tag = 'internal scratch']
  %s0 = inlined_call_operand.vmem [shape: f32[8,32], index: 0, kind: input, shape index: {}]
  %s1 = inlined_call_operand.hbm [shape: f32[32,64], index: 1, kind: input, shape index: {}]
  %s2 = inlined_call_operand.hbm [shape: f32[32,64], index: 2, kind: input, shape index: {}]
  %s3 = inlined_call_operand.hbm [shape: f32[96,1024], index: 3, kind: input, shape index: {}]
  %s4 = inlined_call_operand.hbm [shape: f32[1024,256], index: 4, kind: input, shape index: {}]
  %s5 = inlined_call_operand.vmem [shape: f32[8,256], index: 5, kind: output, shape index: {}]
  %s6 = sld [smem:[#allocation0]]
  $region46: #{ctx_encoder_forward.1} parent=0
    _
  %s8 = ssub.s32 1, %s6
  %s9 = scalar_select 0, %s8, %s6
  $region1: #{ctx_encoder_forward.1} parent=0
    #allocation2 [shape = 'u8[16384]{0}', space=vmem, size = 0x4000, scoped, tag = 'input window, operand 1, single buffered']
    #allocation3 [shape = 's32[1]{0}', space=sflag, size = 0x4, scoped, tag = 'scoped memory for ctx_encoder_forward.1']
    #allocation4 [shape = 'u8[16384]{0}', space=vmem, size = 0x4000, scoped, tag = 'input window, operand 2, single buffered']
    #allocation5 [shape = 's32[1]{0}', space=sflag, size = 0x4, scoped, tag = 'scoped memory for ctx_encoder_forward.1']
    #allocation6 [shape = 'u8[393216]{0}', space=vmem, size = 0x60000, scoped, tag = 'input window, operand 3, single buffered']
    #allocation7 [shape = 'u8[1048576]{0}', space=vmem, size = 0x100000, scoped, tag = 'input window, operand 4, single buffered']
    #allocation8 [shape = 's32[1]{0}', space=sflag, size = 0x4, scoped, tag = 'scoped memory for ctx_encoder_forward.1']
    %10 = vsyncpa [#allocation3], 0
    %11 = vsyncpa [#allocation5], 0
    %12 = vsyncpa [#allocation8], 0
    // Predicated region
    $region2: #{ctx_encoder_forward.1} parent=1 // pred_check
      _
    $region3: #{ctx_encoder_forward.1} parent=1 // pred_check_branch
      %14 = sbr.rel (0) target = $region5
    $region4: #{ctx_encoder_forward.1} parent=1 // pred_region
      _
    $region5: #{ctx_encoder_forward.1} parent=1 // pred_fallthru
      _
    // Predicated region
    $region6: #{ctx_encoder_forward.1} parent=1 // pred_check
      _
    $region7: #{ctx_encoder_forward.1} parent=1 // pred_check_branch
      %16 = sbr.rel (0) target = $region9
    $region8: #{ctx_encoder_forward.1} parent=1 // pred_region
      %18 = vsyncadd [#allocation3], 0
      %s19 = sshll.u32 %s1, 4
      %s20 = int_to_ptr.hbm [resolvable:$true] %s19
      %s21 = sshll.u32 [#allocation2], 4
      %s22 = int_to_ptr.vmem [resolvable:$true] %s21
      %27 = dma.hbm_to_vmem [thread:$0]  %s20, 512, %s22, [#allocation3], 128, 128, 8
    $region9: #{ctx_encoder_forward.1} parent=1 // pred_fallthru
      _
    // Predicated region
    $region10: #{ctx_encoder_forward.1} parent=1 // pred_check
      _
    $region11: #{ctx_encoder_forward.1} parent=1 // pred_check_branch
      %29 = sbr.rel (0) target = $region13
    $region12: #{ctx_encoder_forward.1} parent=1 // pred_region
      %31 = vsyncadd [#allocation5], 0
      %s32 = sshll.u32 %s2, 4
      %s33 = int_to_ptr.hbm [resolvable:$true] %s32
      %s34 = sshll.u32 [#allocation4], 4
      %s35 = int_to_ptr.vmem [resolvable:$true] %s34
      %40 = dma.hbm_to_vmem [thread:$0]  %s33, 512, %s35, [#allocation5], 128, 128, 8
    $region13: #{ctx_encoder_forward.1} parent=1 // pred_fallthru
      _
    // Predicated region
    $region14: #{ctx_encoder_forward.1} parent=1 // pred_check
      _
    $region15: #{ctx_encoder_forward.1} parent=1 // pred_check_branch
      %42 = sbr.rel (0) target = $region17
    $region16: #{ctx_encoder_forward.1} parent=1 // pred_region
      %44 = vsyncadd [#allocation5], 0
      %s45 = sshll.u32 %s3, 4
      %s46 = int_to_ptr.hbm [resolvable:$true] %s45
      %s47 = sshll.u32 [#allocation6], 4
      %s48 = int_to_ptr.vmem [resolvable:$true] %s47
      %53 = dma.hbm_to_vmem [thread:$0]  %s46, 12288, %s48, [#allocation5], 1024, 1024, 64
    $region17: #{ctx_encoder_forward.1} parent=1 // pred_fallthru
      _
    // Predicated region
    $region18: #{ctx_encoder_forward.1} parent=1 // pred_check
      _
    $region19: #{ctx_encoder_forward.1} parent=1 // pred_check_branch
      %55 = sbr.rel (0) target = $region21
    $region20: #{ctx_encoder_forward.1} parent=1 // pred_region
      %57 = vsyncadd [#allocation8], 0
      %s58 = sshll.u32 %s4, 4
      %s59 = int_to_ptr.hbm [resolvable:$true] %s58
      %s60 = sshll.u32 [#allocation7], 4
      %s61 = int_to_ptr.vmem [resolvable:$true] %s60
      %66 = dma.hbm_to_vmem [thread:$0]  %s59, 32768, %s61, [#allocation8], 256, 256, 16
    $region21: #{ctx_encoder_forward.1} parent=1 // pred_fallthru
      _
    // Predicated region
    $region22: #{ctx_encoder_forward.1} parent=1 // pred_check
      _
    $region23: #{ctx_encoder_forward.1} parent=1 // pred_check_branch
      %68 = sbr.rel (0) target = $region25
    $region24: #{ctx_encoder_forward.1} parent=1 // pred_region
      %70 = dma.done [#allocation3], 512
    $region25: #{ctx_encoder_forward.1} parent=1 // pred_fallthru
      _
    // Predicated region
    $region26: #{ctx_encoder_forward.1} parent=1 // pred_check
      _
    $region27: #{ctx_encoder_forward.1} parent=1 // pred_check_branch
      %72 = sbr.rel (0) target = $region29
    $region28: #{ctx_encoder_forward.1} parent=1 // pred_region
      %74 = dma.done [#allocation5], 512
    $region29: #{ctx_encoder_forward.1} parent=1 // pred_fallthru
      _
    // Predicated region
    $region30: #{ctx_encoder_forward.1} parent=1 // pred_check
      _
    $region31: #{ctx_encoder_forward.1} parent=1 // pred_check_branch
      %76 = sbr.rel (0) target = $region33
    $region32: #{ctx_encoder_forward.1} parent=1 // pred_region
      %78 = dma.done [#allocation5], 12288
    $region33: #{ctx_encoder_forward.1} parent=1 // pred_fallthru
      _
    // Predicated region
    $region34: #{ctx_encoder_forward.1} parent=1 // pred_check
      _
    $region35: #{ctx_encoder_forward.1} parent=1 // pred_check_branch
      %80 = sbr.rel (0) target = $region37
    $region36: #{ctx_encoder_forward.1} parent=1 // pred_region
      %82 = dma.done [#allocation8], 32768
    $region37: #{ctx_encoder_forward.1} parent=1 // pred_fallthru
      _
    %v83 = vld [vmem:[%s0] sm:$0xff]
    %v84 = vld [vmem:[#allocation2] sm:$0xff]
    %v85 = vld [vmem:[#allocation2 + $0x8] sm:$0xff]
    %v86 = vld [vmem:[#allocation2 + $0x10] sm:$0xff]
    %v87 = vld [vmem:[#allocation2 + $0x18] sm:$0xff]
    %vm88 = vcmask 261120
    %v90 = vsel %vm88, %v83, 0
    %92 = vmatpush.msra.mxu0 0.0
    %93 = vmatpush.msra.mxu0 0.0
    %94 = vmatpush.msra.mxu0 0.0
    %95 = vmatpush.msra.mxu0 0.0
    %96 = vmatpush.msra.mxu0 0.0
    %97 = vmatpush.msra.mxu0 0.0
    %98 = vmatpush.msra.mxu0 0.0
    %99 = vmatpush.msra.mxu0 0.0
    %100 = vmatpush.msra.mxu0 0.0
    %101 = vmatpush.msra.mxu0 0.0
    %102 = vmatpush.msra.mxu0 0.0
    %103 = vmatpush.msra.mxu0 0.0
    %v104 = vand.u32 %v87, 4294901760
    %105 = vmatpush.msra.mxu0 %v104
    %v106 = vand.u32 %v86, 4294901760
    %107 = vmatpush.msra.mxu0 %v106
    %v108 = vand.u32 %v85, 4294901760
    %109 = vmatpush.msra.mxu0 %v108
    %v110 = vand.u32 %v84, 4294901760
    %111 = vmatpush.msra.mxu0 %v110
    %v112 = vand.u32 %v90, 4294901760
    %v113 = vsub.f32 %v90, %v112
    %v114 = vand.u32 %v113, 4294901760
    %v115 = vsub.f32 %v113, %v114
    %v116 = vand.u32 %v115, 4294901760
    %117 = vmatmul.f32.gmra.mxu0 %v116
    %v118 = vpop.f32.mrf.mxu0
    %v119 = vadd.f32 0.0, %v118
    %120 = vdwg.mxu0
    %121 = vmatpush.msra.mxu0 0.0
    %122 = vmatpush.msra.mxu0 0.0
    %123 = vmatpush.msra.mxu0 0.0
    %124 = vmatpush.msra.mxu0 0.0
    %125 = vmatpush.msra.mxu0 0.0
    %126 = vmatpush.msra.mxu0 0.0
    %127 = vmatpush.msra.mxu0 0.0
    %128 = vmatpush.msra.mxu0 0.0
    %129 = vmatpush.msra.mxu0 0.0
    %130 = vmatpush.msra.mxu0 0.0
    %131 = vmatpush.msra.mxu0 0.0
    %132 = vmatpush.msra.mxu0 0.0
    %v133 = vand.u32 %v87, 4294901760
    %v134 = vsub.f32 %v87, %v133
    %v135 = vand.u32 %v134, 4294901760
    %v136 = vsub.f32 %v134, %v135
    %v137 = vand.u32 %v136, 4294901760
    %138 = vmatpush.msra.mxu0 %v137
    %v139 = vand.u32 %v86, 4294901760
    %v140 = vsub.f32 %v86, %v139
    %v141 = vand.u32 %v140, 4294901760
    %v142 = vsub.f32 %v140, %v141
    %v143 = vand.u32 %v142, 4294901760
    %144 = vmatpush.msra.mxu0 %v143
    %v145 = vand.u32 %v85, 4294901760
    %v146 = vsub.f32 %v85, %v145
    %v147 = vand.u32 %v146, 4294901760
    %v148 = vsub.f32 %v146, %v147
    %v149 = vand.u32 %v148, 4294901760
    %150 = vmatpush.msra.mxu0 %v149
    %v151 = vand.u32 %v84, 4294901760
    %v152 = vsub.f32 %v84, %v151
    %v153 = vand.u32 %v152, 4294901760
    %v154 = vsub.f32 %v152, %v153
    %v155 = vand.u32 %v154, 4294901760
    %156 = vmatpush.msra.mxu0 %v155
    %v157 = vand.u32 %v90, 4294901760
    %158 = vmatmul.f32.gmra.mxu0 %v157
    %v159 = vpop.f32.mrf.mxu0
    %v160 = vadd.f32 %v119, %v159
    %161 = vdwg.mxu0
    %162 = vmatpush.msra.mxu0 0.0
    %163 = vmatpush.msra.mxu0 0.0
    %164 = vmatpush.msra.mxu0 0.0
    %165 = vmatpush.msra.mxu0 0.0
    %166 = vmatpush.msra.mxu0 0.0
    %167 = vmatpush.msra.mxu0 0.0
    %168 = vmatpush.msra.mxu0 0.0
    %169 = vmatpush.msra.mxu0 0.0
    %170 = vmatpush.msra.mxu0 0.0
    %171 = vmatpush.msra.mxu0 0.0
    %172 = vmatpush.msra.mxu0 0.0
    %173 = vmatpush.msra.mxu0 0.0
    %v174 = vand.u32 %v87, 4294901760
    %v175 = vsub.f32 %v87, %v174
    %176 = vmatpush.msra.mxu0 %v175
    %v177 = vand.u32 %v86, 4294901760
    %v178 = vsub.f32 %v86, %v177
    %179 = vmatpush.msra.mxu0 %v178
    %v180 = vand.u32 %v85, 4294901760
    %v181 = vsub.f32 %v85, %v180
    %182 = vmatpush.msra.mxu0 %v181
    %v183 = vand.u32 %v84, 4294901760
    %v184 = vsub.f32 %v84, %v183
    %185 = vmatpush.msra.mxu0 %v184
    %v186 = vand.u32 %v90, 4294901760
    %v187 = vsub.f32 %v90, %v186
    %188 = vmatmul.f32.gmra.mxu0 %v187
    %v189 = vpop.f32.mrf.mxu0
    %v190 = vadd.f32 %v160, %v189
    %191 = vdwg.mxu0
    %192 = vmatpush.msra.mxu0 0.0
    %193 = vmatpush.msra.mxu0 0.0
    %194 = vmatpush.msra.mxu0 0.0
    %195 = vmatpush.msra.mxu0 0.0
    %196 = vmatpush.msra.mxu0 0.0
    %197 = vmatpush.msra.mxu0 0.0
    %198 = vmatpush.msra.mxu0 0.0
    %199 = vmatpush.msra.mxu0 0.0
    %200 = vmatpush.msra.mxu0 0.0
    %201 = vmatpush.msra.mxu0 0.0
    %202 = vmatpush.msra.mxu0 0.0
    %203 = vmatpush.msra.mxu0 0.0
    %v204 = vand.u32 %v87, 4294901760
    %205 = vmatpush.msra.mxu0 %v204
    %v206 = vand.u32 %v86, 4294901760
    %207 = vmatpush.msra.mxu0 %v206
    %v208 = vand.u32 %v85, 4294901760
    %209 = vmatpush.msra.mxu0 %v208
    %v210 = vand.u32 %v84, 4294901760
    %211 = vmatpush.msra.mxu0 %v210
    %v212 = vand.u32 %v90, 4294901760
    %v213 = vsub.f32 %v90, %v212
    %v214 = vand.u32 %v213, 4294901760
    %215 = vmatmul.f32.gmra.mxu0 %v214
    %v216 = vpop.f32.mrf.mxu0
    %v217 = vadd.f32 %v190, %v216
    %218 = vdwg.mxu0
    %219 = vmatpush.msra.mxu0 0.0
    %220 = vmatpush.msra.mxu0 0.0
    %221 = vmatpush.msra.mxu0 0.0
    %222 = vmatpush.msra.mxu0 0.0
    %223 = vmatpush.msra.mxu0 0.0
    %224 = vmatpush.msra.mxu0 0.0
    %225 = vmatpush.msra.mxu0 0.0
    %226 = vmatpush.msra.mxu0 0.0
    %227 = vmatpush.msra.mxu0 0.0
    %228 = vmatpush.msra.mxu0 0.0
    %229 = vmatpush.msra.mxu0 0.0
    %230 = vmatpush.msra.mxu0 0.0
    %v231 = vand.u32 %v87, 4294901760
    %v232 = vsub.f32 %v87, %v231
    %v233 = vand.u32 %v232, 4294901760
    %234 = vmatpush.msra.mxu0 %v233
    %v235 = vand.u32 %v86, 4294901760
    %v236 = vsub.f32 %v86, %v235
    %v237 = vand.u32 %v236, 4294901760
    %238 = vmatpush.msra.mxu0 %v237
    %v239 = vand.u32 %v85, 4294901760
    %v240 = vsub.f32 %v85, %v239
    %v241 = vand.u32 %v240, 4294901760
    %242 = vmatpush.msra.mxu0 %v241
    %v243 = vand.u32 %v84, 4294901760
    %v244 = vsub.f32 %v84, %v243
    %v245 = vand.u32 %v244, 4294901760
    %246 = vmatpush.msra.mxu0 %v245
    %v247 = vand.u32 %v90, 4294901760
    %248 = vmatmul.f32.gmra.mxu0 %v247
    %v249 = vpop.f32.mrf.mxu0
    %v250 = vadd.f32 %v217, %v249
    %251 = vdwg.mxu0
    %252 = vmatpush.msra.mxu0 0.0
    %253 = vmatpush.msra.mxu0 0.0
    %254 = vmatpush.msra.mxu0 0.0
    %255 = vmatpush.msra.mxu0 0.0
    %256 = vmatpush.msra.mxu0 0.0
    %257 = vmatpush.msra.mxu0 0.0
    %258 = vmatpush.msra.mxu0 0.0
    %259 = vmatpush.msra.mxu0 0.0
    %260 = vmatpush.msra.mxu0 0.0
    %261 = vmatpush.msra.mxu0 0.0
    %262 = vmatpush.msra.mxu0 0.0
    %263 = vmatpush.msra.mxu0 0.0
    %v264 = vand.u32 %v87, 4294901760
    %265 = vmatpush.msra.mxu0 %v264
    %v266 = vand.u32 %v86, 4294901760
    %267 = vmatpush.msra.mxu0 %v266
    %v268 = vand.u32 %v85, 4294901760
    %269 = vmatpush.msra.mxu0 %v268
    %v270 = vand.u32 %v84, 4294901760
    %271 = vmatpush.msra.mxu0 %v270
    %v272 = vand.u32 %v90, 4294901760
    %273 = vmatmul.f32.gmra.mxu0 %v272
    %v274 = vpop.f32.mrf.mxu0
    %v275 = vadd.f32 %v250, %v274
    %276 = vdwg.mxu0
    %v277 = vld [vmem:[#allocation4] sm:$0xff]
    %v278 = vld [vmem:[#allocation4 + $0x8] sm:$0xff]
    %v279 = vld [vmem:[#allocation4 + $0x10] sm:$0xff]
    %v280 = vld [vmem:[#allocation4 + $0x18] sm:$0xff]
    %281 = vmatpush.msra.mxu0 0.0
    %282 = vmatpush.msra.mxu0 0.0
    %283 = vmatpush.msra.mxu0 0.0
    %284 = vmatpush.msra.mxu0 0.0
    %285 = vmatpush.msra.mxu0 0.0
    %286 = vmatpush.msra.mxu0 0.0
    %287 = vmatpush.msra.mxu0 0.0
    %288 = vmatpush.msra.mxu0 0.0
    %289 = vmatpush.msra.mxu0 0.0
    %290 = vmatpush.msra.mxu0 0.0
    %291 = vmatpush.msra.mxu0 0.0
    %292 = vmatpush.msra.mxu0 0.0
    %v293 = vand.u32 %v280, 4294901760
    %294 = vmatpush.msra.mxu0 %v293
    %v295 = vand.u32 %v279, 4294901760
    %296 = vmatpush.msra.mxu0 %v295
    %v297 = vand.u32 %v278, 4294901760
    %298 = vmatpush.msra.mxu0 %v297
    %v299 = vand.u32 %v277, 4294901760
    %300 = vmatpush.msra.mxu0 %v299
    %v301 = vand.u32 %v90, 4294901760
    %v302 = vsub.f32 %v90, %v301
    %v303 = vand.u32 %v302, 4294901760
    %v304 = vsub.f32 %v302, %v303
    %v305 = vand.u32 %v304, 4294901760
    %306 = vmatmul.f32.gmra.mxu0 %v305
    %v307 = vpop.f32.mrf.mxu0
    %v308 = vadd.f32 0.0, %v307
    %309 = vdwg.mxu0
    %310 = vmatpush.msra.mxu0 0.0
    %311 = vmatpush.msra.mxu0 0.0
    %312 = vmatpush.msra.mxu0 0.0
    %313 = vmatpush.msra.mxu0 0.0
    %314 = vmatpush.msra.mxu0 0.0
    %315 = vmatpush.msra.mxu0 0.0
    %316 = vmatpush.msra.mxu0 0.0
    %317 = vmatpush.msra.mxu0 0.0
    %318 = vmatpush.msra.mxu0 0.0
    %319 = vmatpush.msra.mxu0 0.0
    %320 = vmatpush.msra.mxu0 0.0
    %321 = vmatpush.msra.mxu0 0.0
    %v322 = vand.u32 %v280, 4294901760
    %v323 = vsub.f32 %v280, %v322
    %v324 = vand.u32 %v323, 4294901760
    %v325 = vsub.f32 %v323, %v324
    %v326 = vand.u32 %v325, 4294901760
    %327 = vmatpush.msra.mxu0 %v326
    %v328 = vand.u32 %v279, 4294901760
    %v329 = vsub.f32 %v279, %v328
    %v330 = vand.u32 %v329, 4294901760
    %v331 = vsub.f32 %v329, %v330
    %v332 = vand.u32 %v331, 4294901760
    %333 = vmatpush.msra.mxu0 %v332
    %v334 = vand.u32 %v278, 4294901760
    %v335 = vsub.f32 %v278, %v334
    %v336 = vand.u32 %v335, 4294901760
    %v337 = vsub.f32 %v335, %v336
    %v338 = vand.u32 %v337, 4294901760
    %339 = vmatpush.msra.mxu0 %v338
    %v340 = vand.u32 %v277, 4294901760
    %v341 = vsub.f32 %v277, %v340
    %v342 = vand.u32 %v341, 4294901760
    %v343 = vsub.f32 %v341, %v342
    %v344 = vand.u32 %v343, 4294901760
    %345 = vmatpush.msra.mxu0 %v344
    %v346 = vand.u32 %v90, 4294901760
    %347 = vmatmul.f32.gmra.mxu0 %v346
    %v348 = vpop.f32.mrf.mxu0
    %v349 = vadd.f32 %v308, %v348
    %350 = vdwg.mxu0
    %351 = vmatpush.msra.mxu0 0.0
    %352 = vmatpush.msra.mxu0 0.0
    %353 = vmatpush.msra.mxu0 0.0
    %354 = vmatpush.msra.mxu0 0.0
    %355 = vmatpush.msra.mxu0 0.0
    %356 = vmatpush.msra.mxu0 0.0
    %357 = vmatpush.msra.mxu0 0.0
    %358 = vmatpush.msra.mxu0 0.0
    %359 = vmatpush.msra.mxu0 0.0
    %360 = vmatpush.msra.mxu0 0.0
    %361 = vmatpush.msra.mxu0 0.0
    %362 = vmatpush.msra.mxu0 0.0
    %v363 = vand.u32 %v280, 4294901760
    %v364 = vsub.f32 %v280, %v363
    %365 = vmatpush.msra.mxu0 %v364
    %v366 = vand.u32 %v279, 4294901760
    %v367 = vsub.f32 %v279, %v366
    %368 = vmatpush.msra.mxu0 %v367
    %v369 = vand.u32 %v278, 4294901760
    %v370 = vsub.f32 %v278, %v369
    %371 = vmatpush.msra.mxu0 %v370
    %v372 = vand.u32 %v277, 4294901760
    %v373 = vsub.f32 %v277, %v372
    %374 = vmatpush.msra.mxu0 %v373
    %v375 = vand.u32 %v90, 4294901760
    %v376 = vsub.f32 %v90, %v375
    %377 = vmatmul.f32.gmra.mxu0 %v376
    %v378 = vpop.f32.mrf.mxu0
    %v379 = vadd.f32 %v349, %v378
    %380 = vdwg.mxu0
    %381 = vmatpush.msra.mxu0 0.0
    %382 = vmatpush.msra.mxu0 0.0
    %383 = vmatpush.msra.mxu0 0.0
    %384 = vmatpush.msra.mxu0 0.0
    %385 = vmatpush.msra.mxu0 0.0
    %386 = vmatpush.msra.mxu0 0.0
    %387 = vmatpush.msra.mxu0 0.0
    %388 = vmatpush.msra.mxu0 0.0
    %389 = vmatpush.msra.mxu0 0.0
    %390 = vmatpush.msra.mxu0 0.0
    %391 = vmatpush.msra.mxu0 0.0
    %392 = vmatpush.msra.mxu0 0.0
    %v393 = vand.u32 %v280, 4294901760
    %394 = vmatpush.msra.mxu0 %v393
    %v395 = vand.u32 %v279, 4294901760
    %396 = vmatpush.msra.mxu0 %v395
    %v397 = vand.u32 %v278, 4294901760
    %398 = vmatpush.msra.mxu0 %v397
    %v399 = vand.u32 %v277, 4294901760
    %400 = vmatpush.msra.mxu0 %v399
    %v401 = vand.u32 %v90, 4294901760
    %v402 = vsub.f32 %v90, %v401
    %v403 = vand.u32 %v402, 4294901760
    %404 = vmatmul.f32.gmra.mxu0 %v403
    %v405 = vpop.f32.mrf.mxu0
    %v406 = vadd.f32 %v379, %v405
    %407 = vdwg.mxu0
    %408 = vmatpush.msra.mxu0 0.0
    %409 = vmatpush.msra.mxu0 0.0
    %410 = vmatpush.msra.mxu0 0.0
    %411 = vmatpush.msra.mxu0 0.0
    %412 = vmatpush.msra.mxu0 0.0
    %413 = vmatpush.msra.mxu0 0.0
    %414 = vmatpush.msra.mxu0 0.0
    %415 = vmatpush.msra.mxu0 0.0
    %416 = vmatpush.msra.mxu0 0.0
    %417 = vmatpush.msra.mxu0 0.0
    %418 = vmatpush.msra.mxu0 0.0
    %419 = vmatpush.msra.mxu0 0.0
    %v420 = vand.u32 %v280, 4294901760
    %v421 = vsub.f32 %v280, %v420
    %v422 = vand.u32 %v421, 4294901760
    %423 = vmatpush.msra.mxu0 %v422
    %v424 = vand.u32 %v279, 4294901760
    %v425 = vsub.f32 %v279, %v424
    %v426 = vand.u32 %v425, 4294901760
    %427 = vmatpush.msra.mxu0 %v426
    %v428 = vand.u32 %v278, 4294901760
    %v429 = vsub.f32 %v278, %v428
    %v430 = vand.u32 %v429, 4294901760
    %431 = vmatpush.msra.mxu0 %v430
    %v432 = vand.u32 %v277, 4294901760
    %v433 = vsub.f32 %v277, %v432
    %v434 = vand.u32 %v433, 4294901760
    %435 = vmatpush.msra.mxu0 %v434
    %v436 = vand.u32 %v90, 4294901760
    %437 = vmatmul.f32.gmra.mxu0 %v436
    %v438 = vpop.f32.mrf.mxu0
    %v439 = vadd.f32 %v406, %v438
    %440 = vdwg.mxu0
    %441 = vmatpush.msra.mxu0 0.0
    %442 = vmatpush.msra.mxu0 0.0
    %443 = vmatpush.msra.mxu0 0.0
    %444 = vmatpush.msra.mxu0 0.0
    %445 = vmatpush.msra.mxu0 0.0
    %446 = vmatpush.msra.mxu0 0.0
    %447 = vmatpush.msra.mxu0 0.0
    %448 = vmatpush.msra.mxu0 0.0
    %449 = vmatpush.msra.mxu0 0.0
    %450 = vmatpush.msra.mxu0 0.0
    %451 = vmatpush.msra.mxu0 0.0
    %452 = vmatpush.msra.mxu0 0.0
    %v453 = vand.u32 %v280, 4294901760
    %454 = vmatpush.msra.mxu0 %v453
    %v455 = vand.u32 %v279, 4294901760
    %456 = vmatpush.msra.mxu0 %v455
    %v457 = vand.u32 %v278, 4294901760
    %458 = vmatpush.msra.mxu0 %v457
    %v459 = vand.u32 %v277, 4294901760
    %460 = vmatpush.msra.mxu0 %v459
    %v461 = vand.u32 %v90, 4294901760
    %462 = vmatmul.f32.gmra.mxu0 %v461
    %v463 = vpop.f32.mrf.mxu0
    %v464 = vadd.f32 %v439, %v463
    %465 = vdwg.mxu0
    %v466 = vmul.f32 %v275, %v275
    %v467 = vmul.f32 %v464, %v464
    %v468 = vadd.f32 %v466, %v467
    %v469 = vrsqrt.pop %v468
    %v470 = vmul.f32 %v469, %v468
    %v471 = vmul.f32 %v470, %v469
    %v472 = vmul.f32 0.5, %v471
    %v473 = vsub.f32 1.5, %v472
    %v474 = vmul.f32 %v469, %v473
    %v475 = vmul.f32 %v468, %v474
    %vm476 = vcmp.eq.f32.partialorder %v468, inf
    %v477 = vsel %vm476, %v468, %v475
    %vm478 = vcmp.eq.f32.partialorder %v468, 0.0
    %v479 = vand.u32 %v468, 2147483648
    %v480 = vsel %vm478, %v479, %v477
    %482 = vrot.lane.b32.xlu0 %v480, 32
    %v483 = vpop.permute.xlu0 %482
    %v485 = vsel %vm88, %v83, %v483
    %v486 = vld [vmem:[#allocation6] sm:$0xff]
    %v487 = vld [vmem:[#allocation6 + $0x8] sm:$0xff]
    %v488 = vld [vmem:[#allocation6 + $0x10] sm:$0xff]
    %v489 = vld [vmem:[#allocation6 + $0x18] sm:$0xff]
    %v490 = vld [vmem:[#allocation6 + $0x20] sm:$0xff]
    %v491 = vld [vmem:[#allocation6 + $0x28] sm:$0xff]
    %v492 = vld [vmem:[#allocation6 + $0x30] sm:$0xff]
    %v493 = vld [vmem:[#allocation6 + $0x38] sm:$0xff]
    %v494 = vld [vmem:[#allocation6 + $0x40] sm:$0xff]
    %v495 = vld [vmem:[#allocation6 + $0x48] sm:$0xff]
    %v496 = vld [vmem:[#allocation6 + $0x50] sm:$0xff]
    %v497 = vld [vmem:[#allocation6 + $0x58] sm:$0xff]
    %v498 = vld [vmem:[#allocation6 + $0x60] sm:$0xff]
    %v499 = vld [vmem:[#allocation6 + $0x68] sm:$0xff]
    %v500 = vld [vmem:[#allocation6 + $0x70] sm:$0xff]
    %v501 = vld [vmem:[#allocation6 + $0x78] sm:$0xff]
    %v502 = vld [vmem:[#allocation6 + $0x80] sm:$0xff]
    %v503 = vld [vmem:[#allocation6 + $0x88] sm:$0xff]
    %v504 = vld [vmem:[#allocation6 + $0x90] sm:$0xff]
    %v505 = vld [vmem:[#allocation6 + $0x98] sm:$0xff]
    %v506 = vld [vmem:[#allocation6 + $0xa0] sm:$0xff]
    %v507 = vld [vmem:[#allocation6 + $0xa8] sm:$0xff]
    %v508 = vld [vmem:[#allocation6 + $0xb0] sm:$0xff]
    %v509 = vld [vmem:[#allocation6 + $0xb8] sm:$0xff]
    %v510 = vld [vmem:[#allocation6 + $0xc0] sm:$0xff]
    %v511 = vld [vmem:[#allocation6 + $0xc8] sm:$0xff]
    %v512 = vld [vmem:[#allocation6 + $0xd0] sm:$0xff]
    %v513 = vld [vmem:[#allocation6 + $0xd8] sm:$0xff]
    %v514 = vld [vmem:[#allocation6 + $0xe0] sm:$0xff]
    %v515 = vld [vmem:[#allocation6 + $0xe8] sm:$0xff]
    %v516 = vld [vmem:[#allocation6 + $0xf0] sm:$0xff]
    %v517 = vld [vmem:[#allocation6 + $0xf8] sm:$0xff]
    %v518 = vld [vmem:[#allocation6 + $0x100] sm:$0xff]
    %v519 = vld [vmem:[#allocation6 + $0x108] sm:$0xff]
    %v520 = vld [vmem:[#allocation6 + $0x110] sm:$0xff]
    %v521 = vld [vmem:[#allocation6 + $0x118] sm:$0xff]
    %v522 = vld [vmem:[#allocation6 + $0x120] sm:$0xff]
    %v523 = vld [vmem:[#allocation6 + $0x128] sm:$0xff]
    %v524 = vld [vmem:[#allocation6 + $0x130] sm:$0xff]
    %v525 = vld [vmem:[#allocation6 + $0x138] sm:$0xff]
    %v526 = vld [vmem:[#allocation6 + $0x140] sm:$0xff]
    %v527 = vld [vmem:[#allocation6 + $0x148] sm:$0xff]
    %v528 = vld [vmem:[#allocation6 + $0x150] sm:$0xff]
    %v529 = vld [vmem:[#allocation6 + $0x158] sm:$0xff]
    %v530 = vld [vmem:[#allocation6 + $0x160] sm:$0xff]
    %v531 = vld [vmem:[#allocation6 + $0x168] sm:$0xff]
    %v532 = vld [vmem:[#allocation6 + $0x170] sm:$0xff]
    %v533 = vld [vmem:[#allocation6 + $0x178] sm:$0xff]
    %v534 = vld [vmem:[#allocation6 + $0x180] sm:$0xff]
    %v535 = vld [vmem:[#allocation6 + $0x188] sm:$0xff]
    %v536 = vld [vmem:[#allocation6 + $0x190] sm:$0xff]
    %v537 = vld [vmem:[#allocation6 + $0x198] sm:$0xff]
    %v538 = vld [vmem:[#allocation6 + $0x1a0] sm:$0xff]
    %v539 = vld [vmem:[#allocation6 + $0x1a8] sm:$0xff]
    %v540 = vld [vmem:[#allocation6 + $0x1b0] sm:$0xff]
    %v541 = vld [vmem:[#allocation6 + $0x1b8] sm:$0xff]
    %v542 = vld [vmem:[#allocation6 + $0x1c0] sm:$0xff]
    %v543 = vld [vmem:[#allocation6 + $0x1c8] sm:$0xff]
    %v544 = vld [vmem:[#allocation6 + $0x1d0] sm:$0xff]
    %v545 = vld [vmem:[#allocation6 + $0x1d8] sm:$0xff]
    %v546 = vld [vmem:[#allocation6 + $0x1e0] sm:$0xff]
    %v547 = vld [vmem:[#allocation6 + $0x1e8] sm:$0xff]
    %v548 = vld [vmem:[#allocation6 + $0x1f0] sm:$0xff]
    %v549 = vld [vmem:[#allocation6 + $0x1f8] sm:$0xff]
    %v550 = vld [vmem:[#allocation6 + $0x200] sm:$0xff]
    %v551 = vld [vmem:[#allocation6 + $0x208] sm:$0xff]
    %v552 = vld [vmem:[#allocation6 + $0x210] sm:$0xff]
    %v553 = vld [vmem:[#allocation6 + $0x218] sm:$0xff]
    %v554 = vld [vmem:[#allocation6 + $0x220] sm:$0xff]
    %v555 = vld [vmem:[#allocation6 + $0x228] sm:$0xff]
    %v556 = vld [vmem:[#allocation6 + $0x230] sm:$0xff]
    %v557 = vld [vmem:[#allocation6 + $0x238] sm:$0xff]
    %v558 = vld [vmem:[#allocation6 + $0x240] sm:$0xff]
    %v559 = vld [vmem:[#allocation6 + $0x248] sm:$0xff]
    %v560 = vld [vmem:[#allocation6 + $0x250] sm:$0xff]
    %v561 = vld [vmem:[#allocation6 + $0x258] sm:$0xff]
    %v562 = vld [vmem:[#allocation6 + $0x260] sm:$0xff]
    %v563 = vld [vmem:[#allocation6 + $0x268] sm:$0xff]
    %v564 = vld [vmem:[#allocation6 + $0x270] sm:$0xff]
    %v565 = vld [vmem:[#allocation6 + $0x278] sm:$0xff]
    %v566 = vld [vmem:[#allocation6 + $0x280] sm:$0xff]
    %v567 = vld [vmem:[#allocation6 + $0x288] sm:$0xff]
    %v568 = vld [vmem:[#allocation6 + $0x290] sm:$0xff]
    %v569 = vld [vmem:[#allocation6 + $0x298] sm:$0xff]
    %v570 = vld [vmem:[#allocation6 + $0x2a0] sm:$0xff]
    %v571 = vld [vmem:[#allocation6 + $0x2a8] sm:$0xff]
    %v572 = vld [vmem:[#allocation6 + $0x2b0] sm:$0xff]
    %v573 = vld [vmem:[#allocation6 + $0x2b8] sm:$0xff]
    %v574 = vld [vmem:[#allocation6 + $0x2c0] sm:$0xff]
    %v575 = vld [vmem:[#allocation6 + $0x2c8] sm:$0xff]
    %v576 = vld [vmem:[#allocation6 + $0x2d0] sm:$0xff]
    %v577 = vld [vmem:[#allocation6 + $0x2d8] sm:$0xff]
    %v578 = vld [vmem:[#allocation6 + $0x2e0] sm:$0xff]
    %v579 = vld [vmem:[#allocation6 + $0x2e8] sm:$0xff]
    %v580 = vld [vmem:[#allocation6 + $0x2f0] sm:$0xff]
    %v581 = vld [vmem:[#allocation6 + $0x2f8] sm:$0xff]
    %vm582 = vcmask 785408
    %v584 = vsel %vm582, %v485, 0
    %586 = vmatpush.msra.mxu0 0.0
    %587 = vmatpush.msra.mxu0 0.0
    %588 = vmatpush.msra.mxu0 0.0
    %589 = vmatpush.msra.mxu0 0.0
    %v590 = vand.u32 %v574, 4294901760
    %591 = vmatpush.msra.mxu0 %v590
    %v592 = vand.u32 %v566, 4294901760
    %593 = vmatpush.msra.mxu0 %v592
    %v594 = vand.u32 %v558, 4294901760
    %595 = vmatpush.msra.mxu0 %v594
    %v596 = vand.u32 %v550, 4294901760
    %597 = vmatpush.msra.mxu0 %v596
    %v598 = vand.u32 %v542, 4294901760
    %599 = vmatpush.msra.mxu0 %v598
    %v600 = vand.u32 %v534, 4294901760
    %601 = vmatpush.msra.mxu0 %v600
    %v602 = vand.u32 %v526, 4294901760
    %603 = vmatpush.msra.mxu0 %v602
    %v604 = vand.u32 %v518, 4294901760
    %605 = vmatpush.msra.mxu0 %v604
    %v606 = vand.u32 %v510, 4294901760
    %607 = vmatpush.msra.mxu0 %v606
    %v608 = vand.u32 %v502, 4294901760
    %609 = vmatpush.msra.mxu0 %v608
    %v610 = vand.u32 %v494, 4294901760
    %611 = vmatpush.msra.mxu0 %v610
    %v612 = vand.u32 %v486, 4294901760
    %613 = vmatpush.msra.mxu0 %v612
    %v614 = vand.u32 %v584, 4294901760
    %v615 = vsub.f32 %v584, %v614
    %v616 = vand.u32 %v615, 4294901760
    %v617 = vsub.f32 %v615, %v616
    %v618 = vand.u32 %v617, 4294901760
    %619 = vmatmul.f32.gmra.mxu0 %v618
    %v620 = vpop.f32.mrf.mxu0
    %v621 = vadd.f32 0.0, %v620
    %622 = vdwg.mxu0
    %623 = vmatpush.msra.mxu0 0.0
    %624 = vmatpush.msra.mxu0 0.0
    %625 = vmatpush.msra.mxu0 0.0
    %626 = vmatpush.msra.mxu0 0.0
    %v627 = vand.u32 %v574, 4294901760
    %v628 = vsub.f32 %v574, %v627
    %v629 = vand.u32 %v628, 4294901760
    %v630 = vsub.f32 %v628, %v629
    %v631 = vand.u32 %v630, 4294901760
    %632 = vmatpush.msra.mxu0 %v631
    %v633 = vand.u32 %v566, 4294901760
    %v634 = vsub.f32 %v566, %v633
    %v635 = vand.u32 %v634, 4294901760
    %v636 = vsub.f32 %v634, %v635
    %v637 = vand.u32 %v636, 4294901760
    %638 = vmatpush.msra.mxu0 %v637
    %v639 = vand.u32 %v558, 4294901760
    %v640 = vsub.f32 %v558, %v639
    %v641 = vand.u32 %v640, 4294901760
    %v642 = vsub.f32 %v640, %v641
    %v643 = vand.u32 %v642, 4294901760
    %644 = vmatpush.msra.mxu0 %v643
    %v645 = vand.u32 %v550, 4294901760
    %v646 = vsub.f32 %v550, %v645
    %v647 = vand.u32 %v646, 4294901760
    %v648 = vsub.f32 %v646, %v647
    %v649 = vand.u32 %v648, 4294901760
    %650 = vmatpush.msra.mxu0 %v649
    %v651 = vand.u32 %v542, 4294901760
    %v652 = vsub.f32 %v542, %v651
    %v653 = vand.u32 %v652, 4294901760
    %v654 = vsub.f32 %v652, %v653
    %v655 = vand.u32 %v654, 4294901760
    %656 = vmatpush.msra.mxu0 %v655
    %v657 = vand.u32 %v534, 4294901760
    %v658 = vsub.f32 %v534, %v657
    %v659 = vand.u32 %v658, 4294901760
    %v660 = vsub.f32 %v658, %v659
    %v661 = vand.u32 %v660, 4294901760
    %662 = vmatpush.msra.mxu0 %v661
    %v663 = vand.u32 %v526, 4294901760
    %v664 = vsub.f32 %v526, %v663
    %v665 = vand.u32 %v664, 4294901760
    %v666 = vsub.f32 %v664, %v665
    %v667 = vand.u32 %v666, 4294901760
    %668 = vmatpush.msra.mxu0 %v667
    %v669 = vand.u32 %v518, 4294901760
    %v670 = vsub.f32 %v518, %v669
    %v671 = vand.u32 %v670, 4294901760
    %v672 = vsub.f32 %v670, %v671
    %v673 = vand.u32 %v672, 4294901760
    %674 = vmatpush.msra.mxu0 %v673
    %v675 = vand.u32 %v510, 4294901760
    %v676 = vsub.f32 %v510, %v675
    %v677 = vand.u32 %v676, 4294901760
    %v678 = vsub.f32 %v676, %v677
    %v679 = vand.u32 %v678, 4294901760
    %680 = vmatpush.msra.mxu0 %v679
    %v681 = vand.u32 %v502, 4294901760
    %v682 = vsub.f32 %v502, %v681
    %v683 = vand.u32 %v682, 4294901760
    %v684 = vsub.f32 %v682, %v683
    %v685 = vand.u32 %v684, 4294901760
    %686 = vmatpush.msra.mxu0 %v685
    %v687 = vand.u32 %v494, 4294901760
    %v688 = vsub.f32 %v494, %v687
    %v689 = vand.u32 %v688, 4294901760
    %v690 = vsub.f32 %v688, %v689
    %v691 = vand.u32 %v690, 4294901760
    %692 = vmatpush.msra.mxu0 %v691
    %v693 = vand.u32 %v486, 4294901760
    %v694 = vsub.f32 %v486, %v693
    %v695 = vand.u32 %v694, 4294901760
    %v696 = vsub.f32 %v694, %v695
    %v697 = vand.u32 %v696, 4294901760
    %698 = vmatpush.msra.mxu0 %v697
    %v699 = vand.u32 %v584, 4294901760
    %700 = vmatmul.f32.gmra.mxu0 %v699
    %v701 = vpop.f32.mrf.mxu0
    %v702 = vadd.f32 %v621, %v701
    %703 = vdwg.mxu0
    %704 = vmatpush.msra.mxu0 0.0
    %705 = vmatpush.msra.mxu0 0.0
    %706 = vmatpush.msra.mxu0 0.0
    %707 = vmatpush.msra.mxu0 0.0
    %v708 = vand.u32 %v574, 4294901760
    %v709 = vsub.f32 %v574, %v708
    %710 = vmatpush.msra.mxu0 %v709
    %v711 = vand.u32 %v566, 4294901760
    %v712 = vsub.f32 %v566, %v711
    %713 = vmatpush.msra.mxu0 %v712
    %v714 = vand.u32 %v558, 4294901760
    %v715 = vsub.f32 %v558, %v714
    %716 = vmatpush.msra.mxu0 %v715
    %v717 = vand.u32 %v550, 4294901760
    %v718 = vsub.f32 %v550, %v717
    %719 = vmatpush.msra.mxu0 %v718
    %v720 = vand.u32 %v542, 4294901760
    %v721 = vsub.f32 %v542, %v720
    %722 = vmatpush.msra.mxu0 %v721
    %v723 = vand.u32 %v534, 4294901760
    %v724 = vsub.f32 %v534, %v723
    %725 = vmatpush.msra.mxu0 %v724
    %v726 = vand.u32 %v526, 4294901760
    %v727 = vsub.f32 %v526, %v726
    %728 = vmatpush.msra.mxu0 %v727
    %v729 = vand.u32 %v518, 4294901760
    %v730 = vsub.f32 %v518, %v729
    %731 = vmatpush.msra.mxu0 %v730
    %v732 = vand.u32 %v510, 4294901760
    %v733 = vsub.f32 %v510, %v732
    %734 = vmatpush.msra.mxu0 %v733
    %v735 = vand.u32 %v502, 4294901760
    %v736 = vsub.f32 %v502, %v735
    %737 = vmatpush.msra.mxu0 %v736
    %v738 = vand.u32 %v494, 4294901760
    %v739 = vsub.f32 %v494, %v738
    %740 = vmatpush.msra.mxu0 %v739
    %v741 = vand.u32 %v486, 4294901760
    %v742 = vsub.f32 %v486, %v741
    %743 = vmatpush.msra.mxu0 %v742
    %v744 = vand.u32 %v584, 4294901760
    %v745 = vsub.f32 %v584, %v744
    %746 = vmatmul.f32.gmra.mxu0 %v745
    %v747 = vpop.f32.mrf.mxu0
    %v748 = vadd.f32 %v702, %v747
    %749 = vdwg.mxu0
    %750 = vmatpush.msra.mxu0 0.0
    %751 = vmatpush.msra.mxu0 0.0
    %752 = vmatpush.msra.mxu0 0.0
    %753 = vmatpush.msra.mxu0 0.0
    %v754 = vand.u32 %v574, 4294901760
    %755 = vmatpush.msra.mxu0 %v754
    %v756 = vand.u32 %v566, 4294901760
    %757 = vmatpush.msra.mxu0 %v756
    %v758 = vand.u32 %v558, 4294901760
    %759 = vmatpush.msra.mxu0 %v758
    %v760 = vand.u32 %v550, 4294901760
    %761 = vmatpush.msra.mxu0 %v760
    %v762 = vand.u32 %v542, 4294901760
    %763 = vmatpush.msra.mxu0 %v762
    %v764 = vand.u32 %v534, 4294901760
    %765 = vmatpush.msra.mxu0 %v764
    %v766 = vand.u32 %v526, 4294901760
    %767 = vmatpush.msra.mxu0 %v766
    %v768 = vand.u32 %v518, 4294901760
    %769 = vmatpush.msra.mxu0 %v768
    %v770 = vand.u32 %v510, 4294901760
    %771 = vmatpush.msra.mxu0 %v770
    %v772 = vand.u32 %v502, 4294901760
    %773 = vmatpush.msra.mxu0 %v772
    %v774 = vand.u32 %v494, 4294901760
    %775 = vmatpush.msra.mxu0 %v774
    %v776 = vand.u32 %v486, 4294901760
    %777 = vmatpush.msra.mxu0 %v776
    %v778 = vand.u32 %v584, 4294901760
    %v779 = vsub.f32 %v584, %v778
    %v780 = vand.u32 %v779, 4294901760
    %781 = vmatmul.f32.gmra.mxu0 %v780
    %v782 = vpop.f32.mrf.mxu0
    %v783 = vadd.f32 %v748, %v782
    %784 = vdwg.mxu0
    %785 = vmatpush.msra.mxu0 0.0
    %786 = vmatpush.msra.mxu0 0.0
    %787 = vmatpush.msra.mxu0 0.0
    %788 = vmatpush.msra.mxu0 0.0
    %v789 = vand.u32 %v574, 4294901760
    %v790 = vsub.f32 %v574, %v789
    %v791 = vand.u32 %v790, 4294901760
    %792 = vmatpush.msra.mxu0 %v791
    %v793 = vand.u32 %v566, 4294901760
    %v794 = vsub.f32 %v566, %v793
    %v795 = vand.u32 %v794, 4294901760
    %796 = vmatpush.msra.mxu0 %v795
    %v797 = vand.u32 %v558, 4294901760
    %v798 = vsub.f32 %v558, %v797
    %v799 = vand.u32 %v798, 4294901760
    %800 = vmatpush.msra.mxu0 %v799
    %v801 = vand.u32 %v550, 4294901760
    %v802 = vsub.f32 %v550, %v801
    %v803 = vand.u32 %v802, 4294901760
    %804 = vmatpush.msra.mxu0 %v803
    %v805 = vand.u32 %v542, 4294901760
    %v806 = vsub.f32 %v542, %v805
    %v807 = vand.u32 %v806, 4294901760
    %808 = vmatpush.msra.mxu0 %v807
    %v809 = vand.u32 %v534, 4294901760
    %v810 = vsub.f32 %v534, %v809
    %v811 = vand.u32 %v810, 4294901760
    %812 = vmatpush.msra.mxu0 %v811
    %v813 = vand.u32 %v526, 4294901760
    %v814 = vsub.f32 %v526, %v813
    %v815 = vand.u32 %v814, 4294901760
    %816 = vmatpush.msra.mxu0 %v815
    %v817 = vand.u32 %v518, 4294901760
    %v818 = vsub.f32 %v518, %v817
    %v819 = vand.u32 %v818, 4294901760
    %820 = vmatpush.msra.mxu0 %v819
    %v821 = vand.u32 %v510, 4294901760
    %v822 = vsub.f32 %v510, %v821
    %v823 = vand.u32 %v822, 4294901760
    %824 = vmatpush.msra.mxu0 %v823
    %v825 = vand.u32 %v502, 4294901760
    %v826 = vsub.f32 %v502, %v825
    %v827 = vand.u32 %v826, 4294901760
    %828 = vmatpush.msra.mxu0 %v827
    %v829 = vand.u32 %v494, 4294901760
    %v830 = vsub.f32 %v494, %v829
    %v831 = vand.u32 %v830, 4294901760
    %832 = vmatpush.msra.mxu0 %v831
    %v833 = vand.u32 %v486, 4294901760
    %v834 = vsub.f32 %v486, %v833
    %v835 = vand.u32 %v834, 4294901760
    %836 = vmatpush.msra.mxu0 %v835
    %v837 = vand.u32 %v584, 4294901760
    %838 = vmatmul.f32.gmra.mxu0 %v837
    %v839 = vpop.f32.mrf.mxu0
    %v840 = vadd.f32 %v783, %v839
    %841 = vdwg.mxu0
    %842 = vmatpush.msra.mxu0 0.0
    %843 = vmatpush.msra.mxu0 0.0
    %844 = vmatpush.msra.mxu0 0.0
    %845 = vmatpush.msra.mxu0 0.0
    %v846 = vand.u32 %v574, 4294901760
    %847 = vmatpush.msra.mxu0 %v846
    %v848 = vand.u32 %v566, 4294901760
    %849 = vmatpush.msra.mxu0 %v848
    %v850 = vand.u32 %v558, 4294901760
    %851 = vmatpush.msra.mxu0 %v850
    %v852 = vand.u32 %v550, 4294901760
    %853 = vmatpush.msra.mxu0 %v852
    %v854 = vand.u32 %v542, 4294901760
    %855 = vmatpush.msra.mxu0 %v854
    %v856 = vand.u32 %v534, 4294901760
    %857 = vmatpush.msra.mxu0 %v856
    %v858 = vand.u32 %v526, 4294901760
    %859 = vmatpush.msra.mxu0 %v858
    %v860 = vand.u32 %v518, 4294901760
    %861 = vmatpush.msra.mxu0 %v860
    %v862 = vand.u32 %v510, 4294901760
    %863 = vmatpush.msra.mxu0 %v862
    %v864 = vand.u32 %v502, 4294901760
    %865 = vmatpush.msra.mxu0 %v864
    %v866 = vand.u32 %v494, 4294901760
    %867 = vmatpush.msra.mxu0 %v866
    %v868 = vand.u32 %v486, 4294901760
    %869 = vmatpush.msra.mxu0 %v868
    %v870 = vand.u32 %v584, 4294901760
    %871 = vmatmul.f32.gmra.mxu0 %v870
    %v872 = vpop.f32.mrf.mxu0
    %v873 = vadd.f32 %v840, %v872
    %874 = vdwg.mxu0
    %875 = vmatpush.msra.mxu0 0.0
    %876 = vmatpush.msra.mxu0 0.0
    %877 = vmatpush.msra.mxu0 0.0
    %878 = vmatpush.msra.mxu0 0.0
    %v879 = vand.u32 %v575, 4294901760
    %880 = vmatpush.msra.mxu0 %v879
    %v881 = vand.u32 %v567, 4294901760
    %882 = vmatpush.msra.mxu0 %v881
    %v883 = vand.u32 %v559, 4294901760
    %884 = vmatpush.msra.mxu0 %v883
    %v885 = vand.u32 %v551, 4294901760
    %886 = vmatpush.msra.mxu0 %v885
    %v887 = vand.u32 %v543, 4294901760
    %888 = vmatpush.msra.mxu0 %v887
    %v889 = vand.u32 %v535, 4294901760
    %890 = vmatpush.msra.mxu0 %v889
    %v891 = vand.u32 %v527, 4294901760
    %892 = vmatpush.msra.mxu0 %v891
    %v893 = vand.u32 %v519, 4294901760
    %894 = vmatpush.msra.mxu0 %v893
    %v895 = vand.u32 %v511, 4294901760
    %896 = vmatpush.msra.mxu0 %v895
    %v897 = vand.u32 %v503, 4294901760
    %898 = vmatpush.msra.mxu0 %v897
    %v899 = vand.u32 %v495, 4294901760
    %900 = vmatpush.msra.mxu0 %v899
    %v901 = vand.u32 %v487, 4294901760
    %902 = vmatpush.msra.mxu0 %v901
    %v903 = vand.u32 %v584, 4294901760
    %v904 = vsub.f32 %v584, %v903
    %v905 = vand.u32 %v904, 4294901760
    %v906 = vsub.f32 %v904, %v905
    %v907 = vand.u32 %v906, 4294901760
    %908 = vmatmul.f32.gmra.mxu0 %v907
    %v909 = vpop.f32.mrf.mxu0
    %v910 = vadd.f32 0.0, %v909
    %911 = vdwg.mxu0
    %912 = vmatpush.msra.mxu0 0.0
    %913 = vmatpush.msra.mxu0 0.0
    %914 = vmatpush.msra.mxu0 0.0
    %915 = vmatpush.msra.mxu0 0.0
    %v916 = vand.u32 %v575, 4294901760
    %v917 = vsub.f32 %v575, %v916
    %v918 = vand.u32 %v917, 4294901760
    %v919 = vsub.f32 %v917, %v918
    %v920 = vand.u32 %v919, 4294901760
    %921 = vmatpush.msra.mxu0 %v920
    %v922 = vand.u32 %v567, 4294901760
    %v923 = vsub.f32 %v567, %v922
    %v924 = vand.u32 %v923, 4294901760
    %v925 = vsub.f32 %v923, %v924
    %v926 = vand.u32 %v925, 4294901760
    %927 = vmatpush.msra.mxu0 %v926
    %v928 = vand.u32 %v559, 4294901760
    %v929 = vsub.f32 %v559, %v928
    %v930 = vand.u32 %v929, 4294901760
    %v931 = vsub.f32 %v929, %v930
    %v932 = vand.u32 %v931, 4294901760
    %933 = vmatpush.msra.mxu0 %v932
    %v934 = vand.u32 %v551, 4294901760
    %v935 = vsub.f32 %v551, %v934
    %v936 = vand.u32 %v935, 4294901760
    %v937 = vsub.f32 %v935, %v936
    %v938 = vand.u32 %v937, 4294901760
    %939 = vmatpush.msra.mxu0 %v938
    %v940 = vand.u32 %v543, 4294901760
    %v941 = vsub.f32 %v543, %v940
    %v942 = vand.u32 %v941, 4294901760
    %v943 = vsub.f32 %v941, %v942
    %v944 = vand.u32 %v943, 4294901760
    %945 = vmatpush.msra.mxu0 %v944
    %v946 = vand.u32 %v535, 4294901760
    %v947 = vsub.f32 %v535, %v946
    %v948 = vand.u32 %v947, 4294901760
    %v949 = vsub.f32 %v947, %v948
    %v950 = vand.u32 %v949, 4294901760
    %951 = vmatpush.msra.mxu0 %v950
    %v952 = vand.u32 %v527, 4294901760
    %v953 = vsub.f32 %v527, %v952
    %v954 = vand.u32 %v953, 4294901760
    %v955 = vsub.f32 %v953, %v954
    %v956 = vand.u32 %v955, 4294901760
    %957 = vmatpush.msra.mxu0 %v956
    %v958 = vand.u32 %v519, 4294901760
    %v959 = vsub.f32 %v519, %v958
    %v960 = vand.u32 %v959, 4294901760
    %v961 = vsub.f32 %v959, %v960
    %v962 = vand.u32 %v961, 4294901760
    %963 = vmatpush.msra.mxu0 %v962
    %v964 = vand.u32 %v511, 4294901760
    %v965 = vsub.f32 %v511, %v964
    %v966 = vand.u32 %v965, 4294901760
    %v967 = vsub.f32 %v965, %v966
    %v968 = vand.u32 %v967, 4294901760
    %969 = vmatpush.msra.mxu0 %v968
    %v970 = vand.u32 %v503, 4294901760
    %v971 = vsub.f32 %v503, %v970
    %v972 = vand.u32 %v971, 4294901760
    %v973 = vsub.f32 %v971, %v972
    %v974 = vand.u32 %v973, 4294901760
    %975 = vmatpush.msra.mxu0 %v974
    %v976 = vand.u32 %v495, 4294901760
    %v977 = vsub.f32 %v495, %v976
    %v978 = vand.u32 %v977, 4294901760
    %v979 = vsub.f32 %v977, %v978
    %v980 = vand.u32 %v979, 4294901760
    %981 = vmatpush.msra.mxu0 %v980
    %v982 = vand.u32 %v487, 4294901760
    %v983 = vsub.f32 %v487, %v982
    %v984 = vand.u32 %v983, 4294901760
    %v985 = vsub.f32 %v983, %v984
    %v986 = vand.u32 %v985, 4294901760
    %987 = vmatpush.msra.mxu0 %v986
    %v988 = vand.u32 %v584, 4294901760
    %989 = vmatmul.f32.gmra.mxu0 %v988
    %v990 = vpop.f32.mrf.mxu0
    %v991 = vadd.f32 %v910, %v990
    %992 = vdwg.mxu0
    %993 = vmatpush.msra.mxu0 0.0
    %994 = vmatpush.msra.mxu0 0.0
    %995 = vmatpush.msra.mxu0 0.0
    %996 = vmatpush.msra.mxu0 0.0
    %v997 = vand.u32 %v575, 4294901760
    %v998 = vsub.f32 %v575, %v997
    %999 = vmatpush.msra.mxu0 %v998
    %v1000 = vand.u32 %v567, 4294901760
    %v1001 = vsub.f32 %v567, %v1000
    %1002 = vmatpush.msra.mxu0 %v1001
    %v1003 = vand.u32 %v559, 4294901760
    %v1004 = vsub.f32 %v559, %v1003
    %1005 = vmatpush.msra.mxu0 %v1004
    %v1006 = vand.u32 %v551, 4294901760
    %v1007 = vsub.f32 %v551, %v1006
    %1008 = vmatpush.msra.mxu0 %v1007
    %v1009 = vand.u32 %v543, 4294901760
    %v1010 = vsub.f32 %v543, %v1009
    %1011 = vmatpush.msra.mxu0 %v1010
    %v1012 = vand.u32 %v535, 4294901760
    %v1013 = vsub.f32 %v535, %v1012
    %1014 = vmatpush.msra.mxu0 %v1013
    %v1015 = vand.u32 %v527, 4294901760
    %v1016 = vsub.f32 %v527, %v1015
    %1017 = vmatpush.msra.mxu0 %v1016
    %v1018 = vand.u32 %v519, 4294901760
    %v1019 = vsub.f32 %v519, %v1018
    %1020 = vmatpush.msra.mxu0 %v1019
    %v1021 = vand.u32 %v511, 4294901760
    %v1022 = vsub.f32 %v511, %v1021
    %1023 = vmatpush.msra.mxu0 %v1022
    %v1024 = vand.u32 %v503, 4294901760
    %v1025 = vsub.f32 %v503, %v1024
    %1026 = vmatpush.msra.mxu0 %v1025
    %v1027 = vand.u32 %v495, 4294901760
    %v1028 = vsub.f32 %v495, %v1027
    %1029 = vmatpush.msra.mxu0 %v1028
    %v1030 = vand.u32 %v487, 4294901760
    %v1031 = vsub.f32 %v487, %v1030
    %1032 = vmatpush.msra.mxu0 %v1031
    %v1033 = vand.u32 %v584, 4294901760
    %v1034 = vsub.f32 %v584, %v1033
    %1035 = vmatmul.f32.gmra.mxu0 %v1034
    %v1036 = vpop.f32.mrf.mxu0
    %v1037 = vadd.f32 %v991, %v1036
    %1038 = vdwg.mxu0
    %1039 = vmatpush.msra.mxu0 0.0
    %1040 = vmatpush.msra.mxu0 0.0
    %1041 = vmatpush.msra.mxu0 0.0
    %1042 = vmatpush.msra.mxu0 0.0
    %v1043 = vand.u32 %v575, 4294901760
    %1044 = vmatpush.msra.mxu0 %v1043
    %v1045 = vand.u32 %v567, 4294901760
    %1046 = vmatpush.msra.mxu0 %v1045
    %v1047 = vand.u32 %v559, 4294901760
    %1048 = vmatpush.msra.mxu0 %v1047
    %v1049 = vand.u32 %v551, 4294901760
    %1050 = vmatpush.msra.mxu0 %v1049
    %v1051 = vand.u32 %v543, 4294901760
    %1052 = vmatpush.msra.mxu0 %v1051
    %v1053 = vand.u32 %v535, 4294901760
    %1054 = vmatpush.msra.mxu0 %v1053
    %v1055 = vand.u32 %v527, 4294901760
    %1056 = vmatpush.msra.mxu0 %v1055
    %v1057 = vand.u32 %v519, 4294901760
    %1058 = vmatpush.msra.mxu0 %v1057
    %v1059 = vand.u32 %v511, 4294901760
    %1060 = vmatpush.msra.mxu0 %v1059
    %v1061 = vand.u32 %v503, 4294901760
    %1062 = vmatpush.msra.mxu0 %v1061
    %v1063 = vand.u32 %v495, 4294901760
    %1064 = vmatpush.msra.mxu0 %v1063
    %v1065 = vand.u32 %v487, 4294901760
    %1066 = vmatpush.msra.mxu0 %v1065
    %v1067 = vand.u32 %v584, 4294901760
    %v1068 = vsub.f32 %v584, %v1067
    %v1069 = vand.u32 %v1068, 4294901760
    %1070 = vmatmul.f32.gmra.mxu0 %v1069
    %v1071 = vpop.f32.mrf.mxu0
    %v1072 = vadd.f32 %v1037, %v1071
    %1073 = vdwg.mxu0
    %1074 = vmatpush.msra.mxu0 0.0
    %1075 = vmatpush.msra.mxu0 0.0
    %1076 = vmatpush.msra.mxu0 0.0
    %1077 = vmatpush.msra.mxu0 0.0
    %v1078 = vand.u32 %v575, 4294901760
    %v1079 = vsub.f32 %v575, %v1078
    %v1080 = vand.u32 %v1079, 4294901760
    %1081 = vmatpush.msra.mxu0 %v1080
    %v1082 = vand.u32 %v567, 4294901760
    %v1083 = vsub.f32 %v567, %v1082
    %v1084 = vand.u32 %v1083, 4294901760
    %1085 = vmatpush.msra.mxu0 %v1084
    %v1086 = vand.u32 %v559, 4294901760
    %v1087 = vsub.f32 %v559, %v1086
    %v1088 = vand.u32 %v1087, 4294901760
    %1089 = vmatpush.msra.mxu0 %v1088
    %v1090 = vand.u32 %v551, 4294901760
    %v1091 = vsub.f32 %v551, %v1090
    %v1092 = vand.u32 %v1091, 4294901760
    %1093 = vmatpush.msra.mxu0 %v1092
    %v1094 = vand.u32 %v543, 4294901760
    %v1095 = vsub.f32 %v543, %v1094
    %v1096 = vand.u32 %v1095, 4294901760
    %1097 = vmatpush.msra.mxu0 %v1096
    %v1098 = vand.u32 %v535, 4294901760
    %v1099 = vsub.f32 %v535, %v1098
    %v1100 = vand.u32 %v1099, 4294901760
    %1101 = vmatpush.msra.mxu0 %v1100
    %v1102 = vand.u32 %v527, 4294901760
    %v1103 = vsub.f32 %v527, %v1102
    %v1104 = vand.u32 %v1103, 4294901760
    %1105 = vmatpush.msra.mxu0 %v1104
    %v1106 = vand.u32 %v519, 4294901760
    %v1107 = vsub.f32 %v519, %v1106
    %v1108 = vand.u32 %v1107, 4294901760
    %1109 = vmatpush.msra.mxu0 %v1108
    %v1110 = vand.u32 %v511, 4294901760
    %v1111 = vsub.f32 %v511, %v1110
    %v1112 = vand.u32 %v1111, 4294901760
    %1113 = vmatpush.msra.mxu0 %v1112
    %v1114 = vand.u32 %v503, 4294901760
    %v1115 = vsub.f32 %v503, %v1114
    %v1116 = vand.u32 %v1115, 4294901760
    %1117 = vmatpush.msra.mxu0 %v1116
    %v1118 = vand.u32 %v495, 4294901760
    %v1119 = vsub.f32 %v495, %v1118
    %v1120 = vand.u32 %v1119, 4294901760
    %1121 = vmatpush.msra.mxu0 %v1120
    %v1122 = vand.u32 %v487, 4294901760
    %v1123 = vsub.f32 %v487, %v1122
    %v1124 = vand.u32 %v1123, 4294901760
    %1125 = vmatpush.msra.mxu0 %v1124
    %v1126 = vand.u32 %v584, 4294901760
    %1127 = vmatmul.f32.gmra.mxu0 %v1126
    %v1128 = vpop.f32.mrf.mxu0
    %v1129 = vadd.f32 %v1072, %v1128
    %1130 = vdwg.mxu0
    %1131 = vmatpush.msra.mxu0 0.0
    %1132 = vmatpush.msra.mxu0 0.0
    %1133 = vmatpush.msra.mxu0 0.0
    %1134 = vmatpush.msra.mxu0 0.0
    %v1135 = vand.u32 %v575, 4294901760
    %1136 = vmatpush.msra.mxu0 %v1135
    %v1137 = vand.u32 %v567, 4294901760
    %1138 = vmatpush.msra.mxu0 %v1137
    %v1139 = vand.u32 %v559, 4294901760
    %1140 = vmatpush.msra.mxu0 %v1139
    %v1141 = vand.u32 %v551, 4294901760
    %1142 = vmatpush.msra.mxu0 %v1141
    %v1143 = vand.u32 %v543, 4294901760
    %1144 = vmatpush.msra.mxu0 %v1143
    %v1145 = vand.u32 %v535, 4294901760
    %1146 = vmatpush.msra.mxu0 %v1145
    %v1147 = vand.u32 %v527, 4294901760
    %1148 = vmatpush.msra.mxu0 %v1147
    %v1149 = vand.u32 %v519, 4294901760
    %1150 = vmatpush.msra.mxu0 %v1149
    %v1151 = vand.u32 %v511, 4294901760
    %1152 = vmatpush.msra.mxu0 %v1151
    %v1153 = vand.u32 %v503, 4294901760
    %1154 = vmatpush.msra.mxu0 %v1153
    %v1155 = vand.u32 %v495, 4294901760
    %1156 = vmatpush.msra.mxu0 %v1155
    %v1157 = vand.u32 %v487, 4294901760
    %1158 = vmatpush.msra.mxu0 %v1157
    %v1159 = vand.u32 %v584, 4294901760
    %1160 = vmatmul.f32.gmra.mxu0 %v1159
    %v1161 = vpop.f32.mrf.mxu0
    %v1162 = vadd.f32 %v1129, %v1161
    %1163 = vdwg.mxu0
    %1164 = vmatpush.msra.mxu0 0.0
    %1165 = vmatpush.msra.mxu0 0.0
    %1166 = vmatpush.msra.mxu0 0.0
    %1167 = vmatpush.msra.mxu0 0.0
    %v1168 = vand.u32 %v576, 4294901760
    %1169 = vmatpush.msra.mxu0 %v1168
    %v1170 = vand.u32 %v568, 4294901760
    %1171 = vmatpush.msra.mxu0 %v1170
    %v1172 = vand.u32 %v560, 4294901760
    %1173 = vmatpush.msra.mxu0 %v1172
    %v1174 = vand.u32 %v552, 4294901760
    %1175 = vmatpush.msra.mxu0 %v1174
    %v1176 = vand.u32 %v544, 4294901760
    %1177 = vmatpush.msra.mxu0 %v1176
    %v1178 = vand.u32 %v536, 4294901760
    %1179 = vmatpush.msra.mxu0 %v1178
    %v1180 = vand.u32 %v528, 4294901760
    %1181 = vmatpush.msra.mxu0 %v1180
    %v1182 = vand.u32 %v520, 4294901760
    %1183 = vmatpush.msra.mxu0 %v1182
    %v1184 = vand.u32 %v512, 4294901760
    %1185 = vmatpush.msra.mxu0 %v1184
    %v1186 = vand.u32 %v504, 4294901760
    %1187 = vmatpush.msra.mxu0 %v1186
    %v1188 = vand.u32 %v496, 4294901760
    %1189 = vmatpush.msra.mxu0 %v1188
    %v1190 = vand.u32 %v488, 4294901760
    %1191 = vmatpush.msra.mxu0 %v1190
    %v1192 = vand.u32 %v584, 4294901760
    %v1193 = vsub.f32 %v584, %v1192
    %v1194 = vand.u32 %v1193, 4294901760
    %v1195 = vsub.f32 %v1193, %v1194
    %v1196 = vand.u32 %v1195, 4294901760
    %1197 = vmatmul.f32.gmra.mxu0 %v1196
    %v1198 = vpop.f32.mrf.mxu0
    %v1199 = vadd.f32 0.0, %v1198
    %1200 = vdwg.mxu0
    %1201 = vmatpush.msra.mxu0 0.0
    %1202 = vmatpush.msra.mxu0 0.0
    %1203 = vmatpush.msra.mxu0 0.0
    %1204 = vmatpush.msra.mxu0 0.0
    %v1205 = vand.u32 %v576, 4294901760
    %v1206 = vsub.f32 %v576, %v1205
    %v1207 = vand.u32 %v1206, 4294901760
    %v1208 = vsub.f32 %v1206, %v1207
    %v1209 = vand.u32 %v1208, 4294901760
    %1210 = vmatpush.msra.mxu0 %v1209
    %v1211 = vand.u32 %v568, 4294901760
    %v1212 = vsub.f32 %v568, %v1211
    %v1213 = vand.u32 %v1212, 4294901760
    %v1214 = vsub.f32 %v1212, %v1213
    %v1215 = vand.u32 %v1214, 4294901760
    %1216 = vmatpush.msra.mxu0 %v1215
    %v1217 = vand.u32 %v560, 4294901760
    %v1218 = vsub.f32 %v560, %v1217
    %v1219 = vand.u32 %v1218, 4294901760
    %v1220 = vsub.f32 %v1218, %v1219
    %v1221 = vand.u32 %v1220, 4294901760
    %1222 = vmatpush.msra.mxu0 %v1221
    %v1223 = vand.u32 %v552, 4294901760
    %v1224 = vsub.f32 %v552, %v1223
    %v1225 = vand.u32 %v1224, 4294901760
    %v1226 = vsub.f32 %v1224, %v1225
    %v1227 = vand.u32 %v1226, 4294901760
    %1228 = vmatpush.msra.mxu0 %v1227
    %v1229 = vand.u32 %v544, 4294901760
    %v1230 = vsub.f32 %v544, %v1229
    %v1231 = vand.u32 %v1230, 4294901760
    %v1232 = vsub.f32 %v1230, %v1231
    %v1233 = vand.u32 %v1232, 4294901760
    %1234 = vmatpush.msra.mxu0 %v1233
    %v1235 = vand.u32 %v536, 4294901760
    %v1236 = vsub.f32 %v536, %v1235
    %v1237 = vand.u32 %v1236, 4294901760
    %v1238 = vsub.f32 %v1236, %v1237
    %v1239 = vand.u32 %v1238, 4294901760
    %1240 = vmatpush.msra.mxu0 %v1239
    %v1241 = vand.u32 %v528, 4294901760
    %v1242 = vsub.f32 %v528, %v1241
    %v1243 = vand.u32 %v1242, 4294901760
    %v1244 = vsub.f32 %v1242, %v1243
    %v1245 = vand.u32 %v1244, 4294901760
    %1246 = vmatpush.msra.mxu0 %v1245
    %v1247 = vand.u32 %v520, 4294901760
    %v1248 = vsub.f32 %v520, %v1247
    %v1249 = vand.u32 %v1248, 4294901760
    %v1250 = vsub.f32 %v1248, %v1249
    %v1251 = vand.u32 %v1250, 4294901760
    %1252 = vmatpush.msra.mxu0 %v1251
    %v1253 = vand.u32 %v512, 4294901760
    %v1254 = vsub.f32 %v512, %v1253
    %v1255 = vand.u32 %v1254, 4294901760
    %v1256 = vsub.f32 %v1254, %v1255
    %v1257 = vand.u32 %v1256, 4294901760
    %1258 = vmatpush.msra.mxu0 %v1257
    %v1259 = vand.u32 %v504, 4294901760
    %v1260 = vsub.f32 %v504, %v1259
    %v1261 = vand.u32 %v1260, 4294901760
    %v1262 = vsub.f32 %v1260, %v1261
    %v1263 = vand.u32 %v1262, 4294901760
    %1264 = vmatpush.msra.mxu0 %v1263
    %v1265 = vand.u32 %v496, 4294901760
    %v1266 = vsub.f32 %v496, %v1265
    %v1267 = vand.u32 %v1266, 4294901760
    %v1268 = vsub.f32 %v1266, %v1267
    %v1269 = vand.u32 %v1268, 4294901760
    %1270 = vmatpush.msra.mxu0 %v1269
    %v1271 = vand.u32 %v488, 4294901760
    %v1272 = vsub.f32 %v488, %v1271
    %v1273 = vand.u32 %v1272, 4294901760
    %v1274 = vsub.f32 %v1272, %v1273
    %v1275 = vand.u32 %v1274, 4294901760
    %1276 = vmatpush.msra.mxu0 %v1275
    %v1277 = vand.u32 %v584, 4294901760
    %1278 = vmatmul.f32.gmra.mxu0 %v1277
    %v1279 = vpop.f32.mrf.mxu0
    %v1280 = vadd.f32 %v1199, %v1279
    %1281 = vdwg.mxu0
    %1282 = vmatpush.msra.mxu0 0.0
    %1283 = vmatpush.msra.mxu0 0.0
    %1284 = vmatpush.msra.mxu0 0.0
    %1285 = vmatpush.msra.mxu0 0.0
    %v1286 = vand.u32 %v576, 4294901760
    %v1287 = vsub.f32 %v576, %v1286
    %1288 = vmatpush.msra.mxu0 %v1287
    %v1289 = vand.u32 %v568, 4294901760
    %v1290 = vsub.f32 %v568, %v1289
    %1291 = vmatpush.msra.mxu0 %v1290
    %v1292 = vand.u32 %v560, 4294901760
    %v1293 = vsub.f32 %v560, %v1292
    %1294 = vmatpush.msra.mxu0 %v1293
    %v1295 = vand.u32 %v552, 4294901760
    %v1296 = vsub.f32 %v552, %v1295
    %1297 = vmatpush.msra.mxu0 %v1296
    %v1298 = vand.u32 %v544, 4294901760
    %v1299 = vsub.f32 %v544, %v1298
    %1300 = vmatpush.msra.mxu0 %v1299
    %v1301 = vand.u32 %v536, 4294901760
    %v1302 = vsub.f32 %v536, %v1301
    %1303 = vmatpush.msra.mxu0 %v1302
    %v1304 = vand.u32 %v528, 4294901760
    %v1305 = vsub.f32 %v528, %v1304
    %1306 = vmatpush.msra.mxu0 %v1305
    %v1307 = vand.u32 %v520, 4294901760
    %v1308 = vsub.f32 %v520, %v1307
    %1309 = vmatpush.msra.mxu0 %v1308
    %v1310 = vand.u32 %v512, 4294901760
    %v1311 = vsub.f32 %v512, %v1310
    %1312 = vmatpush.msra.mxu0 %v1311
    %v1313 = vand.u32 %v504, 4294901760
    %v1314 = vsub.f32 %v504, %v1313
    %1315 = vmatpush.msra.mxu0 %v1314
    %v1316 = vand.u32 %v496, 4294901760
    %v1317 = vsub.f32 %v496, %v1316
    %1318 = vmatpush.msra.mxu0 %v1317
    %v1319 = vand.u32 %v488, 4294901760
    %v1320 = vsub.f32 %v488, %v1319
    %1321 = vmatpush.msra.mxu0 %v1320
    %v1322 = vand.u32 %v584, 4294901760
    %v1323 = vsub.f32 %v584, %v1322
    %1324 = vmatmul.f32.gmra.mxu0 %v1323
    %v1325 = vpop.f32.mrf.mxu0
    %v1326 = vadd.f32 %v1280, %v1325
    %1327 = vdwg.mxu0
    %1328 = vmatpush.msra.mxu0 0.0
    %1329 = vmatpush.msra.mxu0 0.0
    %1330 = vmatpush.msra.mxu0 0.0
    %1331 = vmatpush.msra.mxu0 0.0
    %v1332 = vand.u32 %v576, 4294901760
    %1333 = vmatpush.msra.mxu0 %v1332
    %v1334 = vand.u32 %v568, 4294901760
    %1335 = vmatpush.msra.mxu0 %v1334
    %v1336 = vand.u32 %v560, 4294901760
    %1337 = vmatpush.msra.mxu0 %v1336
    %v1338 = vand.u32 %v552, 4294901760
    %1339 = vmatpush.msra.mxu0 %v1338
    %v1340 = vand.u32 %v544, 4294901760
    %1341 = vmatpush.msra.mxu0 %v1340
    %v1342 = vand.u32 %v536, 4294901760
    %1343 = vmatpush.msra.mxu0 %v1342
    %v1344 = vand.u32 %v528, 4294901760
    %1345 = vmatpush.msra.mxu0 %v1344
    %v1346 = vand.u32 %v520, 4294901760
    %1347 = vmatpush.msra.mxu0 %v1346
    %v1348 = vand.u32 %v512, 4294901760
    %1349 = vmatpush.msra.mxu0 %v1348
    %v1350 = vand.u32 %v504, 4294901760
    %1351 = vmatpush.msra.mxu0 %v1350
    %v1352 = vand.u32 %v496, 4294901760
    %1353 = vmatpush.msra.mxu0 %v1352
    %v1354 = vand.u32 %v488, 4294901760
    %1355 = vmatpush.msra.mxu0 %v1354
    %v1356 = vand.u32 %v584, 4294901760
    %v1357 = vsub.f32 %v584, %v1356
    %v1358 = vand.u32 %v1357, 4294901760
    %1359 = vmatmul.f32.gmra.mxu0 %v1358
    %v1360 = vpop.f32.mrf.mxu0
    %v1361 = vadd.f32 %v1326, %v1360
    %1362 = vdwg.mxu0
    %1363 = vmatpush.msra.mxu0 0.0
    %1364 = vmatpush.msra.mxu0 0.0
    %1365 = vmatpush.msra.mxu0 0.0
    %1366 = vmatpush.msra.mxu0 0.0
    %v1367 = vand.u32 %v576, 4294901760
    %v1368 = vsub.f32 %v576, %v1367
    %v1369 = vand.u32 %v1368, 4294901760
    %1370 = vmatpush.msra.mxu0 %v1369
    %v1371 = vand.u32 %v568, 4294901760
    %v1372 = vsub.f32 %v568, %v1371
    %v1373 = vand.u32 %v1372, 4294901760
    %1374 = vmatpush.msra.mxu0 %v1373
    %v1375 = vand.u32 %v560, 4294901760
    %v1376 = vsub.f32 %v560, %v1375
    %v1377 = vand.u32 %v1376, 4294901760
    %1378 = vmatpush.msra.mxu0 %v1377
    %v1379 = vand.u32 %v552, 4294901760
    %v1380 = vsub.f32 %v552, %v1379
    %v1381 = vand.u32 %v1380, 4294901760
    %1382 = vmatpush.msra.mxu0 %v1381
    %v1383 = vand.u32 %v544, 4294901760
    %v1384 = vsub.f32 %v544, %v1383
    %v1385 = vand.u32 %v1384, 4294901760
    %1386 = vmatpush.msra.mxu0 %v1385
    %v1387 = vand.u32 %v536, 4294901760
    %v1388 = vsub.f32 %v536, %v1387
    %v1389 = vand.u32 %v1388, 4294901760
    %1390 = vmatpush.msra.mxu0 %v1389
    %v1391 = vand.u32 %v528, 4294901760
    %v1392 = vsub.f32 %v528, %v1391
    %v1393 = vand.u32 %v1392, 4294901760
    %1394 = vmatpush.msra.mxu0 %v1393
    %v1395 = vand.u32 %v520, 4294901760
    %v1396 = vsub.f32 %v520, %v1395
    %v1397 = vand.u32 %v1396, 4294901760
    %1398 = vmatpush.msra.mxu0 %v1397
    %v1399 = vand.u32 %v512, 4294901760
    %v1400 = vsub.f32 %v512, %v1399
    %v1401 = vand.u32 %v1400, 4294901760
    %1402 = vmatpush.msra.mxu0 %v1401
    %v1403 = vand.u32 %v504, 4294901760
    %v1404 = vsub.f32 %v504, %v1403
    %v1405 = vand.u32 %v1404, 4294901760
    %1406 = vmatpush.msra.mxu0 %v1405
    %v1407 = vand.u32 %v496, 4294901760
    %v1408 = vsub.f32 %v496, %v1407
    %v1409 = vand.u32 %v1408, 4294901760
    %1410 = vmatpush.msra.mxu0 %v1409
    %v1411 = vand.u32 %v488, 4294901760
    %v1412 = vsub.f32 %v488, %v1411
    %v1413 = vand.u32 %v1412, 4294901760
    %1414 = vmatpush.msra.mxu0 %v1413
    %v1415 = vand.u32 %v584, 4294901760
    %1416 = vmatmul.f32.gmra.mxu0 %v1415
    %v1417 = vpop.f32.mrf.mxu0
    %v1418 = vadd.f32 %v1361, %v1417
    %1419 = vdwg.mxu0
    %1420 = vmatpush.msra.mxu0 0.0
    %1421 = vmatpush.msra.mxu0 0.0
    %1422 = vmatpush.msra.mxu0 0.0
    %1423 = vmatpush.msra.mxu0 0.0
    %v1424 = vand.u32 %v576, 4294901760
    %1425 = vmatpush.msra.mxu0 %v1424
    %v1426 = vand.u32 %v568, 4294901760
    %1427 = vmatpush.msra.mxu0 %v1426
    %v1428 = vand.u32 %v560, 4294901760
    %1429 = vmatpush.msra.mxu0 %v1428
    %v1430 = vand.u32 %v552, 4294901760
    %1431 = vmatpush.msra.mxu0 %v1430
    %v1432 = vand.u32 %v544, 4294901760
    %1433 = vmatpush.msra.mxu0 %v1432
    %v1434 = vand.u32 %v536, 4294901760
    %1435 = vmatpush.msra.mxu0 %v1434
    %v1436 = vand.u32 %v528, 4294901760
    %1437 = vmatpush.msra.mxu0 %v1436
    %v1438 = vand.u32 %v520, 4294901760
    %1439 = vmatpush.msra.mxu0 %v1438
    %v1440 = vand.u32 %v512, 4294901760
    %1441 = vmatpush.msra.mxu0 %v1440
    %v1442 = vand.u32 %v504, 4294901760
    %1443 = vmatpush.msra.mxu0 %v1442
    %v1444 = vand.u32 %v496, 4294901760
    %1445 = vmatpush.msra.mxu0 %v1444
    %v1446 = vand.u32 %v488, 4294901760
    %1447 = vmatpush.msra.mxu0 %v1446
    %v1448 = vand.u32 %v584, 4294901760
    %1449 = vmatmul.f32.gmra.mxu0 %v1448
    %v1450 = vpop.f32.mrf.mxu0
    %v1451 = vadd.f32 %v1418, %v1450
    %1452 = vdwg.mxu0
    %1453 = vmatpush.msra.mxu0 0.0
    %1454 = vmatpush.msra.mxu0 0.0
    %1455 = vmatpush.msra.mxu0 0.0
    %1456 = vmatpush.msra.mxu0 0.0
    %v1457 = vand.u32 %v577, 4294901760
    %1458 = vmatpush.msra.mxu0 %v1457
    %v1459 = vand.u32 %v569, 4294901760
    %1460 = vmatpush.msra.mxu0 %v1459
    %v1461 = vand.u32 %v561, 4294901760
    %1462 = vmatpush.msra.mxu0 %v1461
    %v1463 = vand.u32 %v553, 4294901760
    %1464 = vmatpush.msra.mxu0 %v1463
    %v1465 = vand.u32 %v545, 4294901760
    %1466 = vmatpush.msra.mxu0 %v1465
    %v1467 = vand.u32 %v537, 4294901760
    %1468 = vmatpush.msra.mxu0 %v1467
    %v1469 = vand.u32 %v529, 4294901760
    %1470 = vmatpush.msra.mxu0 %v1469
    %v1471 = vand.u32 %v521, 4294901760
    %1472 = vmatpush.msra.mxu0 %v1471
    %v1473 = vand.u32 %v513, 4294901760
    %1474 = vmatpush.msra.mxu0 %v1473
    %v1475 = vand.u32 %v505, 4294901760
    %1476 = vmatpush.msra.mxu0 %v1475
    %v1477 = vand.u32 %v497, 4294901760
    %1478 = vmatpush.msra.mxu0 %v1477
    %v1479 = vand.u32 %v489, 4294901760
    %1480 = vmatpush.msra.mxu0 %v1479
    %v1481 = vand.u32 %v584, 4294901760
    %v1482 = vsub.f32 %v584, %v1481
    %v1483 = vand.u32 %v1482, 4294901760
    %v1484 = vsub.f32 %v1482, %v1483
    %v1485 = vand.u32 %v1484, 4294901760
    %1486 = vmatmul.f32.gmra.mxu0 %v1485
    %v1487 = vpop.f32.mrf.mxu0
    %v1488 = vadd.f32 0.0, %v1487
    %1489 = vdwg.mxu0
    %1490 = vmatpush.msra.mxu0 0.0
    %1491 = vmatpush.msra.mxu0 0.0
    %1492 = vmatpush.msra.mxu0 0.0
    %1493 = vmatpush.msra.mxu0 0.0
    %v1494 = vand.u32 %v577, 4294901760
    %v1495 = vsub.f32 %v577, %v1494
    %v1496 = vand.u32 %v1495, 4294901760
    %v1497 = vsub.f32 %v1495, %v1496
    %v1498 = vand.u32 %v1497, 4294901760
    %1499 = vmatpush.msra.mxu0 %v1498
    %v1500 = vand.u32 %v569, 4294901760
    %v1501 = vsub.f32 %v569, %v1500
    %v1502 = vand.u32 %v1501, 4294901760
    %v1503 = vsub.f32 %v1501, %v1502
    %v1504 = vand.u32 %v1503, 4294901760
    %1505 = vmatpush.msra.mxu0 %v1504
    %v1506 = vand.u32 %v561, 4294901760
    %v1507 = vsub.f32 %v561, %v1506
    %v1508 = vand.u32 %v1507, 4294901760
    %v1509 = vsub.f32 %v1507, %v1508
    %v1510 = vand.u32 %v1509, 4294901760
    %1511 = vmatpush.msra.mxu0 %v1510
    %v1512 = vand.u32 %v553, 4294901760
    %v1513 = vsub.f32 %v553, %v1512
    %v1514 = vand.u32 %v1513, 4294901760
    %v1515 = vsub.f32 %v1513, %v1514
    %v1516 = vand.u32 %v1515, 4294901760
    %1517 = vmatpush.msra.mxu0 %v1516
    %v1518 = vand.u32 %v545, 4294901760
    %v1519 = vsub.f32 %v545, %v1518
    %v1520 = vand.u32 %v1519, 4294901760
    %v1521 = vsub.f32 %v1519, %v1520
    %v1522 = vand.u32 %v1521, 4294901760
    %1523 = vmatpush.msra.mxu0 %v1522
    %v1524 = vand.u32 %v537, 4294901760
    %v1525 = vsub.f32 %v537, %v1524
    %v1526 = vand.u32 %v1525, 4294901760
    %v1527 = vsub.f32 %v1525, %v1526
    %v1528 = vand.u32 %v1527, 4294901760
    %1529 = vmatpush.msra.mxu0 %v1528
    %v1530 = vand.u32 %v529, 4294901760
    %v1531 = vsub.f32 %v529, %v1530
    %v1532 = vand.u32 %v1531, 4294901760
    %v1533 = vsub.f32 %v1531, %v1532
    %v1534 = vand.u32 %v1533, 4294901760
    %1535 = vmatpush.msra.mxu0 %v1534
    %v1536 = vand.u32 %v521, 4294901760
    %v1537 = vsub.f32 %v521, %v1536
    %v1538 = vand.u32 %v1537, 4294901760
    %v1539 = vsub.f32 %v1537, %v1538
    %v1540 = vand.u32 %v1539, 4294901760
    %1541 = vmatpush.msra.mxu0 %v1540
    %v1542 = vand.u32 %v513, 4294901760
    %v1543 = vsub.f32 %v513, %v1542
    %v1544 = vand.u32 %v1543, 4294901760
    %v1545 = vsub.f32 %v1543, %v1544
    %v1546 = vand.u32 %v1545, 4294901760
    %1547 = vmatpush.msra.mxu0 %v1546
    %v1548 = vand.u32 %v505, 4294901760
    %v1549 = vsub.f32 %v505, %v1548
    %v1550 = vand.u32 %v1549, 4294901760
    %v1551 = vsub.f32 %v1549, %v1550
    %v1552 = vand.u32 %v1551, 4294901760
    %1553 = vmatpush.msra.mxu0 %v1552
    %v1554 = vand.u32 %v497, 4294901760
    %v1555 = vsub.f32 %v497, %v1554
    %v1556 = vand.u32 %v1555, 4294901760
    %v1557 = vsub.f32 %v1555, %v1556
    %v1558 = vand.u32 %v1557, 4294901760
    %1559 = vmatpush.msra.mxu0 %v1558
    %v1560 = vand.u32 %v489, 4294901760
    %v1561 = vsub.f32 %v489, %v1560
    %v1562 = vand.u32 %v1561, 4294901760
    %v1563 = vsub.f32 %v1561, %v1562
    %v1564 = vand.u32 %v1563, 4294901760
    %1565 = vmatpush.msra.mxu0 %v1564
    %v1566 = vand.u32 %v584, 4294901760
    %1567 = vmatmul.f32.gmra.mxu0 %v1566
    %v1568 = vpop.f32.mrf.mxu0
    %v1569 = vadd.f32 %v1488, %v1568
    %1570 = vdwg.mxu0
    %1571 = vmatpush.msra.mxu0 0.0
    %1572 = vmatpush.msra.mxu0 0.0
    %1573 = vmatpush.msra.mxu0 0.0
    %1574 = vmatpush.msra.mxu0 0.0
    %v1575 = vand.u32 %v577, 4294901760
    %v1576 = vsub.f32 %v577, %v1575
    %1577 = vmatpush.msra.mxu0 %v1576
    %v1578 = vand.u32 %v569, 4294901760
    %v1579 = vsub.f32 %v569, %v1578
    %1580 = vmatpush.msra.mxu0 %v1579
    %v1581 = vand.u32 %v561, 4294901760
    %v1582 = vsub.f32 %v561, %v1581
    %1583 = vmatpush.msra.mxu0 %v1582
    %v1584 = vand.u32 %v553, 4294901760
    %v1585 = vsub.f32 %v553, %v1584
    %1586 = vmatpush.msra.mxu0 %v1585
    %v1587 = vand.u32 %v545, 4294901760
    %v1588 = vsub.f32 %v545, %v1587
    %1589 = vmatpush.msra.mxu0 %v1588
    %v1590 = vand.u32 %v537, 4294901760
    %v1591 = vsub.f32 %v537, %v1590
    %1592 = vmatpush.msra.mxu0 %v1591
    %v1593 = vand.u32 %v529, 4294901760
    %v1594 = vsub.f32 %v529, %v1593
    %1595 = vmatpush.msra.mxu0 %v1594
    %v1596 = vand.u32 %v521, 4294901760
    %v1597 = vsub.f32 %v521, %v1596
    %1598 = vmatpush.msra.mxu0 %v1597
    %v1599 = vand.u32 %v513, 4294901760
    %v1600 = vsub.f32 %v513, %v1599
    %1601 = vmatpush.msra.mxu0 %v1600
    %v1602 = vand.u32 %v505, 4294901760
    %v1603 = vsub.f32 %v505, %v1602
    %1604 = vmatpush.msra.mxu0 %v1603
    %v1605 = vand.u32 %v497, 4294901760
    %v1606 = vsub.f32 %v497, %v1605
    %1607 = vmatpush.msra.mxu0 %v1606
    %v1608 = vand.u32 %v489, 4294901760
    %v1609 = vsub.f32 %v489, %v1608
    %1610 = vmatpush.msra.mxu0 %v1609
    %v1611 = vand.u32 %v584, 4294901760
    %v1612 = vsub.f32 %v584, %v1611
    %1613 = vmatmul.f32.gmra.mxu0 %v1612
    %v1614 = vpop.f32.mrf.mxu0
    %v1615 = vadd.f32 %v1569, %v1614
    %1616 = vdwg.mxu0
    %1617 = vmatpush.msra.mxu0 0.0
    %1618 = vmatpush.msra.mxu0 0.0
    %1619 = vmatpush.msra.mxu0 0.0
    %1620 = vmatpush.msra.mxu0 0.0
    %v1621 = vand.u32 %v577, 4294901760
    %1622 = vmatpush.msra.mxu0 %v1621
    %v1623 = vand.u32 %v569, 4294901760
    %1624 = vmatpush.msra.mxu0 %v1623
    %v1625 = vand.u32 %v561, 4294901760
    %1626 = vmatpush.msra.mxu0 %v1625
    %v1627 = vand.u32 %v553, 4294901760
    %1628 = vmatpush.msra.mxu0 %v1627
    %v1629 = vand.u32 %v545, 4294901760
    %1630 = vmatpush.msra.mxu0 %v1629
    %v1631 = vand.u32 %v537, 4294901760
    %1632 = vmatpush.msra.mxu0 %v1631
    %v1633 = vand.u32 %v529, 4294901760
    %1634 = vmatpush.msra.mxu0 %v1633
    %v1635 = vand.u32 %v521, 4294901760
    %1636 = vmatpush.msra.mxu0 %v1635
    %v1637 = vand.u32 %v513, 4294901760
    %1638 = vmatpush.msra.mxu0 %v1637
    %v1639 = vand.u32 %v505, 4294901760
    %1640 = vmatpush.msra.mxu0 %v1639
    %v1641 = vand.u32 %v497, 4294901760
    %1642 = vmatpush.msra.mxu0 %v1641
    %v1643 = vand.u32 %v489, 4294901760
    %1644 = vmatpush.msra.mxu0 %v1643
    %v1645 = vand.u32 %v584, 4294901760
    %v1646 = vsub.f32 %v584, %v1645
    %v1647 = vand.u32 %v1646, 4294901760
    %1648 = vmatmul.f32.gmra.mxu0 %v1647
    %v1649 = vpop.f32.mrf.mxu0
    %v1650 = vadd.f32 %v1615, %v1649
    %1651 = vdwg.mxu0
    %1652 = vmatpush.msra.mxu0 0.0
    %1653 = vmatpush.msra.mxu0 0.0
    %1654 = vmatpush.msra.mxu0 0.0
    %1655 = vmatpush.msra.mxu0 0.0
    %v1656 = vand.u32 %v577, 4294901760
    %v1657 = vsub.f32 %v577, %v1656
    %v1658 = vand.u32 %v1657, 4294901760
    %1659 = vmatpush.msra.mxu0 %v1658
    %v1660 = vand.u32 %v569, 4294901760
    %v1661 = vsub.f32 %v569, %v1660
    %v1662 = vand.u32 %v1661, 4294901760
    %1663 = vmatpush.msra.mxu0 %v1662
    %v1664 = vand.u32 %v561, 4294901760
    %v1665 = vsub.f32 %v561, %v1664
    %v1666 = vand.u32 %v1665, 4294901760
    %1667 = vmatpush.msra.mxu0 %v1666
    %v1668 = vand.u32 %v553, 4294901760
    %v1669 = vsub.f32 %v553, %v1668
    %v1670 = vand.u32 %v1669, 4294901760
    %1671 = vmatpush.msra.mxu0 %v1670
    %v1672 = vand.u32 %v545, 4294901760
    %v1673 = vsub.f32 %v545, %v1672
    %v1674 = vand.u32 %v1673, 4294901760
    %1675 = vmatpush.msra.mxu0 %v1674
    %v1676 = vand.u32 %v537, 4294901760
    %v1677 = vsub.f32 %v537, %v1676
    %v1678 = vand.u32 %v1677, 4294901760
    %1679 = vmatpush.msra.mxu0 %v1678
    %v1680 = vand.u32 %v529, 4294901760
    %v1681 = vsub.f32 %v529, %v1680
    %v1682 = vand.u32 %v1681, 4294901760
    %1683 = vmatpush.msra.mxu0 %v1682
    %v1684 = vand.u32 %v521, 4294901760
    %v1685 = vsub.f32 %v521, %v1684
    %v1686 = vand.u32 %v1685, 4294901760
    %1687 = vmatpush.msra.mxu0 %v1686
    %v1688 = vand.u32 %v513, 4294901760
    %v1689 = vsub.f32 %v513, %v1688
    %v1690 = vand.u32 %v1689, 4294901760
    %1691 = vmatpush.msra.mxu0 %v1690
    %v1692 = vand.u32 %v505, 4294901760
    %v1693 = vsub.f32 %v505, %v1692
    %v1694 = vand.u32 %v1693, 4294901760
    %1695 = vmatpush.msra.mxu0 %v1694
    %v1696 = vand.u32 %v497, 4294901760
    %v1697 = vsub.f32 %v497, %v1696
    %v1698 = vand.u32 %v1697, 4294901760
    %1699 = vmatpush.msra.mxu0 %v1698
    %v1700 = vand.u32 %v489, 4294901760
    %v1701 = vsub.f32 %v489, %v1700
    %v1702 = vand.u32 %v1701, 4294901760
    %1703 = vmatpush.msra.mxu0 %v1702
    %v1704 = vand.u32 %v584, 4294901760
    %1705 = vmatmul.f32.gmra.mxu0 %v1704
    %v1706 = vpop.f32.mrf.mxu0
    %v1707 = vadd.f32 %v1650, %v1706
    %1708 = vdwg.mxu0
    %1709 = vmatpush.msra.mxu0 0.0
    %1710 = vmatpush.msra.mxu0 0.0
    %1711 = vmatpush.msra.mxu0 0.0
    %1712 = vmatpush.msra.mxu0 0.0
    %v1713 = vand.u32 %v577, 4294901760
    %1714 = vmatpush.msra.mxu0 %v1713
    %v1715 = vand.u32 %v569, 4294901760
    %1716 = vmatpush.msra.mxu0 %v1715
    %v1717 = vand.u32 %v561, 4294901760
    %1718 = vmatpush.msra.mxu0 %v1717
    %v1719 = vand.u32 %v553, 4294901760
    %1720 = vmatpush.msra.mxu0 %v1719
    %v1721 = vand.u32 %v545, 4294901760
    %1722 = vmatpush.msra.mxu0 %v1721
    %v1723 = vand.u32 %v537, 4294901760
    %1724 = vmatpush.msra.mxu0 %v1723
    %v1725 = vand.u32 %v529, 4294901760
    %1726 = vmatpush.msra.mxu0 %v1725
    %v1727 = vand.u32 %v521, 4294901760
    %1728 = vmatpush.msra.mxu0 %v1727
    %v1729 = vand.u32 %v513, 4294901760
    %1730 = vmatpush.msra.mxu0 %v1729
    %v1731 = vand.u32 %v505, 4294901760
    %1732 = vmatpush.msra.mxu0 %v1731
    %v1733 = vand.u32 %v497, 4294901760
    %1734 = vmatpush.msra.mxu0 %v1733
    %v1735 = vand.u32 %v489, 4294901760
    %1736 = vmatpush.msra.mxu0 %v1735
    %v1737 = vand.u32 %v584, 4294901760
    %1738 = vmatmul.f32.gmra.mxu0 %v1737
    %v1739 = vpop.f32.mrf.mxu0
    %v1740 = vadd.f32 %v1707, %v1739
    %1741 = vdwg.mxu0
    %1742 = vmatpush.msra.mxu0 0.0
    %1743 = vmatpush.msra.mxu0 0.0
    %1744 = vmatpush.msra.mxu0 0.0
    %1745 = vmatpush.msra.mxu0 0.0
    %v1746 = vand.u32 %v578, 4294901760
    %1747 = vmatpush.msra.mxu0 %v1746
    %v1748 = vand.u32 %v570, 4294901760
    %1749 = vmatpush.msra.mxu0 %v1748
    %v1750 = vand.u32 %v562, 4294901760
    %1751 = vmatpush.msra.mxu0 %v1750
    %v1752 = vand.u32 %v554, 4294901760
    %1753 = vmatpush.msra.mxu0 %v1752
    %v1754 = vand.u32 %v546, 4294901760
    %1755 = vmatpush.msra.mxu0 %v1754
    %v1756 = vand.u32 %v538, 4294901760
    %1757 = vmatpush.msra.mxu0 %v1756
    %v1758 = vand.u32 %v530, 4294901760
    %1759 = vmatpush.msra.mxu0 %v1758
    %v1760 = vand.u32 %v522, 4294901760
    %1761 = vmatpush.msra.mxu0 %v1760
    %v1762 = vand.u32 %v514, 4294901760
    %1763 = vmatpush.msra.mxu0 %v1762
    %v1764 = vand.u32 %v506, 4294901760
    %1765 = vmatpush.msra.mxu0 %v1764
    %v1766 = vand.u32 %v498, 4294901760
    %1767 = vmatpush.msra.mxu0 %v1766
    %v1768 = vand.u32 %v490, 4294901760
    %1769 = vmatpush.msra.mxu0 %v1768
    %v1770 = vand.u32 %v584, 4294901760
    %v1771 = vsub.f32 %v584, %v1770
    %v1772 = vand.u32 %v1771, 4294901760
    %v1773 = vsub.f32 %v1771, %v1772
    %v1774 = vand.u32 %v1773, 4294901760
    %1775 = vmatmul.f32.gmra.mxu0 %v1774
    %v1776 = vpop.f32.mrf.mxu0
    %v1777 = vadd.f32 0.0, %v1776
    %1778 = vdwg.mxu0
    %1779 = vmatpush.msra.mxu0 0.0
    %1780 = vmatpush.msra.mxu0 0.0
    %1781 = vmatpush.msra.mxu0 0.0
    %1782 = vmatpush.msra.mxu0 0.0
    %v1783 = vand.u32 %v578, 4294901760
    %v1784 = vsub.f32 %v578, %v1783
    %v1785 = vand.u32 %v1784, 4294901760
    %v1786 = vsub.f32 %v1784, %v1785
    %v1787 = vand.u32 %v1786, 4294901760
    %1788 = vmatpush.msra.mxu0 %v1787
    %v1789 = vand.u32 %v570, 4294901760
    %v1790 = vsub.f32 %v570, %v1789
    %v1791 = vand.u32 %v1790, 4294901760
    %v1792 = vsub.f32 %v1790, %v1791
    %v1793 = vand.u32 %v1792, 4294901760
    %1794 = vmatpush.msra.mxu0 %v1793
    %v1795 = vand.u32 %v562, 4294901760
    %v1796 = vsub.f32 %v562, %v1795
    %v1797 = vand.u32 %v1796, 4294901760
    %v1798 = vsub.f32 %v1796, %v1797
    %v1799 = vand.u32 %v1798, 4294901760
    %1800 = vmatpush.msra.mxu0 %v1799
    %v1801 = vand.u32 %v554, 4294901760
    %v1802 = vsub.f32 %v554, %v1801
    %v1803 = vand.u32 %v1802, 4294901760
    %v1804 = vsub.f32 %v1802, %v1803
    %v1805 = vand.u32 %v1804, 4294901760
    %1806 = vmatpush.msra.mxu0 %v1805
    %v1807 = vand.u32 %v546, 4294901760
    %v1808 = vsub.f32 %v546, %v1807
    %v1809 = vand.u32 %v1808, 4294901760
    %v1810 = vsub.f32 %v1808, %v1809
    %v1811 = vand.u32 %v1810, 4294901760
    %1812 = vmatpush.msra.mxu0 %v1811
    %v1813 = vand.u32 %v538, 4294901760
    %v1814 = vsub.f32 %v538, %v1813
    %v1815 = vand.u32 %v1814, 4294901760
    %v1816 = vsub.f32 %v1814, %v1815
    %v1817 = vand.u32 %v1816, 4294901760
    %1818 = vmatpush.msra.mxu0 %v1817
    %v1819 = vand.u32 %v530, 4294901760
    %v1820 = vsub.f32 %v530, %v1819
    %v1821 = vand.u32 %v1820, 4294901760
    %v1822 = vsub.f32 %v1820, %v1821
    %v1823 = vand.u32 %v1822, 4294901760
    %1824 = vmatpush.msra.mxu0 %v1823
    %v1825 = vand.u32 %v522, 4294901760
    %v1826 = vsub.f32 %v522, %v1825
    %v1827 = vand.u32 %v1826, 4294901760
    %v1828 = vsub.f32 %v1826, %v1827
    %v1829 = vand.u32 %v1828, 4294901760
    %1830 = vmatpush.msra.mxu0 %v1829
    %v1831 = vand.u32 %v514, 4294901760
    %v1832 = vsub.f32 %v514, %v1831
    %v1833 = vand.u32 %v1832, 4294901760
    %v1834 = vsub.f32 %v1832, %v1833
    %v1835 = vand.u32 %v1834, 4294901760
    %1836 = vmatpush.msra.mxu0 %v1835
    %v1837 = vand.u32 %v506, 4294901760
    %v1838 = vsub.f32 %v506, %v1837
    %v1839 = vand.u32 %v1838, 4294901760
    %v1840 = vsub.f32 %v1838, %v1839
    %v1841 = vand.u32 %v1840, 4294901760
    %1842 = vmatpush.msra.mxu0 %v1841
    %v1843 = vand.u32 %v498, 4294901760
    %v1844 = vsub.f32 %v498, %v1843
    %v1845 = vand.u32 %v1844, 4294901760
    %v1846 = vsub.f32 %v1844, %v1845
    %v1847 = vand.u32 %v1846, 4294901760
    %1848 = vmatpush.msra.mxu0 %v1847
    %v1849 = vand.u32 %v490, 4294901760
    %v1850 = vsub.f32 %v490, %v1849
    %v1851 = vand.u32 %v1850, 4294901760
    %v1852 = vsub.f32 %v1850, %v1851
    %v1853 = vand.u32 %v1852, 4294901760
    %1854 = vmatpush.msra.mxu0 %v1853
    %v1855 = vand.u32 %v584, 4294901760
    %1856 = vmatmul.f32.gmra.mxu0 %v1855
    %v1857 = vpop.f32.mrf.mxu0
    %v1858 = vadd.f32 %v1777, %v1857
    %1859 = vdwg.mxu0
    %1860 = vmatpush.msra.mxu0 0.0
    %1861 = vmatpush.msra.mxu0 0.0
    %1862 = vmatpush.msra.mxu0 0.0
    %1863 = vmatpush.msra.mxu0 0.0
    %v1864 = vand.u32 %v578, 4294901760
    %v1865 = vsub.f32 %v578, %v1864
    %1866 = vmatpush.msra.mxu0 %v1865
    %v1867 = vand.u32 %v570, 4294901760
    %v1868 = vsub.f32 %v570, %v1867
    %1869 = vmatpush.msra.mxu0 %v1868
    %v1870 = vand.u32 %v562, 4294901760
    %v1871 = vsub.f32 %v562, %v1870
    %1872 = vmatpush.msra.mxu0 %v1871
    %v1873 = vand.u32 %v554, 4294901760
    %v1874 = vsub.f32 %v554, %v1873
    %1875 = vmatpush.msra.mxu0 %v1874
    %v1876 = vand.u32 %v546, 4294901760
    %v1877 = vsub.f32 %v546, %v1876
    %1878 = vmatpush.msra.mxu0 %v1877
    %v1879 = vand.u32 %v538, 4294901760
    %v1880 = vsub.f32 %v538, %v1879
    %1881 = vmatpush.msra.mxu0 %v1880
    %v1882 = vand.u32 %v530, 4294901760
    %v1883 = vsub.f32 %v530, %v1882
    %1884 = vmatpush.msra.mxu0 %v1883
    %v1885 = vand.u32 %v522, 4294901760
    %v1886 = vsub.f32 %v522, %v1885
    %1887 = vmatpush.msra.mxu0 %v1886
    %v1888 = vand.u32 %v514, 4294901760
    %v1889 = vsub.f32 %v514, %v1888
    %1890 = vmatpush.msra.mxu0 %v1889
    %v1891 = vand.u32 %v506, 4294901760
    %v1892 = vsub.f32 %v506, %v1891
    %1893 = vmatpush.msra.mxu0 %v1892
    %v1894 = vand.u32 %v498, 4294901760
    %v1895 = vsub.f32 %v498, %v1894
    %1896 = vmatpush.msra.mxu0 %v1895
    %v1897 = vand.u32 %v490, 4294901760
    %v1898 = vsub.f32 %v490, %v1897
    %1899 = vmatpush.msra.mxu0 %v1898
    %v1900 = vand.u32 %v584, 4294901760
    %v1901 = vsub.f32 %v584, %v1900
    %1902 = vmatmul.f32.gmra.mxu0 %v1901
    %v1903 = vpop.f32.mrf.mxu0
    %v1904 = vadd.f32 %v1858, %v1903
    %1905 = vdwg.mxu0
    %1906 = vmatpush.msra.mxu0 0.0
    %1907 = vmatpush.msra.mxu0 0.0
    %1908 = vmatpush.msra.mxu0 0.0
    %1909 = vmatpush.msra.mxu0 0.0
    %v1910 = vand.u32 %v578, 4294901760
    %1911 = vmatpush.msra.mxu0 %v1910
    %v1912 = vand.u32 %v570, 4294901760
    %1913 = vmatpush.msra.mxu0 %v1912
    %v1914 = vand.u32 %v562, 4294901760
    %1915 = vmatpush.msra.mxu0 %v1914
    %v1916 = vand.u32 %v554, 4294901760
    %1917 = vmatpush.msra.mxu0 %v1916
    %v1918 = vand.u32 %v546, 4294901760
    %1919 = vmatpush.msra.mxu0 %v1918
    %v1920 = vand.u32 %v538, 4294901760
    %1921 = vmatpush.msra.mxu0 %v1920
    %v1922 = vand.u32 %v530, 4294901760
    %1923 = vmatpush.msra.mxu0 %v1922
    %v1924 = vand.u32 %v522, 4294901760
    %1925 = vmatpush.msra.mxu0 %v1924
    %v1926 = vand.u32 %v514, 4294901760
    %1927 = vmatpush.msra.mxu0 %v1926
    %v1928 = vand.u32 %v506, 4294901760
    %1929 = vmatpush.msra.mxu0 %v1928
    %v1930 = vand.u32 %v498, 4294901760
    %1931 = vmatpush.msra.mxu0 %v1930
    %v1932 = vand.u32 %v490, 4294901760
    %1933 = vmatpush.msra.mxu0 %v1932
    %v1934 = vand.u32 %v584, 4294901760
    %v1935 = vsub.f32 %v584, %v1934
    %v1936 = vand.u32 %v1935, 4294901760
    %1937 = vmatmul.f32.gmra.mxu0 %v1936
    %v1938 = vpop.f32.mrf.mxu0
    %v1939 = vadd.f32 %v1904, %v1938
    %1940 = vdwg.mxu0
    %1941 = vmatpush.msra.mxu0 0.0
    %1942 = vmatpush.msra.mxu0 0.0
    %1943 = vmatpush.msra.mxu0 0.0
    %1944 = vmatpush.msra.mxu0 0.0
    %v1945 = vand.u32 %v578, 4294901760
    %v1946 = vsub.f32 %v578, %v1945
    %v1947 = vand.u32 %v1946, 4294901760
    %1948 = vmatpush.msra.mxu0 %v1947
    %v1949 = vand.u32 %v570, 4294901760
    %v1950 = vsub.f32 %v570, %v1949
    %v1951 = vand.u32 %v1950, 4294901760
    %1952 = vmatpush.msra.mxu0 %v1951
    %v1953 = vand.u32 %v562, 4294901760
    %v1954 = vsub.f32 %v562, %v1953
    %v1955 = vand.u32 %v1954, 4294901760
    %1956 = vmatpush.msra.mxu0 %v1955
    %v1957 = vand.u32 %v554, 4294901760
    %v1958 = vsub.f32 %v554, %v1957
    %v1959 = vand.u32 %v1958, 4294901760
    %1960 = vmatpush.msra.mxu0 %v1959
    %v1961 = vand.u32 %v546, 4294901760
    %v1962 = vsub.f32 %v546, %v1961
    %v1963 = vand.u32 %v1962, 4294901760
    %1964 = vmatpush.msra.mxu0 %v1963
    %v1965 = vand.u32 %v538, 4294901760
    %v1966 = vsub.f32 %v538, %v1965
    %v1967 = vand.u32 %v1966, 4294901760
    %1968 = vmatpush.msra.mxu0 %v1967
    %v1969 = vand.u32 %v530, 4294901760
    %v1970 = vsub.f32 %v530, %v1969
    %v1971 = vand.u32 %v1970, 4294901760
    %1972 = vmatpush.msra.mxu0 %v1971
    %v1973 = vand.u32 %v522, 4294901760
    %v1974 = vsub.f32 %v522, %v1973
    %v1975 = vand.u32 %v1974, 4294901760
    %1976 = vmatpush.msra.mxu0 %v1975
    %v1977 = vand.u32 %v514, 4294901760
    %v1978 = vsub.f32 %v514, %v1977
    %v1979 = vand.u32 %v1978, 4294901760
    %1980 = vmatpush.msra.mxu0 %v1979
    %v1981 = vand.u32 %v506, 4294901760
    %v1982 = vsub.f32 %v506, %v1981
    %v1983 = vand.u32 %v1982, 4294901760
    %1984 = vmatpush.msra.mxu0 %v1983
    %v1985 = vand.u32 %v498, 4294901760
    %v1986 = vsub.f32 %v498, %v1985
    %v1987 = vand.u32 %v1986, 4294901760
    %1988 = vmatpush.msra.mxu0 %v1987
    %v1989 = vand.u32 %v490, 4294901760
    %v1990 = vsub.f32 %v490, %v1989
    %v1991 = vand.u32 %v1990, 4294901760
    %1992 = vmatpush.msra.mxu0 %v1991
    %v1993 = vand.u32 %v584, 4294901760
    %1994 = vmatmul.f32.gmra.mxu0 %v1993
    %v1995 = vpop.f32.mrf.mxu0
    %v1996 = vadd.f32 %v1939, %v1995
    %1997 = vdwg.mxu0
    %1998 = vmatpush.msra.mxu0 0.0
    %1999 = vmatpush.msra.mxu0 0.0
    %2000 = vmatpush.msra.mxu0 0.0
    %2001 = vmatpush.msra.mxu0 0.0
    %v2002 = vand.u32 %v578, 4294901760
    %2003 = vmatpush.msra.mxu0 %v2002
    %v2004 = vand.u32 %v570, 4294901760
    %2005 = vmatpush.msra.mxu0 %v2004
    %v2006 = vand.u32 %v562, 4294901760
    %2007 = vmatpush.msra.mxu0 %v2006
    %v2008 = vand.u32 %v554, 4294901760
    %2009 = vmatpush.msra.mxu0 %v2008
    %v2010 = vand.u32 %v546, 4294901760
    %2011 = vmatpush.msra.mxu0 %v2010
    %v2012 = vand.u32 %v538, 4294901760
    %2013 = vmatpush.msra.mxu0 %v2012
    %v2014 = vand.u32 %v530, 4294901760
    %2015 = vmatpush.msra.mxu0 %v2014
    %v2016 = vand.u32 %v522, 4294901760
    %2017 = vmatpush.msra.mxu0 %v2016
    %v2018 = vand.u32 %v514, 4294901760
    %2019 = vmatpush.msra.mxu0 %v2018
    %v2020 = vand.u32 %v506, 4294901760
    %2021 = vmatpush.msra.mxu0 %v2020
    %v2022 = vand.u32 %v498, 4294901760
    %2023 = vmatpush.msra.mxu0 %v2022
    %v2024 = vand.u32 %v490, 4294901760
    %2025 = vmatpush.msra.mxu0 %v2024
    %v2026 = vand.u32 %v584, 4294901760
    %2027 = vmatmul.f32.gmra.mxu0 %v2026
    %v2028 = vpop.f32.mrf.mxu0
    %v2029 = vadd.f32 %v1996, %v2028
    %2030 = vdwg.mxu0
    %2031 = vmatpush.msra.mxu0 0.0
    %2032 = vmatpush.msra.mxu0 0.0
    %2033 = vmatpush.msra.mxu0 0.0
    %2034 = vmatpush.msra.mxu0 0.0
    %v2035 = vand.u32 %v579, 4294901760
    %2036 = vmatpush.msra.mxu0 %v2035
    %v2037 = vand.u32 %v571, 4294901760
    %2038 = vmatpush.msra.mxu0 %v2037
    %v2039 = vand.u32 %v563, 4294901760
    %2040 = vmatpush.msra.mxu0 %v2039
    %v2041 = vand.u32 %v555, 4294901760
    %2042 = vmatpush.msra.mxu0 %v2041
    %v2043 = vand.u32 %v547, 4294901760
    %2044 = vmatpush.msra.mxu0 %v2043
    %v2045 = vand.u32 %v539, 4294901760
    %2046 = vmatpush.msra.mxu0 %v2045
    %v2047 = vand.u32 %v531, 4294901760
    %2048 = vmatpush.msra.mxu0 %v2047
    %v2049 = vand.u32 %v523, 4294901760
    %2050 = vmatpush.msra.mxu0 %v2049
    %v2051 = vand.u32 %v515, 4294901760
    %2052 = vmatpush.msra.mxu0 %v2051
    %v2053 = vand.u32 %v507, 4294901760
    %2054 = vmatpush.msra.mxu0 %v2053
    %v2055 = vand.u32 %v499, 4294901760
    %2056 = vmatpush.msra.mxu0 %v2055
    %v2057 = vand.u32 %v491, 4294901760
    %2058 = vmatpush.msra.mxu0 %v2057
    %v2059 = vand.u32 %v584, 4294901760
    %v2060 = vsub.f32 %v584, %v2059
    %v2061 = vand.u32 %v2060, 4294901760
    %v2062 = vsub.f32 %v2060, %v2061
    %v2063 = vand.u32 %v2062, 4294901760
    %2064 = vmatmul.f32.gmra.mxu0 %v2063
    %v2065 = vpop.f32.mrf.mxu0
    %v2066 = vadd.f32 0.0, %v2065
    %2067 = vdwg.mxu0
    %2068 = vmatpush.msra.mxu0 0.0
    %2069 = vmatpush.msra.mxu0 0.0
    %2070 = vmatpush.msra.mxu0 0.0
    %2071 = vmatpush.msra.mxu0 0.0
    %v2072 = vand.u32 %v579, 4294901760
    %v2073 = vsub.f32 %v579, %v2072
    %v2074 = vand.u32 %v2073, 4294901760
    %v2075 = vsub.f32 %v2073, %v2074
    %v2076 = vand.u32 %v2075, 4294901760
    %2077 = vmatpush.msra.mxu0 %v2076
    %v2078 = vand.u32 %v571, 4294901760
    %v2079 = vsub.f32 %v571, %v2078
    %v2080 = vand.u32 %v2079, 4294901760
    %v2081 = vsub.f32 %v2079, %v2080
    %v2082 = vand.u32 %v2081, 4294901760
    %2083 = vmatpush.msra.mxu0 %v2082
    %v2084 = vand.u32 %v563, 4294901760
    %v2085 = vsub.f32 %v563, %v2084
    %v2086 = vand.u32 %v2085, 4294901760
    %v2087 = vsub.f32 %v2085, %v2086
    %v2088 = vand.u32 %v2087, 4294901760
    %2089 = vmatpush.msra.mxu0 %v2088
    %v2090 = vand.u32 %v555, 4294901760
    %v2091 = vsub.f32 %v555, %v2090
    %v2092 = vand.u32 %v2091, 4294901760
    %v2093 = vsub.f32 %v2091, %v2092
    %v2094 = vand.u32 %v2093, 4294901760
    %2095 = vmatpush.msra.mxu0 %v2094
    %v2096 = vand.u32 %v547, 4294901760
    %v2097 = vsub.f32 %v547, %v2096
    %v2098 = vand.u32 %v2097, 4294901760
    %v2099 = vsub.f32 %v2097, %v2098
    %v2100 = vand.u32 %v2099, 4294901760
    %2101 = vmatpush.msra.mxu0 %v2100
    %v2102 = vand.u32 %v539, 4294901760
    %v2103 = vsub.f32 %v539, %v2102
    %v2104 = vand.u32 %v2103, 4294901760
    %v2105 = vsub.f32 %v2103, %v2104
    %v2106 = vand.u32 %v2105, 4294901760
    %2107 = vmatpush.msra.mxu0 %v2106
    %v2108 = vand.u32 %v531, 4294901760
    %v2109 = vsub.f32 %v531, %v2108
    %v2110 = vand.u32 %v2109, 4294901760
    %v2111 = vsub.f32 %v2109, %v2110
    %v2112 = vand.u32 %v2111, 4294901760
    %2113 = vmatpush.msra.mxu0 %v2112
    %v2114 = vand.u32 %v523, 4294901760
    %v2115 = vsub.f32 %v523, %v2114
    %v2116 = vand.u32 %v2115, 4294901760
    %v2117 = vsub.f32 %v2115, %v2116
    %v2118 = vand.u32 %v2117, 4294901760
    %2119 = vmatpush.msra.mxu0 %v2118
    %v2120 = vand.u32 %v515, 4294901760
    %v2121 = vsub.f32 %v515, %v2120
    %v2122 = vand.u32 %v2121, 4294901760
    %v2123 = vsub.f32 %v2121, %v2122
    %v2124 = vand.u32 %v2123, 4294901760
    %2125 = vmatpush.msra.mxu0 %v2124
    %v2126 = vand.u32 %v507, 4294901760
    %v2127 = vsub.f32 %v507, %v2126
    %v2128 = vand.u32 %v2127, 4294901760
    %v2129 = vsub.f32 %v2127, %v2128
    %v2130 = vand.u32 %v2129, 4294901760
    %2131 = vmatpush.msra.mxu0 %v2130
    %v2132 = vand.u32 %v499, 4294901760
    %v2133 = vsub.f32 %v499, %v2132
    %v2134 = vand.u32 %v2133, 4294901760
    %v2135 = vsub.f32 %v2133, %v2134
    %v2136 = vand.u32 %v2135, 4294901760
    %2137 = vmatpush.msra.mxu0 %v2136
    %v2138 = vand.u32 %v491, 4294901760
    %v2139 = vsub.f32 %v491, %v2138
    %v2140 = vand.u32 %v2139, 4294901760
    %v2141 = vsub.f32 %v2139, %v2140
    %v2142 = vand.u32 %v2141, 4294901760
    %2143 = vmatpush.msra.mxu0 %v2142
    %v2144 = vand.u32 %v584, 4294901760
    %2145 = vmatmul.f32.gmra.mxu0 %v2144
    %v2146 = vpop.f32.mrf.mxu0
    %v2147 = vadd.f32 %v2066, %v2146
    %2148 = vdwg.mxu0
    %2149 = vmatpush.msra.mxu0 0.0
    %2150 = vmatpush.msra.mxu0 0.0
    %2151 = vmatpush.msra.mxu0 0.0
    %2152 = vmatpush.msra.mxu0 0.0
    %v2153 = vand.u32 %v579, 4294901760
    %v2154 = vsub.f32 %v579, %v2153
    %2155 = vmatpush.msra.mxu0 %v2154
    %v2156 = vand.u32 %v571, 4294901760
    %v2157 = vsub.f32 %v571, %v2156
    %2158 = vmatpush.msra.mxu0 %v2157
    %v2159 = vand.u32 %v563, 4294901760
    %v2160 = vsub.f32 %v563, %v2159
    %2161 = vmatpush.msra.mxu0 %v2160
    %v2162 = vand.u32 %v555, 4294901760
    %v2163 = vsub.f32 %v555, %v2162
    %2164 = vmatpush.msra.mxu0 %v2163
    %v2165 = vand.u32 %v547, 4294901760
    %v2166 = vsub.f32 %v547, %v2165
    %2167 = vmatpush.msra.mxu0 %v2166
    %v2168 = vand.u32 %v539, 4294901760
    %v2169 = vsub.f32 %v539, %v2168
    %2170 = vmatpush.msra.mxu0 %v2169
    %v2171 = vand.u32 %v531, 4294901760
    %v2172 = vsub.f32 %v531, %v2171
    %2173 = vmatpush.msra.mxu0 %v2172
    %v2174 = vand.u32 %v523, 4294901760
    %v2175 = vsub.f32 %v523, %v2174
    %2176 = vmatpush.msra.mxu0 %v2175
    %v2177 = vand.u32 %v515, 4294901760
    %v2178 = vsub.f32 %v515, %v2177
    %2179 = vmatpush.msra.mxu0 %v2178
    %v2180 = vand.u32 %v507, 4294901760
    %v2181 = vsub.f32 %v507, %v2180
    %2182 = vmatpush.msra.mxu0 %v2181
    %v2183 = vand.u32 %v499, 4294901760
    %v2184 = vsub.f32 %v499, %v2183
    %2185 = vmatpush.msra.mxu0 %v2184
    %v2186 = vand.u32 %v491, 4294901760
    %v2187 = vsub.f32 %v491, %v2186
    %2188 = vmatpush.msra.mxu0 %v2187
    %v2189 = vand.u32 %v584, 4294901760
    %v2190 = vsub.f32 %v584, %v2189
    %2191 = vmatmul.f32.gmra.mxu0 %v2190
    %v2192 = vpop.f32.mrf.mxu0
    %v2193 = vadd.f32 %v2147, %v2192
    %2194 = vdwg.mxu0
    %2195 = vmatpush.msra.mxu0 0.0
    %2196 = vmatpush.msra.mxu0 0.0
    %2197 = vmatpush.msra.mxu0 0.0
    %2198 = vmatpush.msra.mxu0 0.0
    %v2199 = vand.u32 %v579, 4294901760
    %2200 = vmatpush.msra.mxu0 %v2199
    %v2201 = vand.u32 %v571, 4294901760
    %2202 = vmatpush.msra.mxu0 %v2201
    %v2203 = vand.u32 %v563, 4294901760
    %2204 = vmatpush.msra.mxu0 %v2203
    %v2205 = vand.u32 %v555, 4294901760
    %2206 = vmatpush.msra.mxu0 %v2205
    %v2207 = vand.u32 %v547, 4294901760
    %2208 = vmatpush.msra.mxu0 %v2207
    %v2209 = vand.u32 %v539, 4294901760
    %2210 = vmatpush.msra.mxu0 %v2209
    %v2211 = vand.u32 %v531, 4294901760
    %2212 = vmatpush.msra.mxu0 %v2211
    %v2213 = vand.u32 %v523, 4294901760
    %2214 = vmatpush.msra.mxu0 %v2213
    %v2215 = vand.u32 %v515, 4294901760
    %2216 = vmatpush.msra.mxu0 %v2215
    %v2217 = vand.u32 %v507, 4294901760
    %2218 = vmatpush.msra.mxu0 %v2217
    %v2219 = vand.u32 %v499, 4294901760
    %2220 = vmatpush.msra.mxu0 %v2219
    %v2221 = vand.u32 %v491, 4294901760
    %2222 = vmatpush.msra.mxu0 %v2221
    %v2223 = vand.u32 %v584, 4294901760
    %v2224 = vsub.f32 %v584, %v2223
    %v2225 = vand.u32 %v2224, 4294901760
    %2226 = vmatmul.f32.gmra.mxu0 %v2225
    %v2227 = vpop.f32.mrf.mxu0
    %v2228 = vadd.f32 %v2193, %v2227
    %2229 = vdwg.mxu0
    %2230 = vmatpush.msra.mxu0 0.0
    %2231 = vmatpush.msra.mxu0 0.0
    %2232 = vmatpush.msra.mxu0 0.0
    %2233 = vmatpush.msra.mxu0 0.0
    %v2234 = vand.u32 %v579, 4294901760
    %v2235 = vsub.f32 %v579, %v2234
    %v2236 = vand.u32 %v2235, 4294901760
    %2237 = vmatpush.msra.mxu0 %v2236
    %v2238 = vand.u32 %v571, 4294901760
    %v2239 = vsub.f32 %v571, %v2238
    %v2240 = vand.u32 %v2239, 4294901760
    %2241 = vmatpush.msra.mxu0 %v2240
    %v2242 = vand.u32 %v563, 4294901760
    %v2243 = vsub.f32 %v563, %v2242
    %v2244 = vand.u32 %v2243, 4294901760
    %2245 = vmatpush.msra.mxu0 %v2244
    %v2246 = vand.u32 %v555, 4294901760
    %v2247 = vsub.f32 %v555, %v2246
    %v2248 = vand.u32 %v2247, 4294901760
    %2249 = vmatpush.msra.mxu0 %v2248
    %v2250 = vand.u32 %v547, 4294901760
    %v2251 = vsub.f32 %v547, %v2250
    %v2252 = vand.u32 %v2251, 4294901760
    %2253 = vmatpush.msra.mxu0 %v2252
    %v2254 = vand.u32 %v539, 4294901760
    %v2255 = vsub.f32 %v539, %v2254
    %v2256 = vand.u32 %v2255, 4294901760
    %2257 = vmatpush.msra.mxu0 %v2256
    %v2258 = vand.u32 %v531, 4294901760
    %v2259 = vsub.f32 %v531, %v2258
    %v2260 = vand.u32 %v2259, 4294901760
    %2261 = vmatpush.msra.mxu0 %v2260
    %v2262 = vand.u32 %v523, 4294901760
    %v2263 = vsub.f32 %v523, %v2262
    %v2264 = vand.u32 %v2263, 4294901760
    %2265 = vmatpush.msra.mxu0 %v2264
    %v2266 = vand.u32 %v515, 4294901760
    %v2267 = vsub.f32 %v515, %v2266
    %v2268 = vand.u32 %v2267, 4294901760
    %2269 = vmatpush.msra.mxu0 %v2268
    %v2270 = vand.u32 %v507, 4294901760
    %v2271 = vsub.f32 %v507, %v2270
    %v2272 = vand.u32 %v2271, 4294901760
    %2273 = vmatpush.msra.mxu0 %v2272
    %v2274 = vand.u32 %v499, 4294901760
    %v2275 = vsub.f32 %v499, %v2274
    %v2276 = vand.u32 %v2275, 4294901760
    %2277 = vmatpush.msra.mxu0 %v2276
    %v2278 = vand.u32 %v491, 4294901760
    %v2279 = vsub.f32 %v491, %v2278
    %v2280 = vand.u32 %v2279, 4294901760
    %2281 = vmatpush.msra.mxu0 %v2280
    %v2282 = vand.u32 %v584, 4294901760
    %2283 = vmatmul.f32.gmra.mxu0 %v2282
    %v2284 = vpop.f32.mrf.mxu0
    %v2285 = vadd.f32 %v2228, %v2284
    %2286 = vdwg.mxu0
    %2287 = vmatpush.msra.mxu0 0.0
    %2288 = vmatpush.msra.mxu0 0.0
    %2289 = vmatpush.msra.mxu0 0.0
    %2290 = vmatpush.msra.mxu0 0.0
    %v2291 = vand.u32 %v579, 4294901760
    %2292 = vmatpush.msra.mxu0 %v2291
    %v2293 = vand.u32 %v571, 4294901760
    %2294 = vmatpush.msra.mxu0 %v2293
    %v2295 = vand.u32 %v563, 4294901760
    %2296 = vmatpush.msra.mxu0 %v2295
    %v2297 = vand.u32 %v555, 4294901760
    %2298 = vmatpush.msra.mxu0 %v2297
    %v2299 = vand.u32 %v547, 4294901760
    %2300 = vmatpush.msra.mxu0 %v2299
    %v2301 = vand.u32 %v539, 4294901760
    %2302 = vmatpush.msra.mxu0 %v2301
    %v2303 = vand.u32 %v531, 4294901760
    %2304 = vmatpush.msra.mxu0 %v2303
    %v2305 = vand.u32 %v523, 4294901760
    %2306 = vmatpush.msra.mxu0 %v2305
    %v2307 = vand.u32 %v515, 4294901760
    %2308 = vmatpush.msra.mxu0 %v2307
    %v2309 = vand.u32 %v507, 4294901760
    %2310 = vmatpush.msra.mxu0 %v2309
    %v2311 = vand.u32 %v499, 4294901760
    %2312 = vmatpush.msra.mxu0 %v2311
    %v2313 = vand.u32 %v491, 4294901760
    %2314 = vmatpush.msra.mxu0 %v2313
    %v2315 = vand.u32 %v584, 4294901760
    %2316 = vmatmul.f32.gmra.mxu0 %v2315
    %v2317 = vpop.f32.mrf.mxu0
    %v2318 = vadd.f32 %v2285, %v2317
    %2319 = vdwg.mxu0
    %2320 = vmatpush.msra.mxu0 0.0
    %2321 = vmatpush.msra.mxu0 0.0
    %2322 = vmatpush.msra.mxu0 0.0
    %2323 = vmatpush.msra.mxu0 0.0
    %v2324 = vand.u32 %v580, 4294901760
    %2325 = vmatpush.msra.mxu0 %v2324
    %v2326 = vand.u32 %v572, 4294901760
    %2327 = vmatpush.msra.mxu0 %v2326
    %v2328 = vand.u32 %v564, 4294901760
    %2329 = vmatpush.msra.mxu0 %v2328
    %v2330 = vand.u32 %v556, 4294901760
    %2331 = vmatpush.msra.mxu0 %v2330
    %v2332 = vand.u32 %v548, 4294901760
    %2333 = vmatpush.msra.mxu0 %v2332
    %v2334 = vand.u32 %v540, 4294901760
    %2335 = vmatpush.msra.mxu0 %v2334
    %v2336 = vand.u32 %v532, 4294901760
    %2337 = vmatpush.msra.mxu0 %v2336
    %v2338 = vand.u32 %v524, 4294901760
    %2339 = vmatpush.msra.mxu0 %v2338
    %v2340 = vand.u32 %v516, 4294901760
    %2341 = vmatpush.msra.mxu0 %v2340
    %v2342 = vand.u32 %v508, 4294901760
    %2343 = vmatpush.msra.mxu0 %v2342
    %v2344 = vand.u32 %v500, 4294901760
    %2345 = vmatpush.msra.mxu0 %v2344
    %v2346 = vand.u32 %v492, 4294901760
    %2347 = vmatpush.msra.mxu0 %v2346
    %v2348 = vand.u32 %v584, 4294901760
    %v2349 = vsub.f32 %v584, %v2348
    %v2350 = vand.u32 %v2349, 4294901760
    %v2351 = vsub.f32 %v2349, %v2350
    %v2352 = vand.u32 %v2351, 4294901760
    %2353 = vmatmul.f32.gmra.mxu0 %v2352
    %v2354 = vpop.f32.mrf.mxu0
    %v2355 = vadd.f32 0.0, %v2354
    %2356 = vdwg.mxu0
    %2357 = vmatpush.msra.mxu0 0.0
    %2358 = vmatpush.msra.mxu0 0.0
    %2359 = vmatpush.msra.mxu0 0.0
    %2360 = vmatpush.msra.mxu0 0.0
    %v2361 = vand.u32 %v580, 4294901760
    %v2362 = vsub.f32 %v580, %v2361
    %v2363 = vand.u32 %v2362, 4294901760
    %v2364 = vsub.f32 %v2362, %v2363
    %v2365 = vand.u32 %v2364, 4294901760
    %2366 = vmatpush.msra.mxu0 %v2365
    %v2367 = vand.u32 %v572, 4294901760
    %v2368 = vsub.f32 %v572, %v2367
    %v2369 = vand.u32 %v2368, 4294901760
    %v2370 = vsub.f32 %v2368, %v2369
    %v2371 = vand.u32 %v2370, 4294901760
    %2372 = vmatpush.msra.mxu0 %v2371
    %v2373 = vand.u32 %v564, 4294901760
    %v2374 = vsub.f32 %v564, %v2373
    %v2375 = vand.u32 %v2374, 4294901760
    %v2376 = vsub.f32 %v2374, %v2375
    %v2377 = vand.u32 %v2376, 4294901760
    %2378 = vmatpush.msra.mxu0 %v2377
    %v2379 = vand.u32 %v556, 4294901760
    %v2380 = vsub.f32 %v556, %v2379
    %v2381 = vand.u32 %v2380, 4294901760
    %v2382 = vsub.f32 %v2380, %v2381
    %v2383 = vand.u32 %v2382, 4294901760
    %2384 = vmatpush.msra.mxu0 %v2383
    %v2385 = vand.u32 %v548, 4294901760
    %v2386 = vsub.f32 %v548, %v2385
    %v2387 = vand.u32 %v2386, 4294901760
    %v2388 = vsub.f32 %v2386, %v2387
    %v2389 = vand.u32 %v2388, 4294901760
    %2390 = vmatpush.msra.mxu0 %v2389
    %v2391 = vand.u32 %v540, 4294901760
    %v2392 = vsub.f32 %v540, %v2391
    %v2393 = vand.u32 %v2392, 4294901760
    %v2394 = vsub.f32 %v2392, %v2393
    %v2395 = vand.u32 %v2394, 4294901760
    %2396 = vmatpush.msra.mxu0 %v2395
    %v2397 = vand.u32 %v532, 4294901760
    %v2398 = vsub.f32 %v532, %v2397
    %v2399 = vand.u32 %v2398, 4294901760
    %v2400 = vsub.f32 %v2398, %v2399
    %v2401 = vand.u32 %v2400, 4294901760
    %2402 = vmatpush.msra.mxu0 %v2401
    %v2403 = vand.u32 %v524, 4294901760
    %v2404 = vsub.f32 %v524, %v2403
    %v2405 = vand.u32 %v2404, 4294901760
    %v2406 = vsub.f32 %v2404, %v2405
    %v2407 = vand.u32 %v2406, 4294901760
    %2408 = vmatpush.msra.mxu0 %v2407
    %v2409 = vand.u32 %v516, 4294901760
    %v2410 = vsub.f32 %v516, %v2409
    %v2411 = vand.u32 %v2410, 4294901760
    %v2412 = vsub.f32 %v2410, %v2411
    %v2413 = vand.u32 %v2412, 4294901760
    %2414 = vmatpush.msra.mxu0 %v2413
    %v2415 = vand.u32 %v508, 4294901760
    %v2416 = vsub.f32 %v508, %v2415
    %v2417 = vand.u32 %v2416, 4294901760
    %v2418 = vsub.f32 %v2416, %v2417
    %v2419 = vand.u32 %v2418, 4294901760
    %2420 = vmatpush.msra.mxu0 %v2419
    %v2421 = vand.u32 %v500, 4294901760
    %v2422 = vsub.f32 %v500, %v2421
    %v2423 = vand.u32 %v2422, 4294901760
    %v2424 = vsub.f32 %v2422, %v2423
    %v2425 = vand.u32 %v2424, 4294901760
    %2426 = vmatpush.msra.mxu0 %v2425
    %v2427 = vand.u32 %v492, 4294901760
    %v2428 = vsub.f32 %v492, %v2427
    %v2429 = vand.u32 %v2428, 4294901760
    %v2430 = vsub.f32 %v2428, %v2429
    %v2431 = vand.u32 %v2430, 4294901760
    %2432 = vmatpush.msra.mxu0 %v2431
    %v2433 = vand.u32 %v584, 4294901760
    %2434 = vmatmul.f32.gmra.mxu0 %v2433
    %v2435 = vpop.f32.mrf.mxu0
    %v2436 = vadd.f32 %v2355, %v2435
    %2437 = vdwg.mxu0
    %2438 = vmatpush.msra.mxu0 0.0
    %2439 = vmatpush.msra.mxu0 0.0
    %2440 = vmatpush.msra.mxu0 0.0
    %2441 = vmatpush.msra.mxu0 0.0
    %v2442 = vand.u32 %v580, 4294901760
    %v2443 = vsub.f32 %v580, %v2442
    %2444 = vmatpush.msra.mxu0 %v2443
    %v2445 = vand.u32 %v572, 4294901760
    %v2446 = vsub.f32 %v572, %v2445
    %2447 = vmatpush.msra.mxu0 %v2446
    %v2448 = vand.u32 %v564, 4294901760
    %v2449 = vsub.f32 %v564, %v2448
    %2450 = vmatpush.msra.mxu0 %v2449
    %v2451 = vand.u32 %v556, 4294901760
    %v2452 = vsub.f32 %v556, %v2451
    %2453 = vmatpush.msra.mxu0 %v2452
    %v2454 = vand.u32 %v548, 4294901760
    %v2455 = vsub.f32 %v548, %v2454
    %2456 = vmatpush.msra.mxu0 %v2455
    %v2457 = vand.u32 %v540, 4294901760
    %v2458 = vsub.f32 %v540, %v2457
    %2459 = vmatpush.msra.mxu0 %v2458
    %v2460 = vand.u32 %v532, 4294901760
    %v2461 = vsub.f32 %v532, %v2460
    %2462 = vmatpush.msra.mxu0 %v2461
    %v2463 = vand.u32 %v524, 4294901760
    %v2464 = vsub.f32 %v524, %v2463
    %2465 = vmatpush.msra.mxu0 %v2464
    %v2466 = vand.u32 %v516, 4294901760
    %v2467 = vsub.f32 %v516, %v2466
    %2468 = vmatpush.msra.mxu0 %v2467
    %v2469 = vand.u32 %v508, 4294901760
    %v2470 = vsub.f32 %v508, %v2469
    %2471 = vmatpush.msra.mxu0 %v2470
    %v2472 = vand.u32 %v500, 4294901760
    %v2473 = vsub.f32 %v500, %v2472
    %2474 = vmatpush.msra.mxu0 %v2473
    %v2475 = vand.u32 %v492, 4294901760
    %v2476 = vsub.f32 %v492, %v2475
    %2477 = vmatpush.msra.mxu0 %v2476
    %v2478 = vand.u32 %v584, 4294901760
    %v2479 = vsub.f32 %v584, %v2478
    %2480 = vmatmul.f32.gmra.mxu0 %v2479
    %v2481 = vpop.f32.mrf.mxu0
    %v2482 = vadd.f32 %v2436, %v2481
    %2483 = vdwg.mxu0
    %2484 = vmatpush.msra.mxu0 0.0
    %2485 = vmatpush.msra.mxu0 0.0
    %2486 = vmatpush.msra.mxu0 0.0
    %2487 = vmatpush.msra.mxu0 0.0
    %v2488 = vand.u32 %v580, 4294901760
    %2489 = vmatpush.msra.mxu0 %v2488
    %v2490 = vand.u32 %v572, 4294901760
    %2491 = vmatpush.msra.mxu0 %v2490
    %v2492 = vand.u32 %v564, 4294901760
    %2493 = vmatpush.msra.mxu0 %v2492
    %v2494 = vand.u32 %v556, 4294901760
    %2495 = vmatpush.msra.mxu0 %v2494
    %v2496 = vand.u32 %v548, 4294901760
    %2497 = vmatpush.msra.mxu0 %v2496
    %v2498 = vand.u32 %v540, 4294901760
    %2499 = vmatpush.msra.mxu0 %v2498
    %v2500 = vand.u32 %v532, 4294901760
    %2501 = vmatpush.msra.mxu0 %v2500
    %v2502 = vand.u32 %v524, 4294901760
    %2503 = vmatpush.msra.mxu0 %v2502
    %v2504 = vand.u32 %v516, 4294901760
    %2505 = vmatpush.msra.mxu0 %v2504
    %v2506 = vand.u32 %v508, 4294901760
    %2507 = vmatpush.msra.mxu0 %v2506
    %v2508 = vand.u32 %v500, 4294901760
    %2509 = vmatpush.msra.mxu0 %v2508
    %v2510 = vand.u32 %v492, 4294901760
    %2511 = vmatpush.msra.mxu0 %v2510
    %v2512 = vand.u32 %v584, 4294901760
    %v2513 = vsub.f32 %v584, %v2512
    %v2514 = vand.u32 %v2513, 4294901760
    %2515 = vmatmul.f32.gmra.mxu0 %v2514
    %v2516 = vpop.f32.mrf.mxu0
    %v2517 = vadd.f32 %v2482, %v2516
    %2518 = vdwg.mxu0
    %2519 = vmatpush.msra.mxu0 0.0
    %2520 = vmatpush.msra.mxu0 0.0
    %2521 = vmatpush.msra.mxu0 0.0
    %2522 = vmatpush.msra.mxu0 0.0
    %v2523 = vand.u32 %v580, 4294901760
    %v2524 = vsub.f32 %v580, %v2523
    %v2525 = vand.u32 %v2524, 4294901760
    %2526 = vmatpush.msra.mxu0 %v2525
    %v2527 = vand.u32 %v572, 4294901760
    %v2528 = vsub.f32 %v572, %v2527
    %v2529 = vand.u32 %v2528, 4294901760
    %2530 = vmatpush.msra.mxu0 %v2529
    %v2531 = vand.u32 %v564, 4294901760
    %v2532 = vsub.f32 %v564, %v2531
    %v2533 = vand.u32 %v2532, 4294901760
    %2534 = vmatpush.msra.mxu0 %v2533
    %v2535 = vand.u32 %v556, 4294901760
    %v2536 = vsub.f32 %v556, %v2535
    %v2537 = vand.u32 %v2536, 4294901760
    %2538 = vmatpush.msra.mxu0 %v2537
    %v2539 = vand.u32 %v548, 4294901760
    %v2540 = vsub.f32 %v548, %v2539
    %v2541 = vand.u32 %v2540, 4294901760
    %2542 = vmatpush.msra.mxu0 %v2541
    %v2543 = vand.u32 %v540, 4294901760
    %v2544 = vsub.f32 %v540, %v2543
    %v2545 = vand.u32 %v2544, 4294901760
    %2546 = vmatpush.msra.mxu0 %v2545
    %v2547 = vand.u32 %v532, 4294901760
    %v2548 = vsub.f32 %v532, %v2547
    %v2549 = vand.u32 %v2548, 4294901760
    %2550 = vmatpush.msra.mxu0 %v2549
    %v2551 = vand.u32 %v524, 4294901760
    %v2552 = vsub.f32 %v524, %v2551
    %v2553 = vand.u32 %v2552, 4294901760
    %2554 = vmatpush.msra.mxu0 %v2553
    %v2555 = vand.u32 %v516, 4294901760
    %v2556 = vsub.f32 %v516, %v2555
    %v2557 = vand.u32 %v2556, 4294901760
    %2558 = vmatpush.msra.mxu0 %v2557
    %v2559 = vand.u32 %v508, 4294901760
    %v2560 = vsub.f32 %v508, %v2559
    %v2561 = vand.u32 %v2560, 4294901760
    %2562 = vmatpush.msra.mxu0 %v2561
    %v2563 = vand.u32 %v500, 4294901760
    %v2564 = vsub.f32 %v500, %v2563
    %v2565 = vand.u32 %v2564, 4294901760
    %2566 = vmatpush.msra.mxu0 %v2565
    %v2567 = vand.u32 %v492, 4294901760
    %v2568 = vsub.f32 %v492, %v2567
    %v2569 = vand.u32 %v2568, 4294901760
    %2570 = vmatpush.msra.mxu0 %v2569
    %v2571 = vand.u32 %v584, 4294901760
    %2572 = vmatmul.f32.gmra.mxu0 %v2571
    %v2573 = vpop.f32.mrf.mxu0
    %v2574 = vadd.f32 %v2517, %v2573
    %2575 = vdwg.mxu0
    %2576 = vmatpush.msra.mxu0 0.0
    %2577 = vmatpush.msra.mxu0 0.0
    %2578 = vmatpush.msra.mxu0 0.0
    %2579 = vmatpush.msra.mxu0 0.0
    %v2580 = vand.u32 %v580, 4294901760
    %2581 = vmatpush.msra.mxu0 %v2580
    %v2582 = vand.u32 %v572, 4294901760
    %2583 = vmatpush.msra.mxu0 %v2582
    %v2584 = vand.u32 %v564, 4294901760
    %2585 = vmatpush.msra.mxu0 %v2584
    %v2586 = vand.u32 %v556, 4294901760
    %2587 = vmatpush.msra.mxu0 %v2586
    %v2588 = vand.u32 %v548, 4294901760
    %2589 = vmatpush.msra.mxu0 %v2588
    %v2590 = vand.u32 %v540, 4294901760
    %2591 = vmatpush.msra.mxu0 %v2590
    %v2592 = vand.u32 %v532, 4294901760
    %2593 = vmatpush.msra.mxu0 %v2592
    %v2594 = vand.u32 %v524, 4294901760
    %2595 = vmatpush.msra.mxu0 %v2594
    %v2596 = vand.u32 %v516, 4294901760
    %2597 = vmatpush.msra.mxu0 %v2596
    %v2598 = vand.u32 %v508, 4294901760
    %2599 = vmatpush.msra.mxu0 %v2598
    %v2600 = vand.u32 %v500, 4294901760
    %2601 = vmatpush.msra.mxu0 %v2600
    %v2602 = vand.u32 %v492, 4294901760
    %2603 = vmatpush.msra.mxu0 %v2602
    %v2604 = vand.u32 %v584, 4294901760
    %2605 = vmatmul.f32.gmra.mxu0 %v2604
    %v2606 = vpop.f32.mrf.mxu0
    %v2607 = vadd.f32 %v2574, %v2606
    %2608 = vdwg.mxu0
    %2609 = vmatpush.msra.mxu0 0.0
    %2610 = vmatpush.msra.mxu0 0.0
    %2611 = vmatpush.msra.mxu0 0.0
    %2612 = vmatpush.msra.mxu0 0.0
    %v2613 = vand.u32 %v581, 4294901760
    %2614 = vmatpush.msra.mxu0 %v2613
    %v2615 = vand.u32 %v573, 4294901760
    %2616 = vmatpush.msra.mxu0 %v2615
    %v2617 = vand.u32 %v565, 4294901760
    %2618 = vmatpush.msra.mxu0 %v2617
    %v2619 = vand.u32 %v557, 4294901760
    %2620 = vmatpush.msra.mxu0 %v2619
    %v2621 = vand.u32 %v549, 4294901760
    %2622 = vmatpush.msra.mxu0 %v2621
    %v2623 = vand.u32 %v541, 4294901760
    %2624 = vmatpush.msra.mxu0 %v2623
    %v2625 = vand.u32 %v533, 4294901760
    %2626 = vmatpush.msra.mxu0 %v2625
    %v2627 = vand.u32 %v525, 4294901760
    %2628 = vmatpush.msra.mxu0 %v2627
    %v2629 = vand.u32 %v517, 4294901760
    %2630 = vmatpush.msra.mxu0 %v2629
    %v2631 = vand.u32 %v509, 4294901760
    %2632 = vmatpush.msra.mxu0 %v2631
    %v2633 = vand.u32 %v501, 4294901760
    %2634 = vmatpush.msra.mxu0 %v2633
    %v2635 = vand.u32 %v493, 4294901760
    %2636 = vmatpush.msra.mxu0 %v2635
    %v2637 = vand.u32 %v584, 4294901760
    %v2638 = vsub.f32 %v584, %v2637
    %v2639 = vand.u32 %v2638, 4294901760
    %v2640 = vsub.f32 %v2638, %v2639
    %v2641 = vand.u32 %v2640, 4294901760
    %2642 = vmatmul.f32.gmra.mxu0 %v2641
    %v2643 = vpop.f32.mrf.mxu0
    %v2644 = vadd.f32 0.0, %v2643
    %2645 = vdwg.mxu0
    %2646 = vmatpush.msra.mxu0 0.0
    %2647 = vmatpush.msra.mxu0 0.0
    %2648 = vmatpush.msra.mxu0 0.0
    %2649 = vmatpush.msra.mxu0 0.0
    %v2650 = vand.u32 %v581, 4294901760
    %v2651 = vsub.f32 %v581, %v2650
    %v2652 = vand.u32 %v2651, 4294901760
    %v2653 = vsub.f32 %v2651, %v2652
    %v2654 = vand.u32 %v2653, 4294901760
    %2655 = vmatpush.msra.mxu0 %v2654
    %v2656 = vand.u32 %v573, 4294901760
    %v2657 = vsub.f32 %v573, %v2656
    %v2658 = vand.u32 %v2657, 4294901760
    %v2659 = vsub.f32 %v2657, %v2658
    %v2660 = vand.u32 %v2659, 4294901760
    %2661 = vmatpush.msra.mxu0 %v2660
    %v2662 = vand.u32 %v565, 4294901760
    %v2663 = vsub.f32 %v565, %v2662
    %v2664 = vand.u32 %v2663, 4294901760
    %v2665 = vsub.f32 %v2663, %v2664
    %v2666 = vand.u32 %v2665, 4294901760
    %2667 = vmatpush.msra.mxu0 %v2666
    %v2668 = vand.u32 %v557, 4294901760
    %v2669 = vsub.f32 %v557, %v2668
    %v2670 = vand.u32 %v2669, 4294901760
    %v2671 = vsub.f32 %v2669, %v2670
    %v2672 = vand.u32 %v2671, 4294901760
    %2673 = vmatpush.msra.mxu0 %v2672
    %v2674 = vand.u32 %v549, 4294901760
    %v2675 = vsub.f32 %v549, %v2674
    %v2676 = vand.u32 %v2675, 4294901760
    %v2677 = vsub.f32 %v2675, %v2676
    %v2678 = vand.u32 %v2677, 4294901760
    %2679 = vmatpush.msra.mxu0 %v2678
    %v2680 = vand.u32 %v541, 4294901760
    %v2681 = vsub.f32 %v541, %v2680
    %v2682 = vand.u32 %v2681, 4294901760
    %v2683 = vsub.f32 %v2681, %v2682
    %v2684 = vand.u32 %v2683, 4294901760
    %2685 = vmatpush.msra.mxu0 %v2684
    %v2686 = vand.u32 %v533, 4294901760
    %v2687 = vsub.f32 %v533, %v2686
    %v2688 = vand.u32 %v2687, 4294901760
    %v2689 = vsub.f32 %v2687, %v2688
    %v2690 = vand.u32 %v2689, 4294901760
    %2691 = vmatpush.msra.mxu0 %v2690
    %v2692 = vand.u32 %v525, 4294901760
    %v2693 = vsub.f32 %v525, %v2692
    %v2694 = vand.u32 %v2693, 4294901760
    %v2695 = vsub.f32 %v2693, %v2694
    %v2696 = vand.u32 %v2695, 4294901760
    %2697 = vmatpush.msra.mxu0 %v2696
    %v2698 = vand.u32 %v517, 4294901760
    %v2699 = vsub.f32 %v517, %v2698
    %v2700 = vand.u32 %v2699, 4294901760
    %v2701 = vsub.f32 %v2699, %v2700
    %v2702 = vand.u32 %v2701, 4294901760
    %2703 = vmatpush.msra.mxu0 %v2702
    %v2704 = vand.u32 %v509, 4294901760
    %v2705 = vsub.f32 %v509, %v2704
    %v2706 = vand.u32 %v2705, 4294901760
    %v2707 = vsub.f32 %v2705, %v2706
    %v2708 = vand.u32 %v2707, 4294901760
    %2709 = vmatpush.msra.mxu0 %v2708
    %v2710 = vand.u32 %v501, 4294901760
    %v2711 = vsub.f32 %v501, %v2710
    %v2712 = vand.u32 %v2711, 4294901760
    %v2713 = vsub.f32 %v2711, %v2712
    %v2714 = vand.u32 %v2713, 4294901760
    %2715 = vmatpush.msra.mxu0 %v2714
    %v2716 = vand.u32 %v493, 4294901760
    %v2717 = vsub.f32 %v493, %v2716
    %v2718 = vand.u32 %v2717, 4294901760
    %v2719 = vsub.f32 %v2717, %v2718
    %v2720 = vand.u32 %v2719, 4294901760
    %2721 = vmatpush.msra.mxu0 %v2720
    %v2722 = vand.u32 %v584, 4294901760
    %2723 = vmatmul.f32.gmra.mxu0 %v2722
    %v2724 = vpop.f32.mrf.mxu0
    %v2725 = vadd.f32 %v2644, %v2724
    %2726 = vdwg.mxu0
    %2727 = vmatpush.msra.mxu0 0.0
    %2728 = vmatpush.msra.mxu0 0.0
    %2729 = vmatpush.msra.mxu0 0.0
    %2730 = vmatpush.msra.mxu0 0.0
    %v2731 = vand.u32 %v581, 4294901760
    %v2732 = vsub.f32 %v581, %v2731
    %2733 = vmatpush.msra.mxu0 %v2732
    %v2734 = vand.u32 %v573, 4294901760
    %v2735 = vsub.f32 %v573, %v2734
    %2736 = vmatpush.msra.mxu0 %v2735
    %v2737 = vand.u32 %v565, 4294901760
    %v2738 = vsub.f32 %v565, %v2737
    %2739 = vmatpush.msra.mxu0 %v2738
    %v2740 = vand.u32 %v557, 4294901760
    %v2741 = vsub.f32 %v557, %v2740
    %2742 = vmatpush.msra.mxu0 %v2741
    %v2743 = vand.u32 %v549, 4294901760
    %v2744 = vsub.f32 %v549, %v2743
    %2745 = vmatpush.msra.mxu0 %v2744
    %v2746 = vand.u32 %v541, 4294901760
    %v2747 = vsub.f32 %v541, %v2746
    %2748 = vmatpush.msra.mxu0 %v2747
    %v2749 = vand.u32 %v533, 4294901760
    %v2750 = vsub.f32 %v533, %v2749
    %2751 = vmatpush.msra.mxu0 %v2750
    %v2752 = vand.u32 %v525, 4294901760
    %v2753 = vsub.f32 %v525, %v2752
    %2754 = vmatpush.msra.mxu0 %v2753
    %v2755 = vand.u32 %v517, 4294901760
    %v2756 = vsub.f32 %v517, %v2755
    %2757 = vmatpush.msra.mxu0 %v2756
    %v2758 = vand.u32 %v509, 4294901760
    %v2759 = vsub.f32 %v509, %v2758
    %2760 = vmatpush.msra.mxu0 %v2759
    %v2761 = vand.u32 %v501, 4294901760
    %v2762 = vsub.f32 %v501, %v2761
    %2763 = vmatpush.msra.mxu0 %v2762
    %v2764 = vand.u32 %v493, 4294901760
    %v2765 = vsub.f32 %v493, %v2764
    %2766 = vmatpush.msra.mxu0 %v2765
    %v2767 = vand.u32 %v584, 4294901760
    %v2768 = vsub.f32 %v584, %v2767
    %2769 = vmatmul.f32.gmra.mxu0 %v2768
    %v2770 = vpop.f32.mrf.mxu0
    %v2771 = vadd.f32 %v2725, %v2770
    %2772 = vdwg.mxu0
    %2773 = vmatpush.msra.mxu0 0.0
    %2774 = vmatpush.msra.mxu0 0.0
    %2775 = vmatpush.msra.mxu0 0.0
    %2776 = vmatpush.msra.mxu0 0.0
    %v2777 = vand.u32 %v581, 4294901760
    %2778 = vmatpush.msra.mxu0 %v2777
    %v2779 = vand.u32 %v573, 4294901760
    %2780 = vmatpush.msra.mxu0 %v2779
    %v2781 = vand.u32 %v565, 4294901760
    %2782 = vmatpush.msra.mxu0 %v2781
    %v2783 = vand.u32 %v557, 4294901760
    %2784 = vmatpush.msra.mxu0 %v2783
    %v2785 = vand.u32 %v549, 4294901760
    %2786 = vmatpush.msra.mxu0 %v2785
    %v2787 = vand.u32 %v541, 4294901760
    %2788 = vmatpush.msra.mxu0 %v2787
    %v2789 = vand.u32 %v533, 4294901760
    %2790 = vmatpush.msra.mxu0 %v2789
    %v2791 = vand.u32 %v525, 4294901760
    %2792 = vmatpush.msra.mxu0 %v2791
    %v2793 = vand.u32 %v517, 4294901760
    %2794 = vmatpush.msra.mxu0 %v2793
    %v2795 = vand.u32 %v509, 4294901760
    %2796 = vmatpush.msra.mxu0 %v2795
    %v2797 = vand.u32 %v501, 4294901760
    %2798 = vmatpush.msra.mxu0 %v2797
    %v2799 = vand.u32 %v493, 4294901760
    %2800 = vmatpush.msra.mxu0 %v2799
    %v2801 = vand.u32 %v584, 4294901760
    %v2802 = vsub.f32 %v584, %v2801
    %v2803 = vand.u32 %v2802, 4294901760
    %2804 = vmatmul.f32.gmra.mxu0 %v2803
    %v2805 = vpop.f32.mrf.mxu0
    %v2806 = vadd.f32 %v2771, %v2805
    %2807 = vdwg.mxu0
    %2808 = vmatpush.msra.mxu0 0.0
    %2809 = vmatpush.msra.mxu0 0.0
    %2810 = vmatpush.msra.mxu0 0.0
    %2811 = vmatpush.msra.mxu0 0.0
    %v2812 = vand.u32 %v581, 4294901760
    %v2813 = vsub.f32 %v581, %v2812
    %v2814 = vand.u32 %v2813, 4294901760
    %2815 = vmatpush.msra.mxu0 %v2814
    %v2816 = vand.u32 %v573, 4294901760
    %v2817 = vsub.f32 %v573, %v2816
    %v2818 = vand.u32 %v2817, 4294901760
    %2819 = vmatpush.msra.mxu0 %v2818
    %v2820 = vand.u32 %v565, 4294901760
    %v2821 = vsub.f32 %v565, %v2820
    %v2822 = vand.u32 %v2821, 4294901760
    %2823 = vmatpush.msra.mxu0 %v2822
    %v2824 = vand.u32 %v557, 4294901760
    %v2825 = vsub.f32 %v557, %v2824
    %v2826 = vand.u32 %v2825, 4294901760
    %2827 = vmatpush.msra.mxu0 %v2826
    %v2828 = vand.u32 %v549, 4294901760
    %v2829 = vsub.f32 %v549, %v2828
    %v2830 = vand.u32 %v2829, 4294901760
    %2831 = vmatpush.msra.mxu0 %v2830
    %v2832 = vand.u32 %v541, 4294901760
    %v2833 = vsub.f32 %v541, %v2832
    %v2834 = vand.u32 %v2833, 4294901760
    %2835 = vmatpush.msra.mxu0 %v2834
    %v2836 = vand.u32 %v533, 4294901760
    %v2837 = vsub.f32 %v533, %v2836
    %v2838 = vand.u32 %v2837, 4294901760
    %2839 = vmatpush.msra.mxu0 %v2838
    %v2840 = vand.u32 %v525, 4294901760
    %v2841 = vsub.f32 %v525, %v2840
    %v2842 = vand.u32 %v2841, 4294901760
    %2843 = vmatpush.msra.mxu0 %v2842
    %v2844 = vand.u32 %v517, 4294901760
    %v2845 = vsub.f32 %v517, %v2844
    %v2846 = vand.u32 %v2845, 4294901760
    %2847 = vmatpush.msra.mxu0 %v2846
    %v2848 = vand.u32 %v509, 4294901760
    %v2849 = vsub.f32 %v509, %v2848
    %v2850 = vand.u32 %v2849, 4294901760
    %2851 = vmatpush.msra.mxu0 %v2850
    %v2852 = vand.u32 %v501, 4294901760
    %v2853 = vsub.f32 %v501, %v2852
    %v2854 = vand.u32 %v2853, 4294901760
    %2855 = vmatpush.msra.mxu0 %v2854
    %v2856 = vand.u32 %v493, 4294901760
    %v2857 = vsub.f32 %v493, %v2856
    %v2858 = vand.u32 %v2857, 4294901760
    %2859 = vmatpush.msra.mxu0 %v2858
    %v2860 = vand.u32 %v584, 4294901760
    %2861 = vmatmul.f32.gmra.mxu0 %v2860
    %v2862 = vpop.f32.mrf.mxu0
    %v2863 = vadd.f32 %v2806, %v2862
    %2864 = vdwg.mxu0
    %2865 = vmatpush.msra.mxu0 0.0
    %2866 = vmatpush.msra.mxu0 0.0
    %2867 = vmatpush.msra.mxu0 0.0
    %2868 = vmatpush.msra.mxu0 0.0
    %v2869 = vand.u32 %v581, 4294901760
    %2870 = vmatpush.msra.mxu0 %v2869
    %v2871 = vand.u32 %v573, 4294901760
    %2872 = vmatpush.msra.mxu0 %v2871
    %v2873 = vand.u32 %v565, 4294901760
    %2874 = vmatpush.msra.mxu0 %v2873
    %v2875 = vand.u32 %v557, 4294901760
    %2876 = vmatpush.msra.mxu0 %v2875
    %v2877 = vand.u32 %v549, 4294901760
    %2878 = vmatpush.msra.mxu0 %v2877
    %v2879 = vand.u32 %v541, 4294901760
    %2880 = vmatpush.msra.mxu0 %v2879
    %v2881 = vand.u32 %v533, 4294901760
    %2882 = vmatpush.msra.mxu0 %v2881
    %v2883 = vand.u32 %v525, 4294901760
    %2884 = vmatpush.msra.mxu0 %v2883
    %v2885 = vand.u32 %v517, 4294901760
    %2886 = vmatpush.msra.mxu0 %v2885
    %v2887 = vand.u32 %v509, 4294901760
    %2888 = vmatpush.msra.mxu0 %v2887
    %v2889 = vand.u32 %v501, 4294901760
    %2890 = vmatpush.msra.mxu0 %v2889
    %v2891 = vand.u32 %v493, 4294901760
    %2892 = vmatpush.msra.mxu0 %v2891
    %v2893 = vand.u32 %v584, 4294901760
    %2894 = vmatmul.f32.gmra.mxu0 %v2893
    %v2895 = vpop.f32.mrf.mxu0
    %v2896 = vadd.f32 %v2863, %v2895
    %2897 = vdwg.mxu0
    %v2898 = vmax.f32 %v873, 0.0
    %v2899 = vmax.f32 %v1162, 0.0
    %v2900 = vmax.f32 %v1451, 0.0
    %v2901 = vmax.f32 %v1740, 0.0
    %v2902 = vmax.f32 %v2029, 0.0
    %v2903 = vmax.f32 %v2318, 0.0
    %v2904 = vmax.f32 %v2607, 0.0
    %v2905 = vmax.f32 %v2896, 0.0
    %v2906 = vld [vmem:[#allocation7] sm:$0xff]
    %v2907 = vld [vmem:[#allocation7 + $0x8] sm:$0xff]
    %v2908 = vld [vmem:[#allocation7 + $0x10] sm:$0xff]
    %v2909 = vld [vmem:[#allocation7 + $0x18] sm:$0xff]
    %v2910 = vld [vmem:[#allocation7 + $0x20] sm:$0xff]
    %v2911 = vld [vmem:[#allocation7 + $0x28] sm:$0xff]
    %v2912 = vld [vmem:[#allocation7 + $0x30] sm:$0xff]
    %v2913 = vld [vmem:[#allocation7 + $0x38] sm:$0xff]
    %v2914 = vld [vmem:[#allocation7 + $0x40] sm:$0xff]
    %v2915 = vld [vmem:[#allocation7 + $0x48] sm:$0xff]
    %v2916 = vld [vmem:[#allocation7 + $0x50] sm:$0xff]
    %v2917 = vld [vmem:[#allocation7 + $0x58] sm:$0xff]
    %v2918 = vld [vmem:[#allocation7 + $0x60] sm:$0xff]
    %v2919 = vld [vmem:[#allocation7 + $0x68] sm:$0xff]
    %v2920 = vld [vmem:[#allocation7 + $0x70] sm:$0xff]
    %v2921 = vld [vmem:[#allocation7 + $0x78] sm:$0xff]
    %v2922 = vld [vmem:[#allocation7 + $0x80] sm:$0xff]
    %v2923 = vld [vmem:[#allocation7 + $0x88] sm:$0xff]
    %v2924 = vld [vmem:[#allocation7 + $0x90] sm:$0xff]
    %v2925 = vld [vmem:[#allocation7 + $0x98] sm:$0xff]
    %v2926 = vld [vmem:[#allocation7 + $0xa0] sm:$0xff]
    %v2927 = vld [vmem:[#allocation7 + $0xa8] sm:$0xff]
    %v2928 = vld [vmem:[#allocation7 + $0xb0] sm:$0xff]
    %v2929 = vld [vmem:[#allocation7 + $0xb8] sm:$0xff]
    %v2930 = vld [vmem:[#allocation7 + $0xc0] sm:$0xff]
    %v2931 = vld [vmem:[#allocation7 + $0xc8] sm:$0xff]
    %v2932 = vld [vmem:[#allocation7 + $0xd0] sm:$0xff]
    %v2933 = vld [vmem:[#allocation7 + $0xd8] sm:$0xff]
    %v2934 = vld [vmem:[#allocation7 + $0xe0] sm:$0xff]
    %v2935 = vld [vmem:[#allocation7 + $0xe8] sm:$0xff]
    %v2936 = vld [vmem:[#allocation7 + $0xf0] sm:$0xff]
    %v2937 = vld [vmem:[#allocation7 + $0xf8] sm:$0xff]
    %v2938 = vld [vmem:[#allocation7 + $0x100] sm:$0xff]
    %v2939 = vld [vmem:[#allocation7 + $0x108] sm:$0xff]
    %v2940 = vld [vmem:[#allocation7 + $0x110] sm:$0xff]
    %v2941 = vld [vmem:[#allocation7 + $0x118] sm:$0xff]
    %v2942 = vld [vmem:[#allocation7 + $0x120] sm:$0xff]
    %v2943 = vld [vmem:[#allocation7 + $0x128] sm:$0xff]
    %v2944 = vld [vmem:[#allocation7 + $0x130] sm:$0xff]
    %v2945 = vld [vmem:[#allocation7 + $0x138] sm:$0xff]
    %v2946 = vld [vmem:[#allocation7 + $0x140] sm:$0xff]
    %v2947 = vld [vmem:[#allocation7 + $0x148] sm:$0xff]
    %v2948 = vld [vmem:[#allocation7 + $0x150] sm:$0xff]
    %v2949 = vld [vmem:[#allocation7 + $0x158] sm:$0xff]
    %v2950 = vld [vmem:[#allocation7 + $0x160] sm:$0xff]
    %v2951 = vld [vmem:[#allocation7 + $0x168] sm:$0xff]
    %v2952 = vld [vmem:[#allocation7 + $0x170] sm:$0xff]
    %v2953 = vld [vmem:[#allocation7 + $0x178] sm:$0xff]
    %v2954 = vld [vmem:[#allocation7 + $0x180] sm:$0xff]
    %v2955 = vld [vmem:[#allocation7 + $0x188] sm:$0xff]
    %v2956 = vld [vmem:[#allocation7 + $0x190] sm:$0xff]
    %v2957 = vld [vmem:[#allocation7 + $0x198] sm:$0xff]
    %v2958 = vld [vmem:[#allocation7 + $0x1a0] sm:$0xff]
    %v2959 = vld [vmem:[#allocation7 + $0x1a8] sm:$0xff]
    %v2960 = vld [vmem:[#allocation7 + $0x1b0] sm:$0xff]
    %v2961 = vld [vmem:[#allocation7 + $0x1b8] sm:$0xff]
    %v2962 = vld [vmem:[#allocation7 + $0x1c0] sm:$0xff]
    %v2963 = vld [vmem:[#allocation7 + $0x1c8] sm:$0xff]
    %v2964 = vld [vmem:[#allocation7 + $0x1d0] sm:$0xff]
    %v2965 = vld [vmem:[#allocation7 + $0x1d8] sm:$0xff]
    %v2966 = vld [vmem:[#allocation7 + $0x1e0] sm:$0xff]
    %v2967 = vld [vmem:[#allocation7 + $0x1e8] sm:$0xff]
    %v2968 = vld [vmem:[#allocation7 + $0x1f0] sm:$0xff]
    %v2969 = vld [vmem:[#allocation7 + $0x1f8] sm:$0xff]
    %v2970 = vld [vmem:[#allocation7 + $0x200] sm:$0xff]
    %v2971 = vld [vmem:[#allocation7 + $0x208] sm:$0xff]
    %v2972 = vld [vmem:[#allocation7 + $0x210] sm:$0xff]
    %v2973 = vld [vmem:[#allocation7 + $0x218] sm:$0xff]
    %v2974 = vld [vmem:[#allocation7 + $0x220] sm:$0xff]
    %v2975 = vld [vmem:[#allocation7 + $0x228] sm:$0xff]
    %v2976 = vld [vmem:[#allocation7 + $0x230] sm:$0xff]
    %v2977 = vld [vmem:[#allocation7 + $0x238] sm:$0xff]
    %v2978 = vld [vmem:[#allocation7 + $0x240] sm:$0xff]
    %v2979 = vld [vmem:[#allocation7 + $0x248] sm:$0xff]
    %v2980 = vld [vmem:[#allocation7 + $0x250] sm:$0xff]
    %v2981 = vld [vmem:[#allocation7 + $0x258] sm:$0xff]
    %v2982 = vld [vmem:[#allocation7 + $0x260] sm:$0xff]
    %v2983 = vld [vmem:[#allocation7 + $0x268] sm:$0xff]
    %v2984 = vld [vmem:[#allocation7 + $0x270] sm:$0xff]
    %v2985 = vld [vmem:[#allocation7 + $0x278] sm:$0xff]
    %v2986 = vld [vmem:[#allocation7 + $0x280] sm:$0xff]
    %v2987 = vld [vmem:[#allocation7 + $0x288] sm:$0xff]
    %v2988 = vld [vmem:[#allocation7 + $0x290] sm:$0xff]
    %v2989 = vld [vmem:[#allocation7 + $0x298] sm:$0xff]
    %v2990 = vld [vmem:[#allocation7 + $0x2a0] sm:$0xff]
    %v2991 = vld [vmem:[#allocation7 + $0x2a8] sm:$0xff]
    %v2992 = vld [vmem:[#allocation7 + $0x2b0] sm:$0xff]
    %v2993 = vld [vmem:[#allocation7 + $0x2b8] sm:$0xff]
    %v2994 = vld [vmem:[#allocation7 + $0x2c0] sm:$0xff]
    %v2995 = vld [vmem:[#allocation7 + $0x2c8] sm:$0xff]
    %v2996 = vld [vmem:[#allocation7 + $0x2d0] sm:$0xff]
    %v2997 = vld [vmem:[#allocation7 + $0x2d8] sm:$0xff]
    %v2998 = vld [vmem:[#allocation7 + $0x2e0] sm:$0xff]
    %v2999 = vld [vmem:[#allocation7 + $0x2e8] sm:$0xff]
    %v3000 = vld [vmem:[#allocation7 + $0x2f0] sm:$0xff]
    %v3001 = vld [vmem:[#allocation7 + $0x2f8] sm:$0xff]
    %v3002 = vld [vmem:[#allocation7 + $0x300] sm:$0xff]
    %v3003 = vld [vmem:[#allocation7 + $0x308] sm:$0xff]
    %v3004 = vld [vmem:[#allocation7 + $0x310] sm:$0xff]
    %v3005 = vld [vmem:[#allocation7 + $0x318] sm:$0xff]
    %v3006 = vld [vmem:[#allocation7 + $0x320] sm:$0xff]
    %v3007 = vld [vmem:[#allocation7 + $0x328] sm:$0xff]
    %v3008 = vld [vmem:[#allocation7 + $0x330] sm:$0xff]
    %v3009 = vld [vmem:[#allocation7 + $0x338] sm:$0xff]
    %v3010 = vld [vmem:[#allocation7 + $0x340] sm:$0xff]
    %v3011 = vld [vmem:[#allocation7 + $0x348] sm:$0xff]
    %v3012 = vld [vmem:[#allocation7 + $0x350] sm:$0xff]
    %v3013 = vld [vmem:[#allocation7 + $0x358] sm:$0xff]
    %v3014 = vld [vmem:[#allocation7 + $0x360] sm:$0xff]
    %v3015 = vld [vmem:[#allocation7 + $0x368] sm:$0xff]
    %v3016 = vld [vmem:[#allocation7 + $0x370] sm:$0xff]
    %v3017 = vld [vmem:[#allocation7 + $0x378] sm:$0xff]
    %v3018 = vld [vmem:[#allocation7 + $0x380] sm:$0xff]
    %v3019 = vld [vmem:[#allocation7 + $0x388] sm:$0xff]
    %v3020 = vld [vmem:[#allocation7 + $0x390] sm:$0xff]
    %v3021 = vld [vmem:[#allocation7 + $0x398] sm:$0xff]
    %v3022 = vld [vmem:[#allocation7 + $0x3a0] sm:$0xff]
    %v3023 = vld [vmem:[#allocation7 + $0x3a8] sm:$0xff]
    %v3024 = vld [vmem:[#allocation7 + $0x3b0] sm:$0xff]
    %v3025 = vld [vmem:[#allocation7 + $0x3b8] sm:$0xff]
    %v3026 = vld [vmem:[#allocation7 + $0x3c0] sm:$0xff]
    %v3027 = vld [vmem:[#allocation7 + $0x3c8] sm:$0xff]
    %v3028 = vld [vmem:[#allocation7 + $0x3d0] sm:$0xff]
    %v3029 = vld [vmem:[#allocation7 + $0x3d8] sm:$0xff]
    %v3030 = vld [vmem:[#allocation7 + $0x3e0] sm:$0xff]
    %v3031 = vld [vmem:[#allocation7 + $0x3e8] sm:$0xff]
    %v3032 = vld [vmem:[#allocation7 + $0x3f0] sm:$0xff]
    %v3033 = vld [vmem:[#allocation7 + $0x3f8] sm:$0xff]
    %v3034 = vld [vmem:[#allocation7 + $0x400] sm:$0xff]
    %v3035 = vld [vmem:[#allocation7 + $0x408] sm:$0xff]
    %v3036 = vld [vmem:[#allocation7 + $0x410] sm:$0xff]
    %v3037 = vld [vmem:[#allocation7 + $0x418] sm:$0xff]
    %v3038 = vld [vmem:[#allocation7 + $0x420] sm:$0xff]
    %v3039 = vld [vmem:[#allocation7 + $0x428] sm:$0xff]
    %v3040 = vld [vmem:[#allocation7 + $0x430] sm:$0xff]
    %v3041 = vld [vmem:[#allocation7 + $0x438] sm:$0xff]
    %v3042 = vld [vmem:[#allocation7 + $0x440] sm:$0xff]
    %v3043 = vld [vmem:[#allocation7 + $0x448] sm:$0xff]
    %v3044 = vld [vmem:[#allocation7 + $0x450] sm:$0xff]
    %v3045 = vld [vmem:[#allocation7 + $0x458] sm:$0xff]
    %v3046 = vld [vmem:[#allocation7 + $0x460] sm:$0xff]
    %v3047 = vld [vmem:[#allocation7 + $0x468] sm:$0xff]
    %v3048 = vld [vmem:[#allocation7 + $0x470] sm:$0xff]
    %v3049 = vld [vmem:[#allocation7 + $0x478] sm:$0xff]
    %v3050 = vld [vmem:[#allocation7 + $0x480] sm:$0xff]
    %v3051 = vld [vmem:[#allocation7 + $0x488] sm:$0xff]
    %v3052 = vld [vmem:[#allocation7 + $0x490] sm:$0xff]
    %v3053 = vld [vmem:[#allocation7 + $0x498] sm:$0xff]
    %v3054 = vld [vmem:[#allocation7 + $0x4a0] sm:$0xff]
    %v3055 = vld [vmem:[#allocation7 + $0x4a8] sm:$0xff]
    %v3056 = vld [vmem:[#allocation7 + $0x4b0] sm:$0xff]
    %v3057 = vld [vmem:[#allocation7 + $0x4b8] sm:$0xff]
    %v3058 = vld [vmem:[#allocation7 + $0x4c0] sm:$0xff]
    %v3059 = vld [vmem:[#allocation7 + $0x4c8] sm:$0xff]
    %v3060 = vld [vmem:[#allocation7 + $0x4d0] sm:$0xff]
    %v3061 = vld [vmem:[#allocation7 + $0x4d8] sm:$0xff]
    %v3062 = vld [vmem:[#allocation7 + $0x4e0] sm:$0xff]
    %v3063 = vld [vmem:[#allocation7 + $0x4e8] sm:$0xff]
    %v3064 = vld [vmem:[#allocation7 + $0x4f0] sm:$0xff]
    %v3065 = vld [vmem:[#allocation7 + $0x4f8] sm:$0xff]
    %v3066 = vld [vmem:[#allocation7 + $0x500] sm:$0xff]
    %v3067 = vld [vmem:[#allocation7 + $0x508] sm:$0xff]
    %v3068 = vld [vmem:[#allocation7 + $0x510] sm:$0xff]
    %v3069 = vld [vmem:[#allocation7 + $0x518] sm:$0xff]
    %v3070 = vld [vmem:[#allocation7 + $0x520] sm:$0xff]
    %v3071 = vld [vmem:[#allocation7 + $0x528] sm:$0xff]
    %v3072 = vld [vmem:[#allocation7 + $0x530] sm:$0xff]
    %v3073 = vld [vmem:[#allocation7 + $0x538] sm:$0xff]
    %v3074 = vld [vmem:[#allocation7 + $0x540] sm:$0xff]
    %v3075 = vld [vmem:[#allocation7 + $0x548] sm:$0xff]
    %v3076 = vld [vmem:[#allocation7 + $0x550] sm:$0xff]
    %v3077 = vld [vmem:[#allocation7 + $0x558] sm:$0xff]
    %v3078 = vld [vmem:[#allocation7 + $0x560] sm:$0xff]
    %v3079 = vld [vmem:[#allocation7 + $0x568] sm:$0xff]
    %v3080 = vld [vmem:[#allocation7 + $0x570] sm:$0xff]
    %v3081 = vld [vmem:[#allocation7 + $0x578] sm:$0xff]
    %v3082 = vld [vmem:[#allocation7 + $0x580] sm:$0xff]
    %v3083 = vld [vmem:[#allocation7 + $0x588] sm:$0xff]
    %v3084 = vld [vmem:[#allocation7 + $0x590] sm:$0xff]
    %v3085 = vld [vmem:[#allocation7 + $0x598] sm:$0xff]
    %v3086 = vld [vmem:[#allocation7 + $0x5a0] sm:$0xff]
    %v3087 = vld [vmem:[#allocation7 + $0x5a8] sm:$0xff]
    %v3088 = vld [vmem:[#allocation7 + $0x5b0] sm:$0xff]
    %v3089 = vld [vmem:[#allocation7 + $0x5b8] sm:$0xff]
    %v3090 = vld [vmem:[#allocation7 + $0x5c0] sm:$0xff]
    %v3091 = vld [vmem:[#allocation7 + $0x5c8] sm:$0xff]
    %v3092 = vld [vmem:[#allocation7 + $0x5d0] sm:$0xff]
    %v3093 = vld [vmem:[#allocation7 + $0x5d8] sm:$0xff]
    %v3094 = vld [vmem:[#allocation7 + $0x5e0] sm:$0xff]
    %v3095 = vld [vmem:[#allocation7 + $0x5e8] sm:$0xff]
    %v3096 = vld [vmem:[#allocation7 + $0x5f0] sm:$0xff]
    %v3097 = vld [vmem:[#allocation7 + $0x5f8] sm:$0xff]
    %v3098 = vld [vmem:[#allocation7 + $0x600] sm:$0xff]
    %v3099 = vld [vmem:[#allocation7 + $0x608] sm:$0xff]
    %v3100 = vld [vmem:[#allocation7 + $0x610] sm:$0xff]
    %v3101 = vld [vmem:[#allocation7 + $0x618] sm:$0xff]
    %v3102 = vld [vmem:[#allocation7 + $0x620] sm:$0xff]
    %v3103 = vld [vmem:[#allocation7 + $0x628] sm:$0xff]
    %v3104 = vld [vmem:[#allocation7 + $0x630] sm:$0xff]
    %v3105 = vld [vmem:[#allocation7 + $0x638] sm:$0xff]
    %v3106 = vld [vmem:[#allocation7 + $0x640] sm:$0xff]
    %v3107 = vld [vmem:[#allocation7 + $0x648] sm:$0xff]
    %v3108 = vld [vmem:[#allocation7 + $0x650] sm:$0xff]
    %v3109 = vld [vmem:[#allocation7 + $0x658] sm:$0xff]
    %v3110 = vld [vmem:[#allocation7 + $0x660] sm:$0xff]
    %v3111 = vld [vmem:[#allocation7 + $0x668] sm:$0xff]
    %v3112 = vld [vmem:[#allocation7 + $0x670] sm:$0xff]
    %v3113 = vld [vmem:[#allocation7 + $0x678] sm:$0xff]
    %v3114 = vld [vmem:[#allocation7 + $0x680] sm:$0xff]
    %v3115 = vld [vmem:[#allocation7 + $0x688] sm:$0xff]
    %v3116 = vld [vmem:[#allocation7 + $0x690] sm:$0xff]
    %v3117 = vld [vmem:[#allocation7 + $0x698] sm:$0xff]
    %v3118 = vld [vmem:[#allocation7 + $0x6a0] sm:$0xff]
    %v3119 = vld [vmem:[#allocation7 + $0x6a8] sm:$0xff]
    %v3120 = vld [vmem:[#allocation7 + $0x6b0] sm:$0xff]
    %v3121 = vld [vmem:[#allocation7 + $0x6b8] sm:$0xff]
    %v3122 = vld [vmem:[#allocation7 + $0x6c0] sm:$0xff]
    %v3123 = vld [vmem:[#allocation7 + $0x6c8] sm:$0xff]
    %v3124 = vld [vmem:[#allocation7 + $0x6d0] sm:$0xff]
    %v3125 = vld [vmem:[#allocation7 + $0x6d8] sm:$0xff]
    %v3126 = vld [vmem:[#allocation7 + $0x6e0] sm:$0xff]
    %v3127 = vld [vmem:[#allocation7 + $0x6e8] sm:$0xff]
    %v3128 = vld [vmem:[#allocation7 + $0x6f0] sm:$0xff]
    %v3129 = vld [vmem:[#allocation7 + $0x6f8] sm:$0xff]
    %v3130 = vld [vmem:[#allocation7 + $0x700] sm:$0xff]
    %v3131 = vld [vmem:[#allocation7 + $0x708] sm:$0xff]
    %v3132 = vld [vmem:[#allocation7 + $0x710] sm:$0xff]
    %v3133 = vld [vmem:[#allocation7 + $0x718] sm:$0xff]
    %v3134 = vld [vmem:[#allocation7 + $0x720] sm:$0xff]
    %v3135 = vld [vmem:[#allocation7 + $0x728] sm:$0xff]
    %v3136 = vld [vmem:[#allocation7 + $0x730] sm:$0xff]
    %v3137 = vld [vmem:[#allocation7 + $0x738] sm:$0xff]
    %v3138 = vld [vmem:[#allocation7 + $0x740] sm:$0xff]
    %v3139 = vld [vmem:[#allocation7 + $0x748] sm:$0xff]
    %v3140 = vld [vmem:[#allocation7 + $0x750] sm:$0xff]
    %v3141 = vld [vmem:[#allocation7 + $0x758] sm:$0xff]
    %v3142 = vld [vmem:[#allocation7 + $0x760] sm:$0xff]
    %v3143 = vld [vmem:[#allocation7 + $0x768] sm:$0xff]
    %v3144 = vld [vmem:[#allocation7 + $0x770] sm:$0xff]
    %v3145 = vld [vmem:[#allocation7 + $0x778] sm:$0xff]
    %v3146 = vld [vmem:[#allocation7 + $0x780] sm:$0xff]
    %v3147 = vld [vmem:[#allocation7 + $0x788] sm:$0xff]
    %v3148 = vld [vmem:[#allocation7 + $0x790] sm:$0xff]
    %v3149 = vld [vmem:[#allocation7 + $0x798] sm:$0xff]
    %v3150 = vld [vmem:[#allocation7 + $0x7a0] sm:$0xff]
    %v3151 = vld [vmem:[#allocation7 + $0x7a8] sm:$0xff]
    %v3152 = vld [vmem:[#allocation7 + $0x7b0] sm:$0xff]
    %v3153 = vld [vmem:[#allocation7 + $0x7b8] sm:$0xff]
    %v3154 = vld [vmem:[#allocation7 + $0x7c0] sm:$0xff]
    %v3155 = vld [vmem:[#allocation7 + $0x7c8] sm:$0xff]
    %v3156 = vld [vmem:[#allocation7 + $0x7d0] sm:$0xff]
    %v3157 = vld [vmem:[#allocation7 + $0x7d8] sm:$0xff]
    %v3158 = vld [vmem:[#allocation7 + $0x7e0] sm:$0xff]
    %v3159 = vld [vmem:[#allocation7 + $0x7e8] sm:$0xff]
    %v3160 = vld [vmem:[#allocation7 + $0x7f0] sm:$0xff]
    %v3161 = vld [vmem:[#allocation7 + $0x7f8] sm:$0xff]
    %v3162 = vand.u32 %v2936, 4294901760
    %3163 = vmatpush.msra.mxu0 %v3162
    %v3164 = vand.u32 %v2934, 4294901760
    %3165 = vmatpush.msra.mxu0 %v3164
    %v3166 = vand.u32 %v2932, 4294901760
    %3167 = vmatpush.msra.mxu0 %v3166
    %v3168 = vand.u32 %v2930, 4294901760
    %3169 = vmatpush.msra.mxu0 %v3168
    %v3170 = vand.u32 %v2928, 4294901760
    %3171 = vmatpush.msra.mxu0 %v3170
    %v3172 = vand.u32 %v2926, 4294901760
    %3173 = vmatpush.msra.mxu0 %v3172
    %v3174 = vand.u32 %v2924, 4294901760
    %3175 = vmatpush.msra.mxu0 %v3174
    %v3176 = vand.u32 %v2922, 4294901760
    %3177 = vmatpush.msra.mxu0 %v3176
    %v3178 = vand.u32 %v2920, 4294901760
    %3179 = vmatpush.msra.mxu0 %v3178
    %v3180 = vand.u32 %v2918, 4294901760
    %3181 = vmatpush.msra.mxu0 %v3180
    %v3182 = vand.u32 %v2916, 4294901760
    %3183 = vmatpush.msra.mxu0 %v3182
    %v3184 = vand.u32 %v2914, 4294901760
    %3185 = vmatpush.msra.mxu0 %v3184
    %v3186 = vand.u32 %v2912, 4294901760
    %3187 = vmatpush.msra.mxu0 %v3186
    %v3188 = vand.u32 %v2910, 4294901760
    %3189 = vmatpush.msra.mxu0 %v3188
    %v3190 = vand.u32 %v2908, 4294901760
    %3191 = vmatpush.msra.mxu0 %v3190
    %v3192 = vand.u32 %v2906, 4294901760
    %3193 = vmatpush.msra.mxu0 %v3192
    %v3194 = vand.u32 %v2898, 4294901760
    %v3195 = vsub.f32 %v2898, %v3194
    %v3196 = vand.u32 %v3195, 4294901760
    %v3197 = vsub.f32 %v3195, %v3196
    %v3198 = vand.u32 %v3197, 4294901760
    %3199 = vmatmul.f32.gmra.mxu0 %v3198
    %v3200 = vpop.f32.mrf.mxu0
    %v3201 = vadd.f32 0.0, %v3200
    %3202 = vdwg.mxu0
    %v3203 = vand.u32 %v2936, 4294901760
    %v3204 = vsub.f32 %v2936, %v3203
    %v3205 = vand.u32 %v3204, 4294901760
    %v3206 = vsub.f32 %v3204, %v3205
    %v3207 = vand.u32 %v3206, 4294901760
    %3208 = vmatpush.msra.mxu0 %v3207
    %v3209 = vand.u32 %v2934, 4294901760
    %v3210 = vsub.f32 %v2934, %v3209
    %v3211 = vand.u32 %v3210, 4294901760
    %v3212 = vsub.f32 %v3210, %v3211
    %v3213 = vand.u32 %v3212, 4294901760
    %3214 = vmatpush.msra.mxu0 %v3213
    %v3215 = vand.u32 %v2932, 4294901760
    %v3216 = vsub.f32 %v2932, %v3215
    %v3217 = vand.u32 %v3216, 4294901760
    %v3218 = vsub.f32 %v3216, %v3217
    %v3219 = vand.u32 %v3218, 4294901760
    %3220 = vmatpush.msra.mxu0 %v3219
    %v3221 = vand.u32 %v2930, 4294901760
    %v3222 = vsub.f32 %v2930, %v3221
    %v3223 = vand.u32 %v3222, 4294901760
    %v3224 = vsub.f32 %v3222, %v3223
    %v3225 = vand.u32 %v3224, 4294901760
    %3226 = vmatpush.msra.mxu0 %v3225
    %v3227 = vand.u32 %v2928, 4294901760
    %v3228 = vsub.f32 %v2928, %v3227
    %v3229 = vand.u32 %v3228, 4294901760
    %v3230 = vsub.f32 %v3228, %v3229
    %v3231 = vand.u32 %v3230, 4294901760
    %3232 = vmatpush.msra.mxu0 %v3231
    %v3233 = vand.u32 %v2926, 4294901760
    %v3234 = vsub.f32 %v2926, %v3233
    %v3235 = vand.u32 %v3234, 4294901760
    %v3236 = vsub.f32 %v3234, %v3235
    %v3237 = vand.u32 %v3236, 4294901760
    %3238 = vmatpush.msra.mxu0 %v3237
    %v3239 = vand.u32 %v2924, 4294901760
    %v3240 = vsub.f32 %v2924, %v3239
    %v3241 = vand.u32 %v3240, 4294901760
    %v3242 = vsub.f32 %v3240, %v3241
    %v3243 = vand.u32 %v3242, 4294901760
    %3244 = vmatpush.msra.mxu0 %v3243
    %v3245 = vand.u32 %v2922, 4294901760
    %v3246 = vsub.f32 %v2922, %v3245
    %v3247 = vand.u32 %v3246, 4294901760
    %v3248 = vsub.f32 %v3246, %v3247
    %v3249 = vand.u32 %v3248, 4294901760
    %3250 = vmatpush.msra.mxu0 %v3249
    %v3251 = vand.u32 %v2920, 4294901760
    %v3252 = vsub.f32 %v2920, %v3251
    %v3253 = vand.u32 %v3252, 4294901760
    %v3254 = vsub.f32 %v3252, %v3253
    %v3255 = vand.u32 %v3254, 4294901760
    %3256 = vmatpush.msra.mxu0 %v3255
    %v3257 = vand.u32 %v2918, 4294901760
    %v3258 = vsub.f32 %v2918, %v3257
    %v3259 = vand.u32 %v3258, 4294901760
    %v3260 = vsub.f32 %v3258, %v3259
    %v3261 = vand.u32 %v3260, 4294901760
    %3262 = vmatpush.msra.mxu0 %v3261
    %v3263 = vand.u32 %v2916, 4294901760
    %v3264 = vsub.f32 %v2916, %v3263
    %v3265 = vand.u32 %v3264, 4294901760
    %v3266 = vsub.f32 %v3264, %v3265
    %v3267 = vand.u32 %v3266, 4294901760
    %3268 = vmatpush.msra.mxu0 %v3267
    %v3269 = vand.u32 %v2914, 4294901760
    %v3270 = vsub.f32 %v2914, %v3269
    %v3271 = vand.u32 %v3270, 4294901760
    %v3272 = vsub.f32 %v3270, %v3271
    %v3273 = vand.u32 %v3272, 4294901760
    %3274 = vmatpush.msra.mxu0 %v3273
    %v3275 = vand.u32 %v2912, 4294901760
    %v3276 = vsub.f32 %v2912, %v3275
    %v3277 = vand.u32 %v3276, 4294901760
    %v3278 = vsub.f32 %v3276, %v3277
    %v3279 = vand.u32 %v3278, 4294901760
    %3280 = vmatpush.msra.mxu0 %v3279
    %v3281 = vand.u32 %v2910, 4294901760
    %v3282 = vsub.f32 %v2910, %v3281
    %v3283 = vand.u32 %v3282, 4294901760
    %v3284 = vsub.f32 %v3282, %v3283
    %v3285 = vand.u32 %v3284, 4294901760
    %3286 = vmatpush.msra.mxu0 %v3285
    %v3287 = vand.u32 %v2908, 4294901760
    %v3288 = vsub.f32 %v2908, %v3287
    %v3289 = vand.u32 %v3288, 4294901760
    %v3290 = vsub.f32 %v3288, %v3289
    %v3291 = vand.u32 %v3290, 4294901760
    %3292 = vmatpush.msra.mxu0 %v3291
    %v3293 = vand.u32 %v2906, 4294901760
    %v3294 = vsub.f32 %v2906, %v3293
    %v3295 = vand.u32 %v3294, 4294901760
    %v3296 = vsub.f32 %v3294, %v3295
    %v3297 = vand.u32 %v3296, 4294901760
    %3298 = vmatpush.msra.mxu0 %v3297
    %v3299 = vand.u32 %v2898, 4294901760
    %3300 = vmatmul.f32.gmra.mxu0 %v3299
    %v3301 = vpop.f32.mrf.mxu0
    %v3302 = vadd.f32 %v3201, %v3301
    %3303 = vdwg.mxu0
    %v3304 = vand.u32 %v2936, 4294901760
    %v3305 = vsub.f32 %v2936, %v3304
    %3306 = vmatpush.msra.mxu0 %v3305
    %v3307 = vand.u32 %v2934, 4294901760
    %v3308 = vsub.f32 %v2934, %v3307
    %3309 = vmatpush.msra.mxu0 %v3308
    %v3310 = vand.u32 %v2932, 4294901760
    %v3311 = vsub.f32 %v2932, %v3310
    %3312 = vmatpush.msra.mxu0 %v3311
    %v3313 = vand.u32 %v2930, 4294901760
    %v3314 = vsub.f32 %v2930, %v3313
    %3315 = vmatpush.msra.mxu0 %v3314
    %v3316 = vand.u32 %v2928, 4294901760
    %v3317 = vsub.f32 %v2928, %v3316
    %3318 = vmatpush.msra.mxu0 %v3317
    %v3319 = vand.u32 %v2926, 4294901760
    %v3320 = vsub.f32 %v2926, %v3319
    %3321 = vmatpush.msra.mxu0 %v3320
    %v3322 = vand.u32 %v2924, 4294901760
    %v3323 = vsub.f32 %v2924, %v3322
    %3324 = vmatpush.msra.mxu0 %v3323
    %v3325 = vand.u32 %v2922, 4294901760
    %v3326 = vsub.f32 %v2922, %v3325
    %3327 = vmatpush.msra.mxu0 %v3326
    %v3328 = vand.u32 %v2920, 4294901760
    %v3329 = vsub.f32 %v2920, %v3328
    %3330 = vmatpush.msra.mxu0 %v3329
    %v3331 = vand.u32 %v2918, 4294901760
    %v3332 = vsub.f32 %v2918, %v3331
    %3333 = vmatpush.msra.mxu0 %v3332
    %v3334 = vand.u32 %v2916, 4294901760
    %v3335 = vsub.f32 %v2916, %v3334
    %3336 = vmatpush.msra.mxu0 %v3335
    %v3337 = vand.u32 %v2914, 4294901760
    %v3338 = vsub.f32 %v2914, %v3337
    %3339 = vmatpush.msra.mxu0 %v3338
    %v3340 = vand.u32 %v2912, 4294901760
    %v3341 = vsub.f32 %v2912, %v3340
    %3342 = vmatpush.msra.mxu0 %v3341
    %v3343 = vand.u32 %v2910, 4294901760
    %v3344 = vsub.f32 %v2910, %v3343
    %3345 = vmatpush.msra.mxu0 %v3344
    %v3346 = vand.u32 %v2908, 4294901760
    %v3347 = vsub.f32 %v2908, %v3346
    %3348 = vmatpush.msra.mxu0 %v3347
    %v3349 = vand.u32 %v2906, 4294901760
    %v3350 = vsub.f32 %v2906, %v3349
    %3351 = vmatpush.msra.mxu0 %v3350
    %v3352 = vand.u32 %v2898, 4294901760
    %v3353 = vsub.f32 %v2898, %v3352
    %3354 = vmatmul.f32.gmra.mxu0 %v3353
    %v3355 = vpop.f32.mrf.mxu0
    %v3356 = vadd.f32 %v3302, %v3355
    %3357 = vdwg.mxu0
    %v3358 = vand.u32 %v2936, 4294901760
    %3359 = vmatpush.msra.mxu0 %v3358
    %v3360 = vand.u32 %v2934, 4294901760
    %3361 = vmatpush.msra.mxu0 %v3360
    %v3362 = vand.u32 %v2932, 4294901760
    %3363 = vmatpush.msra.mxu0 %v3362
    %v3364 = vand.u32 %v2930, 4294901760
    %3365 = vmatpush.msra.mxu0 %v3364
    %v3366 = vand.u32 %v2928, 4294901760
    %3367 = vmatpush.msra.mxu0 %v3366
    %v3368 = vand.u32 %v2926, 4294901760
    %3369 = vmatpush.msra.mxu0 %v3368
    %v3370 = vand.u32 %v2924, 4294901760
    %3371 = vmatpush.msra.mxu0 %v3370
    %v3372 = vand.u32 %v2922, 4294901760
    %3373 = vmatpush.msra.mxu0 %v3372
    %v3374 = vand.u32 %v2920, 4294901760
    %3375 = vmatpush.msra.mxu0 %v3374
    %v3376 = vand.u32 %v2918, 4294901760
    %3377 = vmatpush.msra.mxu0 %v3376
    %v3378 = vand.u32 %v2916, 4294901760
    %3379 = vmatpush.msra.mxu0 %v3378
    %v3380 = vand.u32 %v2914, 4294901760
    %3381 = vmatpush.msra.mxu0 %v3380
    %v3382 = vand.u32 %v2912, 4294901760
    %3383 = vmatpush.msra.mxu0 %v3382
    %v3384 = vand.u32 %v2910, 4294901760
    %3385 = vmatpush.msra.mxu0 %v3384
    %v3386 = vand.u32 %v2908, 4294901760
    %3387 = vmatpush.msra.mxu0 %v3386
    %v3388 = vand.u32 %v2906, 4294901760
    %3389 = vmatpush.msra.mxu0 %v3388
    %v3390 = vand.u32 %v2898, 4294901760
    %v3391 = vsub.f32 %v2898, %v3390
    %v3392 = vand.u32 %v3391, 4294901760
    %3393 = vmatmul.f32.gmra.mxu0 %v3392
    %v3394 = vpop.f32.mrf.mxu0
    %v3395 = vadd.f32 %v3356, %v3394
    %3396 = vdwg.mxu0
    %v3397 = vand.u32 %v2936, 4294901760
    %v3398 = vsub.f32 %v2936, %v3397
    %v3399 = vand.u32 %v3398, 4294901760
    %3400 = vmatpush.msra.mxu0 %v3399
    %v3401 = vand.u32 %v2934, 4294901760
    %v3402 = vsub.f32 %v2934, %v3401
    %v3403 = vand.u32 %v3402, 4294901760
    %3404 = vmatpush.msra.mxu0 %v3403
    %v3405 = vand.u32 %v2932, 4294901760
    %v3406 = vsub.f32 %v2932, %v3405
    %v3407 = vand.u32 %v3406, 4294901760
    %3408 = vmatpush.msra.mxu0 %v3407
    %v3409 = vand.u32 %v2930, 4294901760
    %v3410 = vsub.f32 %v2930, %v3409
    %v3411 = vand.u32 %v3410, 4294901760
    %3412 = vmatpush.msra.mxu0 %v3411
    %v3413 = vand.u32 %v2928, 4294901760
    %v3414 = vsub.f32 %v2928, %v3413
    %v3415 = vand.u32 %v3414, 4294901760
    %3416 = vmatpush.msra.mxu0 %v3415
    %v3417 = vand.u32 %v2926, 4294901760
    %v3418 = vsub.f32 %v2926, %v3417
    %v3419 = vand.u32 %v3418, 4294901760
    %3420 = vmatpush.msra.mxu0 %v3419
    %v3421 = vand.u32 %v2924, 4294901760
    %v3422 = vsub.f32 %v2924, %v3421
    %v3423 = vand.u32 %v3422, 4294901760
    %3424 = vmatpush.msra.mxu0 %v3423
    %v3425 = vand.u32 %v2922, 4294901760
    %v3426 = vsub.f32 %v2922, %v3425
    %v3427 = vand.u32 %v3426, 4294901760
    %3428 = vmatpush.msra.mxu0 %v3427
    %v3429 = vand.u32 %v2920, 4294901760
    %v3430 = vsub.f32 %v2920, %v3429
    %v3431 = vand.u32 %v3430, 4294901760
    %3432 = vmatpush.msra.mxu0 %v3431
    %v3433 = vand.u32 %v2918, 4294901760
    %v3434 = vsub.f32 %v2918, %v3433
    %v3435 = vand.u32 %v3434, 4294901760
    %3436 = vmatpush.msra.mxu0 %v3435
    %v3437 = vand.u32 %v2916, 4294901760
    %v3438 = vsub.f32 %v2916, %v3437
    %v3439 = vand.u32 %v3438, 4294901760
    %3440 = vmatpush.msra.mxu0 %v3439
    %v3441 = vand.u32 %v2914, 4294901760
    %v3442 = vsub.f32 %v2914, %v3441
    %v3443 = vand.u32 %v3442, 4294901760
    %3444 = vmatpush.msra.mxu0 %v3443
    %v3445 = vand.u32 %v2912, 4294901760
    %v3446 = vsub.f32 %v2912, %v3445
    %v3447 = vand.u32 %v3446, 4294901760
    %3448 = vmatpush.msra.mxu0 %v3447
    %v3449 = vand.u32 %v2910, 4294901760
    %v3450 = vsub.f32 %v2910, %v3449
    %v3451 = vand.u32 %v3450, 4294901760
    %3452 = vmatpush.msra.mxu0 %v3451
    %v3453 = vand.u32 %v2908, 4294901760
    %v3454 = vsub.f32 %v2908, %v3453
    %v3455 = vand.u32 %v3454, 4294901760
    %3456 = vmatpush.msra.mxu0 %v3455
    %v3457 = vand.u32 %v2906, 4294901760
    %v3458 = vsub.f32 %v2906, %v3457
    %v3459 = vand.u32 %v3458, 4294901760
    %3460 = vmatpush.msra.mxu0 %v3459
    %v3461 = vand.u32 %v2898, 4294901760
    %3462 = vmatmul.f32.gmra.mxu0 %v3461
    %v3463 = vpop.f32.mrf.mxu0
    %v3464 = vadd.f32 %v3395, %v3463
    %3465 = vdwg.mxu0
    %v3466 = vand.u32 %v2936, 4294901760
    %3467 = vmatpush.msra.mxu0 %v3466
    %v3468 = vand.u32 %v2934, 4294901760
    %3469 = vmatpush.msra.mxu0 %v3468
    %v3470 = vand.u32 %v2932, 4294901760
    %3471 = vmatpush.msra.mxu0 %v3470
    %v3472 = vand.u32 %v2930, 4294901760
    %3473 = vmatpush.msra.mxu0 %v3472
    %v3474 = vand.u32 %v2928, 4294901760
    %3475 = vmatpush.msra.mxu0 %v3474
    %v3476 = vand.u32 %v2926, 4294901760
    %3477 = vmatpush.msra.mxu0 %v3476
    %v3478 = vand.u32 %v2924, 4294901760
    %3479 = vmatpush.msra.mxu0 %v3478
    %v3480 = vand.u32 %v2922, 4294901760
    %3481 = vmatpush.msra.mxu0 %v3480
    %v3482 = vand.u32 %v2920, 4294901760
    %3483 = vmatpush.msra.mxu0 %v3482
    %v3484 = vand.u32 %v2918, 4294901760
    %3485 = vmatpush.msra.mxu0 %v3484
    %v3486 = vand.u32 %v2916, 4294901760
    %3487 = vmatpush.msra.mxu0 %v3486
    %v3488 = vand.u32 %v2914, 4294901760
    %3489 = vmatpush.msra.mxu0 %v3488
    %v3490 = vand.u32 %v2912, 4294901760
    %3491 = vmatpush.msra.mxu0 %v3490
    %v3492 = vand.u32 %v2910, 4294901760
    %3493 = vmatpush.msra.mxu0 %v3492
    %v3494 = vand.u32 %v2908, 4294901760
    %3495 = vmatpush.msra.mxu0 %v3494
    %v3496 = vand.u32 %v2906, 4294901760
    %3497 = vmatpush.msra.mxu0 %v3496
    %v3498 = vand.u32 %v2898, 4294901760
    %3499 = vmatmul.f32.gmra.mxu0 %v3498
    %v3500 = vpop.f32.mrf.mxu0
    %v3501 = vadd.f32 %v3464, %v3500
    %3502 = vdwg.mxu0
    %v3503 = vand.u32 %v2968, 4294901760
    %3504 = vmatpush.msra.mxu0 %v3503
    %v3505 = vand.u32 %v2966, 4294901760
    %3506 = vmatpush.msra.mxu0 %v3505
    %v3507 = vand.u32 %v2964, 4294901760
    %3508 = vmatpush.msra.mxu0 %v3507
    %v3509 = vand.u32 %v2962, 4294901760
    %3510 = vmatpush.msra.mxu0 %v3509
    %v3511 = vand.u32 %v2960, 4294901760
    %3512 = vmatpush.msra.mxu0 %v3511
    %v3513 = vand.u32 %v2958, 4294901760
    %3514 = vmatpush.msra.mxu0 %v3513
    %v3515 = vand.u32 %v2956, 4294901760
    %3516 = vmatpush.msra.mxu0 %v3515
    %v3517 = vand.u32 %v2954, 4294901760
    %3518 = vmatpush.msra.mxu0 %v3517
    %v3519 = vand.u32 %v2952, 4294901760
    %3520 = vmatpush.msra.mxu0 %v3519
    %v3521 = vand.u32 %v2950, 4294901760
    %3522 = vmatpush.msra.mxu0 %v3521
    %v3523 = vand.u32 %v2948, 4294901760
    %3524 = vmatpush.msra.mxu0 %v3523
    %v3525 = vand.u32 %v2946, 4294901760
    %3526 = vmatpush.msra.mxu0 %v3525
    %v3527 = vand.u32 %v2944, 4294901760
    %3528 = vmatpush.msra.mxu0 %v3527
    %v3529 = vand.u32 %v2942, 4294901760
    %3530 = vmatpush.msra.mxu0 %v3529
    %v3531 = vand.u32 %v2940, 4294901760
    %3532 = vmatpush.msra.mxu0 %v3531
    %v3533 = vand.u32 %v2938, 4294901760
    %3534 = vmatpush.msra.mxu0 %v3533
    %v3535 = vand.u32 %v2899, 4294901760
    %v3536 = vsub.f32 %v2899, %v3535
    %v3537 = vand.u32 %v3536, 4294901760
    %v3538 = vsub.f32 %v3536, %v3537
    %v3539 = vand.u32 %v3538, 4294901760
    %3540 = vmatmul.f32.gmra.mxu0 %v3539
    %v3541 = vpop.f32.mrf.mxu0
    %v3542 = vadd.f32 %v3501, %v3541
    %3543 = vdwg.mxu0
    %v3544 = vand.u32 %v2968, 4294901760
    %v3545 = vsub.f32 %v2968, %v3544
    %v3546 = vand.u32 %v3545, 4294901760
    %v3547 = vsub.f32 %v3545, %v3546
    %v3548 = vand.u32 %v3547, 4294901760
    %3549 = vmatpush.msra.mxu0 %v3548
    %v3550 = vand.u32 %v2966, 4294901760
    %v3551 = vsub.f32 %v2966, %v3550
    %v3552 = vand.u32 %v3551, 4294901760
    %v3553 = vsub.f32 %v3551, %v3552
    %v3554 = vand.u32 %v3553, 4294901760
    %3555 = vmatpush.msra.mxu0 %v3554
    %v3556 = vand.u32 %v2964, 4294901760
    %v3557 = vsub.f32 %v2964, %v3556
    %v3558 = vand.u32 %v3557, 4294901760
    %v3559 = vsub.f32 %v3557, %v3558
    %v3560 = vand.u32 %v3559, 4294901760
    %3561 = vmatpush.msra.mxu0 %v3560
    %v3562 = vand.u32 %v2962, 4294901760
    %v3563 = vsub.f32 %v2962, %v3562
    %v3564 = vand.u32 %v3563, 4294901760
    %v3565 = vsub.f32 %v3563, %v3564
    %v3566 = vand.u32 %v3565, 4294901760
    %3567 = vmatpush.msra.mxu0 %v3566
    %v3568 = vand.u32 %v2960, 4294901760
    %v3569 = vsub.f32 %v2960, %v3568
    %v3570 = vand.u32 %v3569, 4294901760
    %v3571 = vsub.f32 %v3569, %v3570
    %v3572 = vand.u32 %v3571, 4294901760
    %3573 = vmatpush.msra.mxu0 %v3572
    %v3574 = vand.u32 %v2958, 4294901760
    %v3575 = vsub.f32 %v2958, %v3574
    %v3576 = vand.u32 %v3575, 4294901760
    %v3577 = vsub.f32 %v3575, %v3576
    %v3578 = vand.u32 %v3577, 4294901760
    %3579 = vmatpush.msra.mxu0 %v3578
    %v3580 = vand.u32 %v2956, 4294901760
    %v3581 = vsub.f32 %v2956, %v3580
    %v3582 = vand.u32 %v3581, 4294901760
    %v3583 = vsub.f32 %v3581, %v3582
    %v3584 = vand.u32 %v3583, 4294901760
    %3585 = vmatpush.msra.mxu0 %v3584
    %v3586 = vand.u32 %v2954, 4294901760
    %v3587 = vsub.f32 %v2954, %v3586
    %v3588 = vand.u32 %v3587, 4294901760
    %v3589 = vsub.f32 %v3587, %v3588
    %v3590 = vand.u32 %v3589, 4294901760
    %3591 = vmatpush.msra.mxu0 %v3590
    %v3592 = vand.u32 %v2952, 4294901760
    %v3593 = vsub.f32 %v2952, %v3592
    %v3594 = vand.u32 %v3593, 4294901760
    %v3595 = vsub.f32 %v3593, %v3594
    %v3596 = vand.u32 %v3595, 4294901760
    %3597 = vmatpush.msra.mxu0 %v3596
    %v3598 = vand.u32 %v2950, 4294901760
    %v3599 = vsub.f32 %v2950, %v3598
    %v3600 = vand.u32 %v3599, 4294901760
    %v3601 = vsub.f32 %v3599, %v3600
    %v3602 = vand.u32 %v3601, 4294901760
    %3603 = vmatpush.msra.mxu0 %v3602
    %v3604 = vand.u32 %v2948, 4294901760
    %v3605 = vsub.f32 %v2948, %v3604
    %v3606 = vand.u32 %v3605, 4294901760
    %v3607 = vsub.f32 %v3605, %v3606
    %v3608 = vand.u32 %v3607, 4294901760
    %3609 = vmatpush.msra.mxu0 %v3608
    %v3610 = vand.u32 %v2946, 4294901760
    %v3611 = vsub.f32 %v2946, %v3610
    %v3612 = vand.u32 %v3611, 4294901760
    %v3613 = vsub.f32 %v3611, %v3612
    %v3614 = vand.u32 %v3613, 4294901760
    %3615 = vmatpush.msra.mxu0 %v3614
    %v3616 = vand.u32 %v2944, 4294901760
    %v3617 = vsub.f32 %v2944, %v3616
    %v3618 = vand.u32 %v3617, 4294901760
    %v3619 = vsub.f32 %v3617, %v3618
    %v3620 = vand.u32 %v3619, 4294901760
    %3621 = vmatpush.msra.mxu0 %v3620
    %v3622 = vand.u32 %v2942, 4294901760
    %v3623 = vsub.f32 %v2942, %v3622
    %v3624 = vand.u32 %v3623, 4294901760
    %v3625 = vsub.f32 %v3623, %v3624
    %v3626 = vand.u32 %v3625, 4294901760
    %3627 = vmatpush.msra.mxu0 %v3626
    %v3628 = vand.u32 %v2940, 4294901760
    %v3629 = vsub.f32 %v2940, %v3628
    %v3630 = vand.u32 %v3629, 4294901760
    %v3631 = vsub.f32 %v3629, %v3630
    %v3632 = vand.u32 %v3631, 4294901760
    %3633 = vmatpush.msra.mxu0 %v3632
    %v3634 = vand.u32 %v2938, 4294901760
    %v3635 = vsub.f32 %v2938, %v3634
    %v3636 = vand.u32 %v3635, 4294901760
    %v3637 = vsub.f32 %v3635, %v3636
    %v3638 = vand.u32 %v3637, 4294901760
    %3639 = vmatpush.msra.mxu0 %v3638
    %v3640 = vand.u32 %v2899, 4294901760
    %3641 = vmatmul.f32.gmra.mxu0 %v3640
    %v3642 = vpop.f32.mrf.mxu0
    %v3643 = vadd.f32 %v3542, %v3642
    %3644 = vdwg.mxu0
    %v3645 = vand.u32 %v2968, 4294901760
    %v3646 = vsub.f32 %v2968, %v3645
    %3647 = vmatpush.msra.mxu0 %v3646
    %v3648 = vand.u32 %v2966, 4294901760
    %v3649 = vsub.f32 %v2966, %v3648
    %3650 = vmatpush.msra.mxu0 %v3649
    %v3651 = vand.u32 %v2964, 4294901760
    %v3652 = vsub.f32 %v2964, %v3651
    %3653 = vmatpush.msra.mxu0 %v3652
    %v3654 = vand.u32 %v2962, 4294901760
    %v3655 = vsub.f32 %v2962, %v3654
    %3656 = vmatpush.msra.mxu0 %v3655
    %v3657 = vand.u32 %v2960, 4294901760
    %v3658 = vsub.f32 %v2960, %v3657
    %3659 = vmatpush.msra.mxu0 %v3658
    %v3660 = vand.u32 %v2958, 4294901760
    %v3661 = vsub.f32 %v2958, %v3660
    %3662 = vmatpush.msra.mxu0 %v3661
    %v3663 = vand.u32 %v2956, 4294901760
    %v3664 = vsub.f32 %v2956, %v3663
    %3665 = vmatpush.msra.mxu0 %v3664
    %v3666 = vand.u32 %v2954, 4294901760
    %v3667 = vsub.f32 %v2954, %v3666
    %3668 = vmatpush.msra.mxu0 %v3667
    %v3669 = vand.u32 %v2952, 4294901760
    %v3670 = vsub.f32 %v2952, %v3669
    %3671 = vmatpush.msra.mxu0 %v3670
    %v3672 = vand.u32 %v2950, 4294901760
    %v3673 = vsub.f32 %v2950, %v3672
    %3674 = vmatpush.msra.mxu0 %v3673
    %v3675 = vand.u32 %v2948, 4294901760
    %v3676 = vsub.f32 %v2948, %v3675
    %3677 = vmatpush.msra.mxu0 %v3676
    %v3678 = vand.u32 %v2946, 4294901760
    %v3679 = vsub.f32 %v2946, %v3678
    %3680 = vmatpush.msra.mxu0 %v3679
    %v3681 = vand.u32 %v2944, 4294901760
    %v3682 = vsub.f32 %v2944, %v3681
    %3683 = vmatpush.msra.mxu0 %v3682
    %v3684 = vand.u32 %v2942, 4294901760
    %v3685 = vsub.f32 %v2942, %v3684
    %3686 = vmatpush.msra.mxu0 %v3685
    %v3687 = vand.u32 %v2940, 4294901760
    %v3688 = vsub.f32 %v2940, %v3687
    %3689 = vmatpush.msra.mxu0 %v3688
    %v3690 = vand.u32 %v2938, 4294901760
    %v3691 = vsub.f32 %v2938, %v3690
    %3692 = vmatpush.msra.mxu0 %v3691
    %v3693 = vand.u32 %v2899, 4294901760
    %v3694 = vsub.f32 %v2899, %v3693
    %3695 = vmatmul.f32.gmra.mxu0 %v3694
    %v3696 = vpop.f32.mrf.mxu0
    %v3697 = vadd.f32 %v3643, %v3696
    %3698 = vdwg.mxu0
    %v3699 = vand.u32 %v2968, 4294901760
    %3700 = vmatpush.msra.mxu0 %v3699
    %v3701 = vand.u32 %v2966, 4294901760
    %3702 = vmatpush.msra.mxu0 %v3701
    %v3703 = vand.u32 %v2964, 4294901760
    %3704 = vmatpush.msra.mxu0 %v3703
    %v3705 = vand.u32 %v2962, 4294901760
    %3706 = vmatpush.msra.mxu0 %v3705
    %v3707 = vand.u32 %v2960, 4294901760
    %3708 = vmatpush.msra.mxu0 %v3707
    %v3709 = vand.u32 %v2958, 4294901760
    %3710 = vmatpush.msra.mxu0 %v3709
    %v3711 = vand.u32 %v2956, 4294901760
    %3712 = vmatpush.msra.mxu0 %v3711
    %v3713 = vand.u32 %v2954, 4294901760
    %3714 = vmatpush.msra.mxu0 %v3713
    %v3715 = vand.u32 %v2952, 4294901760
    %3716 = vmatpush.msra.mxu0 %v3715
    %v3717 = vand.u32 %v2950, 4294901760
    %3718 = vmatpush.msra.mxu0 %v3717
    %v3719 = vand.u32 %v2948, 4294901760
    %3720 = vmatpush.msra.mxu0 %v3719
    %v3721 = vand.u32 %v2946, 4294901760
    %3722 = vmatpush.msra.mxu0 %v3721
    %v3723 = vand.u32 %v2944, 4294901760
    %3724 = vmatpush.msra.mxu0 %v3723
    %v3725 = vand.u32 %v2942, 4294901760
    %3726 = vmatpush.msra.mxu0 %v3725
    %v3727 = vand.u32 %v2940, 4294901760
    %3728 = vmatpush.msra.mxu0 %v3727
    %v3729 = vand.u32 %v2938, 4294901760
    %3730 = vmatpush.msra.mxu0 %v3729
    %v3731 = vand.u32 %v2899, 4294901760
    %v3732 = vsub.f32 %v2899, %v3731
    %v3733 = vand.u32 %v3732, 4294901760
    %3734 = vmatmul.f32.gmra.mxu0 %v3733
    %v3735 = vpop.f32.mrf.mxu0
    %v3736 = vadd.f32 %v3697, %v3735
    %3737 = vdwg.mxu0
    %v3738 = vand.u32 %v2968, 4294901760
    %v3739 = vsub.f32 %v2968, %v3738
    %v3740 = vand.u32 %v3739, 4294901760
    %3741 = vmatpush.msra.mxu0 %v3740
    %v3742 = vand.u32 %v2966, 4294901760
    %v3743 = vsub.f32 %v2966, %v3742
    %v3744 = vand.u32 %v3743, 4294901760
    %3745 = vmatpush.msra.mxu0 %v3744
    %v3746 = vand.u32 %v2964, 4294901760
    %v3747 = vsub.f32 %v2964, %v3746
    %v3748 = vand.u32 %v3747, 4294901760
    %3749 = vmatpush.msra.mxu0 %v3748
    %v3750 = vand.u32 %v2962, 4294901760
    %v3751 = vsub.f32 %v2962, %v3750
    %v3752 = vand.u32 %v3751, 4294901760
    %3753 = vmatpush.msra.mxu0 %v3752
    %v3754 = vand.u32 %v2960, 4294901760
    %v3755 = vsub.f32 %v2960, %v3754
    %v3756 = vand.u32 %v3755, 4294901760
    %3757 = vmatpush.msra.mxu0 %v3756
    %v3758 = vand.u32 %v2958, 4294901760
    %v3759 = vsub.f32 %v2958, %v3758
    %v3760 = vand.u32 %v3759, 4294901760
    %3761 = vmatpush.msra.mxu0 %v3760
    %v3762 = vand.u32 %v2956, 4294901760
    %v3763 = vsub.f32 %v2956, %v3762
    %v3764 = vand.u32 %v3763, 4294901760
    %3765 = vmatpush.msra.mxu0 %v3764
    %v3766 = vand.u32 %v2954, 4294901760
    %v3767 = vsub.f32 %v2954, %v3766
    %v3768 = vand.u32 %v3767, 4294901760
    %3769 = vmatpush.msra.mxu0 %v3768
    %v3770 = vand.u32 %v2952, 4294901760
    %v3771 = vsub.f32 %v2952, %v3770
    %v3772 = vand.u32 %v3771, 4294901760
    %3773 = vmatpush.msra.mxu0 %v3772
    %v3774 = vand.u32 %v2950, 4294901760
    %v3775 = vsub.f32 %v2950, %v3774
    %v3776 = vand.u32 %v3775, 4294901760
    %3777 = vmatpush.msra.mxu0 %v3776
    %v3778 = vand.u32 %v2948, 4294901760
    %v3779 = vsub.f32 %v2948, %v3778
    %v3780 = vand.u32 %v3779, 4294901760
    %3781 = vmatpush.msra.mxu0 %v3780
    %v3782 = vand.u32 %v2946, 4294901760
    %v3783 = vsub.f32 %v2946, %v3782
    %v3784 = vand.u32 %v3783, 4294901760
    %3785 = vmatpush.msra.mxu0 %v3784
    %v3786 = vand.u32 %v2944, 4294901760
    %v3787 = vsub.f32 %v2944, %v3786
    %v3788 = vand.u32 %v3787, 4294901760
    %3789 = vmatpush.msra.mxu0 %v3788
    %v3790 = vand.u32 %v2942, 4294901760
    %v3791 = vsub.f32 %v2942, %v3790
    %v3792 = vand.u32 %v3791, 4294901760
    %3793 = vmatpush.msra.mxu0 %v3792
    %v3794 = vand.u32 %v2940, 4294901760
    %v3795 = vsub.f32 %v2940, %v3794
    %v3796 = vand.u32 %v3795, 4294901760
    %3797 = vmatpush.msra.mxu0 %v3796
    %v3798 = vand.u32 %v2938, 4294901760
    %v3799 = vsub.f32 %v2938, %v3798
    %v3800 = vand.u32 %v3799, 4294901760
    %3801 = vmatpush.msra.mxu0 %v3800
    %v3802 = vand.u32 %v2899, 4294901760
    %3803 = vmatmul.f32.gmra.mxu0 %v3802
    %v3804 = vpop.f32.mrf.mxu0
    %v3805 = vadd.f32 %v3736, %v3804
    %3806 = vdwg.mxu0
    %v3807 = vand.u32 %v2968, 4294901760
    %3808 = vmatpush.msra.mxu0 %v3807
    %v3809 = vand.u32 %v2966, 4294901760
    %3810 = vmatpush.msra.mxu0 %v3809
    %v3811 = vand.u32 %v2964, 4294901760
    %3812 = vmatpush.msra.mxu0 %v3811
    %v3813 = vand.u32 %v2962, 4294901760
    %3814 = vmatpush.msra.mxu0 %v3813
    %v3815 = vand.u32 %v2960, 4294901760
    %3816 = vmatpush.msra.mxu0 %v3815
    %v3817 = vand.u32 %v2958, 4294901760
    %3818 = vmatpush.msra.mxu0 %v3817
    %v3819 = vand.u32 %v2956, 4294901760
    %3820 = vmatpush.msra.mxu0 %v3819
    %v3821 = vand.u32 %v2954, 4294901760
    %3822 = vmatpush.msra.mxu0 %v3821
    %v3823 = vand.u32 %v2952, 4294901760
    %3824 = vmatpush.msra.mxu0 %v3823
    %v3825 = vand.u32 %v2950, 4294901760
    %3826 = vmatpush.msra.mxu0 %v3825
    %v3827 = vand.u32 %v2948, 4294901760
    %3828 = vmatpush.msra.mxu0 %v3827
    %v3829 = vand.u32 %v2946, 4294901760
    %3830 = vmatpush.msra.mxu0 %v3829
    %v3831 = vand.u32 %v2944, 4294901760
    %3832 = vmatpush.msra.mxu0 %v3831
    %v3833 = vand.u32 %v2942, 4294901760
    %3834 = vmatpush.msra.mxu0 %v3833
    %v3835 = vand.u32 %v2940, 4294901760
    %3836 = vmatpush.msra.mxu0 %v3835
    %v3837 = vand.u32 %v2938, 4294901760
    %3838 = vmatpush.msra.mxu0 %v3837
    %v3839 = vand.u32 %v2899, 4294901760
    %3840 = vmatmul.f32.gmra.mxu0 %v3839
    %v3841 = vpop.f32.mrf.mxu0
    %v3842 = vadd.f32 %v3805, %v3841
    %3843 = vdwg.mxu0
    %v3844 = vand.u32 %v3000, 4294901760
    %3845 = vmatpush.msra.mxu0 %v3844
    %v3846 = vand.u32 %v2998, 4294901760
    %3847 = vmatpush.msra.mxu0 %v3846
    %v3848 = vand.u32 %v2996, 4294901760
    %3849 = vmatpush.msra.mxu0 %v3848
    %v3850 = vand.u32 %v2994, 4294901760
    %3851 = vmatpush.msra.mxu0 %v3850
    %v3852 = vand.u32 %v2992, 4294901760
    %3853 = vmatpush.msra.mxu0 %v3852
    %v3854 = vand.u32 %v2990, 4294901760
    %3855 = vmatpush.msra.mxu0 %v3854
    %v3856 = vand.u32 %v2988, 4294901760
    %3857 = vmatpush.msra.mxu0 %v3856
    %v3858 = vand.u32 %v2986, 4294901760
    %3859 = vmatpush.msra.mxu0 %v3858
    %v3860 = vand.u32 %v2984, 4294901760
    %3861 = vmatpush.msra.mxu0 %v3860
    %v3862 = vand.u32 %v2982, 4294901760
    %3863 = vmatpush.msra.mxu0 %v3862
    %v3864 = vand.u32 %v2980, 4294901760
    %3865 = vmatpush.msra.mxu0 %v3864
    %v3866 = vand.u32 %v2978, 4294901760
    %3867 = vmatpush.msra.mxu0 %v3866
    %v3868 = vand.u32 %v2976, 4294901760
    %3869 = vmatpush.msra.mxu0 %v3868
    %v3870 = vand.u32 %v2974, 4294901760
    %3871 = vmatpush.msra.mxu0 %v3870
    %v3872 = vand.u32 %v2972, 4294901760
    %3873 = vmatpush.msra.mxu0 %v3872
    %v3874 = vand.u32 %v2970, 4294901760
    %3875 = vmatpush.msra.mxu0 %v3874
    %v3876 = vand.u32 %v2900, 4294901760
    %v3877 = vsub.f32 %v2900, %v3876
    %v3878 = vand.u32 %v3877, 4294901760
    %v3879 = vsub.f32 %v3877, %v3878
    %v3880 = vand.u32 %v3879, 4294901760
    %3881 = vmatmul.f32.gmra.mxu0 %v3880
    %v3882 = vpop.f32.mrf.mxu0
    %v3883 = vadd.f32 %v3842, %v3882
    %3884 = vdwg.mxu0
    %v3885 = vand.u32 %v3000, 4294901760
    %v3886 = vsub.f32 %v3000, %v3885
    %v3887 = vand.u32 %v3886, 4294901760
    %v3888 = vsub.f32 %v3886, %v3887
    %v3889 = vand.u32 %v3888, 4294901760
    %3890 = vmatpush.msra.mxu0 %v3889
    %v3891 = vand.u32 %v2998, 4294901760
    %v3892 = vsub.f32 %v2998, %v3891
    %v3893 = vand.u32 %v3892, 4294901760
    %v3894 = vsub.f32 %v3892, %v3893
    %v3895 = vand.u32 %v3894, 4294901760
    %3896 = vmatpush.msra.mxu0 %v3895
    %v3897 = vand.u32 %v2996, 4294901760
    %v3898 = vsub.f32 %v2996, %v3897
    %v3899 = vand.u32 %v3898, 4294901760
    %v3900 = vsub.f32 %v3898, %v3899
    %v3901 = vand.u32 %v3900, 4294901760
    %3902 = vmatpush.msra.mxu0 %v3901
    %v3903 = vand.u32 %v2994, 4294901760
    %v3904 = vsub.f32 %v2994, %v3903
    %v3905 = vand.u32 %v3904, 4294901760
    %v3906 = vsub.f32 %v3904, %v3905
    %v3907 = vand.u32 %v3906, 4294901760
    %3908 = vmatpush.msra.mxu0 %v3907
    %v3909 = vand.u32 %v2992, 4294901760
    %v3910 = vsub.f32 %v2992, %v3909
    %v3911 = vand.u32 %v3910, 4294901760
    %v3912 = vsub.f32 %v3910, %v3911
    %v3913 = vand.u32 %v3912, 4294901760
    %3914 = vmatpush.msra.mxu0 %v3913
    %v3915 = vand.u32 %v2990, 4294901760
    %v3916 = vsub.f32 %v2990, %v3915
    %v3917 = vand.u32 %v3916, 4294901760
    %v3918 = vsub.f32 %v3916, %v3917
    %v3919 = vand.u32 %v3918, 4294901760
    %3920 = vmatpush.msra.mxu0 %v3919
    %v3921 = vand.u32 %v2988, 4294901760
    %v3922 = vsub.f32 %v2988, %v3921
    %v3923 = vand.u32 %v3922, 4294901760
    %v3924 = vsub.f32 %v3922, %v3923
    %v3925 = vand.u32 %v3924, 4294901760
    %3926 = vmatpush.msra.mxu0 %v3925
    %v3927 = vand.u32 %v2986, 4294901760
    %v3928 = vsub.f32 %v2986, %v3927
    %v3929 = vand.u32 %v3928, 4294901760
    %v3930 = vsub.f32 %v3928, %v3929
    %v3931 = vand.u32 %v3930, 4294901760
    %3932 = vmatpush.msra.mxu0 %v3931
    %v3933 = vand.u32 %v2984, 4294901760
    %v3934 = vsub.f32 %v2984, %v3933
    %v3935 = vand.u32 %v3934, 4294901760
    %v3936 = vsub.f32 %v3934, %v3935
    %v3937 = vand.u32 %v3936, 4294901760
    %3938 = vmatpush.msra.mxu0 %v3937
    %v3939 = vand.u32 %v2982, 4294901760
    %v3940 = vsub.f32 %v2982, %v3939
    %v3941 = vand.u32 %v3940, 4294901760
    %v3942 = vsub.f32 %v3940, %v3941
    %v3943 = vand.u32 %v3942, 4294901760
    %3944 = vmatpush.msra.mxu0 %v3943
    %v3945 = vand.u32 %v2980, 4294901760
    %v3946 = vsub.f32 %v2980, %v3945
    %v3947 = vand.u32 %v3946, 4294901760
    %v3948 = vsub.f32 %v3946, %v3947
    %v3949 = vand.u32 %v3948, 4294901760
    %3950 = vmatpush.msra.mxu0 %v3949
    %v3951 = vand.u32 %v2978, 4294901760
    %v3952 = vsub.f32 %v2978, %v3951
    %v3953 = vand.u32 %v3952, 4294901760
    %v3954 = vsub.f32 %v3952, %v3953
    %v3955 = vand.u32 %v3954, 4294901760
    %3956 = vmatpush.msra.mxu0 %v3955
    %v3957 = vand.u32 %v2976, 4294901760
    %v3958 = vsub.f32 %v2976, %v3957
    %v3959 = vand.u32 %v3958, 4294901760
    %v3960 = vsub.f32 %v3958, %v3959
    %v3961 = vand.u32 %v3960, 4294901760
    %3962 = vmatpush.msra.mxu0 %v3961
    %v3963 = vand.u32 %v2974, 4294901760
    %v3964 = vsub.f32 %v2974, %v3963
    %v3965 = vand.u32 %v3964, 4294901760
    %v3966 = vsub.f32 %v3964, %v3965
    %v3967 = vand.u32 %v3966, 4294901760
    %3968 = vmatpush.msra.mxu0 %v3967
    %v3969 = vand.u32 %v2972, 4294901760
    %v3970 = vsub.f32 %v2972, %v3969
    %v3971 = vand.u32 %v3970, 4294901760
    %v3972 = vsub.f32 %v3970, %v3971
    %v3973 = vand.u32 %v3972, 4294901760
    %3974 = vmatpush.msra.mxu0 %v3973
    %v3975 = vand.u32 %v2970, 4294901760
    %v3976 = vsub.f32 %v2970, %v3975
    %v3977 = vand.u32 %v3976, 4294901760
    %v3978 = vsub.f32 %v3976, %v3977
    %v3979 = vand.u32 %v3978, 4294901760
    %3980 = vmatpush.msra.mxu0 %v3979
    %v3981 = vand.u32 %v2900, 4294901760
    %3982 = vmatmul.f32.gmra.mxu0 %v3981
    %v3983 = vpop.f32.mrf.mxu0
    %v3984 = vadd.f32 %v3883, %v3983
    %3985 = vdwg.mxu0
    %v3986 = vand.u32 %v3000, 4294901760
    %v3987 = vsub.f32 %v3000, %v3986
    %3988 = vmatpush.msra.mxu0 %v3987
    %v3989 = vand.u32 %v2998, 4294901760
    %v3990 = vsub.f32 %v2998, %v3989
    %3991 = vmatpush.msra.mxu0 %v3990
    %v3992 = vand.u32 %v2996, 4294901760
    %v3993 = vsub.f32 %v2996, %v3992
    %3994 = vmatpush.msra.mxu0 %v3993
    %v3995 = vand.u32 %v2994, 4294901760
    %v3996 = vsub.f32 %v2994, %v3995
    %3997 = vmatpush.msra.mxu0 %v3996
    %v3998 = vand.u32 %v2992, 4294901760
    %v3999 = vsub.f32 %v2992, %v3998
    %4000 = vmatpush.msra.mxu0 %v3999
    %v4001 = vand.u32 %v2990, 4294901760
    %v4002 = vsub.f32 %v2990, %v4001
    %4003 = vmatpush.msra.mxu0 %v4002
    %v4004 = vand.u32 %v2988, 4294901760
    %v4005 = vsub.f32 %v2988, %v4004
    %4006 = vmatpush.msra.mxu0 %v4005
    %v4007 = vand.u32 %v2986, 4294901760
    %v4008 = vsub.f32 %v2986, %v4007
    %4009 = vmatpush.msra.mxu0 %v4008
    %v4010 = vand.u32 %v2984, 4294901760
    %v4011 = vsub.f32 %v2984, %v4010
    %4012 = vmatpush.msra.mxu0 %v4011
    %v4013 = vand.u32 %v2982, 4294901760
    %v4014 = vsub.f32 %v2982, %v4013
    %4015 = vmatpush.msra.mxu0 %v4014
    %v4016 = vand.u32 %v2980, 4294901760
    %v4017 = vsub.f32 %v2980, %v4016
    %4018 = vmatpush.msra.mxu0 %v4017
    %v4019 = vand.u32 %v2978, 4294901760
    %v4020 = vsub.f32 %v2978, %v4019
    %4021 = vmatpush.msra.mxu0 %v4020
    %v4022 = vand.u32 %v2976, 4294901760
    %v4023 = vsub.f32 %v2976, %v4022
    %4024 = vmatpush.msra.mxu0 %v4023
    %v4025 = vand.u32 %v2974, 4294901760
    %v4026 = vsub.f32 %v2974, %v4025
    %4027 = vmatpush.msra.mxu0 %v4026
    %v4028 = vand.u32 %v2972, 4294901760
    %v4029 = vsub.f32 %v2972, %v4028
    %4030 = vmatpush.msra.mxu0 %v4029
    %v4031 = vand.u32 %v2970, 4294901760
    %v4032 = vsub.f32 %v2970, %v4031
    %4033 = vmatpush.msra.mxu0 %v4032
    %v4034 = vand.u32 %v2900, 4294901760
    %v4035 = vsub.f32 %v2900, %v4034
    %4036 = vmatmul.f32.gmra.mxu0 %v4035
    %v4037 = vpop.f32.mrf.mxu0
    %v4038 = vadd.f32 %v3984, %v4037
    %4039 = vdwg.mxu0
    %v4040 = vand.u32 %v3000, 4294901760
    %4041 = vmatpush.msra.mxu0 %v4040
    %v4042 = vand.u32 %v2998, 4294901760
    %4043 = vmatpush.msra.mxu0 %v4042
    %v4044 = vand.u32 %v2996, 4294901760
    %4045 = vmatpush.msra.mxu0 %v4044
    %v4046 = vand.u32 %v2994, 4294901760
    %4047 = vmatpush.msra.mxu0 %v4046
    %v4048 = vand.u32 %v2992, 4294901760
    %4049 = vmatpush.msra.mxu0 %v4048
    %v4050 = vand.u32 %v2990, 4294901760
    %4051 = vmatpush.msra.mxu0 %v4050
    %v4052 = vand.u32 %v2988, 4294901760
    %4053 = vmatpush.msra.mxu0 %v4052
    %v4054 = vand.u32 %v2986, 4294901760
    %4055 = vmatpush.msra.mxu0 %v4054
    %v4056 = vand.u32 %v2984, 4294901760
    %4057 = vmatpush.msra.mxu0 %v4056
    %v4058 = vand.u32 %v2982, 4294901760
    %4059 = vmatpush.msra.mxu0 %v4058
    %v4060 = vand.u32 %v2980, 4294901760
    %4061 = vmatpush.msra.mxu0 %v4060
    %v4062 = vand.u32 %v2978, 4294901760
    %4063 = vmatpush.msra.mxu0 %v4062
    %v4064 = vand.u32 %v2976, 4294901760
    %4065 = vmatpush.msra.mxu0 %v4064
    %v4066 = vand.u32 %v2974, 4294901760
    %4067 = vmatpush.msra.mxu0 %v4066
    %v4068 = vand.u32 %v2972, 4294901760
    %4069 = vmatpush.msra.mxu0 %v4068
    %v4070 = vand.u32 %v2970, 4294901760
    %4071 = vmatpush.msra.mxu0 %v4070
    %v4072 = vand.u32 %v2900, 4294901760
    %v4073 = vsub.f32 %v2900, %v4072
    %v4074 = vand.u32 %v4073, 4294901760
    %4075 = vmatmul.f32.gmra.mxu0 %v4074
    %v4076 = vpop.f32.mrf.mxu0
    %v4077 = vadd.f32 %v4038, %v4076
    %4078 = vdwg.mxu0
    %v4079 = vand.u32 %v3000, 4294901760
    %v4080 = vsub.f32 %v3000, %v4079
    %v4081 = vand.u32 %v4080, 4294901760
    %4082 = vmatpush.msra.mxu0 %v4081
    %v4083 = vand.u32 %v2998, 4294901760
    %v4084 = vsub.f32 %v2998, %v4083
    %v4085 = vand.u32 %v4084, 4294901760
    %4086 = vmatpush.msra.mxu0 %v4085
    %v4087 = vand.u32 %v2996, 4294901760
    %v4088 = vsub.f32 %v2996, %v4087
    %v4089 = vand.u32 %v4088, 4294901760
    %4090 = vmatpush.msra.mxu0 %v4089
    %v4091 = vand.u32 %v2994, 4294901760
    %v4092 = vsub.f32 %v2994, %v4091
    %v4093 = vand.u32 %v4092, 4294901760
    %4094 = vmatpush.msra.mxu0 %v4093
    %v4095 = vand.u32 %v2992, 4294901760
    %v4096 = vsub.f32 %v2992, %v4095
    %v4097 = vand.u32 %v4096, 4294901760
    %4098 = vmatpush.msra.mxu0 %v4097
    %v4099 = vand.u32 %v2990, 4294901760
    %v4100 = vsub.f32 %v2990, %v4099
    %v4101 = vand.u32 %v4100, 4294901760
    %4102 = vmatpush.msra.mxu0 %v4101
    %v4103 = vand.u32 %v2988, 4294901760
    %v4104 = vsub.f32 %v2988, %v4103
    %v4105 = vand.u32 %v4104, 4294901760
    %4106 = vmatpush.msra.mxu0 %v4105
    %v4107 = vand.u32 %v2986, 4294901760
    %v4108 = vsub.f32 %v2986, %v4107
    %v4109 = vand.u32 %v4108, 4294901760
    %4110 = vmatpush.msra.mxu0 %v4109
    %v4111 = vand.u32 %v2984, 4294901760
    %v4112 = vsub.f32 %v2984, %v4111
    %v4113 = vand.u32 %v4112, 4294901760
    %4114 = vmatpush.msra.mxu0 %v4113
    %v4115 = vand.u32 %v2982, 4294901760
    %v4116 = vsub.f32 %v2982, %v4115
    %v4117 = vand.u32 %v4116, 4294901760
    %4118 = vmatpush.msra.mxu0 %v4117
    %v4119 = vand.u32 %v2980, 4294901760
    %v4120 = vsub.f32 %v2980, %v4119
    %v4121 = vand.u32 %v4120, 4294901760
    %4122 = vmatpush.msra.mxu0 %v4121
    %v4123 = vand.u32 %v2978, 4294901760
    %v4124 = vsub.f32 %v2978, %v4123
    %v4125 = vand.u32 %v4124, 4294901760
    %4126 = vmatpush.msra.mxu0 %v4125
    %v4127 = vand.u32 %v2976, 4294901760
    %v4128 = vsub.f32 %v2976, %v4127
    %v4129 = vand.u32 %v4128, 4294901760
    %4130 = vmatpush.msra.mxu0 %v4129
    %v4131 = vand.u32 %v2974, 4294901760
    %v4132 = vsub.f32 %v2974, %v4131
    %v4133 = vand.u32 %v4132, 4294901760
    %4134 = vmatpush.msra.mxu0 %v4133
    %v4135 = vand.u32 %v2972, 4294901760
    %v4136 = vsub.f32 %v2972, %v4135
    %v4137 = vand.u32 %v4136, 4294901760
    %4138 = vmatpush.msra.mxu0 %v4137
    %v4139 = vand.u32 %v2970, 4294901760
    %v4140 = vsub.f32 %v2970, %v4139
    %v4141 = vand.u32 %v4140, 4294901760
    %4142 = vmatpush.msra.mxu0 %v4141
    %v4143 = vand.u32 %v2900, 4294901760
    %4144 = vmatmul.f32.gmra.mxu0 %v4143
    %v4145 = vpop.f32.mrf.mxu0
    %v4146 = vadd.f32 %v4077, %v4145
    %4147 = vdwg.mxu0
    %v4148 = vand.u32 %v3000, 4294901760
    %4149 = vmatpush.msra.mxu0 %v4148
    %v4150 = vand.u32 %v2998, 4294901760
    %4151 = vmatpush.msra.mxu0 %v4150
    %v4152 = vand.u32 %v2996, 4294901760
    %4153 = vmatpush.msra.mxu0 %v4152
    %v4154 = vand.u32 %v2994, 4294901760
    %4155 = vmatpush.msra.mxu0 %v4154
    %v4156 = vand.u32 %v2992, 4294901760
    %4157 = vmatpush.msra.mxu0 %v4156
    %v4158 = vand.u32 %v2990, 4294901760
    %4159 = vmatpush.msra.mxu0 %v4158
    %v4160 = vand.u32 %v2988, 4294901760
    %4161 = vmatpush.msra.mxu0 %v4160
    %v4162 = vand.u32 %v2986, 4294901760
    %4163 = vmatpush.msra.mxu0 %v4162
    %v4164 = vand.u32 %v2984, 4294901760
    %4165 = vmatpush.msra.mxu0 %v4164
    %v4166 = vand.u32 %v2982, 4294901760
    %4167 = vmatpush.msra.mxu0 %v4166
    %v4168 = vand.u32 %v2980, 4294901760
    %4169 = vmatpush.msra.mxu0 %v4168
    %v4170 = vand.u32 %v2978, 4294901760
    %4171 = vmatpush.msra.mxu0 %v4170
    %v4172 = vand.u32 %v2976, 4294901760
    %4173 = vmatpush.msra.mxu0 %v4172
    %v4174 = vand.u32 %v2974, 4294901760
    %4175 = vmatpush.msra.mxu0 %v4174
    %v4176 = vand.u32 %v2972, 4294901760
    %4177 = vmatpush.msra.mxu0 %v4176
    %v4178 = vand.u32 %v2970, 4294901760
    %4179 = vmatpush.msra.mxu0 %v4178
    %v4180 = vand.u32 %v2900, 4294901760
    %4181 = vmatmul.f32.gmra.mxu0 %v4180
    %v4182 = vpop.f32.mrf.mxu0
    %v4183 = vadd.f32 %v4146, %v4182
    %4184 = vdwg.mxu0
    %v4185 = vand.u32 %v3032, 4294901760
    %4186 = vmatpush.msra.mxu0 %v4185
    %v4187 = vand.u32 %v3030, 4294901760
    %4188 = vmatpush.msra.mxu0 %v4187
    %v4189 = vand.u32 %v3028, 4294901760
    %4190 = vmatpush.msra.mxu0 %v4189
    %v4191 = vand.u32 %v3026, 4294901760
    %4192 = vmatpush.msra.mxu0 %v4191
    %v4193 = vand.u32 %v3024, 4294901760
    %4194 = vmatpush.msra.mxu0 %v4193
    %v4195 = vand.u32 %v3022, 4294901760
    %4196 = vmatpush.msra.mxu0 %v4195
    %v4197 = vand.u32 %v3020, 4294901760
    %4198 = vmatpush.msra.mxu0 %v4197
    %v4199 = vand.u32 %v3018, 4294901760
    %4200 = vmatpush.msra.mxu0 %v4199
    %v4201 = vand.u32 %v3016, 4294901760
    %4202 = vmatpush.msra.mxu0 %v4201
    %v4203 = vand.u32 %v3014, 4294901760
    %4204 = vmatpush.msra.mxu0 %v4203
    %v4205 = vand.u32 %v3012, 4294901760
    %4206 = vmatpush.msra.mxu0 %v4205
    %v4207 = vand.u32 %v3010, 4294901760
    %4208 = vmatpush.msra.mxu0 %v4207
    %v4209 = vand.u32 %v3008, 4294901760
    %4210 = vmatpush.msra.mxu0 %v4209
    %v4211 = vand.u32 %v3006, 4294901760
    %4212 = vmatpush.msra.mxu0 %v4211
    %v4213 = vand.u32 %v3004, 4294901760
    %4214 = vmatpush.msra.mxu0 %v4213
    %v4215 = vand.u32 %v3002, 4294901760
    %4216 = vmatpush.msra.mxu0 %v4215
    %v4217 = vand.u32 %v2901, 4294901760
    %v4218 = vsub.f32 %v2901, %v4217
    %v4219 = vand.u32 %v4218, 4294901760
    %v4220 = vsub.f32 %v4218, %v4219
    %v4221 = vand.u32 %v4220, 4294901760
    %4222 = vmatmul.f32.gmra.mxu0 %v4221
    %v4223 = vpop.f32.mrf.mxu0
    %v4224 = vadd.f32 %v4183, %v4223
    %4225 = vdwg.mxu0
    %v4226 = vand.u32 %v3032, 4294901760
    %v4227 = vsub.f32 %v3032, %v4226
    %v4228 = vand.u32 %v4227, 4294901760
    %v4229 = vsub.f32 %v4227, %v4228
    %v4230 = vand.u32 %v4229, 4294901760
    %4231 = vmatpush.msra.mxu0 %v4230
    %v4232 = vand.u32 %v3030, 4294901760
    %v4233 = vsub.f32 %v3030, %v4232
    %v4234 = vand.u32 %v4233, 4294901760
    %v4235 = vsub.f32 %v4233, %v4234
    %v4236 = vand.u32 %v4235, 4294901760
    %4237 = vmatpush.msra.mxu0 %v4236
    %v4238 = vand.u32 %v3028, 4294901760
    %v4239 = vsub.f32 %v3028, %v4238
    %v4240 = vand.u32 %v4239, 4294901760
    %v4241 = vsub.f32 %v4239, %v4240
    %v4242 = vand.u32 %v4241, 4294901760
    %4243 = vmatpush.msra.mxu0 %v4242
    %v4244 = vand.u32 %v3026, 4294901760
    %v4245 = vsub.f32 %v3026, %v4244
    %v4246 = vand.u32 %v4245, 4294901760
    %v4247 = vsub.f32 %v4245, %v4246
    %v4248 = vand.u32 %v4247, 4294901760
    %4249 = vmatpush.msra.mxu0 %v4248
    %v4250 = vand.u32 %v3024, 4294901760
    %v4251 = vsub.f32 %v3024, %v4250
    %v4252 = vand.u32 %v4251, 4294901760
    %v4253 = vsub.f32 %v4251, %v4252
    %v4254 = vand.u32 %v4253, 4294901760
    %4255 = vmatpush.msra.mxu0 %v4254
    %v4256 = vand.u32 %v3022, 4294901760
    %v4257 = vsub.f32 %v3022, %v4256
    %v4258 = vand.u32 %v4257, 4294901760
    %v4259 = vsub.f32 %v4257, %v4258
    %v4260 = vand.u32 %v4259, 4294901760
    %4261 = vmatpush.msra.mxu0 %v4260
    %v4262 = vand.u32 %v3020, 4294901760
    %v4263 = vsub.f32 %v3020, %v4262
    %v4264 = vand.u32 %v4263, 4294901760
    %v4265 = vsub.f32 %v4263, %v4264
    %v4266 = vand.u32 %v4265, 4294901760
    %4267 = vmatpush.msra.mxu0 %v4266
    %v4268 = vand.u32 %v3018, 4294901760
    %v4269 = vsub.f32 %v3018, %v4268
    %v4270 = vand.u32 %v4269, 4294901760
    %v4271 = vsub.f32 %v4269, %v4270
    %v4272 = vand.u32 %v4271, 4294901760
    %4273 = vmatpush.msra.mxu0 %v4272
    %v4274 = vand.u32 %v3016, 4294901760
    %v4275 = vsub.f32 %v3016, %v4274
    %v4276 = vand.u32 %v4275, 4294901760
    %v4277 = vsub.f32 %v4275, %v4276
    %v4278 = vand.u32 %v4277, 4294901760
    %4279 = vmatpush.msra.mxu0 %v4278
    %v4280 = vand.u32 %v3014, 4294901760
    %v4281 = vsub.f32 %v3014, %v4280
    %v4282 = vand.u32 %v4281, 4294901760
    %v4283 = vsub.f32 %v4281, %v4282
    %v4284 = vand.u32 %v4283, 4294901760
    %4285 = vmatpush.msra.mxu0 %v4284
    %v4286 = vand.u32 %v3012, 4294901760
    %v4287 = vsub.f32 %v3012, %v4286
    %v4288 = vand.u32 %v4287, 4294901760
    %v4289 = vsub.f32 %v4287, %v4288
    %v4290 = vand.u32 %v4289, 4294901760
    %4291 = vmatpush.msra.mxu0 %v4290
    %v4292 = vand.u32 %v3010, 4294901760
    %v4293 = vsub.f32 %v3010, %v4292
    %v4294 = vand.u32 %v4293, 4294901760
    %v4295 = vsub.f32 %v4293, %v4294
    %v4296 = vand.u32 %v4295, 4294901760
    %4297 = vmatpush.msra.mxu0 %v4296
    %v4298 = vand.u32 %v3008, 4294901760
    %v4299 = vsub.f32 %v3008, %v4298
    %v4300 = vand.u32 %v4299, 4294901760
    %v4301 = vsub.f32 %v4299, %v4300
    %v4302 = vand.u32 %v4301, 4294901760
    %4303 = vmatpush.msra.mxu0 %v4302
    %v4304 = vand.u32 %v3006, 4294901760
    %v4305 = vsub.f32 %v3006, %v4304
    %v4306 = vand.u32 %v4305, 4294901760
    %v4307 = vsub.f32 %v4305, %v4306
    %v4308 = vand.u32 %v4307, 4294901760
    %4309 = vmatpush.msra.mxu0 %v4308
    %v4310 = vand.u32 %v3004, 4294901760
    %v4311 = vsub.f32 %v3004, %v4310
    %v4312 = vand.u32 %v4311, 4294901760
    %v4313 = vsub.f32 %v4311, %v4312
    %v4314 = vand.u32 %v4313, 4294901760
    %4315 = vmatpush.msra.mxu0 %v4314
    %v4316 = vand.u32 %v3002, 4294901760
    %v4317 = vsub.f32 %v3002, %v4316
    %v4318 = vand.u32 %v4317, 4294901760
    %v4319 = vsub.f32 %v4317, %v4318
    %v4320 = vand.u32 %v4319, 4294901760
    %4321 = vmatpush.msra.mxu0 %v4320
    %v4322 = vand.u32 %v2901, 4294901760
    %4323 = vmatmul.f32.gmra.mxu0 %v4322
    %v4324 = vpop.f32.mrf.mxu0
    %v4325 = vadd.f32 %v4224, %v4324
    %4326 = vdwg.mxu0
    %v4327 = vand.u32 %v3032, 4294901760
    %v4328 = vsub.f32 %v3032, %v4327
    %4329 = vmatpush.msra.mxu0 %v4328
    %v4330 = vand.u32 %v3030, 4294901760
    %v4331 = vsub.f32 %v3030, %v4330
    %4332 = vmatpush.msra.mxu0 %v4331
    %v4333 = vand.u32 %v3028, 4294901760
    %v4334 = vsub.f32 %v3028, %v4333
    %4335 = vmatpush.msra.mxu0 %v4334
    %v4336 = vand.u32 %v3026, 4294901760
    %v4337 = vsub.f32 %v3026, %v4336
    %4338 = vmatpush.msra.mxu0 %v4337
    %v4339 = vand.u32 %v3024, 4294901760
    %v4340 = vsub.f32 %v3024, %v4339
    %4341 = vmatpush.msra.mxu0 %v4340
    %v4342 = vand.u32 %v3022, 4294901760
    %v4343 = vsub.f32 %v3022, %v4342
    %4344 = vmatpush.msra.mxu0 %v4343
    %v4345 = vand.u32 %v3020, 4294901760
    %v4346 = vsub.f32 %v3020, %v4345
    %4347 = vmatpush.msra.mxu0 %v4346
    %v4348 = vand.u32 %v3018, 4294901760
    %v4349 = vsub.f32 %v3018, %v4348
    %4350 = vmatpush.msra.mxu0 %v4349
    %v4351 = vand.u32 %v3016, 4294901760
    %v4352 = vsub.f32 %v3016, %v4351
    %4353 = vmatpush.msra.mxu0 %v4352
    %v4354 = vand.u32 %v3014, 4294901760
    %v4355 = vsub.f32 %v3014, %v4354
    %4356 = vmatpush.msra.mxu0 %v4355
    %v4357 = vand.u32 %v3012, 4294901760
    %v4358 = vsub.f32 %v3012, %v4357
    %4359 = vmatpush.msra.mxu0 %v4358
    %v4360 = vand.u32 %v3010, 4294901760
    %v4361 = vsub.f32 %v3010, %v4360
    %4362 = vmatpush.msra.mxu0 %v4361
    %v4363 = vand.u32 %v3008, 4294901760
    %v4364 = vsub.f32 %v3008, %v4363
    %4365 = vmatpush.msra.mxu0 %v4364
    %v4366 = vand.u32 %v3006, 4294901760
    %v4367 = vsub.f32 %v3006, %v4366
    %4368 = vmatpush.msra.mxu0 %v4367
    %v4369 = vand.u32 %v3004, 4294901760
    %v4370 = vsub.f32 %v3004, %v4369
    %4371 = vmatpush.msra.mxu0 %v4370
    %v4372 = vand.u32 %v3002, 4294901760
    %v4373 = vsub.f32 %v3002, %v4372
    %4374 = vmatpush.msra.mxu0 %v4373
    %v4375 = vand.u32 %v2901, 4294901760
    %v4376 = vsub.f32 %v2901, %v4375
    %4377 = vmatmul.f32.gmra.mxu0 %v4376
    %v4378 = vpop.f32.mrf.mxu0
    %v4379 = vadd.f32 %v4325, %v4378
    %4380 = vdwg.mxu0
    %v4381 = vand.u32 %v3032, 4294901760
    %4382 = vmatpush.msra.mxu0 %v4381
    %v4383 = vand.u32 %v3030, 4294901760
    %4384 = vmatpush.msra.mxu0 %v4383
    %v4385 = vand.u32 %v3028, 4294901760
    %4386 = vmatpush.msra.mxu0 %v4385
    %v4387 = vand.u32 %v3026, 4294901760
    %4388 = vmatpush.msra.mxu0 %v4387
    %v4389 = vand.u32 %v3024, 4294901760
    %4390 = vmatpush.msra.mxu0 %v4389
    %v4391 = vand.u32 %v3022, 4294901760
    %4392 = vmatpush.msra.mxu0 %v4391
    %v4393 = vand.u32 %v3020, 4294901760
    %4394 = vmatpush.msra.mxu0 %v4393
    %v4395 = vand.u32 %v3018, 4294901760
    %4396 = vmatpush.msra.mxu0 %v4395
    %v4397 = vand.u32 %v3016, 4294901760
    %4398 = vmatpush.msra.mxu0 %v4397
    %v4399 = vand.u32 %v3014, 4294901760
    %4400 = vmatpush.msra.mxu0 %v4399
    %v4401 = vand.u32 %v3012, 4294901760
    %4402 = vmatpush.msra.mxu0 %v4401
    %v4403 = vand.u32 %v3010, 4294901760
    %4404 = vmatpush.msra.mxu0 %v4403
    %v4405 = vand.u32 %v3008, 4294901760
    %4406 = vmatpush.msra.mxu0 %v4405
    %v4407 = vand.u32 %v3006, 4294901760
    %4408 = vmatpush.msra.mxu0 %v4407
    %v4409 = vand.u32 %v3004, 4294901760
    %4410 = vmatpush.msra.mxu0 %v4409
    %v4411 = vand.u32 %v3002, 4294901760
    %4412 = vmatpush.msra.mxu0 %v4411
    %v4413 = vand.u32 %v2901, 4294901760
    %v4414 = vsub.f32 %v2901, %v4413
    %v4415 = vand.u32 %v4414, 4294901760
    %4416 = vmatmul.f32.gmra.mxu0 %v4415
    %v4417 = vpop.f32.mrf.mxu0
    %v4418 = vadd.f32 %v4379, %v4417
    %4419 = vdwg.mxu0
    %v4420 = vand.u32 %v3032, 4294901760
    %v4421 = vsub.f32 %v3032, %v4420
    %v4422 = vand.u32 %v4421, 4294901760
    %4423 = vmatpush.msra.mxu0 %v4422
    %v4424 = vand.u32 %v3030, 4294901760
    %v4425 = vsub.f32 %v3030, %v4424
    %v4426 = vand.u32 %v4425, 4294901760
    %4427 = vmatpush.msra.mxu0 %v4426
    %v4428 = vand.u32 %v3028, 4294901760
    %v4429 = vsub.f32 %v3028, %v4428
    %v4430 = vand.u32 %v4429, 4294901760
    %4431 = vmatpush.msra.mxu0 %v4430
    %v4432 = vand.u32 %v3026, 4294901760
    %v4433 = vsub.f32 %v3026, %v4432
    %v4434 = vand.u32 %v4433, 4294901760
    %4435 = vmatpush.msra.mxu0 %v4434
    %v4436 = vand.u32 %v3024, 4294901760
    %v4437 = vsub.f32 %v3024, %v4436
    %v4438 = vand.u32 %v4437, 4294901760
    %4439 = vmatpush.msra.mxu0 %v4438
    %v4440 = vand.u32 %v3022, 4294901760
    %v4441 = vsub.f32 %v3022, %v4440
    %v4442 = vand.u32 %v4441, 4294901760
    %4443 = vmatpush.msra.mxu0 %v4442
    %v4444 = vand.u32 %v3020, 4294901760
    %v4445 = vsub.f32 %v3020, %v4444
    %v4446 = vand.u32 %v4445, 4294901760
    %4447 = vmatpush.msra.mxu0 %v4446
    %v4448 = vand.u32 %v3018, 4294901760
    %v4449 = vsub.f32 %v3018, %v4448
    %v4450 = vand.u32 %v4449, 4294901760
    %4451 = vmatpush.msra.mxu0 %v4450
    %v4452 = vand.u32 %v3016, 4294901760
    %v4453 = vsub.f32 %v3016, %v4452
    %v4454 = vand.u32 %v4453, 4294901760
    %4455 = vmatpush.msra.mxu0 %v4454
    %v4456 = vand.u32 %v3014, 4294901760
    %v4457 = vsub.f32 %v3014, %v4456
    %v4458 = vand.u32 %v4457, 4294901760
    %4459 = vmatpush.msra.mxu0 %v4458
    %v4460 = vand.u32 %v3012, 4294901760
    %v4461 = vsub.f32 %v3012, %v4460
    %v4462 = vand.u32 %v4461, 4294901760
    %4463 = vmatpush.msra.mxu0 %v4462
    %v4464 = vand.u32 %v3010, 4294901760
    %v4465 = vsub.f32 %v3010, %v4464
    %v4466 = vand.u32 %v4465, 4294901760
    %4467 = vmatpush.msra.mxu0 %v4466
    %v4468 = vand.u32 %v3008, 4294901760
    %v4469 = vsub.f32 %v3008, %v4468
    %v4470 = vand.u32 %v4469, 4294901760
    %4471 = vmatpush.msra.mxu0 %v4470
    %v4472 = vand.u32 %v3006, 4294901760
    %v4473 = vsub.f32 %v3006, %v4472
    %v4474 = vand.u32 %v4473, 4294901760
    %4475 = vmatpush.msra.mxu0 %v4474
    %v4476 = vand.u32 %v3004, 4294901760
    %v4477 = vsub.f32 %v3004, %v4476
    %v4478 = vand.u32 %v4477, 4294901760
    %4479 = vmatpush.msra.mxu0 %v4478
    %v4480 = vand.u32 %v3002, 4294901760
    %v4481 = vsub.f32 %v3002, %v4480
    %v4482 = vand.u32 %v4481, 4294901760
    %4483 = vmatpush.msra.mxu0 %v4482
    %v4484 = vand.u32 %v2901, 4294901760
    %4485 = vmatmul.f32.gmra.mxu0 %v4484
    %v4486 = vpop.f32.mrf.mxu0
    %v4487 = vadd.f32 %v4418, %v4486
    %4488 = vdwg.mxu0
    %v4489 = vand.u32 %v3032, 4294901760
    %4490 = vmatpush.msra.mxu0 %v4489
    %v4491 = vand.u32 %v3030, 4294901760
    %4492 = vmatpush.msra.mxu0 %v4491
    %v4493 = vand.u32 %v3028, 4294901760
    %4494 = vmatpush.msra.mxu0 %v4493
    %v4495 = vand.u32 %v3026, 4294901760
    %4496 = vmatpush.msra.mxu0 %v4495
    %v4497 = vand.u32 %v3024, 4294901760
    %4498 = vmatpush.msra.mxu0 %v4497
    %v4499 = vand.u32 %v3022, 4294901760
    %4500 = vmatpush.msra.mxu0 %v4499
    %v4501 = vand.u32 %v3020, 4294901760
    %4502 = vmatpush.msra.mxu0 %v4501
    %v4503 = vand.u32 %v3018, 4294901760
    %4504 = vmatpush.msra.mxu0 %v4503
    %v4505 = vand.u32 %v3016, 4294901760
    %4506 = vmatpush.msra.mxu0 %v4505
    %v4507 = vand.u32 %v3014, 4294901760
    %4508 = vmatpush.msra.mxu0 %v4507
    %v4509 = vand.u32 %v3012, 4294901760
    %4510 = vmatpush.msra.mxu0 %v4509
    %v4511 = vand.u32 %v3010, 4294901760
    %4512 = vmatpush.msra.mxu0 %v4511
    %v4513 = vand.u32 %v3008, 4294901760
    %4514 = vmatpush.msra.mxu0 %v4513
    %v4515 = vand.u32 %v3006, 4294901760
    %4516 = vmatpush.msra.mxu0 %v4515
    %v4517 = vand.u32 %v3004, 4294901760
    %4518 = vmatpush.msra.mxu0 %v4517
    %v4519 = vand.u32 %v3002, 4294901760
    %4520 = vmatpush.msra.mxu0 %v4519
    %v4521 = vand.u32 %v2901, 4294901760
    %4522 = vmatmul.f32.gmra.mxu0 %v4521
    %v4523 = vpop.f32.mrf.mxu0
    %v4524 = vadd.f32 %v4487, %v4523
    %4525 = vdwg.mxu0
    %v4526 = vand.u32 %v3064, 4294901760
    %4527 = vmatpush.msra.mxu0 %v4526
    %v4528 = vand.u32 %v3062, 4294901760
    %4529 = vmatpush.msra.mxu0 %v4528
    %v4530 = vand.u32 %v3060, 4294901760
    %4531 = vmatpush.msra.mxu0 %v4530
    %v4532 = vand.u32 %v3058, 4294901760
    %4533 = vmatpush.msra.mxu0 %v4532
    %v4534 = vand.u32 %v3056, 4294901760
    %4535 = vmatpush.msra.mxu0 %v4534
    %v4536 = vand.u32 %v3054, 4294901760
    %4537 = vmatpush.msra.mxu0 %v4536
    %v4538 = vand.u32 %v3052, 4294901760
    %4539 = vmatpush.msra.mxu0 %v4538
    %v4540 = vand.u32 %v3050, 4294901760
    %4541 = vmatpush.msra.mxu0 %v4540
    %v4542 = vand.u32 %v3048, 4294901760
    %4543 = vmatpush.msra.mxu0 %v4542
    %v4544 = vand.u32 %v3046, 4294901760
    %4545 = vmatpush.msra.mxu0 %v4544
    %v4546 = vand.u32 %v3044, 4294901760
    %4547 = vmatpush.msra.mxu0 %v4546
    %v4548 = vand.u32 %v3042, 4294901760
    %4549 = vmatpush.msra.mxu0 %v4548
    %v4550 = vand.u32 %v3040, 4294901760
    %4551 = vmatpush.msra.mxu0 %v4550
    %v4552 = vand.u32 %v3038, 4294901760
    %4553 = vmatpush.msra.mxu0 %v4552
    %v4554 = vand.u32 %v3036, 4294901760
    %4555 = vmatpush.msra.mxu0 %v4554
    %v4556 = vand.u32 %v3034, 4294901760
    %4557 = vmatpush.msra.mxu0 %v4556
    %v4558 = vand.u32 %v2902, 4294901760
    %v4559 = vsub.f32 %v2902, %v4558
    %v4560 = vand.u32 %v4559, 4294901760
    %v4561 = vsub.f32 %v4559, %v4560
    %v4562 = vand.u32 %v4561, 4294901760
    %4563 = vmatmul.f32.gmra.mxu0 %v4562
    %v4564 = vpop.f32.mrf.mxu0
    %v4565 = vadd.f32 %v4524, %v4564
    %4566 = vdwg.mxu0
    %v4567 = vand.u32 %v3064, 4294901760
    %v4568 = vsub.f32 %v3064, %v4567
    %v4569 = vand.u32 %v4568, 4294901760
    %v4570 = vsub.f32 %v4568, %v4569
    %v4571 = vand.u32 %v4570, 4294901760
    %4572 = vmatpush.msra.mxu0 %v4571
    %v4573 = vand.u32 %v3062, 4294901760
    %v4574 = vsub.f32 %v3062, %v4573
    %v4575 = vand.u32 %v4574, 4294901760
    %v4576 = vsub.f32 %v4574, %v4575
    %v4577 = vand.u32 %v4576, 4294901760
    %4578 = vmatpush.msra.mxu0 %v4577
    %v4579 = vand.u32 %v3060, 4294901760
    %v4580 = vsub.f32 %v3060, %v4579
    %v4581 = vand.u32 %v4580, 4294901760
    %v4582 = vsub.f32 %v4580, %v4581
    %v4583 = vand.u32 %v4582, 4294901760
    %4584 = vmatpush.msra.mxu0 %v4583
    %v4585 = vand.u32 %v3058, 4294901760
    %v4586 = vsub.f32 %v3058, %v4585
    %v4587 = vand.u32 %v4586, 4294901760
    %v4588 = vsub.f32 %v4586, %v4587
    %v4589 = vand.u32 %v4588, 4294901760
    %4590 = vmatpush.msra.mxu0 %v4589
    %v4591 = vand.u32 %v3056, 4294901760
    %v4592 = vsub.f32 %v3056, %v4591
    %v4593 = vand.u32 %v4592, 4294901760
    %v4594 = vsub.f32 %v4592, %v4593
    %v4595 = vand.u32 %v4594, 4294901760
    %4596 = vmatpush.msra.mxu0 %v4595
    %v4597 = vand.u32 %v3054, 4294901760
    %v4598 = vsub.f32 %v3054, %v4597
    %v4599 = vand.u32 %v4598, 4294901760
    %v4600 = vsub.f32 %v4598, %v4599
    %v4601 = vand.u32 %v4600, 4294901760
    %4602 = vmatpush.msra.mxu0 %v4601
    %v4603 = vand.u32 %v3052, 4294901760
    %v4604 = vsub.f32 %v3052, %v4603
    %v4605 = vand.u32 %v4604, 4294901760
    %v4606 = vsub.f32 %v4604, %v4605
    %v4607 = vand.u32 %v4606, 4294901760
    %4608 = vmatpush.msra.mxu0 %v4607
    %v4609 = vand.u32 %v3050, 4294901760
    %v4610 = vsub.f32 %v3050, %v4609
    %v4611 = vand.u32 %v4610, 4294901760
    %v4612 = vsub.f32 %v4610, %v4611
    %v4613 = vand.u32 %v4612, 4294901760
    %4614 = vmatpush.msra.mxu0 %v4613
    %v4615 = vand.u32 %v3048, 4294901760
    %v4616 = vsub.f32 %v3048, %v4615
    %v4617 = vand.u32 %v4616, 4294901760
    %v4618 = vsub.f32 %v4616, %v4617
    %v4619 = vand.u32 %v4618, 4294901760
    %4620 = vmatpush.msra.mxu0 %v4619
    %v4621 = vand.u32 %v3046, 4294901760
    %v4622 = vsub.f32 %v3046, %v4621
    %v4623 = vand.u32 %v4622, 4294901760
    %v4624 = vsub.f32 %v4622, %v4623
    %v4625 = vand.u32 %v4624, 4294901760
    %4626 = vmatpush.msra.mxu0 %v4625
    %v4627 = vand.u32 %v3044, 4294901760
    %v4628 = vsub.f32 %v3044, %v4627
    %v4629 = vand.u32 %v4628, 4294901760
    %v4630 = vsub.f32 %v4628, %v4629
    %v4631 = vand.u32 %v4630, 4294901760
    %4632 = vmatpush.msra.mxu0 %v4631
    %v4633 = vand.u32 %v3042, 4294901760
    %v4634 = vsub.f32 %v3042, %v4633
    %v4635 = vand.u32 %v4634, 4294901760
    %v4636 = vsub.f32 %v4634, %v4635
    %v4637 = vand.u32 %v4636, 4294901760
    %4638 = vmatpush.msra.mxu0 %v4637
    %v4639 = vand.u32 %v3040, 4294901760
    %v4640 = vsub.f32 %v3040, %v4639
    %v4641 = vand.u32 %v4640, 4294901760
    %v4642 = vsub.f32 %v4640, %v4641
    %v4643 = vand.u32 %v4642, 4294901760
    %4644 = vmatpush.msra.mxu0 %v4643
    %v4645 = vand.u32 %v3038, 4294901760
    %v4646 = vsub.f32 %v3038, %v4645
    %v4647 = vand.u32 %v4646, 4294901760
    %v4648 = vsub.f32 %v4646, %v4647
    %v4649 = vand.u32 %v4648, 4294901760
    %4650 = vmatpush.msra.mxu0 %v4649
    %v4651 = vand.u32 %v3036, 4294901760
    %v4652 = vsub.f32 %v3036, %v4651
    %v4653 = vand.u32 %v4652, 4294901760
    %v4654 = vsub.f32 %v4652, %v4653
    %v4655 = vand.u32 %v4654, 4294901760
    %4656 = vmatpush.msra.mxu0 %v4655
    %v4657 = vand.u32 %v3034, 4294901760
    %v4658 = vsub.f32 %v3034, %v4657
    %v4659 = vand.u32 %v4658, 4294901760
    %v4660 = vsub.f32 %v4658, %v4659
    %v4661 = vand.u32 %v4660, 4294901760
    %4662 = vmatpush.msra.mxu0 %v4661
    %v4663 = vand.u32 %v2902, 4294901760
    %4664 = vmatmul.f32.gmra.mxu0 %v4663
    %v4665 = vpop.f32.mrf.mxu0
    %v4666 = vadd.f32 %v4565, %v4665
    %4667 = vdwg.mxu0
    %v4668 = vand.u32 %v3064, 4294901760
    %v4669 = vsub.f32 %v3064, %v4668
    %4670 = vmatpush.msra.mxu0 %v4669
    %v4671 = vand.u32 %v3062, 4294901760
    %v4672 = vsub.f32 %v3062, %v4671
    %4673 = vmatpush.msra.mxu0 %v4672
    %v4674 = vand.u32 %v3060, 4294901760
    %v4675 = vsub.f32 %v3060, %v4674
    %4676 = vmatpush.msra.mxu0 %v4675
    %v4677 = vand.u32 %v3058, 4294901760
    %v4678 = vsub.f32 %v3058, %v4677
    %4679 = vmatpush.msra.mxu0 %v4678
    %v4680 = vand.u32 %v3056, 4294901760
    %v4681 = vsub.f32 %v3056, %v4680
    %4682 = vmatpush.msra.mxu0 %v4681
    %v4683 = vand.u32 %v3054, 4294901760
    %v4684 = vsub.f32 %v3054, %v4683
    %4685 = vmatpush.msra.mxu0 %v4684
    %v4686 = vand.u32 %v3052, 4294901760
    %v4687 = vsub.f32 %v3052, %v4686
    %4688 = vmatpush.msra.mxu0 %v4687
    %v4689 = vand.u32 %v3050, 4294901760
    %v4690 = vsub.f32 %v3050, %v4689
    %4691 = vmatpush.msra.mxu0 %v4690
    %v4692 = vand.u32 %v3048, 4294901760
    %v4693 = vsub.f32 %v3048, %v4692
    %4694 = vmatpush.msra.mxu0 %v4693
    %v4695 = vand.u32 %v3046, 4294901760
    %v4696 = vsub.f32 %v3046, %v4695
    %4697 = vmatpush.msra.mxu0 %v4696
    %v4698 = vand.u32 %v3044, 4294901760
    %v4699 = vsub.f32 %v3044, %v4698
    %4700 = vmatpush.msra.mxu0 %v4699
    %v4701 = vand.u32 %v3042, 4294901760
    %v4702 = vsub.f32 %v3042, %v4701
    %4703 = vmatpush.msra.mxu0 %v4702
    %v4704 = vand.u32 %v3040, 4294901760
    %v4705 = vsub.f32 %v3040, %v4704
    %4706 = vmatpush.msra.mxu0 %v4705
    %v4707 = vand.u32 %v3038, 4294901760
    %v4708 = vsub.f32 %v3038, %v4707
    %4709 = vmatpush.msra.mxu0 %v4708
    %v4710 = vand.u32 %v3036, 4294901760
    %v4711 = vsub.f32 %v3036, %v4710
    %4712 = vmatpush.msra.mxu0 %v4711
    %v4713 = vand.u32 %v3034, 4294901760
    %v4714 = vsub.f32 %v3034, %v4713
    %4715 = vmatpush.msra.mxu0 %v4714
    %v4716 = vand.u32 %v2902, 4294901760
    %v4717 = vsub.f32 %v2902, %v4716
    %4718 = vmatmul.f32.gmra.mxu0 %v4717
    %v4719 = vpop.f32.mrf.mxu0
    %v4720 = vadd.f32 %v4666, %v4719
    %4721 = vdwg.mxu0
    %v4722 = vand.u32 %v3064, 4294901760
    %4723 = vmatpush.msra.mxu0 %v4722
    %v4724 = vand.u32 %v3062, 4294901760
    %4725 = vmatpush.msra.mxu0 %v4724
    %v4726 = vand.u32 %v3060, 4294901760
    %4727 = vmatpush.msra.mxu0 %v4726
    %v4728 = vand.u32 %v3058, 4294901760
    %4729 = vmatpush.msra.mxu0 %v4728
    %v4730 = vand.u32 %v3056, 4294901760
    %4731 = vmatpush.msra.mxu0 %v4730
    %v4732 = vand.u32 %v3054, 4294901760
    %4733 = vmatpush.msra.mxu0 %v4732
    %v4734 = vand.u32 %v3052, 4294901760
    %4735 = vmatpush.msra.mxu0 %v4734
    %v4736 = vand.u32 %v3050, 4294901760
    %4737 = vmatpush.msra.mxu0 %v4736
    %v4738 = vand.u32 %v3048, 4294901760
    %4739 = vmatpush.msra.mxu0 %v4738
    %v4740 = vand.u32 %v3046, 4294901760
    %4741 = vmatpush.msra.mxu0 %v4740
    %v4742 = vand.u32 %v3044, 4294901760
    %4743 = vmatpush.msra.mxu0 %v4742
    %v4744 = vand.u32 %v3042, 4294901760
    %4745 = vmatpush.msra.mxu0 %v4744
    %v4746 = vand.u32 %v3040, 4294901760
    %4747 = vmatpush.msra.mxu0 %v4746
    %v4748 = vand.u32 %v3038, 4294901760
    %4749 = vmatpush.msra.mxu0 %v4748
    %v4750 = vand.u32 %v3036, 4294901760
    %4751 = vmatpush.msra.mxu0 %v4750
    %v4752 = vand.u32 %v3034, 4294901760
    %4753 = vmatpush.msra.mxu0 %v4752
    %v4754 = vand.u32 %v2902, 4294901760
    %v4755 = vsub.f32 %v2902, %v4754
    %v4756 = vand.u32 %v4755, 4294901760
    %4757 = vmatmul.f32.gmra.mxu0 %v4756
    %v4758 = vpop.f32.mrf.mxu0
    %v4759 = vadd.f32 %v4720, %v4758
    %4760 = vdwg.mxu0
    %v4761 = vand.u32 %v3064, 4294901760
    %v4762 = vsub.f32 %v3064, %v4761
    %v4763 = vand.u32 %v4762, 4294901760
    %4764 = vmatpush.msra.mxu0 %v4763
    %v4765 = vand.u32 %v3062, 4294901760
    %v4766 = vsub.f32 %v3062, %v4765
    %v4767 = vand.u32 %v4766, 4294901760
    %4768 = vmatpush.msra.mxu0 %v4767
    %v4769 = vand.u32 %v3060, 4294901760
    %v4770 = vsub.f32 %v3060, %v4769
    %v4771 = vand.u32 %v4770, 4294901760
    %4772 = vmatpush.msra.mxu0 %v4771
    %v4773 = vand.u32 %v3058, 4294901760
    %v4774 = vsub.f32 %v3058, %v4773
    %v4775 = vand.u32 %v4774, 4294901760
    %4776 = vmatpush.msra.mxu0 %v4775
    %v4777 = vand.u32 %v3056, 4294901760
    %v4778 = vsub.f32 %v3056, %v4777
    %v4779 = vand.u32 %v4778, 4294901760
    %4780 = vmatpush.msra.mxu0 %v4779
    %v4781 = vand.u32 %v3054, 4294901760
    %v4782 = vsub.f32 %v3054, %v4781
    %v4783 = vand.u32 %v4782, 4294901760
    %4784 = vmatpush.msra.mxu0 %v4783
    %v4785 = vand.u32 %v3052, 4294901760
    %v4786 = vsub.f32 %v3052, %v4785
    %v4787 = vand.u32 %v4786, 4294901760
    %4788 = vmatpush.msra.mxu0 %v4787
    %v4789 = vand.u32 %v3050, 4294901760
    %v4790 = vsub.f32 %v3050, %v4789
    %v4791 = vand.u32 %v4790, 4294901760
    %4792 = vmatpush.msra.mxu0 %v4791
    %v4793 = vand.u32 %v3048, 4294901760
    %v4794 = vsub.f32 %v3048, %v4793
    %v4795 = vand.u32 %v4794, 4294901760
    %4796 = vmatpush.msra.mxu0 %v4795
    %v4797 = vand.u32 %v3046, 4294901760
    %v4798 = vsub.f32 %v3046, %v4797
    %v4799 = vand.u32 %v4798, 4294901760
    %4800 = vmatpush.msra.mxu0 %v4799
    %v4801 = vand.u32 %v3044, 4294901760
    %v4802 = vsub.f32 %v3044, %v4801
    %v4803 = vand.u32 %v4802, 4294901760
    %4804 = vmatpush.msra.mxu0 %v4803
    %v4805 = vand.u32 %v3042, 4294901760
    %v4806 = vsub.f32 %v3042, %v4805
    %v4807 = vand.u32 %v4806, 4294901760
    %4808 = vmatpush.msra.mxu0 %v4807
    %v4809 = vand.u32 %v3040, 4294901760
    %v4810 = vsub.f32 %v3040, %v4809
    %v4811 = vand.u32 %v4810, 4294901760
    %4812 = vmatpush.msra.mxu0 %v4811
    %v4813 = vand.u32 %v3038, 4294901760
    %v4814 = vsub.f32 %v3038, %v4813
    %v4815 = vand.u32 %v4814, 4294901760
    %4816 = vmatpush.msra.mxu0 %v4815
    %v4817 = vand.u32 %v3036, 4294901760
    %v4818 = vsub.f32 %v3036, %v4817
    %v4819 = vand.u32 %v4818, 4294901760
    %4820 = vmatpush.msra.mxu0 %v4819
    %v4821 = vand.u32 %v3034, 4294901760
    %v4822 = vsub.f32 %v3034, %v4821
    %v4823 = vand.u32 %v4822, 4294901760
    %4824 = vmatpush.msra.mxu0 %v4823
    %v4825 = vand.u32 %v2902, 4294901760
    %4826 = vmatmul.f32.gmra.mxu0 %v4825
    %v4827 = vpop.f32.mrf.mxu0
    %v4828 = vadd.f32 %v4759, %v4827
    %4829 = vdwg.mxu0
    %v4830 = vand.u32 %v3064, 4294901760
    %4831 = vmatpush.msra.mxu0 %v4830
    %v4832 = vand.u32 %v3062, 4294901760
    %4833 = vmatpush.msra.mxu0 %v4832
    %v4834 = vand.u32 %v3060, 4294901760
    %4835 = vmatpush.msra.mxu0 %v4834
    %v4836 = vand.u32 %v3058, 4294901760
    %4837 = vmatpush.msra.mxu0 %v4836
    %v4838 = vand.u32 %v3056, 4294901760
    %4839 = vmatpush.msra.mxu0 %v4838
    %v4840 = vand.u32 %v3054, 4294901760
    %4841 = vmatpush.msra.mxu0 %v4840
    %v4842 = vand.u32 %v3052, 4294901760
    %4843 = vmatpush.msra.mxu0 %v4842
    %v4844 = vand.u32 %v3050, 4294901760
    %4845 = vmatpush.msra.mxu0 %v4844
    %v4846 = vand.u32 %v3048, 4294901760
    %4847 = vmatpush.msra.mxu0 %v4846
    %v4848 = vand.u32 %v3046, 4294901760
    %4849 = vmatpush.msra.mxu0 %v4848
    %v4850 = vand.u32 %v3044, 4294901760
    %4851 = vmatpush.msra.mxu0 %v4850
    %v4852 = vand.u32 %v3042, 4294901760
    %4853 = vmatpush.msra.mxu0 %v4852
    %v4854 = vand.u32 %v3040, 4294901760
    %4855 = vmatpush.msra.mxu0 %v4854
    %v4856 = vand.u32 %v3038, 4294901760
    %4857 = vmatpush.msra.mxu0 %v4856
    %v4858 = vand.u32 %v3036, 4294901760
    %4859 = vmatpush.msra.mxu0 %v4858
    %v4860 = vand.u32 %v3034, 4294901760
    %4861 = vmatpush.msra.mxu0 %v4860
    %v4862 = vand.u32 %v2902, 4294901760
    %4863 = vmatmul.f32.gmra.mxu0 %v4862
    %v4864 = vpop.f32.mrf.mxu0
    %v4865 = vadd.f32 %v4828, %v4864
    %4866 = vdwg.mxu0
    %v4867 = vand.u32 %v3096, 4294901760
    %4868 = vmatpush.msra.mxu0 %v4867
    %v4869 = vand.u32 %v3094, 4294901760
    %4870 = vmatpush.msra.mxu0 %v4869
    %v4871 = vand.u32 %v3092, 4294901760
    %4872 = vmatpush.msra.mxu0 %v4871
    %v4873 = vand.u32 %v3090, 4294901760
    %4874 = vmatpush.msra.mxu0 %v4873
    %v4875 = vand.u32 %v3088, 4294901760
    %4876 = vmatpush.msra.mxu0 %v4875
    %v4877 = vand.u32 %v3086, 4294901760
    %4878 = vmatpush.msra.mxu0 %v4877
    %v4879 = vand.u32 %v3084, 4294901760
    %4880 = vmatpush.msra.mxu0 %v4879
    %v4881 = vand.u32 %v3082, 4294901760
    %4882 = vmatpush.msra.mxu0 %v4881
    %v4883 = vand.u32 %v3080, 4294901760
    %4884 = vmatpush.msra.mxu0 %v4883
    %v4885 = vand.u32 %v3078, 4294901760
    %4886 = vmatpush.msra.mxu0 %v4885
    %v4887 = vand.u32 %v3076, 4294901760
    %4888 = vmatpush.msra.mxu0 %v4887
    %v4889 = vand.u32 %v3074, 4294901760
    %4890 = vmatpush.msra.mxu0 %v4889
    %v4891 = vand.u32 %v3072, 4294901760
    %4892 = vmatpush.msra.mxu0 %v4891
    %v4893 = vand.u32 %v3070, 4294901760
    %4894 = vmatpush.msra.mxu0 %v4893
    %v4895 = vand.u32 %v3068, 4294901760
    %4896 = vmatpush.msra.mxu0 %v4895
    %v4897 = vand.u32 %v3066, 4294901760
    %4898 = vmatpush.msra.mxu0 %v4897
    %v4899 = vand.u32 %v2903, 4294901760
    %v4900 = vsub.f32 %v2903, %v4899
    %v4901 = vand.u32 %v4900, 4294901760
    %v4902 = vsub.f32 %v4900, %v4901
    %v4903 = vand.u32 %v4902, 4294901760
    %4904 = vmatmul.f32.gmra.mxu0 %v4903
    %v4905 = vpop.f32.mrf.mxu0
    %v4906 = vadd.f32 %v4865, %v4905
    %4907 = vdwg.mxu0
    %v4908 = vand.u32 %v3096, 4294901760
    %v4909 = vsub.f32 %v3096, %v4908
    %v4910 = vand.u32 %v4909, 4294901760
    %v4911 = vsub.f32 %v4909, %v4910
    %v4912 = vand.u32 %v4911, 4294901760
    %4913 = vmatpush.msra.mxu0 %v4912
    %v4914 = vand.u32 %v3094, 4294901760
    %v4915 = vsub.f32 %v3094, %v4914
    %v4916 = vand.u32 %v4915, 4294901760
    %v4917 = vsub.f32 %v4915, %v4916
    %v4918 = vand.u32 %v4917, 4294901760
    %4919 = vmatpush.msra.mxu0 %v4918
    %v4920 = vand.u32 %v3092, 4294901760
    %v4921 = vsub.f32 %v3092, %v4920
    %v4922 = vand.u32 %v4921, 4294901760
    %v4923 = vsub.f32 %v4921, %v4922
    %v4924 = vand.u32 %v4923, 4294901760
    %4925 = vmatpush.msra.mxu0 %v4924
    %v4926 = vand.u32 %v3090, 4294901760
    %v4927 = vsub.f32 %v3090, %v4926
    %v4928 = vand.u32 %v4927, 4294901760
    %v4929 = vsub.f32 %v4927, %v4928
    %v4930 = vand.u32 %v4929, 4294901760
    %4931 = vmatpush.msra.mxu0 %v4930
    %v4932 = vand.u32 %v3088, 4294901760
    %v4933 = vsub.f32 %v3088, %v4932
    %v4934 = vand.u32 %v4933, 4294901760
    %v4935 = vsub.f32 %v4933, %v4934
    %v4936 = vand.u32 %v4935, 4294901760
    %4937 = vmatpush.msra.mxu0 %v4936
    %v4938 = vand.u32 %v3086, 4294901760
    %v4939 = vsub.f32 %v3086, %v4938
    %v4940 = vand.u32 %v4939, 4294901760
    %v4941 = vsub.f32 %v4939, %v4940
    %v4942 = vand.u32 %v4941, 4294901760
    %4943 = vmatpush.msra.mxu0 %v4942
    %v4944 = vand.u32 %v3084, 4294901760
    %v4945 = vsub.f32 %v3084, %v4944
    %v4946 = vand.u32 %v4945, 4294901760
    %v4947 = vsub.f32 %v4945, %v4946
    %v4948 = vand.u32 %v4947, 4294901760
    %4949 = vmatpush.msra.mxu0 %v4948
    %v4950 = vand.u32 %v3082, 4294901760
    %v4951 = vsub.f32 %v3082, %v4950
    %v4952 = vand.u32 %v4951, 4294901760
    %v4953 = vsub.f32 %v4951, %v4952
    %v4954 = vand.u32 %v4953, 4294901760
    %4955 = vmatpush.msra.mxu0 %v4954
    %v4956 = vand.u32 %v3080, 4294901760
    %v4957 = vsub.f32 %v3080, %v4956
    %v4958 = vand.u32 %v4957, 4294901760
    %v4959 = vsub.f32 %v4957, %v4958
    %v4960 = vand.u32 %v4959, 4294901760
    %4961 = vmatpush.msra.mxu0 %v4960
    %v4962 = vand.u32 %v3078, 4294901760
    %v4963 = vsub.f32 %v3078, %v4962
    %v4964 = vand.u32 %v4963, 4294901760
    %v4965 = vsub.f32 %v4963, %v4964
    %v4966 = vand.u32 %v4965, 4294901760
    %4967 = vmatpush.msra.mxu0 %v4966
    %v4968 = vand.u32 %v3076, 4294901760
    %v4969 = vsub.f32 %v3076, %v4968
    %v4970 = vand.u32 %v4969, 4294901760
    %v4971 = vsub.f32 %v4969, %v4970
    %v4972 = vand.u32 %v4971, 4294901760
    %4973 = vmatpush.msra.mxu0 %v4972
    %v4974 = vand.u32 %v3074, 4294901760
    %v4975 = vsub.f32 %v3074, %v4974
    %v4976 = vand.u32 %v4975, 4294901760
    %v4977 = vsub.f32 %v4975, %v4976
    %v4978 = vand.u32 %v4977, 4294901760
    %4979 = vmatpush.msra.mxu0 %v4978
    %v4980 = vand.u32 %v3072, 4294901760
    %v4981 = vsub.f32 %v3072, %v4980
    %v4982 = vand.u32 %v4981, 4294901760
    %v4983 = vsub.f32 %v4981, %v4982
    %v4984 = vand.u32 %v4983, 4294901760
    %4985 = vmatpush.msra.mxu0 %v4984
    %v4986 = vand.u32 %v3070, 4294901760
    %v4987 = vsub.f32 %v3070, %v4986
    %v4988 = vand.u32 %v4987, 4294901760
    %v4989 = vsub.f32 %v4987, %v4988
    %v4990 = vand.u32 %v4989, 4294901760
    %4991 = vmatpush.msra.mxu0 %v4990
    %v4992 = vand.u32 %v3068, 4294901760
    %v4993 = vsub.f32 %v3068, %v4992
    %v4994 = vand.u32 %v4993, 4294901760
    %v4995 = vsub.f32 %v4993, %v4994
    %v4996 = vand.u32 %v4995, 4294901760
    %4997 = vmatpush.msra.mxu0 %v4996
    %v4998 = vand.u32 %v3066, 4294901760
    %v4999 = vsub.f32 %v3066, %v4998
    %v5000 = vand.u32 %v4999, 4294901760
    %v5001 = vsub.f32 %v4999, %v5000
    %v5002 = vand.u32 %v5001, 4294901760
    %5003 = vmatpush.msra.mxu0 %v5002
    %v5004 = vand.u32 %v2903, 4294901760
    %5005 = vmatmul.f32.gmra.mxu0 %v5004
    %v5006 = vpop.f32.mrf.mxu0
    %v5007 = vadd.f32 %v4906, %v5006
    %5008 = vdwg.mxu0
    %v5009 = vand.u32 %v3096, 4294901760
    %v5010 = vsub.f32 %v3096, %v5009
    %5011 = vmatpush.msra.mxu0 %v5010
    %v5012 = vand.u32 %v3094, 4294901760
    %v5013 = vsub.f32 %v3094, %v5012
    %5014 = vmatpush.msra.mxu0 %v5013
    %v5015 = vand.u32 %v3092, 4294901760
    %v5016 = vsub.f32 %v3092, %v5015
    %5017 = vmatpush.msra.mxu0 %v5016
    %v5018 = vand.u32 %v3090, 4294901760
    %v5019 = vsub.f32 %v3090, %v5018
    %5020 = vmatpush.msra.mxu0 %v5019
    %v5021 = vand.u32 %v3088, 4294901760
    %v5022 = vsub.f32 %v3088, %v5021
    %5023 = vmatpush.msra.mxu0 %v5022
    %v5024 = vand.u32 %v3086, 4294901760
    %v5025 = vsub.f32 %v3086, %v5024
    %5026 = vmatpush.msra.mxu0 %v5025
    %v5027 = vand.u32 %v3084, 4294901760
    %v5028 = vsub.f32 %v3084, %v5027
    %5029 = vmatpush.msra.mxu0 %v5028
    %v5030 = vand.u32 %v3082, 4294901760
    %v5031 = vsub.f32 %v3082, %v5030
    %5032 = vmatpush.msra.mxu0 %v5031
    %v5033 = vand.u32 %v3080, 4294901760
    %v5034 = vsub.f32 %v3080, %v5033
    %5035 = vmatpush.msra.mxu0 %v5034
    %v5036 = vand.u32 %v3078, 4294901760
    %v5037 = vsub.f32 %v3078, %v5036
    %5038 = vmatpush.msra.mxu0 %v5037
    %v5039 = vand.u32 %v3076, 4294901760
    %v5040 = vsub.f32 %v3076, %v5039
    %5041 = vmatpush.msra.mxu0 %v5040
    %v5042 = vand.u32 %v3074, 4294901760
    %v5043 = vsub.f32 %v3074, %v5042
    %5044 = vmatpush.msra.mxu0 %v5043
    %v5045 = vand.u32 %v3072, 4294901760
    %v5046 = vsub.f32 %v3072, %v5045
    %5047 = vmatpush.msra.mxu0 %v5046
    %v5048 = vand.u32 %v3070, 4294901760
    %v5049 = vsub.f32 %v3070, %v5048
    %5050 = vmatpush.msra.mxu0 %v5049
    %v5051 = vand.u32 %v3068, 4294901760
    %v5052 = vsub.f32 %v3068, %v5051
    %5053 = vmatpush.msra.mxu0 %v5052
    %v5054 = vand.u32 %v3066, 4294901760
    %v5055 = vsub.f32 %v3066, %v5054
    %5056 = vmatpush.msra.mxu0 %v5055
    %v5057 = vand.u32 %v2903, 4294901760
    %v5058 = vsub.f32 %v2903, %v5057
    %5059 = vmatmul.f32.gmra.mxu0 %v5058
    %v5060 = vpop.f32.mrf.mxu0
    %v5061 = vadd.f32 %v5007, %v5060
    %5062 = vdwg.mxu0
    %v5063 = vand.u32 %v3096, 4294901760
    %5064 = vmatpush.msra.mxu0 %v5063
    %v5065 = vand.u32 %v3094, 4294901760
    %5066 = vmatpush.msra.mxu0 %v5065
    %v5067 = vand.u32 %v3092, 4294901760
    %5068 = vmatpush.msra.mxu0 %v5067
    %v5069 = vand.u32 %v3090, 4294901760
    %5070 = vmatpush.msra.mxu0 %v5069
    %v5071 = vand.u32 %v3088, 4294901760
    %5072 = vmatpush.msra.mxu0 %v5071
    %v5073 = vand.u32 %v3086, 4294901760
    %5074 = vmatpush.msra.mxu0 %v5073
    %v5075 = vand.u32 %v3084, 4294901760
    %5076 = vmatpush.msra.mxu0 %v5075
    %v5077 = vand.u32 %v3082, 4294901760
    %5078 = vmatpush.msra.mxu0 %v5077
    %v5079 = vand.u32 %v3080, 4294901760
    %5080 = vmatpush.msra.mxu0 %v5079
    %v5081 = vand.u32 %v3078, 4294901760
    %5082 = vmatpush.msra.mxu0 %v5081
    %v5083 = vand.u32 %v3076, 4294901760
    %5084 = vmatpush.msra.mxu0 %v5083
    %v5085 = vand.u32 %v3074, 4294901760
    %5086 = vmatpush.msra.mxu0 %v5085
    %v5087 = vand.u32 %v3072, 4294901760
    %5088 = vmatpush.msra.mxu0 %v5087
    %v5089 = vand.u32 %v3070, 4294901760
    %5090 = vmatpush.msra.mxu0 %v5089
    %v5091 = vand.u32 %v3068, 4294901760
    %5092 = vmatpush.msra.mxu0 %v5091
    %v5093 = vand.u32 %v3066, 4294901760
    %5094 = vmatpush.msra.mxu0 %v5093
    %v5095 = vand.u32 %v2903, 4294901760
    %v5096 = vsub.f32 %v2903, %v5095
    %v5097 = vand.u32 %v5096, 4294901760
    %5098 = vmatmul.f32.gmra.mxu0 %v5097
    %v5099 = vpop.f32.mrf.mxu0
    %v5100 = vadd.f32 %v5061, %v5099
    %5101 = vdwg.mxu0
    %v5102 = vand.u32 %v3096, 4294901760
    %v5103 = vsub.f32 %v3096, %v5102
    %v5104 = vand.u32 %v5103, 4294901760
    %5105 = vmatpush.msra.mxu0 %v5104
    %v5106 = vand.u32 %v3094, 4294901760
    %v5107 = vsub.f32 %v3094, %v5106
    %v5108 = vand.u32 %v5107, 4294901760
    %5109 = vmatpush.msra.mxu0 %v5108
    %v5110 = vand.u32 %v3092, 4294901760
    %v5111 = vsub.f32 %v3092, %v5110
    %v5112 = vand.u32 %v5111, 4294901760
    %5113 = vmatpush.msra.mxu0 %v5112
    %v5114 = vand.u32 %v3090, 4294901760
    %v5115 = vsub.f32 %v3090, %v5114
    %v5116 = vand.u32 %v5115, 4294901760
    %5117 = vmatpush.msra.mxu0 %v5116
    %v5118 = vand.u32 %v3088, 4294901760
    %v5119 = vsub.f32 %v3088, %v5118
    %v5120 = vand.u32 %v5119, 4294901760
    %5121 = vmatpush.msra.mxu0 %v5120
    %v5122 = vand.u32 %v3086, 4294901760
    %v5123 = vsub.f32 %v3086, %v5122
    %v5124 = vand.u32 %v5123, 4294901760
    %5125 = vmatpush.msra.mxu0 %v5124
    %v5126 = vand.u32 %v3084, 4294901760
    %v5127 = vsub.f32 %v3084, %v5126
    %v5128 = vand.u32 %v5127, 4294901760
    %5129 = vmatpush.msra.mxu0 %v5128
    %v5130 = vand.u32 %v3082, 4294901760
    %v5131 = vsub.f32 %v3082, %v5130
    %v5132 = vand.u32 %v5131, 4294901760
    %5133 = vmatpush.msra.mxu0 %v5132
    %v5134 = vand.u32 %v3080, 4294901760
    %v5135 = vsub.f32 %v3080, %v5134
    %v5136 = vand.u32 %v5135, 4294901760
    %5137 = vmatpush.msra.mxu0 %v5136
    %v5138 = vand.u32 %v3078, 4294901760
    %v5139 = vsub.f32 %v3078, %v5138
    %v5140 = vand.u32 %v5139, 4294901760
    %5141 = vmatpush.msra.mxu0 %v5140
    %v5142 = vand.u32 %v3076, 4294901760
    %v5143 = vsub.f32 %v3076, %v5142
    %v5144 = vand.u32 %v5143, 4294901760
    %5145 = vmatpush.msra.mxu0 %v5144
    %v5146 = vand.u32 %v3074, 4294901760
    %v5147 = vsub.f32 %v3074, %v5146
    %v5148 = vand.u32 %v5147, 4294901760
    %5149 = vmatpush.msra.mxu0 %v5148
    %v5150 = vand.u32 %v3072, 4294901760
    %v5151 = vsub.f32 %v3072, %v5150
    %v5152 = vand.u32 %v5151, 4294901760
    %5153 = vmatpush.msra.mxu0 %v5152
    %v5154 = vand.u32 %v3070, 4294901760
    %v5155 = vsub.f32 %v3070, %v5154
    %v5156 = vand.u32 %v5155, 4294901760
    %5157 = vmatpush.msra.mxu0 %v5156
    %v5158 = vand.u32 %v3068, 4294901760
    %v5159 = vsub.f32 %v3068, %v5158
    %v5160 = vand.u32 %v5159, 4294901760
    %5161 = vmatpush.msra.mxu0 %v5160
    %v5162 = vand.u32 %v3066, 4294901760
    %v5163 = vsub.f32 %v3066, %v5162
    %v5164 = vand.u32 %v5163, 4294901760
    %5165 = vmatpush.msra.mxu0 %v5164
    %v5166 = vand.u32 %v2903, 4294901760
    %5167 = vmatmul.f32.gmra.mxu0 %v5166
    %v5168 = vpop.f32.mrf.mxu0
    %v5169 = vadd.f32 %v5100, %v5168
    %5170 = vdwg.mxu0
    %v5171 = vand.u32 %v3096, 4294901760
    %5172 = vmatpush.msra.mxu0 %v5171
    %v5173 = vand.u32 %v3094, 4294901760
    %5174 = vmatpush.msra.mxu0 %v5173
    %v5175 = vand.u32 %v3092, 4294901760
    %5176 = vmatpush.msra.mxu0 %v5175
    %v5177 = vand.u32 %v3090, 4294901760
    %5178 = vmatpush.msra.mxu0 %v5177
    %v5179 = vand.u32 %v3088, 4294901760
    %5180 = vmatpush.msra.mxu0 %v5179
    %v5181 = vand.u32 %v3086, 4294901760
    %5182 = vmatpush.msra.mxu0 %v5181
    %v5183 = vand.u32 %v3084, 4294901760
    %5184 = vmatpush.msra.mxu0 %v5183
    %v5185 = vand.u32 %v3082, 4294901760
    %5186 = vmatpush.msra.mxu0 %v5185
    %v5187 = vand.u32 %v3080, 4294901760
    %5188 = vmatpush.msra.mxu0 %v5187
    %v5189 = vand.u32 %v3078, 4294901760
    %5190 = vmatpush.msra.mxu0 %v5189
    %v5191 = vand.u32 %v3076, 4294901760
    %5192 = vmatpush.msra.mxu0 %v5191
    %v5193 = vand.u32 %v3074, 4294901760
    %5194 = vmatpush.msra.mxu0 %v5193
    %v5195 = vand.u32 %v3072, 4294901760
    %5196 = vmatpush.msra.mxu0 %v5195
    %v5197 = vand.u32 %v3070, 4294901760
    %5198 = vmatpush.msra.mxu0 %v5197
    %v5199 = vand.u32 %v3068, 4294901760
    %5200 = vmatpush.msra.mxu0 %v5199
    %v5201 = vand.u32 %v3066, 4294901760
    %5202 = vmatpush.msra.mxu0 %v5201
    %v5203 = vand.u32 %v2903, 4294901760
    %5204 = vmatmul.f32.gmra.mxu0 %v5203
    %v5205 = vpop.f32.mrf.mxu0
    %v5206 = vadd.f32 %v5169, %v5205
    %5207 = vdwg.mxu0
    %v5208 = vand.u32 %v3128, 4294901760
    %5209 = vmatpush.msra.mxu0 %v5208
    %v5210 = vand.u32 %v3126, 4294901760
    %5211 = vmatpush.msra.mxu0 %v5210
    %v5212 = vand.u32 %v3124, 4294901760
    %5213 = vmatpush.msra.mxu0 %v5212
    %v5214 = vand.u32 %v3122, 4294901760
    %5215 = vmatpush.msra.mxu0 %v5214
    %v5216 = vand.u32 %v3120, 4294901760
    %5217 = vmatpush.msra.mxu0 %v5216
    %v5218 = vand.u32 %v3118, 4294901760
    %5219 = vmatpush.msra.mxu0 %v5218
    %v5220 = vand.u32 %v3116, 4294901760
    %5221 = vmatpush.msra.mxu0 %v5220
    %v5222 = vand.u32 %v3114, 4294901760
    %5223 = vmatpush.msra.mxu0 %v5222
    %v5224 = vand.u32 %v3112, 4294901760
    %5225 = vmatpush.msra.mxu0 %v5224
    %v5226 = vand.u32 %v3110, 4294901760
    %5227 = vmatpush.msra.mxu0 %v5226
    %v5228 = vand.u32 %v3108, 4294901760
    %5229 = vmatpush.msra.mxu0 %v5228
    %v5230 = vand.u32 %v3106, 4294901760
    %5231 = vmatpush.msra.mxu0 %v5230
    %v5232 = vand.u32 %v3104, 4294901760
    %5233 = vmatpush.msra.mxu0 %v5232
    %v5234 = vand.u32 %v3102, 4294901760
    %5235 = vmatpush.msra.mxu0 %v5234
    %v5236 = vand.u32 %v3100, 4294901760
    %5237 = vmatpush.msra.mxu0 %v5236
    %v5238 = vand.u32 %v3098, 4294901760
    %5239 = vmatpush.msra.mxu0 %v5238
    %v5240 = vand.u32 %v2904, 4294901760
    %v5241 = vsub.f32 %v2904, %v5240
    %v5242 = vand.u32 %v5241, 4294901760
    %v5243 = vsub.f32 %v5241, %v5242
    %v5244 = vand.u32 %v5243, 4294901760
    %5245 = vmatmul.f32.gmra.mxu0 %v5244
    %v5246 = vpop.f32.mrf.mxu0
    %v5247 = vadd.f32 %v5206, %v5246
    %5248 = vdwg.mxu0
    %v5249 = vand.u32 %v3128, 4294901760
    %v5250 = vsub.f32 %v3128, %v5249
    %v5251 = vand.u32 %v5250, 4294901760
    %v5252 = vsub.f32 %v5250, %v5251
    %v5253 = vand.u32 %v5252, 4294901760
    %5254 = vmatpush.msra.mxu0 %v5253
    %v5255 = vand.u32 %v3126, 4294901760
    %v5256 = vsub.f32 %v3126, %v5255
    %v5257 = vand.u32 %v5256, 4294901760
    %v5258 = vsub.f32 %v5256, %v5257
    %v5259 = vand.u32 %v5258, 4294901760
    %5260 = vmatpush.msra.mxu0 %v5259
    %v5261 = vand.u32 %v3124, 4294901760
    %v5262 = vsub.f32 %v3124, %v5261
    %v5263 = vand.u32 %v5262, 4294901760
    %v5264 = vsub.f32 %v5262, %v5263
    %v5265 = vand.u32 %v5264, 4294901760
    %5266 = vmatpush.msra.mxu0 %v5265
    %v5267 = vand.u32 %v3122, 4294901760
    %v5268 = vsub.f32 %v3122, %v5267
    %v5269 = vand.u32 %v5268, 4294901760
    %v5270 = vsub.f32 %v5268, %v5269
    %v5271 = vand.u32 %v5270, 4294901760
    %5272 = vmatpush.msra.mxu0 %v5271
    %v5273 = vand.u32 %v3120, 4294901760
    %v5274 = vsub.f32 %v3120, %v5273
    %v5275 = vand.u32 %v5274, 4294901760
    %v5276 = vsub.f32 %v5274, %v5275
    %v5277 = vand.u32 %v5276, 4294901760
    %5278 = vmatpush.msra.mxu0 %v5277
    %v5279 = vand.u32 %v3118, 4294901760
    %v5280 = vsub.f32 %v3118, %v5279
    %v5281 = vand.u32 %v5280, 4294901760
    %v5282 = vsub.f32 %v5280, %v5281
    %v5283 = vand.u32 %v5282, 4294901760
    %5284 = vmatpush.msra.mxu0 %v5283
    %v5285 = vand.u32 %v3116, 4294901760
    %v5286 = vsub.f32 %v3116, %v5285
    %v5287 = vand.u32 %v5286, 4294901760
    %v5288 = vsub.f32 %v5286, %v5287
    %v5289 = vand.u32 %v5288, 4294901760
    %5290 = vmatpush.msra.mxu0 %v5289
    %v5291 = vand.u32 %v3114, 4294901760
    %v5292 = vsub.f32 %v3114, %v5291
    %v5293 = vand.u32 %v5292, 4294901760
    %v5294 = vsub.f32 %v5292, %v5293
    %v5295 = vand.u32 %v5294, 4294901760
    %5296 = vmatpush.msra.mxu0 %v5295
    %v5297 = vand.u32 %v3112, 4294901760
    %v5298 = vsub.f32 %v3112, %v5297
    %v5299 = vand.u32 %v5298, 4294901760
    %v5300 = vsub.f32 %v5298, %v5299
    %v5301 = vand.u32 %v5300, 4294901760
    %5302 = vmatpush.msra.mxu0 %v5301
    %v5303 = vand.u32 %v3110, 4294901760
    %v5304 = vsub.f32 %v3110, %v5303
    %v5305 = vand.u32 %v5304, 4294901760
    %v5306 = vsub.f32 %v5304, %v5305
    %v5307 = vand.u32 %v5306, 4294901760
    %5308 = vmatpush.msra.mxu0 %v5307
    %v5309 = vand.u32 %v3108, 4294901760
    %v5310 = vsub.f32 %v3108, %v5309
    %v5311 = vand.u32 %v5310, 4294901760
    %v5312 = vsub.f32 %v5310, %v5311
    %v5313 = vand.u32 %v5312, 4294901760
    %5314 = vmatpush.msra.mxu0 %v5313
    %v5315 = vand.u32 %v3106, 4294901760
    %v5316 = vsub.f32 %v3106, %v5315
    %v5317 = vand.u32 %v5316, 4294901760
    %v5318 = vsub.f32 %v5316, %v5317
    %v5319 = vand.u32 %v5318, 4294901760
    %5320 = vmatpush.msra.mxu0 %v5319
    %v5321 = vand.u32 %v3104, 4294901760
    %v5322 = vsub.f32 %v3104, %v5321
    %v5323 = vand.u32 %v5322, 4294901760
    %v5324 = vsub.f32 %v5322, %v5323
    %v5325 = vand.u32 %v5324, 4294901760
    %5326 = vmatpush.msra.mxu0 %v5325
    %v5327 = vand.u32 %v3102, 4294901760
    %v5328 = vsub.f32 %v3102, %v5327
    %v5329 = vand.u32 %v5328, 4294901760
    %v5330 = vsub.f32 %v5328, %v5329
    %v5331 = vand.u32 %v5330, 4294901760
    %5332 = vmatpush.msra.mxu0 %v5331
    %v5333 = vand.u32 %v3100, 4294901760
    %v5334 = vsub.f32 %v3100, %v5333
    %v5335 = vand.u32 %v5334, 4294901760
    %v5336 = vsub.f32 %v5334, %v5335
    %v5337 = vand.u32 %v5336, 4294901760
    %5338 = vmatpush.msra.mxu0 %v5337
    %v5339 = vand.u32 %v3098, 4294901760
    %v5340 = vsub.f32 %v3098, %v5339
    %v5341 = vand.u32 %v5340, 4294901760
    %v5342 = vsub.f32 %v5340, %v5341
    %v5343 = vand.u32 %v5342, 4294901760
    %5344 = vmatpush.msra.mxu0 %v5343
    %v5345 = vand.u32 %v2904, 4294901760
    %5346 = vmatmul.f32.gmra.mxu0 %v5345
    %v5347 = vpop.f32.mrf.mxu0
    %v5348 = vadd.f32 %v5247, %v5347
    %5349 = vdwg.mxu0
    %v5350 = vand.u32 %v3128, 4294901760
    %v5351 = vsub.f32 %v3128, %v5350
    %5352 = vmatpush.msra.mxu0 %v5351
    %v5353 = vand.u32 %v3126, 4294901760
    %v5354 = vsub.f32 %v3126, %v5353
    %5355 = vmatpush.msra.mxu0 %v5354
    %v5356 = vand.u32 %v3124, 4294901760
    %v5357 = vsub.f32 %v3124, %v5356
    %5358 = vmatpush.msra.mxu0 %v5357
    %v5359 = vand.u32 %v3122, 4294901760
    %v5360 = vsub.f32 %v3122, %v5359
    %5361 = vmatpush.msra.mxu0 %v5360
    %v5362 = vand.u32 %v3120, 4294901760
    %v5363 = vsub.f32 %v3120, %v5362
    %5364 = vmatpush.msra.mxu0 %v5363
    %v5365 = vand.u32 %v3118, 4294901760
    %v5366 = vsub.f32 %v3118, %v5365
    %5367 = vmatpush.msra.mxu0 %v5366
    %v5368 = vand.u32 %v3116, 4294901760
    %v5369 = vsub.f32 %v3116, %v5368
    %5370 = vmatpush.msra.mxu0 %v5369
    %v5371 = vand.u32 %v3114, 4294901760
    %v5372 = vsub.f32 %v3114, %v5371
    %5373 = vmatpush.msra.mxu0 %v5372
    %v5374 = vand.u32 %v3112, 4294901760
    %v5375 = vsub.f32 %v3112, %v5374
    %5376 = vmatpush.msra.mxu0 %v5375
    %v5377 = vand.u32 %v3110, 4294901760
    %v5378 = vsub.f32 %v3110, %v5377
    %5379 = vmatpush.msra.mxu0 %v5378
    %v5380 = vand.u32 %v3108, 4294901760
    %v5381 = vsub.f32 %v3108, %v5380
    %5382 = vmatpush.msra.mxu0 %v5381
    %v5383 = vand.u32 %v3106, 4294901760
    %v5384 = vsub.f32 %v3106, %v5383
    %5385 = vmatpush.msra.mxu0 %v5384
    %v5386 = vand.u32 %v3104, 4294901760
    %v5387 = vsub.f32 %v3104, %v5386
    %5388 = vmatpush.msra.mxu0 %v5387
    %v5389 = vand.u32 %v3102, 4294901760
    %v5390 = vsub.f32 %v3102, %v5389
    %5391 = vmatpush.msra.mxu0 %v5390
    %v5392 = vand.u32 %v3100, 4294901760
    %v5393 = vsub.f32 %v3100, %v5392
    %5394 = vmatpush.msra.mxu0 %v5393
    %v5395 = vand.u32 %v3098, 4294901760
    %v5396 = vsub.f32 %v3098, %v5395
    %5397 = vmatpush.msra.mxu0 %v5396
    %v5398 = vand.u32 %v2904, 4294901760
    %v5399 = vsub.f32 %v2904, %v5398
    %5400 = vmatmul.f32.gmra.mxu0 %v5399
    %v5401 = vpop.f32.mrf.mxu0
    %v5402 = vadd.f32 %v5348, %v5401
    %5403 = vdwg.mxu0
    %v5404 = vand.u32 %v3128, 4294901760
    %5405 = vmatpush.msra.mxu0 %v5404
    %v5406 = vand.u32 %v3126, 4294901760
    %5407 = vmatpush.msra.mxu0 %v5406
    %v5408 = vand.u32 %v3124, 4294901760
    %5409 = vmatpush.msra.mxu0 %v5408
    %v5410 = vand.u32 %v3122, 4294901760
    %5411 = vmatpush.msra.mxu0 %v5410
    %v5412 = vand.u32 %v3120, 4294901760
    %5413 = vmatpush.msra.mxu0 %v5412
    %v5414 = vand.u32 %v3118, 4294901760
    %5415 = vmatpush.msra.mxu0 %v5414
    %v5416 = vand.u32 %v3116, 4294901760
    %5417 = vmatpush.msra.mxu0 %v5416
    %v5418 = vand.u32 %v3114, 4294901760
    %5419 = vmatpush.msra.mxu0 %v5418
    %v5420 = vand.u32 %v3112, 4294901760
    %5421 = vmatpush.msra.mxu0 %v5420
    %v5422 = vand.u32 %v3110, 4294901760
    %5423 = vmatpush.msra.mxu0 %v5422
    %v5424 = vand.u32 %v3108, 4294901760
    %5425 = vmatpush.msra.mxu0 %v5424
    %v5426 = vand.u32 %v3106, 4294901760
    %5427 = vmatpush.msra.mxu0 %v5426
    %v5428 = vand.u32 %v3104, 4294901760
    %5429 = vmatpush.msra.mxu0 %v5428
    %v5430 = vand.u32 %v3102, 4294901760
    %5431 = vmatpush.msra.mxu0 %v5430
    %v5432 = vand.u32 %v3100, 4294901760
    %5433 = vmatpush.msra.mxu0 %v5432
    %v5434 = vand.u32 %v3098, 4294901760
    %5435 = vmatpush.msra.mxu0 %v5434
    %v5436 = vand.u32 %v2904, 4294901760
    %v5437 = vsub.f32 %v2904, %v5436
    %v5438 = vand.u32 %v5437, 4294901760
    %5439 = vmatmul.f32.gmra.mxu0 %v5438
    %v5440 = vpop.f32.mrf.mxu0
    %v5441 = vadd.f32 %v5402, %v5440
    %5442 = vdwg.mxu0
    %v5443 = vand.u32 %v3128, 4294901760
    %v5444 = vsub.f32 %v3128, %v5443
    %v5445 = vand.u32 %v5444, 4294901760
    %5446 = vmatpush.msra.mxu0 %v5445
    %v5447 = vand.u32 %v3126, 4294901760
    %v5448 = vsub.f32 %v3126, %v5447
    %v5449 = vand.u32 %v5448, 4294901760
    %5450 = vmatpush.msra.mxu0 %v5449
    %v5451 = vand.u32 %v3124, 4294901760
    %v5452 = vsub.f32 %v3124, %v5451
    %v5453 = vand.u32 %v5452, 4294901760
    %5454 = vmatpush.msra.mxu0 %v5453
    %v5455 = vand.u32 %v3122, 4294901760
    %v5456 = vsub.f32 %v3122, %v5455
    %v5457 = vand.u32 %v5456, 4294901760
    %5458 = vmatpush.msra.mxu0 %v5457
    %v5459 = vand.u32 %v3120, 4294901760
    %v5460 = vsub.f32 %v3120, %v5459
    %v5461 = vand.u32 %v5460, 4294901760
    %5462 = vmatpush.msra.mxu0 %v5461
    %v5463 = vand.u32 %v3118, 4294901760
    %v5464 = vsub.f32 %v3118, %v5463
    %v5465 = vand.u32 %v5464, 4294901760
    %5466 = vmatpush.msra.mxu0 %v5465
    %v5467 = vand.u32 %v3116, 4294901760
    %v5468 = vsub.f32 %v3116, %v5467
    %v5469 = vand.u32 %v5468, 4294901760
    %5470 = vmatpush.msra.mxu0 %v5469
    %v5471 = vand.u32 %v3114, 4294901760
    %v5472 = vsub.f32 %v3114, %v5471
    %v5473 = vand.u32 %v5472, 4294901760
    %5474 = vmatpush.msra.mxu0 %v5473
    %v5475 = vand.u32 %v3112, 4294901760
    %v5476 = vsub.f32 %v3112, %v5475
    %v5477 = vand.u32 %v5476, 4294901760
    %5478 = vmatpush.msra.mxu0 %v5477
    %v5479 = vand.u32 %v3110, 4294901760
    %v5480 = vsub.f32 %v3110, %v5479
    %v5481 = vand.u32 %v5480, 4294901760
    %5482 = vmatpush.msra.mxu0 %v5481
    %v5483 = vand.u32 %v3108, 4294901760
    %v5484 = vsub.f32 %v3108, %v5483
    %v5485 = vand.u32 %v5484, 4294901760
    %5486 = vmatpush.msra.mxu0 %v5485
    %v5487 = vand.u32 %v3106, 4294901760
    %v5488 = vsub.f32 %v3106, %v5487
    %v5489 = vand.u32 %v5488, 4294901760
    %5490 = vmatpush.msra.mxu0 %v5489
    %v5491 = vand.u32 %v3104, 4294901760
    %v5492 = vsub.f32 %v3104, %v5491
    %v5493 = vand.u32 %v5492, 4294901760
    %5494 = vmatpush.msra.mxu0 %v5493
    %v5495 = vand.u32 %v3102, 4294901760
    %v5496 = vsub.f32 %v3102, %v5495
    %v5497 = vand.u32 %v5496, 4294901760
    %5498 = vmatpush.msra.mxu0 %v5497
    %v5499 = vand.u32 %v3100, 4294901760
    %v5500 = vsub.f32 %v3100, %v5499
    %v5501 = vand.u32 %v5500, 4294901760
    %5502 = vmatpush.msra.mxu0 %v5501
    %v5503 = vand.u32 %v3098, 4294901760
    %v5504 = vsub.f32 %v3098, %v5503
    %v5505 = vand.u32 %v5504, 4294901760
    %5506 = vmatpush.msra.mxu0 %v5505
    %v5507 = vand.u32 %v2904, 4294901760
    %5508 = vmatmul.f32.gmra.mxu0 %v5507
    %v5509 = vpop.f32.mrf.mxu0
    %v5510 = vadd.f32 %v5441, %v5509
    %5511 = vdwg.mxu0
    %v5512 = vand.u32 %v3128, 4294901760
    %5513 = vmatpush.msra.mxu0 %v5512
    %v5514 = vand.u32 %v3126, 4294901760
    %5515 = vmatpush.msra.mxu0 %v5514
    %v5516 = vand.u32 %v3124, 4294901760
    %5517 = vmatpush.msra.mxu0 %v5516
    %v5518 = vand.u32 %v3122, 4294901760
    %5519 = vmatpush.msra.mxu0 %v5518
    %v5520 = vand.u32 %v3120, 4294901760
    %5521 = vmatpush.msra.mxu0 %v5520
    %v5522 = vand.u32 %v3118, 4294901760
    %5523 = vmatpush.msra.mxu0 %v5522
    %v5524 = vand.u32 %v3116, 4294901760
    %5525 = vmatpush.msra.mxu0 %v5524
    %v5526 = vand.u32 %v3114, 4294901760
    %5527 = vmatpush.msra.mxu0 %v5526
    %v5528 = vand.u32 %v3112, 4294901760
    %5529 = vmatpush.msra.mxu0 %v5528
    %v5530 = vand.u32 %v3110, 4294901760
    %5531 = vmatpush.msra.mxu0 %v5530
    %v5532 = vand.u32 %v3108, 4294901760
    %5533 = vmatpush.msra.mxu0 %v5532
    %v5534 = vand.u32 %v3106, 4294901760
    %5535 = vmatpush.msra.mxu0 %v5534
    %v5536 = vand.u32 %v3104, 4294901760
    %5537 = vmatpush.msra.mxu0 %v5536
    %v5538 = vand.u32 %v3102, 4294901760
    %5539 = vmatpush.msra.mxu0 %v5538
    %v5540 = vand.u32 %v3100, 4294901760
    %5541 = vmatpush.msra.mxu0 %v5540
    %v5542 = vand.u32 %v3098, 4294901760
    %5543 = vmatpush.msra.mxu0 %v5542
    %v5544 = vand.u32 %v2904, 4294901760
    %5545 = vmatmul.f32.gmra.mxu0 %v5544
    %v5546 = vpop.f32.mrf.mxu0
    %v5547 = vadd.f32 %v5510, %v5546
    %5548 = vdwg.mxu0
    %v5549 = vand.u32 %v3160, 4294901760
    %5550 = vmatpush.msra.mxu0 %v5549
    %v5551 = vand.u32 %v3158, 4294901760
    %5552 = vmatpush.msra.mxu0 %v5551
    %v5553 = vand.u32 %v3156, 4294901760
    %5554 = vmatpush.msra.mxu0 %v5553
    %v5555 = vand.u32 %v3154, 4294901760
    %5556 = vmatpush.msra.mxu0 %v5555
    %v5557 = vand.u32 %v3152, 4294901760
    %5558 = vmatpush.msra.mxu0 %v5557
    %v5559 = vand.u32 %v3150, 4294901760
    %5560 = vmatpush.msra.mxu0 %v5559
    %v5561 = vand.u32 %v3148, 4294901760
    %5562 = vmatpush.msra.mxu0 %v5561
    %v5563 = vand.u32 %v3146, 4294901760
    %5564 = vmatpush.msra.mxu0 %v5563
    %v5565 = vand.u32 %v3144, 4294901760
    %5566 = vmatpush.msra.mxu0 %v5565
    %v5567 = vand.u32 %v3142, 4294901760
    %5568 = vmatpush.msra.mxu0 %v5567
    %v5569 = vand.u32 %v3140, 4294901760
    %5570 = vmatpush.msra.mxu0 %v5569
    %v5571 = vand.u32 %v3138, 4294901760
    %5572 = vmatpush.msra.mxu0 %v5571
    %v5573 = vand.u32 %v3136, 4294901760
    %5574 = vmatpush.msra.mxu0 %v5573
    %v5575 = vand.u32 %v3134, 4294901760
    %5576 = vmatpush.msra.mxu0 %v5575
    %v5577 = vand.u32 %v3132, 4294901760
    %5578 = vmatpush.msra.mxu0 %v5577
    %v5579 = vand.u32 %v3130, 4294901760
    %5580 = vmatpush.msra.mxu0 %v5579
    %v5581 = vand.u32 %v2905, 4294901760
    %v5582 = vsub.f32 %v2905, %v5581
    %v5583 = vand.u32 %v5582, 4294901760
    %v5584 = vsub.f32 %v5582, %v5583
    %v5585 = vand.u32 %v5584, 4294901760
    %5586 = vmatmul.f32.gmra.mxu0 %v5585
    %v5587 = vpop.f32.mrf.mxu0
    %v5588 = vadd.f32 %v5547, %v5587
    %5589 = vdwg.mxu0
    %v5590 = vand.u32 %v3160, 4294901760
    %v5591 = vsub.f32 %v3160, %v5590
    %v5592 = vand.u32 %v5591, 4294901760
    %v5593 = vsub.f32 %v5591, %v5592
    %v5594 = vand.u32 %v5593, 4294901760
    %5595 = vmatpush.msra.mxu0 %v5594
    %v5596 = vand.u32 %v3158, 4294901760
    %v5597 = vsub.f32 %v3158, %v5596
    %v5598 = vand.u32 %v5597, 4294901760
    %v5599 = vsub.f32 %v5597, %v5598
    %v5600 = vand.u32 %v5599, 4294901760
    %5601 = vmatpush.msra.mxu0 %v5600
    %v5602 = vand.u32 %v3156, 4294901760
    %v5603 = vsub.f32 %v3156, %v5602
    %v5604 = vand.u32 %v5603, 4294901760
    %v5605 = vsub.f32 %v5603, %v5604
    %v5606 = vand.u32 %v5605, 4294901760
    %5607 = vmatpush.msra.mxu0 %v5606
    %v5608 = vand.u32 %v3154, 4294901760
    %v5609 = vsub.f32 %v3154, %v5608
    %v5610 = vand.u32 %v5609, 4294901760
    %v5611 = vsub.f32 %v5609, %v5610
    %v5612 = vand.u32 %v5611, 4294901760
    %5613 = vmatpush.msra.mxu0 %v5612
    %v5614 = vand.u32 %v3152, 4294901760
    %v5615 = vsub.f32 %v3152, %v5614
    %v5616 = vand.u32 %v5615, 4294901760
    %v5617 = vsub.f32 %v5615, %v5616
    %v5618 = vand.u32 %v5617, 4294901760
    %5619 = vmatpush.msra.mxu0 %v5618
    %v5620 = vand.u32 %v3150, 4294901760
    %v5621 = vsub.f32 %v3150, %v5620
    %v5622 = vand.u32 %v5621, 4294901760
    %v5623 = vsub.f32 %v5621, %v5622
    %v5624 = vand.u32 %v5623, 4294901760
    %5625 = vmatpush.msra.mxu0 %v5624
    %v5626 = vand.u32 %v3148, 4294901760
    %v5627 = vsub.f32 %v3148, %v5626
    %v5628 = vand.u32 %v5627, 4294901760
    %v5629 = vsub.f32 %v5627, %v5628
    %v5630 = vand.u32 %v5629, 4294901760
    %5631 = vmatpush.msra.mxu0 %v5630
    %v5632 = vand.u32 %v3146, 4294901760
    %v5633 = vsub.f32 %v3146, %v5632
    %v5634 = vand.u32 %v5633, 4294901760
    %v5635 = vsub.f32 %v5633, %v5634
    %v5636 = vand.u32 %v5635, 4294901760
    %5637 = vmatpush.msra.mxu0 %v5636
    %v5638 = vand.u32 %v3144, 4294901760
    %v5639 = vsub.f32 %v3144, %v5638
    %v5640 = vand.u32 %v5639, 4294901760
    %v5641 = vsub.f32 %v5639, %v5640
    %v5642 = vand.u32 %v5641, 4294901760
    %5643 = vmatpush.msra.mxu0 %v5642
    %v5644 = vand.u32 %v3142, 4294901760
    %v5645 = vsub.f32 %v3142, %v5644
    %v5646 = vand.u32 %v5645, 4294901760
    %v5647 = vsub.f32 %v5645, %v5646
    %v5648 = vand.u32 %v5647, 4294901760
    %5649 = vmatpush.msra.mxu0 %v5648
    %v5650 = vand.u32 %v3140, 4294901760
    %v5651 = vsub.f32 %v3140, %v5650
    %v5652 = vand.u32 %v5651, 4294901760
    %v5653 = vsub.f32 %v5651, %v5652
    %v5654 = vand.u32 %v5653, 4294901760
    %5655 = vmatpush.msra.mxu0 %v5654
    %v5656 = vand.u32 %v3138, 4294901760
    %v5657 = vsub.f32 %v3138, %v5656
    %v5658 = vand.u32 %v5657, 4294901760
    %v5659 = vsub.f32 %v5657, %v5658
    %v5660 = vand.u32 %v5659, 4294901760
    %5661 = vmatpush.msra.mxu0 %v5660
    %v5662 = vand.u32 %v3136, 4294901760
    %v5663 = vsub.f32 %v3136, %v5662
    %v5664 = vand.u32 %v5663, 4294901760
    %v5665 = vsub.f32 %v5663, %v5664
    %v5666 = vand.u32 %v5665, 4294901760
    %5667 = vmatpush.msra.mxu0 %v5666
    %v5668 = vand.u32 %v3134, 4294901760
    %v5669 = vsub.f32 %v3134, %v5668
    %v5670 = vand.u32 %v5669, 4294901760
    %v5671 = vsub.f32 %v5669, %v5670
    %v5672 = vand.u32 %v5671, 4294901760
    %5673 = vmatpush.msra.mxu0 %v5672
    %v5674 = vand.u32 %v3132, 4294901760
    %v5675 = vsub.f32 %v3132, %v5674
    %v5676 = vand.u32 %v5675, 4294901760
    %v5677 = vsub.f32 %v5675, %v5676
    %v5678 = vand.u32 %v5677, 4294901760
    %5679 = vmatpush.msra.mxu0 %v5678
    %v5680 = vand.u32 %v3130, 4294901760
    %v5681 = vsub.f32 %v3130, %v5680
    %v5682 = vand.u32 %v5681, 4294901760
    %v5683 = vsub.f32 %v5681, %v5682
    %v5684 = vand.u32 %v5683, 4294901760
    %5685 = vmatpush.msra.mxu0 %v5684
    %v5686 = vand.u32 %v2905, 4294901760
    %5687 = vmatmul.f32.gmra.mxu0 %v5686
    %v5688 = vpop.f32.mrf.mxu0
    %v5689 = vadd.f32 %v5588, %v5688
    %5690 = vdwg.mxu0
    %v5691 = vand.u32 %v3160, 4294901760
    %v5692 = vsub.f32 %v3160, %v5691
    %5693 = vmatpush.msra.mxu0 %v5692
    %v5694 = vand.u32 %v3158, 4294901760
    %v5695 = vsub.f32 %v3158, %v5694
    %5696 = vmatpush.msra.mxu0 %v5695
    %v5697 = vand.u32 %v3156, 4294901760
    %v5698 = vsub.f32 %v3156, %v5697
    %5699 = vmatpush.msra.mxu0 %v5698
    %v5700 = vand.u32 %v3154, 4294901760
    %v5701 = vsub.f32 %v3154, %v5700
    %5702 = vmatpush.msra.mxu0 %v5701
    %v5703 = vand.u32 %v3152, 4294901760
    %v5704 = vsub.f32 %v3152, %v5703
    %5705 = vmatpush.msra.mxu0 %v5704
    %v5706 = vand.u32 %v3150, 4294901760
    %v5707 = vsub.f32 %v3150, %v5706
    %5708 = vmatpush.msra.mxu0 %v5707
    %v5709 = vand.u32 %v3148, 4294901760
    %v5710 = vsub.f32 %v3148, %v5709
    %5711 = vmatpush.msra.mxu0 %v5710
    %v5712 = vand.u32 %v3146, 4294901760
    %v5713 = vsub.f32 %v3146, %v5712
    %5714 = vmatpush.msra.mxu0 %v5713
    %v5715 = vand.u32 %v3144, 4294901760
    %v5716 = vsub.f32 %v3144, %v5715
    %5717 = vmatpush.msra.mxu0 %v5716
    %v5718 = vand.u32 %v3142, 4294901760
    %v5719 = vsub.f32 %v3142, %v5718
    %5720 = vmatpush.msra.mxu0 %v5719
    %v5721 = vand.u32 %v3140, 4294901760
    %v5722 = vsub.f32 %v3140, %v5721
    %5723 = vmatpush.msra.mxu0 %v5722
    %v5724 = vand.u32 %v3138, 4294901760
    %v5725 = vsub.f32 %v3138, %v5724
    %5726 = vmatpush.msra.mxu0 %v5725
    %v5727 = vand.u32 %v3136, 4294901760
    %v5728 = vsub.f32 %v3136, %v5727
    %5729 = vmatpush.msra.mxu0 %v5728
    %v5730 = vand.u32 %v3134, 4294901760
    %v5731 = vsub.f32 %v3134, %v5730
    %5732 = vmatpush.msra.mxu0 %v5731
    %v5733 = vand.u32 %v3132, 4294901760
    %v5734 = vsub.f32 %v3132, %v5733
    %5735 = vmatpush.msra.mxu0 %v5734
    %v5736 = vand.u32 %v3130, 4294901760
    %v5737 = vsub.f32 %v3130, %v5736
    %5738 = vmatpush.msra.mxu0 %v5737
    %v5739 = vand.u32 %v2905, 4294901760
    %v5740 = vsub.f32 %v2905, %v5739
    %5741 = vmatmul.f32.gmra.mxu0 %v5740
    %v5742 = vpop.f32.mrf.mxu0
    %v5743 = vadd.f32 %v5689, %v5742
    %5744 = vdwg.mxu0
    %v5745 = vand.u32 %v3160, 4294901760
    %5746 = vmatpush.msra.mxu0 %v5745
    %v5747 = vand.u32 %v3158, 4294901760
    %5748 = vmatpush.msra.mxu0 %v5747
    %v5749 = vand.u32 %v3156, 4294901760
    %5750 = vmatpush.msra.mxu0 %v5749
    %v5751 = vand.u32 %v3154, 4294901760
    %5752 = vmatpush.msra.mxu0 %v5751
    %v5753 = vand.u32 %v3152, 4294901760
    %5754 = vmatpush.msra.mxu0 %v5753
    %v5755 = vand.u32 %v3150, 4294901760
    %5756 = vmatpush.msra.mxu0 %v5755
    %v5757 = vand.u32 %v3148, 4294901760
    %5758 = vmatpush.msra.mxu0 %v5757
    %v5759 = vand.u32 %v3146, 4294901760
    %5760 = vmatpush.msra.mxu0 %v5759
    %v5761 = vand.u32 %v3144, 4294901760
    %5762 = vmatpush.msra.mxu0 %v5761
    %v5763 = vand.u32 %v3142, 4294901760
    %5764 = vmatpush.msra.mxu0 %v5763
    %v5765 = vand.u32 %v3140, 4294901760
    %5766 = vmatpush.msra.mxu0 %v5765
    %v5767 = vand.u32 %v3138, 4294901760
    %5768 = vmatpush.msra.mxu0 %v5767
    %v5769 = vand.u32 %v3136, 4294901760
    %5770 = vmatpush.msra.mxu0 %v5769
    %v5771 = vand.u32 %v3134, 4294901760
    %5772 = vmatpush.msra.mxu0 %v5771
    %v5773 = vand.u32 %v3132, 4294901760
    %5774 = vmatpush.msra.mxu0 %v5773
    %v5775 = vand.u32 %v3130, 4294901760
    %5776 = vmatpush.msra.mxu0 %v5775
    %v5777 = vand.u32 %v2905, 4294901760
    %v5778 = vsub.f32 %v2905, %v5777
    %v5779 = vand.u32 %v5778, 4294901760
    %5780 = vmatmul.f32.gmra.mxu0 %v5779
    %v5781 = vpop.f32.mrf.mxu0
    %v5782 = vadd.f32 %v5743, %v5781
    %5783 = vdwg.mxu0
    %v5784 = vand.u32 %v3160, 4294901760
    %v5785 = vsub.f32 %v3160, %v5784
    %v5786 = vand.u32 %v5785, 4294901760
    %5787 = vmatpush.msra.mxu0 %v5786
    %v5788 = vand.u32 %v3158, 4294901760
    %v5789 = vsub.f32 %v3158, %v5788
    %v5790 = vand.u32 %v5789, 4294901760
    %5791 = vmatpush.msra.mxu0 %v5790
    %v5792 = vand.u32 %v3156, 4294901760
    %v5793 = vsub.f32 %v3156, %v5792
    %v5794 = vand.u32 %v5793, 4294901760
    %5795 = vmatpush.msra.mxu0 %v5794
    %v5796 = vand.u32 %v3154, 4294901760
    %v5797 = vsub.f32 %v3154, %v5796
    %v5798 = vand.u32 %v5797, 4294901760
    %5799 = vmatpush.msra.mxu0 %v5798
    %v5800 = vand.u32 %v3152, 4294901760
    %v5801 = vsub.f32 %v3152, %v5800
    %v5802 = vand.u32 %v5801, 4294901760
    %5803 = vmatpush.msra.mxu0 %v5802
    %v5804 = vand.u32 %v3150, 4294901760
    %v5805 = vsub.f32 %v3150, %v5804
    %v5806 = vand.u32 %v5805, 4294901760
    %5807 = vmatpush.msra.mxu0 %v5806
    %v5808 = vand.u32 %v3148, 4294901760
    %v5809 = vsub.f32 %v3148, %v5808
    %v5810 = vand.u32 %v5809, 4294901760
    %5811 = vmatpush.msra.mxu0 %v5810
    %v5812 = vand.u32 %v3146, 4294901760
    %v5813 = vsub.f32 %v3146, %v5812
    %v5814 = vand.u32 %v5813, 4294901760
    %5815 = vmatpush.msra.mxu0 %v5814
    %v5816 = vand.u32 %v3144, 4294901760
    %v5817 = vsub.f32 %v3144, %v5816
    %v5818 = vand.u32 %v5817, 4294901760
    %5819 = vmatpush.msra.mxu0 %v5818
    %v5820 = vand.u32 %v3142, 4294901760
    %v5821 = vsub.f32 %v3142, %v5820
    %v5822 = vand.u32 %v5821, 4294901760
    %5823 = vmatpush.msra.mxu0 %v5822
    %v5824 = vand.u32 %v3140, 4294901760
    %v5825 = vsub.f32 %v3140, %v5824
    %v5826 = vand.u32 %v5825, 4294901760
    %5827 = vmatpush.msra.mxu0 %v5826
    %v5828 = vand.u32 %v3138, 4294901760
    %v5829 = vsub.f32 %v3138, %v5828
    %v5830 = vand.u32 %v5829, 4294901760
    %5831 = vmatpush.msra.mxu0 %v5830
    %v5832 = vand.u32 %v3136, 4294901760
    %v5833 = vsub.f32 %v3136, %v5832
    %v5834 = vand.u32 %v5833, 4294901760
    %5835 = vmatpush.msra.mxu0 %v5834
    %v5836 = vand.u32 %v3134, 4294901760
    %v5837 = vsub.f32 %v3134, %v5836
    %v5838 = vand.u32 %v5837, 4294901760
    %5839 = vmatpush.msra.mxu0 %v5838
    %v5840 = vand.u32 %v3132, 4294901760
    %v5841 = vsub.f32 %v3132, %v5840
    %v5842 = vand.u32 %v5841, 4294901760
    %5843 = vmatpush.msra.mxu0 %v5842
    %v5844 = vand.u32 %v3130, 4294901760
    %v5845 = vsub.f32 %v3130, %v5844
    %v5846 = vand.u32 %v5845, 4294901760
    %5847 = vmatpush.msra.mxu0 %v5846
    %v5848 = vand.u32 %v2905, 4294901760
    %5849 = vmatmul.f32.gmra.mxu0 %v5848
    %v5850 = vpop.f32.mrf.mxu0
    %v5851 = vadd.f32 %v5782, %v5850
    %5852 = vdwg.mxu0
    %v5853 = vand.u32 %v3160, 4294901760
    %5854 = vmatpush.msra.mxu0 %v5853
    %v5855 = vand.u32 %v3158, 4294901760
    %5856 = vmatpush.msra.mxu0 %v5855
    %v5857 = vand.u32 %v3156, 4294901760
    %5858 = vmatpush.msra.mxu0 %v5857
    %v5859 = vand.u32 %v3154, 4294901760
    %5860 = vmatpush.msra.mxu0 %v5859
    %v5861 = vand.u32 %v3152, 4294901760
    %5862 = vmatpush.msra.mxu0 %v5861
    %v5863 = vand.u32 %v3150, 4294901760
    %5864 = vmatpush.msra.mxu0 %v5863
    %v5865 = vand.u32 %v3148, 4294901760
    %5866 = vmatpush.msra.mxu0 %v5865
    %v5867 = vand.u32 %v3146, 4294901760
    %5868 = vmatpush.msra.mxu0 %v5867
    %v5869 = vand.u32 %v3144, 4294901760
    %5870 = vmatpush.msra.mxu0 %v5869
    %v5871 = vand.u32 %v3142, 4294901760
    %5872 = vmatpush.msra.mxu0 %v5871
    %v5873 = vand.u32 %v3140, 4294901760
    %5874 = vmatpush.msra.mxu0 %v5873
    %v5875 = vand.u32 %v3138, 4294901760
    %5876 = vmatpush.msra.mxu0 %v5875
    %v5877 = vand.u32 %v3136, 4294901760
    %5878 = vmatpush.msra.mxu0 %v5877
    %v5879 = vand.u32 %v3134, 4294901760
    %5880 = vmatpush.msra.mxu0 %v5879
    %v5881 = vand.u32 %v3132, 4294901760
    %5882 = vmatpush.msra.mxu0 %v5881
    %v5883 = vand.u32 %v3130, 4294901760
    %5884 = vmatpush.msra.mxu0 %v5883
    %v5885 = vand.u32 %v2905, 4294901760
    %5886 = vmatmul.f32.gmra.mxu0 %v5885
    %v5887 = vpop.f32.mrf.mxu0
    %v5888 = vadd.f32 %v5851, %v5887
    %5889 = vdwg.mxu0
    %v5890 = vand.u32 %v2937, 4294901760
    %5891 = vmatpush.msra.mxu0 %v5890
    %v5892 = vand.u32 %v2935, 4294901760
    %5893 = vmatpush.msra.mxu0 %v5892
    %v5894 = vand.u32 %v2933, 4294901760
    %5895 = vmatpush.msra.mxu0 %v5894
    %v5896 = vand.u32 %v2931, 4294901760
    %5897 = vmatpush.msra.mxu0 %v5896
    %v5898 = vand.u32 %v2929, 4294901760
    %5899 = vmatpush.msra.mxu0 %v5898
    %v5900 = vand.u32 %v2927, 4294901760
    %5901 = vmatpush.msra.mxu0 %v5900
    %v5902 = vand.u32 %v2925, 4294901760
    %5903 = vmatpush.msra.mxu0 %v5902
    %v5904 = vand.u32 %v2923, 4294901760
    %5905 = vmatpush.msra.mxu0 %v5904
    %v5906 = vand.u32 %v2921, 4294901760
    %5907 = vmatpush.msra.mxu0 %v5906
    %v5908 = vand.u32 %v2919, 4294901760
    %5909 = vmatpush.msra.mxu0 %v5908
    %v5910 = vand.u32 %v2917, 4294901760
    %5911 = vmatpush.msra.mxu0 %v5910
    %v5912 = vand.u32 %v2915, 4294901760
    %5913 = vmatpush.msra.mxu0 %v5912
    %v5914 = vand.u32 %v2913, 4294901760
    %5915 = vmatpush.msra.mxu0 %v5914
    %v5916 = vand.u32 %v2911, 4294901760
    %5917 = vmatpush.msra.mxu0 %v5916
    %v5918 = vand.u32 %v2909, 4294901760
    %5919 = vmatpush.msra.mxu0 %v5918
    %v5920 = vand.u32 %v2907, 4294901760
    %5921 = vmatpush.msra.mxu0 %v5920
    %v5922 = vand.u32 %v2898, 4294901760
    %v5923 = vsub.f32 %v2898, %v5922
    %v5924 = vand.u32 %v5923, 4294901760
    %v5925 = vsub.f32 %v5923, %v5924
    %v5926 = vand.u32 %v5925, 4294901760
    %5927 = vmatmul.f32.gmra.mxu0 %v5926
    %v5928 = vpop.f32.mrf.mxu0
    %v5929 = vadd.f32 0.0, %v5928
    %5930 = vdwg.mxu0
    %v5931 = vand.u32 %v2937, 4294901760
    %v5932 = vsub.f32 %v2937, %v5931
    %v5933 = vand.u32 %v5932, 4294901760
    %v5934 = vsub.f32 %v5932, %v5933
    %v5935 = vand.u32 %v5934, 4294901760
    %5936 = vmatpush.msra.mxu0 %v5935
    %v5937 = vand.u32 %v2935, 4294901760
    %v5938 = vsub.f32 %v2935, %v5937
    %v5939 = vand.u32 %v5938, 4294901760
    %v5940 = vsub.f32 %v5938, %v5939
    %v5941 = vand.u32 %v5940, 4294901760
    %5942 = vmatpush.msra.mxu0 %v5941
    %v5943 = vand.u32 %v2933, 4294901760
    %v5944 = vsub.f32 %v2933, %v5943
    %v5945 = vand.u32 %v5944, 4294901760
    %v5946 = vsub.f32 %v5944, %v5945
    %v5947 = vand.u32 %v5946, 4294901760
    %5948 = vmatpush.msra.mxu0 %v5947
    %v5949 = vand.u32 %v2931, 4294901760
    %v5950 = vsub.f32 %v2931, %v5949
    %v5951 = vand.u32 %v5950, 4294901760
    %v5952 = vsub.f32 %v5950, %v5951
    %v5953 = vand.u32 %v5952, 4294901760
    %5954 = vmatpush.msra.mxu0 %v5953
    %v5955 = vand.u32 %v2929, 4294901760
    %v5956 = vsub.f32 %v2929, %v5955
    %v5957 = vand.u32 %v5956, 4294901760
    %v5958 = vsub.f32 %v5956, %v5957
    %v5959 = vand.u32 %v5958, 4294901760
    %5960 = vmatpush.msra.mxu0 %v5959
    %v5961 = vand.u32 %v2927, 4294901760
    %v5962 = vsub.f32 %v2927, %v5961
    %v5963 = vand.u32 %v5962, 4294901760
    %v5964 = vsub.f32 %v5962, %v5963
    %v5965 = vand.u32 %v5964, 4294901760
    %5966 = vmatpush.msra.mxu0 %v5965
    %v5967 = vand.u32 %v2925, 4294901760
    %v5968 = vsub.f32 %v2925, %v5967
    %v5969 = vand.u32 %v5968, 4294901760
    %v5970 = vsub.f32 %v5968, %v5969
    %v5971 = vand.u32 %v5970, 4294901760
    %5972 = vmatpush.msra.mxu0 %v5971
    %v5973 = vand.u32 %v2923, 4294901760
    %v5974 = vsub.f32 %v2923, %v5973
    %v5975 = vand.u32 %v5974, 4294901760
    %v5976 = vsub.f32 %v5974, %v5975
    %v5977 = vand.u32 %v5976, 4294901760
    %5978 = vmatpush.msra.mxu0 %v5977
    %v5979 = vand.u32 %v2921, 4294901760
    %v5980 = vsub.f32 %v2921, %v5979
    %v5981 = vand.u32 %v5980, 4294901760
    %v5982 = vsub.f32 %v5980, %v5981
    %v5983 = vand.u32 %v5982, 4294901760
    %5984 = vmatpush.msra.mxu0 %v5983
    %v5985 = vand.u32 %v2919, 4294901760
    %v5986 = vsub.f32 %v2919, %v5985
    %v5987 = vand.u32 %v5986, 4294901760
    %v5988 = vsub.f32 %v5986, %v5987
    %v5989 = vand.u32 %v5988, 4294901760
    %5990 = vmatpush.msra.mxu0 %v5989
    %v5991 = vand.u32 %v2917, 4294901760
    %v5992 = vsub.f32 %v2917, %v5991
    %v5993 = vand.u32 %v5992, 4294901760
    %v5994 = vsub.f32 %v5992, %v5993
    %v5995 = vand.u32 %v5994, 4294901760
    %5996 = vmatpush.msra.mxu0 %v5995
    %v5997 = vand.u32 %v2915, 4294901760
    %v5998 = vsub.f32 %v2915, %v5997
    %v5999 = vand.u32 %v5998, 4294901760
    %v6000 = vsub.f32 %v5998, %v5999
    %v6001 = vand.u32 %v6000, 4294901760
    %6002 = vmatpush.msra.mxu0 %v6001
    %v6003 = vand.u32 %v2913, 4294901760
    %v6004 = vsub.f32 %v2913, %v6003
    %v6005 = vand.u32 %v6004, 4294901760
    %v6006 = vsub.f32 %v6004, %v6005
    %v6007 = vand.u32 %v6006, 4294901760
    %6008 = vmatpush.msra.mxu0 %v6007
    %v6009 = vand.u32 %v2911, 4294901760
    %v6010 = vsub.f32 %v2911, %v6009
    %v6011 = vand.u32 %v6010, 4294901760
    %v6012 = vsub.f32 %v6010, %v6011
    %v6013 = vand.u32 %v6012, 4294901760
    %6014 = vmatpush.msra.mxu0 %v6013
    %v6015 = vand.u32 %v2909, 4294901760
    %v6016 = vsub.f32 %v2909, %v6015
    %v6017 = vand.u32 %v6016, 4294901760
    %v6018 = vsub.f32 %v6016, %v6017
    %v6019 = vand.u32 %v6018, 4294901760
    %6020 = vmatpush.msra.mxu0 %v6019
    %v6021 = vand.u32 %v2907, 4294901760
    %v6022 = vsub.f32 %v2907, %v6021
    %v6023 = vand.u32 %v6022, 4294901760
    %v6024 = vsub.f32 %v6022, %v6023
    %v6025 = vand.u32 %v6024, 4294901760
    %6026 = vmatpush.msra.mxu0 %v6025
    %v6027 = vand.u32 %v2898, 4294901760
    %6028 = vmatmul.f32.gmra.mxu0 %v6027
    %v6029 = vpop.f32.mrf.mxu0
    %v6030 = vadd.f32 %v5929, %v6029
    %6031 = vdwg.mxu0
    %v6032 = vand.u32 %v2937, 4294901760
    %v6033 = vsub.f32 %v2937, %v6032
    %6034 = vmatpush.msra.mxu0 %v6033
    %v6035 = vand.u32 %v2935, 4294901760
    %v6036 = vsub.f32 %v2935, %v6035
    %6037 = vmatpush.msra.mxu0 %v6036
    %v6038 = vand.u32 %v2933, 4294901760
    %v6039 = vsub.f32 %v2933, %v6038
    %6040 = vmatpush.msra.mxu0 %v6039
    %v6041 = vand.u32 %v2931, 4294901760
    %v6042 = vsub.f32 %v2931, %v6041
    %6043 = vmatpush.msra.mxu0 %v6042
    %v6044 = vand.u32 %v2929, 4294901760
    %v6045 = vsub.f32 %v2929, %v6044
    %6046 = vmatpush.msra.mxu0 %v6045
    %v6047 = vand.u32 %v2927, 4294901760
    %v6048 = vsub.f32 %v2927, %v6047
    %6049 = vmatpush.msra.mxu0 %v6048
    %v6050 = vand.u32 %v2925, 4294901760
    %v6051 = vsub.f32 %v2925, %v6050
    %6052 = vmatpush.msra.mxu0 %v6051
    %v6053 = vand.u32 %v2923, 4294901760
    %v6054 = vsub.f32 %v2923, %v6053
    %6055 = vmatpush.msra.mxu0 %v6054
    %v6056 = vand.u32 %v2921, 4294901760
    %v6057 = vsub.f32 %v2921, %v6056
    %6058 = vmatpush.msra.mxu0 %v6057
    %v6059 = vand.u32 %v2919, 4294901760
    %v6060 = vsub.f32 %v2919, %v6059
    %6061 = vmatpush.msra.mxu0 %v6060
    %v6062 = vand.u32 %v2917, 4294901760
    %v6063 = vsub.f32 %v2917, %v6062
    %6064 = vmatpush.msra.mxu0 %v6063
    %v6065 = vand.u32 %v2915, 4294901760
    %v6066 = vsub.f32 %v2915, %v6065
    %6067 = vmatpush.msra.mxu0 %v6066
    %v6068 = vand.u32 %v2913, 4294901760
    %v6069 = vsub.f32 %v2913, %v6068
    %6070 = vmatpush.msra.mxu0 %v6069
    %v6071 = vand.u32 %v2911, 4294901760
    %v6072 = vsub.f32 %v2911, %v6071
    %6073 = vmatpush.msra.mxu0 %v6072
    %v6074 = vand.u32 %v2909, 4294901760
    %v6075 = vsub.f32 %v2909, %v6074
    %6076 = vmatpush.msra.mxu0 %v6075
    %v6077 = vand.u32 %v2907, 4294901760
    %v6078 = vsub.f32 %v2907, %v6077
    %6079 = vmatpush.msra.mxu0 %v6078
    %v6080 = vand.u32 %v2898, 4294901760
    %v6081 = vsub.f32 %v2898, %v6080
    %6082 = vmatmul.f32.gmra.mxu0 %v6081
    %v6083 = vpop.f32.mrf.mxu0
    %v6084 = vadd.f32 %v6030, %v6083
    %6085 = vdwg.mxu0
    %v6086 = vand.u32 %v2937, 4294901760
    %6087 = vmatpush.msra.mxu0 %v6086
    %v6088 = vand.u32 %v2935, 4294901760
    %6089 = vmatpush.msra.mxu0 %v6088
    %v6090 = vand.u32 %v2933, 4294901760
    %6091 = vmatpush.msra.mxu0 %v6090
    %v6092 = vand.u32 %v2931, 4294901760
    %6093 = vmatpush.msra.mxu0 %v6092
    %v6094 = vand.u32 %v2929, 4294901760
    %6095 = vmatpush.msra.mxu0 %v6094
    %v6096 = vand.u32 %v2927, 4294901760
    %6097 = vmatpush.msra.mxu0 %v6096
    %v6098 = vand.u32 %v2925, 4294901760
    %6099 = vmatpush.msra.mxu0 %v6098
    %v6100 = vand.u32 %v2923, 4294901760
    %6101 = vmatpush.msra.mxu0 %v6100
    %v6102 = vand.u32 %v2921, 4294901760
    %6103 = vmatpush.msra.mxu0 %v6102
    %v6104 = vand.u32 %v2919, 4294901760
    %6105 = vmatpush.msra.mxu0 %v6104
    %v6106 = vand.u32 %v2917, 4294901760
    %6107 = vmatpush.msra.mxu0 %v6106
    %v6108 = vand.u32 %v2915, 4294901760
    %6109 = vmatpush.msra.mxu0 %v6108
    %v6110 = vand.u32 %v2913, 4294901760
    %6111 = vmatpush.msra.mxu0 %v6110
    %v6112 = vand.u32 %v2911, 4294901760
    %6113 = vmatpush.msra.mxu0 %v6112
    %v6114 = vand.u32 %v2909, 4294901760
    %6115 = vmatpush.msra.mxu0 %v6114
    %v6116 = vand.u32 %v2907, 4294901760
    %6117 = vmatpush.msra.mxu0 %v6116
    %v6118 = vand.u32 %v2898, 4294901760
    %v6119 = vsub.f32 %v2898, %v6118
    %v6120 = vand.u32 %v6119, 4294901760
    %6121 = vmatmul.f32.gmra.mxu0 %v6120
    %v6122 = vpop.f32.mrf.mxu0
    %v6123 = vadd.f32 %v6084, %v6122
    %6124 = vdwg.mxu0
    %v6125 = vand.u32 %v2937, 4294901760
    %v6126 = vsub.f32 %v2937, %v6125
    %v6127 = vand.u32 %v6126, 4294901760
    %6128 = vmatpush.msra.mxu0 %v6127
    %v6129 = vand.u32 %v2935, 4294901760
    %v6130 = vsub.f32 %v2935, %v6129
    %v6131 = vand.u32 %v6130, 4294901760
    %6132 = vmatpush.msra.mxu0 %v6131
    %v6133 = vand.u32 %v2933, 4294901760
    %v6134 = vsub.f32 %v2933, %v6133
    %v6135 = vand.u32 %v6134, 4294901760
    %6136 = vmatpush.msra.mxu0 %v6135
    %v6137 = vand.u32 %v2931, 4294901760
    %v6138 = vsub.f32 %v2931, %v6137
    %v6139 = vand.u32 %v6138, 4294901760
    %6140 = vmatpush.msra.mxu0 %v6139
    %v6141 = vand.u32 %v2929, 4294901760
    %v6142 = vsub.f32 %v2929, %v6141
    %v6143 = vand.u32 %v6142, 4294901760
    %6144 = vmatpush.msra.mxu0 %v6143
    %v6145 = vand.u32 %v2927, 4294901760
    %v6146 = vsub.f32 %v2927, %v6145
    %v6147 = vand.u32 %v6146, 4294901760
    %6148 = vmatpush.msra.mxu0 %v6147
    %v6149 = vand.u32 %v2925, 4294901760
    %v6150 = vsub.f32 %v2925, %v6149
    %v6151 = vand.u32 %v6150, 4294901760
    %6152 = vmatpush.msra.mxu0 %v6151
    %v6153 = vand.u32 %v2923, 4294901760
    %v6154 = vsub.f32 %v2923, %v6153
    %v6155 = vand.u32 %v6154, 4294901760
    %6156 = vmatpush.msra.mxu0 %v6155
    %v6157 = vand.u32 %v2921, 4294901760
    %v6158 = vsub.f32 %v2921, %v6157
    %v6159 = vand.u32 %v6158, 4294901760
    %6160 = vmatpush.msra.mxu0 %v6159
    %v6161 = vand.u32 %v2919, 4294901760
    %v6162 = vsub.f32 %v2919, %v6161
    %v6163 = vand.u32 %v6162, 4294901760
    %6164 = vmatpush.msra.mxu0 %v6163
    %v6165 = vand.u32 %v2917, 4294901760
    %v6166 = vsub.f32 %v2917, %v6165
    %v6167 = vand.u32 %v6166, 4294901760
    %6168 = vmatpush.msra.mxu0 %v6167
    %v6169 = vand.u32 %v2915, 4294901760
    %v6170 = vsub.f32 %v2915, %v6169
    %v6171 = vand.u32 %v6170, 4294901760
    %6172 = vmatpush.msra.mxu0 %v6171
    %v6173 = vand.u32 %v2913, 4294901760
    %v6174 = vsub.f32 %v2913, %v6173
    %v6175 = vand.u32 %v6174, 4294901760
    %6176 = vmatpush.msra.mxu0 %v6175
    %v6177 = vand.u32 %v2911, 4294901760
    %v6178 = vsub.f32 %v2911, %v6177
    %v6179 = vand.u32 %v6178, 4294901760
    %6180 = vmatpush.msra.mxu0 %v6179
    %v6181 = vand.u32 %v2909, 4294901760
    %v6182 = vsub.f32 %v2909, %v6181
    %v6183 = vand.u32 %v6182, 4294901760
    %6184 = vmatpush.msra.mxu0 %v6183
    %v6185 = vand.u32 %v2907, 4294901760
    %v6186 = vsub.f32 %v2907, %v6185
    %v6187 = vand.u32 %v6186, 4294901760
    %6188 = vmatpush.msra.mxu0 %v6187
    %v6189 = vand.u32 %v2898, 4294901760
    %6190 = vmatmul.f32.gmra.mxu0 %v6189
    %v6191 = vpop.f32.mrf.mxu0
    %v6192 = vadd.f32 %v6123, %v6191
    %6193 = vdwg.mxu0
    %v6194 = vand.u32 %v2937, 4294901760
    %6195 = vmatpush.msra.mxu0 %v6194
    %v6196 = vand.u32 %v2935, 4294901760
    %6197 = vmatpush.msra.mxu0 %v6196
    %v6198 = vand.u32 %v2933, 4294901760
    %6199 = vmatpush.msra.mxu0 %v6198
    %v6200 = vand.u32 %v2931, 4294901760
    %6201 = vmatpush.msra.mxu0 %v6200
    %v6202 = vand.u32 %v2929, 4294901760
    %6203 = vmatpush.msra.mxu0 %v6202
    %v6204 = vand.u32 %v2927, 4294901760
    %6205 = vmatpush.msra.mxu0 %v6204
    %v6206 = vand.u32 %v2925, 4294901760
    %6207 = vmatpush.msra.mxu0 %v6206
    %v6208 = vand.u32 %v2923, 4294901760
    %6209 = vmatpush.msra.mxu0 %v6208
    %v6210 = vand.u32 %v2921, 4294901760
    %6211 = vmatpush.msra.mxu0 %v6210
    %v6212 = vand.u32 %v2919, 4294901760
    %6213 = vmatpush.msra.mxu0 %v6212
    %v6214 = vand.u32 %v2917, 4294901760
    %6215 = vmatpush.msra.mxu0 %v6214
    %v6216 = vand.u32 %v2915, 4294901760
    %6217 = vmatpush.msra.mxu0 %v6216
    %v6218 = vand.u32 %v2913, 4294901760
    %6219 = vmatpush.msra.mxu0 %v6218
    %v6220 = vand.u32 %v2911, 4294901760
    %6221 = vmatpush.msra.mxu0 %v6220
    %v6222 = vand.u32 %v2909, 4294901760
    %6223 = vmatpush.msra.mxu0 %v6222
    %v6224 = vand.u32 %v2907, 4294901760
    %6225 = vmatpush.msra.mxu0 %v6224
    %v6226 = vand.u32 %v2898, 4294901760
    %6227 = vmatmul.f32.gmra.mxu0 %v6226
    %v6228 = vpop.f32.mrf.mxu0
    %v6229 = vadd.f32 %v6192, %v6228
    %6230 = vdwg.mxu0
    %v6231 = vand.u32 %v2969, 4294901760
    %6232 = vmatpush.msra.mxu0 %v6231
    %v6233 = vand.u32 %v2967, 4294901760
    %6234 = vmatpush.msra.mxu0 %v6233
    %v6235 = vand.u32 %v2965, 4294901760
    %6236 = vmatpush.msra.mxu0 %v6235
    %v6237 = vand.u32 %v2963, 4294901760
    %6238 = vmatpush.msra.mxu0 %v6237
    %v6239 = vand.u32 %v2961, 4294901760
    %6240 = vmatpush.msra.mxu0 %v6239
    %v6241 = vand.u32 %v2959, 4294901760
    %6242 = vmatpush.msra.mxu0 %v6241
    %v6243 = vand.u32 %v2957, 4294901760
    %6244 = vmatpush.msra.mxu0 %v6243
    %v6245 = vand.u32 %v2955, 4294901760
    %6246 = vmatpush.msra.mxu0 %v6245
    %v6247 = vand.u32 %v2953, 4294901760
    %6248 = vmatpush.msra.mxu0 %v6247
    %v6249 = vand.u32 %v2951, 4294901760
    %6250 = vmatpush.msra.mxu0 %v6249
    %v6251 = vand.u32 %v2949, 4294901760
    %6252 = vmatpush.msra.mxu0 %v6251
    %v6253 = vand.u32 %v2947, 4294901760
    %6254 = vmatpush.msra.mxu0 %v6253
    %v6255 = vand.u32 %v2945, 4294901760
    %6256 = vmatpush.msra.mxu0 %v6255
    %v6257 = vand.u32 %v2943, 4294901760
    %6258 = vmatpush.msra.mxu0 %v6257
    %v6259 = vand.u32 %v2941, 4294901760
    %6260 = vmatpush.msra.mxu0 %v6259
    %v6261 = vand.u32 %v2939, 4294901760
    %6262 = vmatpush.msra.mxu0 %v6261
    %v6263 = vand.u32 %v2899, 4294901760
    %v6264 = vsub.f32 %v2899, %v6263
    %v6265 = vand.u32 %v6264, 4294901760
    %v6266 = vsub.f32 %v6264, %v6265
    %v6267 = vand.u32 %v6266, 4294901760
    %6268 = vmatmul.f32.gmra.mxu0 %v6267
    %v6269 = vpop.f32.mrf.mxu0
    %v6270 = vadd.f32 %v6229, %v6269
    %6271 = vdwg.mxu0
    %v6272 = vand.u32 %v2969, 4294901760
    %v6273 = vsub.f32 %v2969, %v6272
    %v6274 = vand.u32 %v6273, 4294901760
    %v6275 = vsub.f32 %v6273, %v6274
    %v6276 = vand.u32 %v6275, 4294901760
    %6277 = vmatpush.msra.mxu0 %v6276
    %v6278 = vand.u32 %v2967, 4294901760
    %v6279 = vsub.f32 %v2967, %v6278
    %v6280 = vand.u32 %v6279, 4294901760
    %v6281 = vsub.f32 %v6279, %v6280
    %v6282 = vand.u32 %v6281, 4294901760
    %6283 = vmatpush.msra.mxu0 %v6282
    %v6284 = vand.u32 %v2965, 4294901760
    %v6285 = vsub.f32 %v2965, %v6284
    %v6286 = vand.u32 %v6285, 4294901760
    %v6287 = vsub.f32 %v6285, %v6286
    %v6288 = vand.u32 %v6287, 4294901760
    %6289 = vmatpush.msra.mxu0 %v6288
    %v6290 = vand.u32 %v2963, 4294901760
    %v6291 = vsub.f32 %v2963, %v6290
    %v6292 = vand.u32 %v6291, 4294901760
    %v6293 = vsub.f32 %v6291, %v6292
    %v6294 = vand.u32 %v6293, 4294901760
    %6295 = vmatpush.msra.mxu0 %v6294
    %v6296 = vand.u32 %v2961, 4294901760
    %v6297 = vsub.f32 %v2961, %v6296
    %v6298 = vand.u32 %v6297, 4294901760
    %v6299 = vsub.f32 %v6297, %v6298
    %v6300 = vand.u32 %v6299, 4294901760
    %6301 = vmatpush.msra.mxu0 %v6300
    %v6302 = vand.u32 %v2959, 4294901760
    %v6303 = vsub.f32 %v2959, %v6302
    %v6304 = vand.u32 %v6303, 4294901760
    %v6305 = vsub.f32 %v6303, %v6304
    %v6306 = vand.u32 %v6305, 4294901760
    %6307 = vmatpush.msra.mxu0 %v6306
    %v6308 = vand.u32 %v2957, 4294901760
    %v6309 = vsub.f32 %v2957, %v6308
    %v6310 = vand.u32 %v6309, 4294901760
    %v6311 = vsub.f32 %v6309, %v6310
    %v6312 = vand.u32 %v6311, 4294901760
    %6313 = vmatpush.msra.mxu0 %v6312
    %v6314 = vand.u32 %v2955, 4294901760
    %v6315 = vsub.f32 %v2955, %v6314
    %v6316 = vand.u32 %v6315, 4294901760
    %v6317 = vsub.f32 %v6315, %v6316
    %v6318 = vand.u32 %v6317, 4294901760
    %6319 = vmatpush.msra.mxu0 %v6318
    %v6320 = vand.u32 %v2953, 4294901760
    %v6321 = vsub.f32 %v2953, %v6320
    %v6322 = vand.u32 %v6321, 4294901760
    %v6323 = vsub.f32 %v6321, %v6322
    %v6324 = vand.u32 %v6323, 4294901760
    %6325 = vmatpush.msra.mxu0 %v6324
    %v6326 = vand.u32 %v2951, 4294901760
    %v6327 = vsub.f32 %v2951, %v6326
    %v6328 = vand.u32 %v6327, 4294901760
    %v6329 = vsub.f32 %v6327, %v6328
    %v6330 = vand.u32 %v6329, 4294901760
    %6331 = vmatpush.msra.mxu0 %v6330
    %v6332 = vand.u32 %v2949, 4294901760
    %v6333 = vsub.f32 %v2949, %v6332
    %v6334 = vand.u32 %v6333, 4294901760
    %v6335 = vsub.f32 %v6333, %v6334
    %v6336 = vand.u32 %v6335, 4294901760
    %6337 = vmatpush.msra.mxu0 %v6336
    %v6338 = vand.u32 %v2947, 4294901760
    %v6339 = vsub.f32 %v2947, %v6338
    %v6340 = vand.u32 %v6339, 4294901760
    %v6341 = vsub.f32 %v6339, %v6340
    %v6342 = vand.u32 %v6341, 4294901760
    %6343 = vmatpush.msra.mxu0 %v6342
    %v6344 = vand.u32 %v2945, 4294901760
    %v6345 = vsub.f32 %v2945, %v6344
    %v6346 = vand.u32 %v6345, 4294901760
    %v6347 = vsub.f32 %v6345, %v6346
    %v6348 = vand.u32 %v6347, 4294901760
    %6349 = vmatpush.msra.mxu0 %v6348
    %v6350 = vand.u32 %v2943, 4294901760
    %v6351 = vsub.f32 %v2943, %v6350
    %v6352 = vand.u32 %v6351, 4294901760
    %v6353 = vsub.f32 %v6351, %v6352
    %v6354 = vand.u32 %v6353, 4294901760
    %6355 = vmatpush.msra.mxu0 %v6354
    %v6356 = vand.u32 %v2941, 4294901760
    %v6357 = vsub.f32 %v2941, %v6356
    %v6358 = vand.u32 %v6357, 4294901760
    %v6359 = vsub.f32 %v6357, %v6358
    %v6360 = vand.u32 %v6359, 4294901760
    %6361 = vmatpush.msra.mxu0 %v6360
    %v6362 = vand.u32 %v2939, 4294901760
    %v6363 = vsub.f32 %v2939, %v6362
    %v6364 = vand.u32 %v6363, 4294901760
    %v6365 = vsub.f32 %v6363, %v6364
    %v6366 = vand.u32 %v6365, 4294901760
    %6367 = vmatpush.msra.mxu0 %v6366
    %v6368 = vand.u32 %v2899, 4294901760
    %6369 = vmatmul.f32.gmra.mxu0 %v6368
    %v6370 = vpop.f32.mrf.mxu0
    %v6371 = vadd.f32 %v6270, %v6370
    %6372 = vdwg.mxu0
    %v6373 = vand.u32 %v2969, 4294901760
    %v6374 = vsub.f32 %v2969, %v6373
    %6375 = vmatpush.msra.mxu0 %v6374
    %v6376 = vand.u32 %v2967, 4294901760
    %v6377 = vsub.f32 %v2967, %v6376
    %6378 = vmatpush.msra.mxu0 %v6377
    %v6379 = vand.u32 %v2965, 4294901760
    %v6380 = vsub.f32 %v2965, %v6379
    %6381 = vmatpush.msra.mxu0 %v6380
    %v6382 = vand.u32 %v2963, 4294901760
    %v6383 = vsub.f32 %v2963, %v6382
    %6384 = vmatpush.msra.mxu0 %v6383
    %v6385 = vand.u32 %v2961, 4294901760
    %v6386 = vsub.f32 %v2961, %v6385
    %6387 = vmatpush.msra.mxu0 %v6386
    %v6388 = vand.u32 %v2959, 4294901760
    %v6389 = vsub.f32 %v2959, %v6388
    %6390 = vmatpush.msra.mxu0 %v6389
    %v6391 = vand.u32 %v2957, 4294901760
    %v6392 = vsub.f32 %v2957, %v6391
    %6393 = vmatpush.msra.mxu0 %v6392
    %v6394 = vand.u32 %v2955, 4294901760
    %v6395 = vsub.f32 %v2955, %v6394
    %6396 = vmatpush.msra.mxu0 %v6395
    %v6397 = vand.u32 %v2953, 4294901760
    %v6398 = vsub.f32 %v2953, %v6397
    %6399 = vmatpush.msra.mxu0 %v6398
    %v6400 = vand.u32 %v2951, 4294901760
    %v6401 = vsub.f32 %v2951, %v6400
    %6402 = vmatpush.msra.mxu0 %v6401
    %v6403 = vand.u32 %v2949, 4294901760
    %v6404 = vsub.f32 %v2949, %v6403
    %6405 = vmatpush.msra.mxu0 %v6404
    %v6406 = vand.u32 %v2947, 4294901760
    %v6407 = vsub.f32 %v2947, %v6406
    %6408 = vmatpush.msra.mxu0 %v6407
    %v6409 = vand.u32 %v2945, 4294901760
    %v6410 = vsub.f32 %v2945, %v6409
    %6411 = vmatpush.msra.mxu0 %v6410
    %v6412 = vand.u32 %v2943, 4294901760
    %v6413 = vsub.f32 %v2943, %v6412
    %6414 = vmatpush.msra.mxu0 %v6413
    %v6415 = vand.u32 %v2941, 4294901760
    %v6416 = vsub.f32 %v2941, %v6415
    %6417 = vmatpush.msra.mxu0 %v6416
    %v6418 = vand.u32 %v2939, 4294901760
    %v6419 = vsub.f32 %v2939, %v6418
    %6420 = vmatpush.msra.mxu0 %v6419
    %v6421 = vand.u32 %v2899, 4294901760
    %v6422 = vsub.f32 %v2899, %v6421
    %6423 = vmatmul.f32.gmra.mxu0 %v6422
    %v6424 = vpop.f32.mrf.mxu0
    %v6425 = vadd.f32 %v6371, %v6424
    %6426 = vdwg.mxu0
    %v6427 = vand.u32 %v2969, 4294901760
    %6428 = vmatpush.msra.mxu0 %v6427
    %v6429 = vand.u32 %v2967, 4294901760
    %6430 = vmatpush.msra.mxu0 %v6429
    %v6431 = vand.u32 %v2965, 4294901760
    %6432 = vmatpush.msra.mxu0 %v6431
    %v6433 = vand.u32 %v2963, 4294901760
    %6434 = vmatpush.msra.mxu0 %v6433
    %v6435 = vand.u32 %v2961, 4294901760
    %6436 = vmatpush.msra.mxu0 %v6435
    %v6437 = vand.u32 %v2959, 4294901760
    %6438 = vmatpush.msra.mxu0 %v6437
    %v6439 = vand.u32 %v2957, 4294901760
    %6440 = vmatpush.msra.mxu0 %v6439
    %v6441 = vand.u32 %v2955, 4294901760
    %6442 = vmatpush.msra.mxu0 %v6441
    %v6443 = vand.u32 %v2953, 4294901760
    %6444 = vmatpush.msra.mxu0 %v6443
    %v6445 = vand.u32 %v2951, 4294901760
    %6446 = vmatpush.msra.mxu0 %v6445
    %v6447 = vand.u32 %v2949, 4294901760
    %6448 = vmatpush.msra.mxu0 %v6447
    %v6449 = vand.u32 %v2947, 4294901760
    %6450 = vmatpush.msra.mxu0 %v6449
    %v6451 = vand.u32 %v2945, 4294901760
    %6452 = vmatpush.msra.mxu0 %v6451
    %v6453 = vand.u32 %v2943, 4294901760
    %6454 = vmatpush.msra.mxu0 %v6453
    %v6455 = vand.u32 %v2941, 4294901760
    %6456 = vmatpush.msra.mxu0 %v6455
    %v6457 = vand.u32 %v2939, 4294901760
    %6458 = vmatpush.msra.mxu0 %v6457
    %v6459 = vand.u32 %v2899, 4294901760
    %v6460 = vsub.f32 %v2899, %v6459
    %v6461 = vand.u32 %v6460, 4294901760
    %6462 = vmatmul.f32.gmra.mxu0 %v6461
    %v6463 = vpop.f32.mrf.mxu0
    %v6464 = vadd.f32 %v6425, %v6463
    %6465 = vdwg.mxu0
    %v6466 = vand.u32 %v2969, 4294901760
    %v6467 = vsub.f32 %v2969, %v6466
    %v6468 = vand.u32 %v6467, 4294901760
    %6469 = vmatpush.msra.mxu0 %v6468
    %v6470 = vand.u32 %v2967, 4294901760
    %v6471 = vsub.f32 %v2967, %v6470
    %v6472 = vand.u32 %v6471, 4294901760
    %6473 = vmatpush.msra.mxu0 %v6472
    %v6474 = vand.u32 %v2965, 4294901760
    %v6475 = vsub.f32 %v2965, %v6474
    %v6476 = vand.u32 %v6475, 4294901760
    %6477 = vmatpush.msra.mxu0 %v6476
    %v6478 = vand.u32 %v2963, 4294901760
    %v6479 = vsub.f32 %v2963, %v6478
    %v6480 = vand.u32 %v6479, 4294901760
    %6481 = vmatpush.msra.mxu0 %v6480
    %v6482 = vand.u32 %v2961, 4294901760
    %v6483 = vsub.f32 %v2961, %v6482
    %v6484 = vand.u32 %v6483, 4294901760
    %6485 = vmatpush.msra.mxu0 %v6484
    %v6486 = vand.u32 %v2959, 4294901760
    %v6487 = vsub.f32 %v2959, %v6486
    %v6488 = vand.u32 %v6487, 4294901760
    %6489 = vmatpush.msra.mxu0 %v6488
    %v6490 = vand.u32 %v2957, 4294901760
    %v6491 = vsub.f32 %v2957, %v6490
    %v6492 = vand.u32 %v6491, 4294901760
    %6493 = vmatpush.msra.mxu0 %v6492
    %v6494 = vand.u32 %v2955, 4294901760
    %v6495 = vsub.f32 %v2955, %v6494
    %v6496 = vand.u32 %v6495, 4294901760
    %6497 = vmatpush.msra.mxu0 %v6496
    %v6498 = vand.u32 %v2953, 4294901760
    %v6499 = vsub.f32 %v2953, %v6498
    %v6500 = vand.u32 %v6499, 4294901760
    %6501 = vmatpush.msra.mxu0 %v6500
    %v6502 = vand.u32 %v2951, 4294901760
    %v6503 = vsub.f32 %v2951, %v6502
    %v6504 = vand.u32 %v6503, 4294901760
    %6505 = vmatpush.msra.mxu0 %v6504
    %v6506 = vand.u32 %v2949, 4294901760
    %v6507 = vsub.f32 %v2949, %v6506
    %v6508 = vand.u32 %v6507, 4294901760
    %6509 = vmatpush.msra.mxu0 %v6508
    %v6510 = vand.u32 %v2947, 4294901760
    %v6511 = vsub.f32 %v2947, %v6510
    %v6512 = vand.u32 %v6511, 4294901760
    %6513 = vmatpush.msra.mxu0 %v6512
    %v6514 = vand.u32 %v2945, 4294901760
    %v6515 = vsub.f32 %v2945, %v6514
    %v6516 = vand.u32 %v6515, 4294901760
    %6517 = vmatpush.msra.mxu0 %v6516
    %v6518 = vand.u32 %v2943, 4294901760
    %v6519 = vsub.f32 %v2943, %v6518
    %v6520 = vand.u32 %v6519, 4294901760
    %6521 = vmatpush.msra.mxu0 %v6520
    %v6522 = vand.u32 %v2941, 4294901760
    %v6523 = vsub.f32 %v2941, %v6522
    %v6524 = vand.u32 %v6523, 4294901760
    %6525 = vmatpush.msra.mxu0 %v6524
    %v6526 = vand.u32 %v2939, 4294901760
    %v6527 = vsub.f32 %v2939, %v6526
    %v6528 = vand.u32 %v6527, 4294901760
    %6529 = vmatpush.msra.mxu0 %v6528
    %v6530 = vand.u32 %v2899, 4294901760
    %6531 = vmatmul.f32.gmra.mxu0 %v6530
    %v6532 = vpop.f32.mrf.mxu0
    %v6533 = vadd.f32 %v6464, %v6532
    %6534 = vdwg.mxu0
    %v6535 = vand.u32 %v2969, 4294901760
    %6536 = vmatpush.msra.mxu0 %v6535
    %v6537 = vand.u32 %v2967, 4294901760
    %6538 = vmatpush.msra.mxu0 %v6537
    %v6539 = vand.u32 %v2965, 4294901760
    %6540 = vmatpush.msra.mxu0 %v6539
    %v6541 = vand.u32 %v2963, 4294901760
    %6542 = vmatpush.msra.mxu0 %v6541
    %v6543 = vand.u32 %v2961, 4294901760
    %6544 = vmatpush.msra.mxu0 %v6543
    %v6545 = vand.u32 %v2959, 4294901760
    %6546 = vmatpush.msra.mxu0 %v6545
    %v6547 = vand.u32 %v2957, 4294901760
    %6548 = vmatpush.msra.mxu0 %v6547
    %v6549 = vand.u32 %v2955, 4294901760
    %6550 = vmatpush.msra.mxu0 %v6549
    %v6551 = vand.u32 %v2953, 4294901760
    %6552 = vmatpush.msra.mxu0 %v6551
    %v6553 = vand.u32 %v2951, 4294901760
    %6554 = vmatpush.msra.mxu0 %v6553
    %v6555 = vand.u32 %v2949, 4294901760
    %6556 = vmatpush.msra.mxu0 %v6555
    %v6557 = vand.u32 %v2947, 4294901760
    %6558 = vmatpush.msra.mxu0 %v6557
    %v6559 = vand.u32 %v2945, 4294901760
    %6560 = vmatpush.msra.mxu0 %v6559
    %v6561 = vand.u32 %v2943, 4294901760
    %6562 = vmatpush.msra.mxu0 %v6561
    %v6563 = vand.u32 %v2941, 4294901760
    %6564 = vmatpush.msra.mxu0 %v6563
    %v6565 = vand.u32 %v2939, 4294901760
    %6566 = vmatpush.msra.mxu0 %v6565
    %v6567 = vand.u32 %v2899, 4294901760
    %6568 = vmatmul.f32.gmra.mxu0 %v6567
    %v6569 = vpop.f32.mrf.mxu0
    %v6570 = vadd.f32 %v6533, %v6569
    %6571 = vdwg.mxu0
    %v6572 = vand.u32 %v3001, 4294901760
    %6573 = vmatpush.msra.mxu0 %v6572
    %v6574 = vand.u32 %v2999, 4294901760
    %6575 = vmatpush.msra.mxu0 %v6574
    %v6576 = vand.u32 %v2997, 4294901760
    %6577 = vmatpush.msra.mxu0 %v6576
    %v6578 = vand.u32 %v2995, 4294901760
    %6579 = vmatpush.msra.mxu0 %v6578
    %v6580 = vand.u32 %v2993, 4294901760
    %6581 = vmatpush.msra.mxu0 %v6580
    %v6582 = vand.u32 %v2991, 4294901760
    %6583 = vmatpush.msra.mxu0 %v6582
    %v6584 = vand.u32 %v2989, 4294901760
    %6585 = vmatpush.msra.mxu0 %v6584
    %v6586 = vand.u32 %v2987, 4294901760
    %6587 = vmatpush.msra.mxu0 %v6586
    %v6588 = vand.u32 %v2985, 4294901760
    %6589 = vmatpush.msra.mxu0 %v6588
    %v6590 = vand.u32 %v2983, 4294901760
    %6591 = vmatpush.msra.mxu0 %v6590
    %v6592 = vand.u32 %v2981, 4294901760
    %6593 = vmatpush.msra.mxu0 %v6592
    %v6594 = vand.u32 %v2979, 4294901760
    %6595 = vmatpush.msra.mxu0 %v6594
    %v6596 = vand.u32 %v2977, 4294901760
    %6597 = vmatpush.msra.mxu0 %v6596
    %v6598 = vand.u32 %v2975, 4294901760
    %6599 = vmatpush.msra.mxu0 %v6598
    %v6600 = vand.u32 %v2973, 4294901760
    %6601 = vmatpush.msra.mxu0 %v6600
    %v6602 = vand.u32 %v2971, 4294901760
    %6603 = vmatpush.msra.mxu0 %v6602
    %v6604 = vand.u32 %v2900, 4294901760
    %v6605 = vsub.f32 %v2900, %v6604
    %v6606 = vand.u32 %v6605, 4294901760
    %v6607 = vsub.f32 %v6605, %v6606
    %v6608 = vand.u32 %v6607, 4294901760
    %6609 = vmatmul.f32.gmra.mxu0 %v6608
    %v6610 = vpop.f32.mrf.mxu0
    %v6611 = vadd.f32 %v6570, %v6610
    %6612 = vdwg.mxu0
    %v6613 = vand.u32 %v3001, 4294901760
    %v6614 = vsub.f32 %v3001, %v6613
    %v6615 = vand.u32 %v6614, 4294901760
    %v6616 = vsub.f32 %v6614, %v6615
    %v6617 = vand.u32 %v6616, 4294901760
    %6618 = vmatpush.msra.mxu0 %v6617
    %v6619 = vand.u32 %v2999, 4294901760
    %v6620 = vsub.f32 %v2999, %v6619
    %v6621 = vand.u32 %v6620, 4294901760
    %v6622 = vsub.f32 %v6620, %v6621
    %v6623 = vand.u32 %v6622, 4294901760
    %6624 = vmatpush.msra.mxu0 %v6623
    %v6625 = vand.u32 %v2997, 4294901760
    %v6626 = vsub.f32 %v2997, %v6625
    %v6627 = vand.u32 %v6626, 4294901760
    %v6628 = vsub.f32 %v6626, %v6627
    %v6629 = vand.u32 %v6628, 4294901760
    %6630 = vmatpush.msra.mxu0 %v6629
    %v6631 = vand.u32 %v2995, 4294901760
    %v6632 = vsub.f32 %v2995, %v6631
    %v6633 = vand.u32 %v6632, 4294901760
    %v6634 = vsub.f32 %v6632, %v6633
    %v6635 = vand.u32 %v6634, 4294901760
    %6636 = vmatpush.msra.mxu0 %v6635
    %v6637 = vand.u32 %v2993, 4294901760
    %v6638 = vsub.f32 %v2993, %v6637
    %v6639 = vand.u32 %v6638, 4294901760
    %v6640 = vsub.f32 %v6638, %v6639
    %v6641 = vand.u32 %v6640, 4294901760
    %6642 = vmatpush.msra.mxu0 %v6641
    %v6643 = vand.u32 %v2991, 4294901760
    %v6644 = vsub.f32 %v2991, %v6643
    %v6645 = vand.u32 %v6644, 4294901760
    %v6646 = vsub.f32 %v6644, %v6645
    %v6647 = vand.u32 %v6646, 4294901760
    %6648 = vmatpush.msra.mxu0 %v6647
    %v6649 = vand.u32 %v2989, 4294901760
    %v6650 = vsub.f32 %v2989, %v6649
    %v6651 = vand.u32 %v6650, 4294901760
    %v6652 = vsub.f32 %v6650, %v6651
    %v6653 = vand.u32 %v6652, 4294901760
    %6654 = vmatpush.msra.mxu0 %v6653
    %v6655 = vand.u32 %v2987, 4294901760
    %v6656 = vsub.f32 %v2987, %v6655
    %v6657 = vand.u32 %v6656, 4294901760
    %v6658 = vsub.f32 %v6656, %v6657
    %v6659 = vand.u32 %v6658, 4294901760
    %6660 = vmatpush.msra.mxu0 %v6659
    %v6661 = vand.u32 %v2985, 4294901760
    %v6662 = vsub.f32 %v2985, %v6661
    %v6663 = vand.u32 %v6662, 4294901760
    %v6664 = vsub.f32 %v6662, %v6663
    %v6665 = vand.u32 %v6664, 4294901760
    %6666 = vmatpush.msra.mxu0 %v6665
    %v6667 = vand.u32 %v2983, 4294901760
    %v6668 = vsub.f32 %v2983, %v6667
    %v6669 = vand.u32 %v6668, 4294901760
    %v6670 = vsub.f32 %v6668, %v6669
    %v6671 = vand.u32 %v6670, 4294901760
    %6672 = vmatpush.msra.mxu0 %v6671
    %v6673 = vand.u32 %v2981, 4294901760
    %v6674 = vsub.f32 %v2981, %v6673
    %v6675 = vand.u32 %v6674, 4294901760
    %v6676 = vsub.f32 %v6674, %v6675
    %v6677 = vand.u32 %v6676, 4294901760
    %6678 = vmatpush.msra.mxu0 %v6677
    %v6679 = vand.u32 %v2979, 4294901760
    %v6680 = vsub.f32 %v2979, %v6679
    %v6681 = vand.u32 %v6680, 4294901760
    %v6682 = vsub.f32 %v6680, %v6681
    %v6683 = vand.u32 %v6682, 4294901760
    %6684 = vmatpush.msra.mxu0 %v6683
    %v6685 = vand.u32 %v2977, 4294901760
    %v6686 = vsub.f32 %v2977, %v6685
    %v6687 = vand.u32 %v6686, 4294901760
    %v6688 = vsub.f32 %v6686, %v6687
    %v6689 = vand.u32 %v6688, 4294901760
    %6690 = vmatpush.msra.mxu0 %v6689
    %v6691 = vand.u32 %v2975, 4294901760
    %v6692 = vsub.f32 %v2975, %v6691
    %v6693 = vand.u32 %v6692, 4294901760
    %v6694 = vsub.f32 %v6692, %v6693
    %v6695 = vand.u32 %v6694, 4294901760
    %6696 = vmatpush.msra.mxu0 %v6695
    %v6697 = vand.u32 %v2973, 4294901760
    %v6698 = vsub.f32 %v2973, %v6697
    %v6699 = vand.u32 %v6698, 4294901760
    %v6700 = vsub.f32 %v6698, %v6699
    %v6701 = vand.u32 %v6700, 4294901760
    %6702 = vmatpush.msra.mxu0 %v6701
    %v6703 = vand.u32 %v2971, 4294901760
    %v6704 = vsub.f32 %v2971, %v6703
    %v6705 = vand.u32 %v6704, 4294901760
    %v6706 = vsub.f32 %v6704, %v6705
    %v6707 = vand.u32 %v6706, 4294901760
    %6708 = vmatpush.msra.mxu0 %v6707
    %v6709 = vand.u32 %v2900, 4294901760
    %6710 = vmatmul.f32.gmra.mxu0 %v6709
    %v6711 = vpop.f32.mrf.mxu0
    %v6712 = vadd.f32 %v6611, %v6711
    %6713 = vdwg.mxu0
    %v6714 = vand.u32 %v3001, 4294901760
    %v6715 = vsub.f32 %v3001, %v6714
    %6716 = vmatpush.msra.mxu0 %v6715
    %v6717 = vand.u32 %v2999, 4294901760
    %v6718 = vsub.f32 %v2999, %v6717
    %6719 = vmatpush.msra.mxu0 %v6718
    %v6720 = vand.u32 %v2997, 4294901760
    %v6721 = vsub.f32 %v2997, %v6720
    %6722 = vmatpush.msra.mxu0 %v6721
    %v6723 = vand.u32 %v2995, 4294901760
    %v6724 = vsub.f32 %v2995, %v6723
    %6725 = vmatpush.msra.mxu0 %v6724
    %v6726 = vand.u32 %v2993, 4294901760
    %v6727 = vsub.f32 %v2993, %v6726
    %6728 = vmatpush.msra.mxu0 %v6727
    %v6729 = vand.u32 %v2991, 4294901760
    %v6730 = vsub.f32 %v2991, %v6729
    %6731 = vmatpush.msra.mxu0 %v6730
    %v6732 = vand.u32 %v2989, 4294901760
    %v6733 = vsub.f32 %v2989, %v6732
    %6734 = vmatpush.msra.mxu0 %v6733
    %v6735 = vand.u32 %v2987, 4294901760
    %v6736 = vsub.f32 %v2987, %v6735
    %6737 = vmatpush.msra.mxu0 %v6736
    %v6738 = vand.u32 %v2985, 4294901760
    %v6739 = vsub.f32 %v2985, %v6738
    %6740 = vmatpush.msra.mxu0 %v6739
    %v6741 = vand.u32 %v2983, 4294901760
    %v6742 = vsub.f32 %v2983, %v6741
    %6743 = vmatpush.msra.mxu0 %v6742
    %v6744 = vand.u32 %v2981, 4294901760
    %v6745 = vsub.f32 %v2981, %v6744
    %6746 = vmatpush.msra.mxu0 %v6745
    %v6747 = vand.u32 %v2979, 4294901760
    %v6748 = vsub.f32 %v2979, %v6747
    %6749 = vmatpush.msra.mxu0 %v6748
    %v6750 = vand.u32 %v2977, 4294901760
    %v6751 = vsub.f32 %v2977, %v6750
    %6752 = vmatpush.msra.mxu0 %v6751
    %v6753 = vand.u32 %v2975, 4294901760
    %v6754 = vsub.f32 %v2975, %v6753
    %6755 = vmatpush.msra.mxu0 %v6754
    %v6756 = vand.u32 %v2973, 4294901760
    %v6757 = vsub.f32 %v2973, %v6756
    %6758 = vmatpush.msra.mxu0 %v6757
    %v6759 = vand.u32 %v2971, 4294901760
    %v6760 = vsub.f32 %v2971, %v6759
    %6761 = vmatpush.msra.mxu0 %v6760
    %v6762 = vand.u32 %v2900, 4294901760
    %v6763 = vsub.f32 %v2900, %v6762
    %6764 = vmatmul.f32.gmra.mxu0 %v6763
    %v6765 = vpop.f32.mrf.mxu0
    %v6766 = vadd.f32 %v6712, %v6765
    %6767 = vdwg.mxu0
    %v6768 = vand.u32 %v3001, 4294901760
    %6769 = vmatpush.msra.mxu0 %v6768
    %v6770 = vand.u32 %v2999, 4294901760
    %6771 = vmatpush.msra.mxu0 %v6770
    %v6772 = vand.u32 %v2997, 4294901760
    %6773 = vmatpush.msra.mxu0 %v6772
    %v6774 = vand.u32 %v2995, 4294901760
    %6775 = vmatpush.msra.mxu0 %v6774
    %v6776 = vand.u32 %v2993, 4294901760
    %6777 = vmatpush.msra.mxu0 %v6776
    %v6778 = vand.u32 %v2991, 4294901760
    %6779 = vmatpush.msra.mxu0 %v6778
    %v6780 = vand.u32 %v2989, 4294901760
    %6781 = vmatpush.msra.mxu0 %v6780
    %v6782 = vand.u32 %v2987, 4294901760
    %6783 = vmatpush.msra.mxu0 %v6782
    %v6784 = vand.u32 %v2985, 4294901760
    %6785 = vmatpush.msra.mxu0 %v6784
    %v6786 = vand.u32 %v2983, 4294901760
    %6787 = vmatpush.msra.mxu0 %v6786
    %v6788 = vand.u32 %v2981, 4294901760
    %6789 = vmatpush.msra.mxu0 %v6788
    %v6790 = vand.u32 %v2979, 4294901760
    %6791 = vmatpush.msra.mxu0 %v6790
    %v6792 = vand.u32 %v2977, 4294901760
    %6793 = vmatpush.msra.mxu0 %v6792
    %v6794 = vand.u32 %v2975, 4294901760
    %6795 = vmatpush.msra.mxu0 %v6794
    %v6796 = vand.u32 %v2973, 4294901760
    %6797 = vmatpush.msra.mxu0 %v6796
    %v6798 = vand.u32 %v2971, 4294901760
    %6799 = vmatpush.msra.mxu0 %v6798
    %v6800 = vand.u32 %v2900, 4294901760
    %v6801 = vsub.f32 %v2900, %v6800
    %v6802 = vand.u32 %v6801, 4294901760
    %6803 = vmatmul.f32.gmra.mxu0 %v6802
    %v6804 = vpop.f32.mrf.mxu0
    %v6805 = vadd.f32 %v6766, %v6804
    %6806 = vdwg.mxu0
    %v6807 = vand.u32 %v3001, 4294901760
    %v6808 = vsub.f32 %v3001, %v6807
    %v6809 = vand.u32 %v6808, 4294901760
    %6810 = vmatpush.msra.mxu0 %v6809
    %v6811 = vand.u32 %v2999, 4294901760
    %v6812 = vsub.f32 %v2999, %v6811
    %v6813 = vand.u32 %v6812, 4294901760
    %6814 = vmatpush.msra.mxu0 %v6813
    %v6815 = vand.u32 %v2997, 4294901760
    %v6816 = vsub.f32 %v2997, %v6815
    %v6817 = vand.u32 %v6816, 4294901760
    %6818 = vmatpush.msra.mxu0 %v6817
    %v6819 = vand.u32 %v2995, 4294901760
    %v6820 = vsub.f32 %v2995, %v6819
    %v6821 = vand.u32 %v6820, 4294901760
    %6822 = vmatpush.msra.mxu0 %v6821
    %v6823 = vand.u32 %v2993, 4294901760
    %v6824 = vsub.f32 %v2993, %v6823
    %v6825 = vand.u32 %v6824, 4294901760
    %6826 = vmatpush.msra.mxu0 %v6825
    %v6827 = vand.u32 %v2991, 4294901760
    %v6828 = vsub.f32 %v2991, %v6827
    %v6829 = vand.u32 %v6828, 4294901760
    %6830 = vmatpush.msra.mxu0 %v6829
    %v6831 = vand.u32 %v2989, 4294901760
    %v6832 = vsub.f32 %v2989, %v6831
    %v6833 = vand.u32 %v6832, 4294901760
    %6834 = vmatpush.msra.mxu0 %v6833
    %v6835 = vand.u32 %v2987, 4294901760
    %v6836 = vsub.f32 %v2987, %v6835
    %v6837 = vand.u32 %v6836, 4294901760
    %6838 = vmatpush.msra.mxu0 %v6837
    %v6839 = vand.u32 %v2985, 4294901760
    %v6840 = vsub.f32 %v2985, %v6839
    %v6841 = vand.u32 %v6840, 4294901760
    %6842 = vmatpush.msra.mxu0 %v6841
    %v6843 = vand.u32 %v2983, 4294901760
    %v6844 = vsub.f32 %v2983, %v6843
    %v6845 = vand.u32 %v6844, 4294901760
    %6846 = vmatpush.msra.mxu0 %v6845
    %v6847 = vand.u32 %v2981, 4294901760
    %v6848 = vsub.f32 %v2981, %v6847
    %v6849 = vand.u32 %v6848, 4294901760
    %6850 = vmatpush.msra.mxu0 %v6849
    %v6851 = vand.u32 %v2979, 4294901760
    %v6852 = vsub.f32 %v2979, %v6851
    %v6853 = vand.u32 %v6852, 4294901760
    %6854 = vmatpush.msra.mxu0 %v6853
    %v6855 = vand.u32 %v2977, 4294901760
    %v6856 = vsub.f32 %v2977, %v6855
    %v6857 = vand.u32 %v6856, 4294901760
    %6858 = vmatpush.msra.mxu0 %v6857
    %v6859 = vand.u32 %v2975, 4294901760
    %v6860 = vsub.f32 %v2975, %v6859
    %v6861 = vand.u32 %v6860, 4294901760
    %6862 = vmatpush.msra.mxu0 %v6861
    %v6863 = vand.u32 %v2973, 4294901760
    %v6864 = vsub.f32 %v2973, %v6863
    %v6865 = vand.u32 %v6864, 4294901760
    %6866 = vmatpush.msra.mxu0 %v6865
    %v6867 = vand.u32 %v2971, 4294901760
    %v6868 = vsub.f32 %v2971, %v6867
    %v6869 = vand.u32 %v6868, 4294901760
    %6870 = vmatpush.msra.mxu0 %v6869
    %v6871 = vand.u32 %v2900, 4294901760
    %6872 = vmatmul.f32.gmra.mxu0 %v6871
    %v6873 = vpop.f32.mrf.mxu0
    %v6874 = vadd.f32 %v6805, %v6873
    %6875 = vdwg.mxu0
    %v6876 = vand.u32 %v3001, 4294901760
    %6877 = vmatpush.msra.mxu0 %v6876
    %v6878 = vand.u32 %v2999, 4294901760
    %6879 = vmatpush.msra.mxu0 %v6878
    %v6880 = vand.u32 %v2997, 4294901760
    %6881 = vmatpush.msra.mxu0 %v6880
    %v6882 = vand.u32 %v2995, 4294901760
    %6883 = vmatpush.msra.mxu0 %v6882
    %v6884 = vand.u32 %v2993, 4294901760
    %6885 = vmatpush.msra.mxu0 %v6884
    %v6886 = vand.u32 %v2991, 4294901760
    %6887 = vmatpush.msra.mxu0 %v6886
    %v6888 = vand.u32 %v2989, 4294901760
    %6889 = vmatpush.msra.mxu0 %v6888
    %v6890 = vand.u32 %v2987, 4294901760
    %6891 = vmatpush.msra.mxu0 %v6890
    %v6892 = vand.u32 %v2985, 4294901760
    %6893 = vmatpush.msra.mxu0 %v6892
    %v6894 = vand.u32 %v2983, 4294901760
    %6895 = vmatpush.msra.mxu0 %v6894
    %v6896 = vand.u32 %v2981, 4294901760
    %6897 = vmatpush.msra.mxu0 %v6896
    %v6898 = vand.u32 %v2979, 4294901760
    %6899 = vmatpush.msra.mxu0 %v6898
    %v6900 = vand.u32 %v2977, 4294901760
    %6901 = vmatpush.msra.mxu0 %v6900
    %v6902 = vand.u32 %v2975, 4294901760
    %6903 = vmatpush.msra.mxu0 %v6902
    %v6904 = vand.u32 %v2973, 4294901760
    %6905 = vmatpush.msra.mxu0 %v6904
    %v6906 = vand.u32 %v2971, 4294901760
    %6907 = vmatpush.msra.mxu0 %v6906
    %v6908 = vand.u32 %v2900, 4294901760
    %6909 = vmatmul.f32.gmra.mxu0 %v6908
    %v6910 = vpop.f32.mrf.mxu0
    %v6911 = vadd.f32 %v6874, %v6910
    %6912 = vdwg.mxu0
    %v6913 = vand.u32 %v3033, 4294901760
    %6914 = vmatpush.msra.mxu0 %v6913
    %v6915 = vand.u32 %v3031, 4294901760
    %6916 = vmatpush.msra.mxu0 %v6915
    %v6917 = vand.u32 %v3029, 4294901760
    %6918 = vmatpush.msra.mxu0 %v6917
    %v6919 = vand.u32 %v3027, 4294901760
    %6920 = vmatpush.msra.mxu0 %v6919
    %v6921 = vand.u32 %v3025, 4294901760
    %6922 = vmatpush.msra.mxu0 %v6921
    %v6923 = vand.u32 %v3023, 4294901760
    %6924 = vmatpush.msra.mxu0 %v6923
    %v6925 = vand.u32 %v3021, 4294901760
    %6926 = vmatpush.msra.mxu0 %v6925
    %v6927 = vand.u32 %v3019, 4294901760
    %6928 = vmatpush.msra.mxu0 %v6927
    %v6929 = vand.u32 %v3017, 4294901760
    %6930 = vmatpush.msra.mxu0 %v6929
    %v6931 = vand.u32 %v3015, 4294901760
    %6932 = vmatpush.msra.mxu0 %v6931
    %v6933 = vand.u32 %v3013, 4294901760
    %6934 = vmatpush.msra.mxu0 %v6933
    %v6935 = vand.u32 %v3011, 4294901760
    %6936 = vmatpush.msra.mxu0 %v6935
    %v6937 = vand.u32 %v3009, 4294901760
    %6938 = vmatpush.msra.mxu0 %v6937
    %v6939 = vand.u32 %v3007, 4294901760
    %6940 = vmatpush.msra.mxu0 %v6939
    %v6941 = vand.u32 %v3005, 4294901760
    %6942 = vmatpush.msra.mxu0 %v6941
    %v6943 = vand.u32 %v3003, 4294901760
    %6944 = vmatpush.msra.mxu0 %v6943
    %v6945 = vand.u32 %v2901, 4294901760
    %v6946 = vsub.f32 %v2901, %v6945
    %v6947 = vand.u32 %v6946, 4294901760
    %v6948 = vsub.f32 %v6946, %v6947
    %v6949 = vand.u32 %v6948, 4294901760
    %6950 = vmatmul.f32.gmra.mxu0 %v6949
    %v6951 = vpop.f32.mrf.mxu0
    %v6952 = vadd.f32 %v6911, %v6951
    %6953 = vdwg.mxu0
    %v6954 = vand.u32 %v3033, 4294901760
    %v6955 = vsub.f32 %v3033, %v6954
    %v6956 = vand.u32 %v6955, 4294901760
    %v6957 = vsub.f32 %v6955, %v6956
    %v6958 = vand.u32 %v6957, 4294901760
    %6959 = vmatpush.msra.mxu0 %v6958
    %v6960 = vand.u32 %v3031, 4294901760
    %v6961 = vsub.f32 %v3031, %v6960
    %v6962 = vand.u32 %v6961, 4294901760
    %v6963 = vsub.f32 %v6961, %v6962
    %v6964 = vand.u32 %v6963, 4294901760
    %6965 = vmatpush.msra.mxu0 %v6964
    %v6966 = vand.u32 %v3029, 4294901760
    %v6967 = vsub.f32 %v3029, %v6966
    %v6968 = vand.u32 %v6967, 4294901760
    %v6969 = vsub.f32 %v6967, %v6968
    %v6970 = vand.u32 %v6969, 4294901760
    %6971 = vmatpush.msra.mxu0 %v6970
    %v6972 = vand.u32 %v3027, 4294901760
    %v6973 = vsub.f32 %v3027, %v6972
    %v6974 = vand.u32 %v6973, 4294901760
    %v6975 = vsub.f32 %v6973, %v6974
    %v6976 = vand.u32 %v6975, 4294901760
    %6977 = vmatpush.msra.mxu0 %v6976
    %v6978 = vand.u32 %v3025, 4294901760
    %v6979 = vsub.f32 %v3025, %v6978
    %v6980 = vand.u32 %v6979, 4294901760
    %v6981 = vsub.f32 %v6979, %v6980
    %v6982 = vand.u32 %v6981, 4294901760
    %6983 = vmatpush.msra.mxu0 %v6982
    %v6984 = vand.u32 %v3023, 4294901760
    %v6985 = vsub.f32 %v3023, %v6984
    %v6986 = vand.u32 %v6985, 4294901760
    %v6987 = vsub.f32 %v6985, %v6986
    %v6988 = vand.u32 %v6987, 4294901760
    %6989 = vmatpush.msra.mxu0 %v6988
    %v6990 = vand.u32 %v3021, 4294901760
    %v6991 = vsub.f32 %v3021, %v6990
    %v6992 = vand.u32 %v6991, 4294901760
    %v6993 = vsub.f32 %v6991, %v6992
    %v6994 = vand.u32 %v6993, 4294901760
    %6995 = vmatpush.msra.mxu0 %v6994
    %v6996 = vand.u32 %v3019, 4294901760
    %v6997 = vsub.f32 %v3019, %v6996
    %v6998 = vand.u32 %v6997, 4294901760
    %v6999 = vsub.f32 %v6997, %v6998
    %v7000 = vand.u32 %v6999, 4294901760
    %7001 = vmatpush.msra.mxu0 %v7000
    %v7002 = vand.u32 %v3017, 4294901760
    %v7003 = vsub.f32 %v3017, %v7002
    %v7004 = vand.u32 %v7003, 4294901760
    %v7005 = vsub.f32 %v7003, %v7004
    %v7006 = vand.u32 %v7005, 4294901760
    %7007 = vmatpush.msra.mxu0 %v7006
    %v7008 = vand.u32 %v3015, 4294901760
    %v7009 = vsub.f32 %v3015, %v7008
    %v7010 = vand.u32 %v7009, 4294901760
    %v7011 = vsub.f32 %v7009, %v7010
    %v7012 = vand.u32 %v7011, 4294901760
    %7013 = vmatpush.msra.mxu0 %v7012
    %v7014 = vand.u32 %v3013, 4294901760
    %v7015 = vsub.f32 %v3013, %v7014
    %v7016 = vand.u32 %v7015, 4294901760
    %v7017 = vsub.f32 %v7015, %v7016
    %v7018 = vand.u32 %v7017, 4294901760
    %7019 = vmatpush.msra.mxu0 %v7018
    %v7020 = vand.u32 %v3011, 4294901760
    %v7021 = vsub.f32 %v3011, %v7020
    %v7022 = vand.u32 %v7021, 4294901760
    %v7023 = vsub.f32 %v7021, %v7022
    %v7024 = vand.u32 %v7023, 4294901760
    %7025 = vmatpush.msra.mxu0 %v7024
    %v7026 = vand.u32 %v3009, 4294901760
    %v7027 = vsub.f32 %v3009, %v7026
    %v7028 = vand.u32 %v7027, 4294901760
    %v7029 = vsub.f32 %v7027, %v7028
    %v7030 = vand.u32 %v7029, 4294901760
    %7031 = vmatpush.msra.mxu0 %v7030
    %v7032 = vand.u32 %v3007, 4294901760
    %v7033 = vsub.f32 %v3007, %v7032
    %v7034 = vand.u32 %v7033, 4294901760
    %v7035 = vsub.f32 %v7033, %v7034
    %v7036 = vand.u32 %v7035, 4294901760
    %7037 = vmatpush.msra.mxu0 %v7036
    %v7038 = vand.u32 %v3005, 4294901760
    %v7039 = vsub.f32 %v3005, %v7038
    %v7040 = vand.u32 %v7039, 4294901760
    %v7041 = vsub.f32 %v7039, %v7040
    %v7042 = vand.u32 %v7041, 4294901760
    %7043 = vmatpush.msra.mxu0 %v7042
    %v7044 = vand.u32 %v3003, 4294901760
    %v7045 = vsub.f32 %v3003, %v7044
    %v7046 = vand.u32 %v7045, 4294901760
    %v7047 = vsub.f32 %v7045, %v7046
    %v7048 = vand.u32 %v7047, 4294901760
    %7049 = vmatpush.msra.mxu0 %v7048
    %v7050 = vand.u32 %v2901, 4294901760
    %7051 = vmatmul.f32.gmra.mxu0 %v7050
    %v7052 = vpop.f32.mrf.mxu0
    %v7053 = vadd.f32 %v6952, %v7052
    %7054 = vdwg.mxu0
    %v7055 = vand.u32 %v3033, 4294901760
    %v7056 = vsub.f32 %v3033, %v7055
    %7057 = vmatpush.msra.mxu0 %v7056
    %v7058 = vand.u32 %v3031, 4294901760
    %v7059 = vsub.f32 %v3031, %v7058
    %7060 = vmatpush.msra.mxu0 %v7059
    %v7061 = vand.u32 %v3029, 4294901760
    %v7062 = vsub.f32 %v3029, %v7061
    %7063 = vmatpush.msra.mxu0 %v7062
    %v7064 = vand.u32 %v3027, 4294901760
    %v7065 = vsub.f32 %v3027, %v7064
    %7066 = vmatpush.msra.mxu0 %v7065
    %v7067 = vand.u32 %v3025, 4294901760
    %v7068 = vsub.f32 %v3025, %v7067
    %7069 = vmatpush.msra.mxu0 %v7068
    %v7070 = vand.u32 %v3023, 4294901760
    %v7071 = vsub.f32 %v3023, %v7070
    %7072 = vmatpush.msra.mxu0 %v7071
    %v7073 = vand.u32 %v3021, 4294901760
    %v7074 = vsub.f32 %v3021, %v7073
    %7075 = vmatpush.msra.mxu0 %v7074
    %v7076 = vand.u32 %v3019, 4294901760
    %v7077 = vsub.f32 %v3019, %v7076
    %7078 = vmatpush.msra.mxu0 %v7077
    %v7079 = vand.u32 %v3017, 4294901760
    %v7080 = vsub.f32 %v3017, %v7079
    %7081 = vmatpush.msra.mxu0 %v7080
    %v7082 = vand.u32 %v3015, 4294901760
    %v7083 = vsub.f32 %v3015, %v7082
    %7084 = vmatpush.msra.mxu0 %v7083
    %v7085 = vand.u32 %v3013, 4294901760
    %v7086 = vsub.f32 %v3013, %v7085
    %7087 = vmatpush.msra.mxu0 %v7086
    %v7088 = vand.u32 %v3011, 4294901760
    %v7089 = vsub.f32 %v3011, %v7088
    %7090 = vmatpush.msra.mxu0 %v7089
    %v7091 = vand.u32 %v3009, 4294901760
    %v7092 = vsub.f32 %v3009, %v7091
    %7093 = vmatpush.msra.mxu0 %v7092
    %v7094 = vand.u32 %v3007, 4294901760
    %v7095 = vsub.f32 %v3007, %v7094
    %7096 = vmatpush.msra.mxu0 %v7095
    %v7097 = vand.u32 %v3005, 4294901760
    %v7098 = vsub.f32 %v3005, %v7097
    %7099 = vmatpush.msra.mxu0 %v7098
    %v7100 = vand.u32 %v3003, 4294901760
    %v7101 = vsub.f32 %v3003, %v7100
    %7102 = vmatpush.msra.mxu0 %v7101
    %v7103 = vand.u32 %v2901, 4294901760
    %v7104 = vsub.f32 %v2901, %v7103
    %7105 = vmatmul.f32.gmra.mxu0 %v7104
    %v7106 = vpop.f32.mrf.mxu0
    %v7107 = vadd.f32 %v7053, %v7106
    %7108 = vdwg.mxu0
    %v7109 = vand.u32 %v3033, 4294901760
    %7110 = vmatpush.msra.mxu0 %v7109
    %v7111 = vand.u32 %v3031, 4294901760
    %7112 = vmatpush.msra.mxu0 %v7111
    %v7113 = vand.u32 %v3029, 4294901760
    %7114 = vmatpush.msra.mxu0 %v7113
    %v7115 = vand.u32 %v3027, 4294901760
    %7116 = vmatpush.msra.mxu0 %v7115
    %v7117 = vand.u32 %v3025, 4294901760
    %7118 = vmatpush.msra.mxu0 %v7117
    %v7119 = vand.u32 %v3023, 4294901760
    %7120 = vmatpush.msra.mxu0 %v7119
    %v7121 = vand.u32 %v3021, 4294901760
    %7122 = vmatpush.msra.mxu0 %v7121
    %v7123 = vand.u32 %v3019, 4294901760
    %7124 = vmatpush.msra.mxu0 %v7123
    %v7125 = vand.u32 %v3017, 4294901760
    %7126 = vmatpush.msra.mxu0 %v7125
    %v7127 = vand.u32 %v3015, 4294901760
    %7128 = vmatpush.msra.mxu0 %v7127
    %v7129 = vand.u32 %v3013, 4294901760
    %7130 = vmatpush.msra.mxu0 %v7129
    %v7131 = vand.u32 %v3011, 4294901760
    %7132 = vmatpush.msra.mxu0 %v7131
    %v7133 = vand.u32 %v3009, 4294901760
    %7134 = vmatpush.msra.mxu0 %v7133
    %v7135 = vand.u32 %v3007, 4294901760
    %7136 = vmatpush.msra.mxu0 %v7135
    %v7137 = vand.u32 %v3005, 4294901760
    %7138 = vmatpush.msra.mxu0 %v7137
    %v7139 = vand.u32 %v3003, 4294901760
    %7140 = vmatpush.msra.mxu0 %v7139
    %v7141 = vand.u32 %v2901, 4294901760
    %v7142 = vsub.f32 %v2901, %v7141
    %v7143 = vand.u32 %v7142, 4294901760
    %7144 = vmatmul.f32.gmra.mxu0 %v7143
    %v7145 = vpop.f32.mrf.mxu0
    %v7146 = vadd.f32 %v7107, %v7145
    %7147 = vdwg.mxu0
    %v7148 = vand.u32 %v3033, 4294901760
    %v7149 = vsub.f32 %v3033, %v7148
    %v7150 = vand.u32 %v7149, 4294901760
    %7151 = vmatpush.msra.mxu0 %v7150
    %v7152 = vand.u32 %v3031, 4294901760
    %v7153 = vsub.f32 %v3031, %v7152
    %v7154 = vand.u32 %v7153, 4294901760
    %7155 = vmatpush.msra.mxu0 %v7154
    %v7156 = vand.u32 %v3029, 4294901760
    %v7157 = vsub.f32 %v3029, %v7156
    %v7158 = vand.u32 %v7157, 4294901760
    %7159 = vmatpush.msra.mxu0 %v7158
    %v7160 = vand.u32 %v3027, 4294901760
    %v7161 = vsub.f32 %v3027, %v7160
    %v7162 = vand.u32 %v7161, 4294901760
    %7163 = vmatpush.msra.mxu0 %v7162
    %v7164 = vand.u32 %v3025, 4294901760
    %v7165 = vsub.f32 %v3025, %v7164
    %v7166 = vand.u32 %v7165, 4294901760
    %7167 = vmatpush.msra.mxu0 %v7166
    %v7168 = vand.u32 %v3023, 4294901760
    %v7169 = vsub.f32 %v3023, %v7168
    %v7170 = vand.u32 %v7169, 4294901760
    %7171 = vmatpush.msra.mxu0 %v7170
    %v7172 = vand.u32 %v3021, 4294901760
    %v7173 = vsub.f32 %v3021, %v7172
    %v7174 = vand.u32 %v7173, 4294901760
    %7175 = vmatpush.msra.mxu0 %v7174
    %v7176 = vand.u32 %v3019, 4294901760
    %v7177 = vsub.f32 %v3019, %v7176
    %v7178 = vand.u32 %v7177, 4294901760
    %7179 = vmatpush.msra.mxu0 %v7178
    %v7180 = vand.u32 %v3017, 4294901760
    %v7181 = vsub.f32 %v3017, %v7180
    %v7182 = vand.u32 %v7181, 4294901760
    %7183 = vmatpush.msra.mxu0 %v7182
    %v7184 = vand.u32 %v3015, 4294901760
    %v7185 = vsub.f32 %v3015, %v7184
    %v7186 = vand.u32 %v7185, 4294901760
    %7187 = vmatpush.msra.mxu0 %v7186
    %v7188 = vand.u32 %v3013, 4294901760
    %v7189 = vsub.f32 %v3013, %v7188
    %v7190 = vand.u32 %v7189, 4294901760
    %7191 = vmatpush.msra.mxu0 %v7190
    %v7192 = vand.u32 %v3011, 4294901760
    %v7193 = vsub.f32 %v3011, %v7192
    %v7194 = vand.u32 %v7193, 4294901760
    %7195 = vmatpush.msra.mxu0 %v7194
    %v7196 = vand.u32 %v3009, 4294901760
    %v7197 = vsub.f32 %v3009, %v7196
    %v7198 = vand.u32 %v7197, 4294901760
    %7199 = vmatpush.msra.mxu0 %v7198
    %v7200 = vand.u32 %v3007, 4294901760
    %v7201 = vsub.f32 %v3007, %v7200
    %v7202 = vand.u32 %v7201, 4294901760
    %7203 = vmatpush.msra.mxu0 %v7202
    %v7204 = vand.u32 %v3005, 4294901760
    %v7205 = vsub.f32 %v3005, %v7204
    %v7206 = vand.u32 %v7205, 4294901760
    %7207 = vmatpush.msra.mxu0 %v7206
    %v7208 = vand.u32 %v3003, 4294901760
    %v7209 = vsub.f32 %v3003, %v7208
    %v7210 = vand.u32 %v7209, 4294901760
    %7211 = vmatpush.msra.mxu0 %v7210
    %v7212 = vand.u32 %v2901, 4294901760
    %7213 = vmatmul.f32.gmra.mxu0 %v7212
    %v7214 = vpop.f32.mrf.mxu0
    %v7215 = vadd.f32 %v7146, %v7214
    %7216 = vdwg.mxu0
    %v7217 = vand.u32 %v3033, 4294901760
    %7218 = vmatpush.msra.mxu0 %v7217
    %v7219 = vand.u32 %v3031, 4294901760
    %7220 = vmatpush.msra.mxu0 %v7219
    %v7221 = vand.u32 %v3029, 4294901760
    %7222 = vmatpush.msra.mxu0 %v7221
    %v7223 = vand.u32 %v3027, 4294901760
    %7224 = vmatpush.msra.mxu0 %v7223
    %v7225 = vand.u32 %v3025, 4294901760
    %7226 = vmatpush.msra.mxu0 %v7225
    %v7227 = vand.u32 %v3023, 4294901760
    %7228 = vmatpush.msra.mxu0 %v7227
    %v7229 = vand.u32 %v3021, 4294901760
    %7230 = vmatpush.msra.mxu0 %v7229
    %v7231 = vand.u32 %v3019, 4294901760
    %7232 = vmatpush.msra.mxu0 %v7231
    %v7233 = vand.u32 %v3017, 4294901760
    %7234 = vmatpush.msra.mxu0 %v7233
    %v7235 = vand.u32 %v3015, 4294901760
    %7236 = vmatpush.msra.mxu0 %v7235
    %v7237 = vand.u32 %v3013, 4294901760
    %7238 = vmatpush.msra.mxu0 %v7237
    %v7239 = vand.u32 %v3011, 4294901760
    %7240 = vmatpush.msra.mxu0 %v7239
    %v7241 = vand.u32 %v3009, 4294901760
    %7242 = vmatpush.msra.mxu0 %v7241
    %v7243 = vand.u32 %v3007, 4294901760
    %7244 = vmatpush.msra.mxu0 %v7243
    %v7245 = vand.u32 %v3005, 4294901760
    %7246 = vmatpush.msra.mxu0 %v7245
    %v7247 = vand.u32 %v3003, 4294901760
    %7248 = vmatpush.msra.mxu0 %v7247
    %v7249 = vand.u32 %v2901, 4294901760
    %7250 = vmatmul.f32.gmra.mxu0 %v7249
    %v7251 = vpop.f32.mrf.mxu0
    %v7252 = vadd.f32 %v7215, %v7251
    %7253 = vdwg.mxu0
    %v7254 = vand.u32 %v3065, 4294901760
    %7255 = vmatpush.msra.mxu0 %v7254
    %v7256 = vand.u32 %v3063, 4294901760
    %7257 = vmatpush.msra.mxu0 %v7256
    %v7258 = vand.u32 %v3061, 4294901760
    %7259 = vmatpush.msra.mxu0 %v7258
    %v7260 = vand.u32 %v3059, 4294901760
    %7261 = vmatpush.msra.mxu0 %v7260
    %v7262 = vand.u32 %v3057, 4294901760
    %7263 = vmatpush.msra.mxu0 %v7262
    %v7264 = vand.u32 %v3055, 4294901760
    %7265 = vmatpush.msra.mxu0 %v7264
    %v7266 = vand.u32 %v3053, 4294901760
    %7267 = vmatpush.msra.mxu0 %v7266
    %v7268 = vand.u32 %v3051, 4294901760
    %7269 = vmatpush.msra.mxu0 %v7268
    %v7270 = vand.u32 %v3049, 4294901760
    %7271 = vmatpush.msra.mxu0 %v7270
    %v7272 = vand.u32 %v3047, 4294901760
    %7273 = vmatpush.msra.mxu0 %v7272
    %v7274 = vand.u32 %v3045, 4294901760
    %7275 = vmatpush.msra.mxu0 %v7274
    %v7276 = vand.u32 %v3043, 4294901760
    %7277 = vmatpush.msra.mxu0 %v7276
    %v7278 = vand.u32 %v3041, 4294901760
    %7279 = vmatpush.msra.mxu0 %v7278
    %v7280 = vand.u32 %v3039, 4294901760
    %7281 = vmatpush.msra.mxu0 %v7280
    %v7282 = vand.u32 %v3037, 4294901760
    %7283 = vmatpush.msra.mxu0 %v7282
    %v7284 = vand.u32 %v3035, 4294901760
    %7285 = vmatpush.msra.mxu0 %v7284
    %v7286 = vand.u32 %v2902, 4294901760
    %v7287 = vsub.f32 %v2902, %v7286
    %v7288 = vand.u32 %v7287, 4294901760
    %v7289 = vsub.f32 %v7287, %v7288
    %v7290 = vand.u32 %v7289, 4294901760
    %7291 = vmatmul.f32.gmra.mxu0 %v7290
    %v7292 = vpop.f32.mrf.mxu0
    %v7293 = vadd.f32 %v7252, %v7292
    %7294 = vdwg.mxu0
    %v7295 = vand.u32 %v3065, 4294901760
    %v7296 = vsub.f32 %v3065, %v7295
    %v7297 = vand.u32 %v7296, 4294901760
    %v7298 = vsub.f32 %v7296, %v7297
    %v7299 = vand.u32 %v7298, 4294901760
    %7300 = vmatpush.msra.mxu0 %v7299
    %v7301 = vand.u32 %v3063, 4294901760
    %v7302 = vsub.f32 %v3063, %v7301
    %v7303 = vand.u32 %v7302, 4294901760
    %v7304 = vsub.f32 %v7302, %v7303
    %v7305 = vand.u32 %v7304, 4294901760
    %7306 = vmatpush.msra.mxu0 %v7305
    %v7307 = vand.u32 %v3061, 4294901760
    %v7308 = vsub.f32 %v3061, %v7307
    %v7309 = vand.u32 %v7308, 4294901760
    %v7310 = vsub.f32 %v7308, %v7309
    %v7311 = vand.u32 %v7310, 4294901760
    %7312 = vmatpush.msra.mxu0 %v7311
    %v7313 = vand.u32 %v3059, 4294901760
    %v7314 = vsub.f32 %v3059, %v7313
    %v7315 = vand.u32 %v7314, 4294901760
    %v7316 = vsub.f32 %v7314, %v7315
    %v7317 = vand.u32 %v7316, 4294901760
    %7318 = vmatpush.msra.mxu0 %v7317
    %v7319 = vand.u32 %v3057, 4294901760
    %v7320 = vsub.f32 %v3057, %v7319
    %v7321 = vand.u32 %v7320, 4294901760
    %v7322 = vsub.f32 %v7320, %v7321
    %v7323 = vand.u32 %v7322, 4294901760
    %7324 = vmatpush.msra.mxu0 %v7323
    %v7325 = vand.u32 %v3055, 4294901760
    %v7326 = vsub.f32 %v3055, %v7325
    %v7327 = vand.u32 %v7326, 4294901760
    %v7328 = vsub.f32 %v7326, %v7327
    %v7329 = vand.u32 %v7328, 4294901760
    %7330 = vmatpush.msra.mxu0 %v7329
    %v7331 = vand.u32 %v3053, 4294901760
    %v7332 = vsub.f32 %v3053, %v7331
    %v7333 = vand.u32 %v7332, 4294901760
    %v7334 = vsub.f32 %v7332, %v7333
    %v7335 = vand.u32 %v7334, 4294901760
    %7336 = vmatpush.msra.mxu0 %v7335
    %v7337 = vand.u32 %v3051, 4294901760
    %v7338 = vsub.f32 %v3051, %v7337
    %v7339 = vand.u32 %v7338, 4294901760
    %v7340 = vsub.f32 %v7338, %v7339
    %v7341 = vand.u32 %v7340, 4294901760
    %7342 = vmatpush.msra.mxu0 %v7341
    %v7343 = vand.u32 %v3049, 4294901760
    %v7344 = vsub.f32 %v3049, %v7343
    %v7345 = vand.u32 %v7344, 4294901760
    %v7346 = vsub.f32 %v7344, %v7345
    %v7347 = vand.u32 %v7346, 4294901760
    %7348 = vmatpush.msra.mxu0 %v7347
    %v7349 = vand.u32 %v3047, 4294901760
    %v7350 = vsub.f32 %v3047, %v7349
    %v7351 = vand.u32 %v7350, 4294901760
    %v7352 = vsub.f32 %v7350, %v7351
    %v7353 = vand.u32 %v7352, 4294901760
    %7354 = vmatpush.msra.mxu0 %v7353
    %v7355 = vand.u32 %v3045, 4294901760
    %v7356 = vsub.f32 %v3045, %v7355
    %v7357 = vand.u32 %v7356, 4294901760
    %v7358 = vsub.f32 %v7356, %v7357
    %v7359 = vand.u32 %v7358, 4294901760
    %7360 = vmatpush.msra.mxu0 %v7359
    %v7361 = vand.u32 %v3043, 4294901760
    %v7362 = vsub.f32 %v3043, %v7361
    %v7363 = vand.u32 %v7362, 4294901760
    %v7364 = vsub.f32 %v7362, %v7363
    %v7365 = vand.u32 %v7364, 4294901760
    %7366 = vmatpush.msra.mxu0 %v7365
    %v7367 = vand.u32 %v3041, 4294901760
    %v7368 = vsub.f32 %v3041, %v7367
    %v7369 = vand.u32 %v7368, 4294901760
    %v7370 = vsub.f32 %v7368, %v7369
    %v7371 = vand.u32 %v7370, 4294901760
    %7372 = vmatpush.msra.mxu0 %v7371
    %v7373 = vand.u32 %v3039, 4294901760
    %v7374 = vsub.f32 %v3039, %v7373
    %v7375 = vand.u32 %v7374, 4294901760
    %v7376 = vsub.f32 %v7374, %v7375
    %v7377 = vand.u32 %v7376, 4294901760
    %7378 = vmatpush.msra.mxu0 %v7377
    %v7379 = vand.u32 %v3037, 4294901760
    %v7380 = vsub.f32 %v3037, %v7379
    %v7381 = vand.u32 %v7380, 4294901760
    %v7382 = vsub.f32 %v7380, %v7381
    %v7383 = vand.u32 %v7382, 4294901760
    %7384 = vmatpush.msra.mxu0 %v7383
    %v7385 = vand.u32 %v3035, 4294901760
    %v7386 = vsub.f32 %v3035, %v7385
    %v7387 = vand.u32 %v7386, 4294901760
    %v7388 = vsub.f32 %v7386, %v7387
    %v7389 = vand.u32 %v7388, 4294901760
    %7390 = vmatpush.msra.mxu0 %v7389
    %v7391 = vand.u32 %v2902, 4294901760
    %7392 = vmatmul.f32.gmra.mxu0 %v7391
    %v7393 = vpop.f32.mrf.mxu0
    %v7394 = vadd.f32 %v7293, %v7393
    %7395 = vdwg.mxu0
    %v7396 = vand.u32 %v3065, 4294901760
    %v7397 = vsub.f32 %v3065, %v7396
    %7398 = vmatpush.msra.mxu0 %v7397
    %v7399 = vand.u32 %v3063, 4294901760
    %v7400 = vsub.f32 %v3063, %v7399
    %7401 = vmatpush.msra.mxu0 %v7400
    %v7402 = vand.u32 %v3061, 4294901760
    %v7403 = vsub.f32 %v3061, %v7402
    %7404 = vmatpush.msra.mxu0 %v7403
    %v7405 = vand.u32 %v3059, 4294901760
    %v7406 = vsub.f32 %v3059, %v7405
    %7407 = vmatpush.msra.mxu0 %v7406
    %v7408 = vand.u32 %v3057, 4294901760
    %v7409 = vsub.f32 %v3057, %v7408
    %7410 = vmatpush.msra.mxu0 %v7409
    %v7411 = vand.u32 %v3055, 4294901760
    %v7412 = vsub.f32 %v3055, %v7411
    %7413 = vmatpush.msra.mxu0 %v7412
    %v7414 = vand.u32 %v3053, 4294901760
    %v7415 = vsub.f32 %v3053, %v7414
    %7416 = vmatpush.msra.mxu0 %v7415
    %v7417 = vand.u32 %v3051, 4294901760
    %v7418 = vsub.f32 %v3051, %v7417
    %7419 = vmatpush.msra.mxu0 %v7418
    %v7420 = vand.u32 %v3049, 4294901760
    %v7421 = vsub.f32 %v3049, %v7420
    %7422 = vmatpush.msra.mxu0 %v7421
    %v7423 = vand.u32 %v3047, 4294901760
    %v7424 = vsub.f32 %v3047, %v7423
    %7425 = vmatpush.msra.mxu0 %v7424
    %v7426 = vand.u32 %v3045, 4294901760
    %v7427 = vsub.f32 %v3045, %v7426
    %7428 = vmatpush.msra.mxu0 %v7427
    %v7429 = vand.u32 %v3043, 4294901760
    %v7430 = vsub.f32 %v3043, %v7429
    %7431 = vmatpush.msra.mxu0 %v7430
    %v7432 = vand.u32 %v3041, 4294901760
    %v7433 = vsub.f32 %v3041, %v7432
    %7434 = vmatpush.msra.mxu0 %v7433
    %v7435 = vand.u32 %v3039, 4294901760
    %v7436 = vsub.f32 %v3039, %v7435
    %7437 = vmatpush.msra.mxu0 %v7436
    %v7438 = vand.u32 %v3037, 4294901760
    %v7439 = vsub.f32 %v3037, %v7438
    %7440 = vmatpush.msra.mxu0 %v7439
    %v7441 = vand.u32 %v3035, 4294901760
    %v7442 = vsub.f32 %v3035, %v7441
    %7443 = vmatpush.msra.mxu0 %v7442
    %v7444 = vand.u32 %v2902, 4294901760
    %v7445 = vsub.f32 %v2902, %v7444
    %7446 = vmatmul.f32.gmra.mxu0 %v7445
    %v7447 = vpop.f32.mrf.mxu0
    %v7448 = vadd.f32 %v7394, %v7447
    %7449 = vdwg.mxu0
    %v7450 = vand.u32 %v3065, 4294901760
    %7451 = vmatpush.msra.mxu0 %v7450
    %v7452 = vand.u32 %v3063, 4294901760
    %7453 = vmatpush.msra.mxu0 %v7452
    %v7454 = vand.u32 %v3061, 4294901760
    %7455 = vmatpush.msra.mxu0 %v7454
    %v7456 = vand.u32 %v3059, 4294901760
    %7457 = vmatpush.msra.mxu0 %v7456
    %v7458 = vand.u32 %v3057, 4294901760
    %7459 = vmatpush.msra.mxu0 %v7458
    %v7460 = vand.u32 %v3055, 4294901760
    %7461 = vmatpush.msra.mxu0 %v7460
    %v7462 = vand.u32 %v3053, 4294901760
    %7463 = vmatpush.msra.mxu0 %v7462
    %v7464 = vand.u32 %v3051, 4294901760
    %7465 = vmatpush.msra.mxu0 %v7464
    %v7466 = vand.u32 %v3049, 4294901760
    %7467 = vmatpush.msra.mxu0 %v7466
    %v7468 = vand.u32 %v3047, 4294901760
    %7469 = vmatpush.msra.mxu0 %v7468
    %v7470 = vand.u32 %v3045, 4294901760
    %7471 = vmatpush.msra.mxu0 %v7470
    %v7472 = vand.u32 %v3043, 4294901760
    %7473 = vmatpush.msra.mxu0 %v7472
    %v7474 = vand.u32 %v3041, 4294901760
    %7475 = vmatpush.msra.mxu0 %v7474
    %v7476 = vand.u32 %v3039, 4294901760
    %7477 = vmatpush.msra.mxu0 %v7476
    %v7478 = vand.u32 %v3037, 4294901760
    %7479 = vmatpush.msra.mxu0 %v7478
    %v7480 = vand.u32 %v3035, 4294901760
    %7481 = vmatpush.msra.mxu0 %v7480
    %v7482 = vand.u32 %v2902, 4294901760
    %v7483 = vsub.f32 %v2902, %v7482
    %v7484 = vand.u32 %v7483, 4294901760
    %7485 = vmatmul.f32.gmra.mxu0 %v7484
    %v7486 = vpop.f32.mrf.mxu0
    %v7487 = vadd.f32 %v7448, %v7486
    %7488 = vdwg.mxu0
    %v7489 = vand.u32 %v3065, 4294901760
    %v7490 = vsub.f32 %v3065, %v7489
    %v7491 = vand.u32 %v7490, 4294901760
    %7492 = vmatpush.msra.mxu0 %v7491
    %v7493 = vand.u32 %v3063, 4294901760
    %v7494 = vsub.f32 %v3063, %v7493
    %v7495 = vand.u32 %v7494, 4294901760
    %7496 = vmatpush.msra.mxu0 %v7495
    %v7497 = vand.u32 %v3061, 4294901760
    %v7498 = vsub.f32 %v3061, %v7497
    %v7499 = vand.u32 %v7498, 4294901760
    %7500 = vmatpush.msra.mxu0 %v7499
    %v7501 = vand.u32 %v3059, 4294901760
    %v7502 = vsub.f32 %v3059, %v7501
    %v7503 = vand.u32 %v7502, 4294901760
    %7504 = vmatpush.msra.mxu0 %v7503
    %v7505 = vand.u32 %v3057, 4294901760
    %v7506 = vsub.f32 %v3057, %v7505
    %v7507 = vand.u32 %v7506, 4294901760
    %7508 = vmatpush.msra.mxu0 %v7507
    %v7509 = vand.u32 %v3055, 4294901760
    %v7510 = vsub.f32 %v3055, %v7509
    %v7511 = vand.u32 %v7510, 4294901760
    %7512 = vmatpush.msra.mxu0 %v7511
    %v7513 = vand.u32 %v3053, 4294901760
    %v7514 = vsub.f32 %v3053, %v7513
    %v7515 = vand.u32 %v7514, 4294901760
    %7516 = vmatpush.msra.mxu0 %v7515
    %v7517 = vand.u32 %v3051, 4294901760
    %v7518 = vsub.f32 %v3051, %v7517
    %v7519 = vand.u32 %v7518, 4294901760
    %7520 = vmatpush.msra.mxu0 %v7519
    %v7521 = vand.u32 %v3049, 4294901760
    %v7522 = vsub.f32 %v3049, %v7521
    %v7523 = vand.u32 %v7522, 4294901760
    %7524 = vmatpush.msra.mxu0 %v7523
    %v7525 = vand.u32 %v3047, 4294901760
    %v7526 = vsub.f32 %v3047, %v7525
    %v7527 = vand.u32 %v7526, 4294901760
    %7528 = vmatpush.msra.mxu0 %v7527
    %v7529 = vand.u32 %v3045, 4294901760
    %v7530 = vsub.f32 %v3045, %v7529
    %v7531 = vand.u32 %v7530, 4294901760
    %7532 = vmatpush.msra.mxu0 %v7531
    %v7533 = vand.u32 %v3043, 4294901760
    %v7534 = vsub.f32 %v3043, %v7533
    %v7535 = vand.u32 %v7534, 4294901760
    %7536 = vmatpush.msra.mxu0 %v7535
    %v7537 = vand.u32 %v3041, 4294901760
    %v7538 = vsub.f32 %v3041, %v7537
    %v7539 = vand.u32 %v7538, 4294901760
    %7540 = vmatpush.msra.mxu0 %v7539
    %v7541 = vand.u32 %v3039, 4294901760
    %v7542 = vsub.f32 %v3039, %v7541
    %v7543 = vand.u32 %v7542, 4294901760
    %7544 = vmatpush.msra.mxu0 %v7543
    %v7545 = vand.u32 %v3037, 4294901760
    %v7546 = vsub.f32 %v3037, %v7545
    %v7547 = vand.u32 %v7546, 4294901760
    %7548 = vmatpush.msra.mxu0 %v7547
    %v7549 = vand.u32 %v3035, 4294901760
    %v7550 = vsub.f32 %v3035, %v7549
    %v7551 = vand.u32 %v7550, 4294901760
    %7552 = vmatpush.msra.mxu0 %v7551
    %v7553 = vand.u32 %v2902, 4294901760
    %7554 = vmatmul.f32.gmra.mxu0 %v7553
    %v7555 = vpop.f32.mrf.mxu0
    %v7556 = vadd.f32 %v7487, %v7555
    %7557 = vdwg.mxu0
    %v7558 = vand.u32 %v3065, 4294901760
    %7559 = vmatpush.msra.mxu0 %v7558
    %v7560 = vand.u32 %v3063, 4294901760
    %7561 = vmatpush.msra.mxu0 %v7560
    %v7562 = vand.u32 %v3061, 4294901760
    %7563 = vmatpush.msra.mxu0 %v7562
    %v7564 = vand.u32 %v3059, 4294901760
    %7565 = vmatpush.msra.mxu0 %v7564
    %v7566 = vand.u32 %v3057, 4294901760
    %7567 = vmatpush.msra.mxu0 %v7566
    %v7568 = vand.u32 %v3055, 4294901760
    %7569 = vmatpush.msra.mxu0 %v7568
    %v7570 = vand.u32 %v3053, 4294901760
    %7571 = vmatpush.msra.mxu0 %v7570
    %v7572 = vand.u32 %v3051, 4294901760
    %7573 = vmatpush.msra.mxu0 %v7572
    %v7574 = vand.u32 %v3049, 4294901760
    %7575 = vmatpush.msra.mxu0 %v7574
    %v7576 = vand.u32 %v3047, 4294901760
    %7577 = vmatpush.msra.mxu0 %v7576
    %v7578 = vand.u32 %v3045, 4294901760
    %7579 = vmatpush.msra.mxu0 %v7578
    %v7580 = vand.u32 %v3043, 4294901760
    %7581 = vmatpush.msra.mxu0 %v7580
    %v7582 = vand.u32 %v3041, 4294901760
    %7583 = vmatpush.msra.mxu0 %v7582
    %v7584 = vand.u32 %v3039, 4294901760
    %7585 = vmatpush.msra.mxu0 %v7584
    %v7586 = vand.u32 %v3037, 4294901760
    %7587 = vmatpush.msra.mxu0 %v7586
    %v7588 = vand.u32 %v3035, 4294901760
    %7589 = vmatpush.msra.mxu0 %v7588
    %v7590 = vand.u32 %v2902, 4294901760
    %7591 = vmatmul.f32.gmra.mxu0 %v7590
    %v7592 = vpop.f32.mrf.mxu0
    %v7593 = vadd.f32 %v7556, %v7592
    %7594 = vdwg.mxu0
    %v7595 = vand.u32 %v3097, 4294901760
    %7596 = vmatpush.msra.mxu0 %v7595
    %v7597 = vand.u32 %v3095, 4294901760
    %7598 = vmatpush.msra.mxu0 %v7597
    %v7599 = vand.u32 %v3093, 4294901760
    %7600 = vmatpush.msra.mxu0 %v7599
    %v7601 = vand.u32 %v3091, 4294901760
    %7602 = vmatpush.msra.mxu0 %v7601
    %v7603 = vand.u32 %v3089, 4294901760
    %7604 = vmatpush.msra.mxu0 %v7603
    %v7605 = vand.u32 %v3087, 4294901760
    %7606 = vmatpush.msra.mxu0 %v7605
    %v7607 = vand.u32 %v3085, 4294901760
    %7608 = vmatpush.msra.mxu0 %v7607
    %v7609 = vand.u32 %v3083, 4294901760
    %7610 = vmatpush.msra.mxu0 %v7609
    %v7611 = vand.u32 %v3081, 4294901760
    %7612 = vmatpush.msra.mxu0 %v7611
    %v7613 = vand.u32 %v3079, 4294901760
    %7614 = vmatpush.msra.mxu0 %v7613
    %v7615 = vand.u32 %v3077, 4294901760
    %7616 = vmatpush.msra.mxu0 %v7615
    %v7617 = vand.u32 %v3075, 4294901760
    %7618 = vmatpush.msra.mxu0 %v7617
    %v7619 = vand.u32 %v3073, 4294901760
    %7620 = vmatpush.msra.mxu0 %v7619
    %v7621 = vand.u32 %v3071, 4294901760
    %7622 = vmatpush.msra.mxu0 %v7621
    %v7623 = vand.u32 %v3069, 4294901760
    %7624 = vmatpush.msra.mxu0 %v7623
    %v7625 = vand.u32 %v3067, 4294901760
    %7626 = vmatpush.msra.mxu0 %v7625
    %v7627 = vand.u32 %v2903, 4294901760
    %v7628 = vsub.f32 %v2903, %v7627
    %v7629 = vand.u32 %v7628, 4294901760
    %v7630 = vsub.f32 %v7628, %v7629
    %v7631 = vand.u32 %v7630, 4294901760
    %7632 = vmatmul.f32.gmra.mxu0 %v7631
    %v7633 = vpop.f32.mrf.mxu0
    %v7634 = vadd.f32 %v7593, %v7633
    %7635 = vdwg.mxu0
    %v7636 = vand.u32 %v3097, 4294901760
    %v7637 = vsub.f32 %v3097, %v7636
    %v7638 = vand.u32 %v7637, 4294901760
    %v7639 = vsub.f32 %v7637, %v7638
    %v7640 = vand.u32 %v7639, 4294901760
    %7641 = vmatpush.msra.mxu0 %v7640
    %v7642 = vand.u32 %v3095, 4294901760
    %v7643 = vsub.f32 %v3095, %v7642
    %v7644 = vand.u32 %v7643, 4294901760
    %v7645 = vsub.f32 %v7643, %v7644
    %v7646 = vand.u32 %v7645, 4294901760
    %7647 = vmatpush.msra.mxu0 %v7646
    %v7648 = vand.u32 %v3093, 4294901760
    %v7649 = vsub.f32 %v3093, %v7648
    %v7650 = vand.u32 %v7649, 4294901760
    %v7651 = vsub.f32 %v7649, %v7650
    %v7652 = vand.u32 %v7651, 4294901760
    %7653 = vmatpush.msra.mxu0 %v7652
    %v7654 = vand.u32 %v3091, 4294901760
    %v7655 = vsub.f32 %v3091, %v7654
    %v7656 = vand.u32 %v7655, 4294901760
    %v7657 = vsub.f32 %v7655, %v7656
    %v7658 = vand.u32 %v7657, 4294901760
    %7659 = vmatpush.msra.mxu0 %v7658
    %v7660 = vand.u32 %v3089, 4294901760
    %v7661 = vsub.f32 %v3089, %v7660
    %v7662 = vand.u32 %v7661, 4294901760
    %v7663 = vsub.f32 %v7661, %v7662
    %v7664 = vand.u32 %v7663, 4294901760
    %7665 = vmatpush.msra.mxu0 %v7664
    %v7666 = vand.u32 %v3087, 4294901760
    %v7667 = vsub.f32 %v3087, %v7666
    %v7668 = vand.u32 %v7667, 4294901760
    %v7669 = vsub.f32 %v7667, %v7668
    %v7670 = vand.u32 %v7669, 4294901760
    %7671 = vmatpush.msra.mxu0 %v7670
    %v7672 = vand.u32 %v3085, 4294901760
    %v7673 = vsub.f32 %v3085, %v7672
    %v7674 = vand.u32 %v7673, 4294901760
    %v7675 = vsub.f32 %v7673, %v7674
    %v7676 = vand.u32 %v7675, 4294901760
    %7677 = vmatpush.msra.mxu0 %v7676
    %v7678 = vand.u32 %v3083, 4294901760
    %v7679 = vsub.f32 %v3083, %v7678
    %v7680 = vand.u32 %v7679, 4294901760
    %v7681 = vsub.f32 %v7679, %v7680
    %v7682 = vand.u32 %v7681, 4294901760
    %7683 = vmatpush.msra.mxu0 %v7682
    %v7684 = vand.u32 %v3081, 4294901760
    %v7685 = vsub.f32 %v3081, %v7684
    %v7686 = vand.u32 %v7685, 4294901760
    %v7687 = vsub.f32 %v7685, %v7686
    %v7688 = vand.u32 %v7687, 4294901760
    %7689 = vmatpush.msra.mxu0 %v7688
    %v7690 = vand.u32 %v3079, 4294901760
    %v7691 = vsub.f32 %v3079, %v7690
    %v7692 = vand.u32 %v7691, 4294901760
    %v7693 = vsub.f32 %v7691, %v7692
    %v7694 = vand.u32 %v7693, 4294901760
    %7695 = vmatpush.msra.mxu0 %v7694
    %v7696 = vand.u32 %v3077, 4294901760
    %v7697 = vsub.f32 %v3077, %v7696
    %v7698 = vand.u32 %v7697, 4294901760
    %v7699 = vsub.f32 %v7697, %v7698
    %v7700 = vand.u32 %v7699, 4294901760
    %7701 = vmatpush.msra.mxu0 %v7700
    %v7702 = vand.u32 %v3075, 4294901760
    %v7703 = vsub.f32 %v3075, %v7702
    %v7704 = vand.u32 %v7703, 4294901760
    %v7705 = vsub.f32 %v7703, %v7704
    %v7706 = vand.u32 %v7705, 4294901760
    %7707 = vmatpush.msra.mxu0 %v7706
    %v7708 = vand.u32 %v3073, 4294901760
    %v7709 = vsub.f32 %v3073, %v7708
    %v7710 = vand.u32 %v7709, 4294901760
    %v7711 = vsub.f32 %v7709, %v7710
    %v7712 = vand.u32 %v7711, 4294901760
    %7713 = vmatpush.msra.mxu0 %v7712
    %v7714 = vand.u32 %v3071, 4294901760
    %v7715 = vsub.f32 %v3071, %v7714
    %v7716 = vand.u32 %v7715, 4294901760
    %v7717 = vsub.f32 %v7715, %v7716
    %v7718 = vand.u32 %v7717, 4294901760
    %7719 = vmatpush.msra.mxu0 %v7718
    %v7720 = vand.u32 %v3069, 4294901760
    %v7721 = vsub.f32 %v3069, %v7720
    %v7722 = vand.u32 %v7721, 4294901760
    %v7723 = vsub.f32 %v7721, %v7722
    %v7724 = vand.u32 %v7723, 4294901760
    %7725 = vmatpush.msra.mxu0 %v7724
    %v7726 = vand.u32 %v3067, 4294901760
    %v7727 = vsub.f32 %v3067, %v7726
    %v7728 = vand.u32 %v7727, 4294901760
    %v7729 = vsub.f32 %v7727, %v7728
    %v7730 = vand.u32 %v7729, 4294901760
    %7731 = vmatpush.msra.mxu0 %v7730
    %v7732 = vand.u32 %v2903, 4294901760
    %7733 = vmatmul.f32.gmra.mxu0 %v7732
    %v7734 = vpop.f32.mrf.mxu0
    %v7735 = vadd.f32 %v7634, %v7734
    %7736 = vdwg.mxu0
    %v7737 = vand.u32 %v3097, 4294901760
    %v7738 = vsub.f32 %v3097, %v7737
    %7739 = vmatpush.msra.mxu0 %v7738
    %v7740 = vand.u32 %v3095, 4294901760
    %v7741 = vsub.f32 %v3095, %v7740
    %7742 = vmatpush.msra.mxu0 %v7741
    %v7743 = vand.u32 %v3093, 4294901760
    %v7744 = vsub.f32 %v3093, %v7743
    %7745 = vmatpush.msra.mxu0 %v7744
    %v7746 = vand.u32 %v3091, 4294901760
    %v7747 = vsub.f32 %v3091, %v7746
    %7748 = vmatpush.msra.mxu0 %v7747
    %v7749 = vand.u32 %v3089, 4294901760
    %v7750 = vsub.f32 %v3089, %v7749
    %7751 = vmatpush.msra.mxu0 %v7750
    %v7752 = vand.u32 %v3087, 4294901760
    %v7753 = vsub.f32 %v3087, %v7752
    %7754 = vmatpush.msra.mxu0 %v7753
    %v7755 = vand.u32 %v3085, 4294901760
    %v7756 = vsub.f32 %v3085, %v7755
    %7757 = vmatpush.msra.mxu0 %v7756
    %v7758 = vand.u32 %v3083, 4294901760
    %v7759 = vsub.f32 %v3083, %v7758
    %7760 = vmatpush.msra.mxu0 %v7759
    %v7761 = vand.u32 %v3081, 4294901760
    %v7762 = vsub.f32 %v3081, %v7761
    %7763 = vmatpush.msra.mxu0 %v7762
    %v7764 = vand.u32 %v3079, 4294901760
    %v7765 = vsub.f32 %v3079, %v7764
    %7766 = vmatpush.msra.mxu0 %v7765
    %v7767 = vand.u32 %v3077, 4294901760
    %v7768 = vsub.f32 %v3077, %v7767
    %7769 = vmatpush.msra.mxu0 %v7768
    %v7770 = vand.u32 %v3075, 4294901760
    %v7771 = vsub.f32 %v3075, %v7770
    %7772 = vmatpush.msra.mxu0 %v7771
    %v7773 = vand.u32 %v3073, 4294901760
    %v7774 = vsub.f32 %v3073, %v7773
    %7775 = vmatpush.msra.mxu0 %v7774
    %v7776 = vand.u32 %v3071, 4294901760
    %v7777 = vsub.f32 %v3071, %v7776
    %7778 = vmatpush.msra.mxu0 %v7777
    %v7779 = vand.u32 %v3069, 4294901760
    %v7780 = vsub.f32 %v3069, %v7779
    %7781 = vmatpush.msra.mxu0 %v7780
    %v7782 = vand.u32 %v3067, 4294901760
    %v7783 = vsub.f32 %v3067, %v7782
    %7784 = vmatpush.msra.mxu0 %v7783
    %v7785 = vand.u32 %v2903, 4294901760
    %v7786 = vsub.f32 %v2903, %v7785
    %7787 = vmatmul.f32.gmra.mxu0 %v7786
    %v7788 = vpop.f32.mrf.mxu0
    %v7789 = vadd.f32 %v7735, %v7788
    %7790 = vdwg.mxu0
    %v7791 = vand.u32 %v3097, 4294901760
    %7792 = vmatpush.msra.mxu0 %v7791
    %v7793 = vand.u32 %v3095, 4294901760
    %7794 = vmatpush.msra.mxu0 %v7793
    %v7795 = vand.u32 %v3093, 4294901760
    %7796 = vmatpush.msra.mxu0 %v7795
    %v7797 = vand.u32 %v3091, 4294901760
    %7798 = vmatpush.msra.mxu0 %v7797
    %v7799 = vand.u32 %v3089, 4294901760
    %7800 = vmatpush.msra.mxu0 %v7799
    %v7801 = vand.u32 %v3087, 4294901760
    %7802 = vmatpush.msra.mxu0 %v7801
    %v7803 = vand.u32 %v3085, 4294901760
    %7804 = vmatpush.msra.mxu0 %v7803
    %v7805 = vand.u32 %v3083, 4294901760
    %7806 = vmatpush.msra.mxu0 %v7805
    %v7807 = vand.u32 %v3081, 4294901760
    %7808 = vmatpush.msra.mxu0 %v7807
    %v7809 = vand.u32 %v3079, 4294901760
    %7810 = vmatpush.msra.mxu0 %v7809
    %v7811 = vand.u32 %v3077, 4294901760
    %7812 = vmatpush.msra.mxu0 %v7811
    %v7813 = vand.u32 %v3075, 4294901760
    %7814 = vmatpush.msra.mxu0 %v7813
    %v7815 = vand.u32 %v3073, 4294901760
    %7816 = vmatpush.msra.mxu0 %v7815
    %v7817 = vand.u32 %v3071, 4294901760
    %7818 = vmatpush.msra.mxu0 %v7817
    %v7819 = vand.u32 %v3069, 4294901760
    %7820 = vmatpush.msra.mxu0 %v7819
    %v7821 = vand.u32 %v3067, 4294901760
    %7822 = vmatpush.msra.mxu0 %v7821
    %v7823 = vand.u32 %v2903, 4294901760
    %v7824 = vsub.f32 %v2903, %v7823
    %v7825 = vand.u32 %v7824, 4294901760
    %7826 = vmatmul.f32.gmra.mxu0 %v7825
    %v7827 = vpop.f32.mrf.mxu0
    %v7828 = vadd.f32 %v7789, %v7827
    %7829 = vdwg.mxu0
    %v7830 = vand.u32 %v3097, 4294901760
    %v7831 = vsub.f32 %v3097, %v7830
    %v7832 = vand.u32 %v7831, 4294901760
    %7833 = vmatpush.msra.mxu0 %v7832
    %v7834 = vand.u32 %v3095, 4294901760
    %v7835 = vsub.f32 %v3095, %v7834
    %v7836 = vand.u32 %v7835, 4294901760
    %7837 = vmatpush.msra.mxu0 %v7836
    %v7838 = vand.u32 %v3093, 4294901760
    %v7839 = vsub.f32 %v3093, %v7838
    %v7840 = vand.u32 %v7839, 4294901760
    %7841 = vmatpush.msra.mxu0 %v7840
    %v7842 = vand.u32 %v3091, 4294901760
    %v7843 = vsub.f32 %v3091, %v7842
    %v7844 = vand.u32 %v7843, 4294901760
    %7845 = vmatpush.msra.mxu0 %v7844
    %v7846 = vand.u32 %v3089, 4294901760
    %v7847 = vsub.f32 %v3089, %v7846
    %v7848 = vand.u32 %v7847, 4294901760
    %7849 = vmatpush.msra.mxu0 %v7848
    %v7850 = vand.u32 %v3087, 4294901760
    %v7851 = vsub.f32 %v3087, %v7850
    %v7852 = vand.u32 %v7851, 4294901760
    %7853 = vmatpush.msra.mxu0 %v7852
    %v7854 = vand.u32 %v3085, 4294901760
    %v7855 = vsub.f32 %v3085, %v7854
    %v7856 = vand.u32 %v7855, 4294901760
    %7857 = vmatpush.msra.mxu0 %v7856
    %v7858 = vand.u32 %v3083, 4294901760
    %v7859 = vsub.f32 %v3083, %v7858
    %v7860 = vand.u32 %v7859, 4294901760
    %7861 = vmatpush.msra.mxu0 %v7860
    %v7862 = vand.u32 %v3081, 4294901760
    %v7863 = vsub.f32 %v3081, %v7862
    %v7864 = vand.u32 %v7863, 4294901760
    %7865 = vmatpush.msra.mxu0 %v7864
    %v7866 = vand.u32 %v3079, 4294901760
    %v7867 = vsub.f32 %v3079, %v7866
    %v7868 = vand.u32 %v7867, 4294901760
    %7869 = vmatpush.msra.mxu0 %v7868
    %v7870 = vand.u32 %v3077, 4294901760
    %v7871 = vsub.f32 %v3077, %v7870
    %v7872 = vand.u32 %v7871, 4294901760
    %7873 = vmatpush.msra.mxu0 %v7872
    %v7874 = vand.u32 %v3075, 4294901760
    %v7875 = vsub.f32 %v3075, %v7874
    %v7876 = vand.u32 %v7875, 4294901760
    %7877 = vmatpush.msra.mxu0 %v7876
    %v7878 = vand.u32 %v3073, 4294901760
    %v7879 = vsub.f32 %v3073, %v7878
    %v7880 = vand.u32 %v7879, 4294901760
    %7881 = vmatpush.msra.mxu0 %v7880
    %v7882 = vand.u32 %v3071, 4294901760
    %v7883 = vsub.f32 %v3071, %v7882
    %v7884 = vand.u32 %v7883, 4294901760
    %7885 = vmatpush.msra.mxu0 %v7884
    %v7886 = vand.u32 %v3069, 4294901760
    %v7887 = vsub.f32 %v3069, %v7886
    %v7888 = vand.u32 %v7887, 4294901760
    %7889 = vmatpush.msra.mxu0 %v7888
    %v7890 = vand.u32 %v3067, 4294901760
    %v7891 = vsub.f32 %v3067, %v7890
    %v7892 = vand.u32 %v7891, 4294901760
    %7893 = vmatpush.msra.mxu0 %v7892
    %v7894 = vand.u32 %v2903, 4294901760
    %7895 = vmatmul.f32.gmra.mxu0 %v7894
    %v7896 = vpop.f32.mrf.mxu0
    %v7897 = vadd.f32 %v7828, %v7896
    %7898 = vdwg.mxu0
    %v7899 = vand.u32 %v3097, 4294901760
    %7900 = vmatpush.msra.mxu0 %v7899
    %v7901 = vand.u32 %v3095, 4294901760
    %7902 = vmatpush.msra.mxu0 %v7901
    %v7903 = vand.u32 %v3093, 4294901760
    %7904 = vmatpush.msra.mxu0 %v7903
    %v7905 = vand.u32 %v3091, 4294901760
    %7906 = vmatpush.msra.mxu0 %v7905
    %v7907 = vand.u32 %v3089, 4294901760
    %7908 = vmatpush.msra.mxu0 %v7907
    %v7909 = vand.u32 %v3087, 4294901760
    %7910 = vmatpush.msra.mxu0 %v7909
    %v7911 = vand.u32 %v3085, 4294901760
    %7912 = vmatpush.msra.mxu0 %v7911
    %v7913 = vand.u32 %v3083, 4294901760
    %7914 = vmatpush.msra.mxu0 %v7913
    %v7915 = vand.u32 %v3081, 4294901760
    %7916 = vmatpush.msra.mxu0 %v7915
    %v7917 = vand.u32 %v3079, 4294901760
    %7918 = vmatpush.msra.mxu0 %v7917
    %v7919 = vand.u32 %v3077, 4294901760
    %7920 = vmatpush.msra.mxu0 %v7919
    %v7921 = vand.u32 %v3075, 4294901760
    %7922 = vmatpush.msra.mxu0 %v7921
    %v7923 = vand.u32 %v3073, 4294901760
    %7924 = vmatpush.msra.mxu0 %v7923
    %v7925 = vand.u32 %v3071, 4294901760
    %7926 = vmatpush.msra.mxu0 %v7925
    %v7927 = vand.u32 %v3069, 4294901760
    %7928 = vmatpush.msra.mxu0 %v7927
    %v7929 = vand.u32 %v3067, 4294901760
    %7930 = vmatpush.msra.mxu0 %v7929
    %v7931 = vand.u32 %v2903, 4294901760
    %7932 = vmatmul.f32.gmra.mxu0 %v7931
    %v7933 = vpop.f32.mrf.mxu0
    %v7934 = vadd.f32 %v7897, %v7933
    %7935 = vdwg.mxu0
    %v7936 = vand.u32 %v3129, 4294901760
    %7937 = vmatpush.msra.mxu0 %v7936
    %v7938 = vand.u32 %v3127, 4294901760
    %7939 = vmatpush.msra.mxu0 %v7938
    %v7940 = vand.u32 %v3125, 4294901760
    %7941 = vmatpush.msra.mxu0 %v7940
    %v7942 = vand.u32 %v3123, 4294901760
    %7943 = vmatpush.msra.mxu0 %v7942
    %v7944 = vand.u32 %v3121, 4294901760
    %7945 = vmatpush.msra.mxu0 %v7944
    %v7946 = vand.u32 %v3119, 4294901760
    %7947 = vmatpush.msra.mxu0 %v7946
    %v7948 = vand.u32 %v3117, 4294901760
    %7949 = vmatpush.msra.mxu0 %v7948
    %v7950 = vand.u32 %v3115, 4294901760
    %7951 = vmatpush.msra.mxu0 %v7950
    %v7952 = vand.u32 %v3113, 4294901760
    %7953 = vmatpush.msra.mxu0 %v7952
    %v7954 = vand.u32 %v3111, 4294901760
    %7955 = vmatpush.msra.mxu0 %v7954
    %v7956 = vand.u32 %v3109, 4294901760
    %7957 = vmatpush.msra.mxu0 %v7956
    %v7958 = vand.u32 %v3107, 4294901760
    %7959 = vmatpush.msra.mxu0 %v7958
    %v7960 = vand.u32 %v3105, 4294901760
    %7961 = vmatpush.msra.mxu0 %v7960
    %v7962 = vand.u32 %v3103, 4294901760
    %7963 = vmatpush.msra.mxu0 %v7962
    %v7964 = vand.u32 %v3101, 4294901760
    %7965 = vmatpush.msra.mxu0 %v7964
    %v7966 = vand.u32 %v3099, 4294901760
    %7967 = vmatpush.msra.mxu0 %v7966
    %v7968 = vand.u32 %v2904, 4294901760
    %v7969 = vsub.f32 %v2904, %v7968
    %v7970 = vand.u32 %v7969, 4294901760
    %v7971 = vsub.f32 %v7969, %v7970
    %v7972 = vand.u32 %v7971, 4294901760
    %7973 = vmatmul.f32.gmra.mxu0 %v7972
    %v7974 = vpop.f32.mrf.mxu0
    %v7975 = vadd.f32 %v7934, %v7974
    %7976 = vdwg.mxu0
    %v7977 = vand.u32 %v3129, 4294901760
    %v7978 = vsub.f32 %v3129, %v7977
    %v7979 = vand.u32 %v7978, 4294901760
    %v7980 = vsub.f32 %v7978, %v7979
    %v7981 = vand.u32 %v7980, 4294901760
    %7982 = vmatpush.msra.mxu0 %v7981
    %v7983 = vand.u32 %v3127, 4294901760
    %v7984 = vsub.f32 %v3127, %v7983
    %v7985 = vand.u32 %v7984, 4294901760
    %v7986 = vsub.f32 %v7984, %v7985
    %v7987 = vand.u32 %v7986, 4294901760
    %7988 = vmatpush.msra.mxu0 %v7987
    %v7989 = vand.u32 %v3125, 4294901760
    %v7990 = vsub.f32 %v3125, %v7989
    %v7991 = vand.u32 %v7990, 4294901760
    %v7992 = vsub.f32 %v7990, %v7991
    %v7993 = vand.u32 %v7992, 4294901760
    %7994 = vmatpush.msra.mxu0 %v7993
    %v7995 = vand.u32 %v3123, 4294901760
    %v7996 = vsub.f32 %v3123, %v7995
    %v7997 = vand.u32 %v7996, 4294901760
    %v7998 = vsub.f32 %v7996, %v7997
    %v7999 = vand.u32 %v7998, 4294901760
    %8000 = vmatpush.msra.mxu0 %v7999
    %v8001 = vand.u32 %v3121, 4294901760
    %v8002 = vsub.f32 %v3121, %v8001
    %v8003 = vand.u32 %v8002, 4294901760
    %v8004 = vsub.f32 %v8002, %v8003
    %v8005 = vand.u32 %v8004, 4294901760
    %8006 = vmatpush.msra.mxu0 %v8005
    %v8007 = vand.u32 %v3119, 4294901760
    %v8008 = vsub.f32 %v3119, %v8007
    %v8009 = vand.u32 %v8008, 4294901760
    %v8010 = vsub.f32 %v8008, %v8009
    %v8011 = vand.u32 %v8010, 4294901760
    %8012 = vmatpush.msra.mxu0 %v8011
    %v8013 = vand.u32 %v3117, 4294901760
    %v8014 = vsub.f32 %v3117, %v8013
    %v8015 = vand.u32 %v8014, 4294901760
    %v8016 = vsub.f32 %v8014, %v8015
    %v8017 = vand.u32 %v8016, 4294901760
    %8018 = vmatpush.msra.mxu0 %v8017
    %v8019 = vand.u32 %v3115, 4294901760
    %v8020 = vsub.f32 %v3115, %v8019
    %v8021 = vand.u32 %v8020, 4294901760
    %v8022 = vsub.f32 %v8020, %v8021
    %v8023 = vand.u32 %v8022, 4294901760
    %8024 = vmatpush.msra.mxu0 %v8023
    %v8025 = vand.u32 %v3113, 4294901760
    %v8026 = vsub.f32 %v3113, %v8025
    %v8027 = vand.u32 %v8026, 4294901760
    %v8028 = vsub.f32 %v8026, %v8027
    %v8029 = vand.u32 %v8028, 4294901760
    %8030 = vmatpush.msra.mxu0 %v8029
    %v8031 = vand.u32 %v3111, 4294901760
    %v8032 = vsub.f32 %v3111, %v8031
    %v8033 = vand.u32 %v8032, 4294901760
    %v8034 = vsub.f32 %v8032, %v8033
    %v8035 = vand.u32 %v8034, 4294901760
    %8036 = vmatpush.msra.mxu0 %v8035
    %v8037 = vand.u32 %v3109, 4294901760
    %v8038 = vsub.f32 %v3109, %v8037
    %v8039 = vand.u32 %v8038, 4294901760
    %v8040 = vsub.f32 %v8038, %v8039
    %v8041 = vand.u32 %v8040, 4294901760
    %8042 = vmatpush.msra.mxu0 %v8041
    %v8043 = vand.u32 %v3107, 4294901760
    %v8044 = vsub.f32 %v3107, %v8043
    %v8045 = vand.u32 %v8044, 4294901760
    %v8046 = vsub.f32 %v8044, %v8045
    %v8047 = vand.u32 %v8046, 4294901760
    %8048 = vmatpush.msra.mxu0 %v8047
    %v8049 = vand.u32 %v3105, 4294901760
    %v8050 = vsub.f32 %v3105, %v8049
    %v8051 = vand.u32 %v8050, 4294901760
    %v8052 = vsub.f32 %v8050, %v8051
    %v8053 = vand.u32 %v8052, 4294901760
    %8054 = vmatpush.msra.mxu0 %v8053
    %v8055 = vand.u32 %v3103, 4294901760
    %v8056 = vsub.f32 %v3103, %v8055
    %v8057 = vand.u32 %v8056, 4294901760
    %v8058 = vsub.f32 %v8056, %v8057
    %v8059 = vand.u32 %v8058, 4294901760
    %8060 = vmatpush.msra.mxu0 %v8059
    %v8061 = vand.u32 %v3101, 4294901760
    %v8062 = vsub.f32 %v3101, %v8061
    %v8063 = vand.u32 %v8062, 4294901760
    %v8064 = vsub.f32 %v8062, %v8063
    %v8065 = vand.u32 %v8064, 4294901760
    %8066 = vmatpush.msra.mxu0 %v8065
    %v8067 = vand.u32 %v3099, 4294901760
    %v8068 = vsub.f32 %v3099, %v8067
    %v8069 = vand.u32 %v8068, 4294901760
    %v8070 = vsub.f32 %v8068, %v8069
    %v8071 = vand.u32 %v8070, 4294901760
    %8072 = vmatpush.msra.mxu0 %v8071
    %v8073 = vand.u32 %v2904, 4294901760
    %8074 = vmatmul.f32.gmra.mxu0 %v8073
    %v8075 = vpop.f32.mrf.mxu0
    %v8076 = vadd.f32 %v7975, %v8075
    %8077 = vdwg.mxu0
    %v8078 = vand.u32 %v3129, 4294901760
    %v8079 = vsub.f32 %v3129, %v8078
    %8080 = vmatpush.msra.mxu0 %v8079
    %v8081 = vand.u32 %v3127, 4294901760
    %v8082 = vsub.f32 %v3127, %v8081
    %8083 = vmatpush.msra.mxu0 %v8082
    %v8084 = vand.u32 %v3125, 4294901760
    %v8085 = vsub.f32 %v3125, %v8084
    %8086 = vmatpush.msra.mxu0 %v8085
    %v8087 = vand.u32 %v3123, 4294901760
    %v8088 = vsub.f32 %v3123, %v8087
    %8089 = vmatpush.msra.mxu0 %v8088
    %v8090 = vand.u32 %v3121, 4294901760
    %v8091 = vsub.f32 %v3121, %v8090
    %8092 = vmatpush.msra.mxu0 %v8091
    %v8093 = vand.u32 %v3119, 4294901760
    %v8094 = vsub.f32 %v3119, %v8093
    %8095 = vmatpush.msra.mxu0 %v8094
    %v8096 = vand.u32 %v3117, 4294901760
    %v8097 = vsub.f32 %v3117, %v8096
    %8098 = vmatpush.msra.mxu0 %v8097
    %v8099 = vand.u32 %v3115, 4294901760
    %v8100 = vsub.f32 %v3115, %v8099
    %8101 = vmatpush.msra.mxu0 %v8100
    %v8102 = vand.u32 %v3113, 4294901760
    %v8103 = vsub.f32 %v3113, %v8102
    %8104 = vmatpush.msra.mxu0 %v8103
    %v8105 = vand.u32 %v3111, 4294901760
    %v8106 = vsub.f32 %v3111, %v8105
    %8107 = vmatpush.msra.mxu0 %v8106
    %v8108 = vand.u32 %v3109, 4294901760
    %v8109 = vsub.f32 %v3109, %v8108
    %8110 = vmatpush.msra.mxu0 %v8109
    %v8111 = vand.u32 %v3107, 4294901760
    %v8112 = vsub.f32 %v3107, %v8111
    %8113 = vmatpush.msra.mxu0 %v8112
    %v8114 = vand.u32 %v3105, 4294901760
    %v8115 = vsub.f32 %v3105, %v8114
    %8116 = vmatpush.msra.mxu0 %v8115
    %v8117 = vand.u32 %v3103, 4294901760
    %v8118 = vsub.f32 %v3103, %v8117
    %8119 = vmatpush.msra.mxu0 %v8118
    %v8120 = vand.u32 %v3101, 4294901760
    %v8121 = vsub.f32 %v3101, %v8120
    %8122 = vmatpush.msra.mxu0 %v8121
    %v8123 = vand.u32 %v3099, 4294901760
    %v8124 = vsub.f32 %v3099, %v8123
    %8125 = vmatpush.msra.mxu0 %v8124
    %v8126 = vand.u32 %v2904, 4294901760
    %v8127 = vsub.f32 %v2904, %v8126
    %8128 = vmatmul.f32.gmra.mxu0 %v8127
    %v8129 = vpop.f32.mrf.mxu0
    %v8130 = vadd.f32 %v8076, %v8129
    %8131 = vdwg.mxu0
    %v8132 = vand.u32 %v3129, 4294901760
    %8133 = vmatpush.msra.mxu0 %v8132
    %v8134 = vand.u32 %v3127, 4294901760
    %8135 = vmatpush.msra.mxu0 %v8134
    %v8136 = vand.u32 %v3125, 4294901760
    %8137 = vmatpush.msra.mxu0 %v8136
    %v8138 = vand.u32 %v3123, 4294901760
    %8139 = vmatpush.msra.mxu0 %v8138
    %v8140 = vand.u32 %v3121, 4294901760
    %8141 = vmatpush.msra.mxu0 %v8140
    %v8142 = vand.u32 %v3119, 4294901760
    %8143 = vmatpush.msra.mxu0 %v8142
    %v8144 = vand.u32 %v3117, 4294901760
    %8145 = vmatpush.msra.mxu0 %v8144
    %v8146 = vand.u32 %v3115, 4294901760
    %8147 = vmatpush.msra.mxu0 %v8146
    %v8148 = vand.u32 %v3113, 4294901760
    %8149 = vmatpush.msra.mxu0 %v8148
    %v8150 = vand.u32 %v3111, 4294901760
    %8151 = vmatpush.msra.mxu0 %v8150
    %v8152 = vand.u32 %v3109, 4294901760
    %8153 = vmatpush.msra.mxu0 %v8152
    %v8154 = vand.u32 %v3107, 4294901760
    %8155 = vmatpush.msra.mxu0 %v8154
    %v8156 = vand.u32 %v3105, 4294901760
    %8157 = vmatpush.msra.mxu0 %v8156
    %v8158 = vand.u32 %v3103, 4294901760
    %8159 = vmatpush.msra.mxu0 %v8158
    %v8160 = vand.u32 %v3101, 4294901760
    %8161 = vmatpush.msra.mxu0 %v8160
    %v8162 = vand.u32 %v3099, 4294901760
    %8163 = vmatpush.msra.mxu0 %v8162
    %v8164 = vand.u32 %v2904, 4294901760
    %v8165 = vsub.f32 %v2904, %v8164
    %v8166 = vand.u32 %v8165, 4294901760
    %8167 = vmatmul.f32.gmra.mxu0 %v8166
    %v8168 = vpop.f32.mrf.mxu0
    %v8169 = vadd.f32 %v8130, %v8168
    %8170 = vdwg.mxu0
    %v8171 = vand.u32 %v3129, 4294901760
    %v8172 = vsub.f32 %v3129, %v8171
    %v8173 = vand.u32 %v8172, 4294901760
    %8174 = vmatpush.msra.mxu0 %v8173
    %v8175 = vand.u32 %v3127, 4294901760
    %v8176 = vsub.f32 %v3127, %v8175
    %v8177 = vand.u32 %v8176, 4294901760
    %8178 = vmatpush.msra.mxu0 %v8177
    %v8179 = vand.u32 %v3125, 4294901760
    %v8180 = vsub.f32 %v3125, %v8179
    %v8181 = vand.u32 %v8180, 4294901760
    %8182 = vmatpush.msra.mxu0 %v8181
    %v8183 = vand.u32 %v3123, 4294901760
    %v8184 = vsub.f32 %v3123, %v8183
    %v8185 = vand.u32 %v8184, 4294901760
    %8186 = vmatpush.msra.mxu0 %v8185
    %v8187 = vand.u32 %v3121, 4294901760
    %v8188 = vsub.f32 %v3121, %v8187
    %v8189 = vand.u32 %v8188, 4294901760
    %8190 = vmatpush.msra.mxu0 %v8189
    %v8191 = vand.u32 %v3119, 4294901760
    %v8192 = vsub.f32 %v3119, %v8191
    %v8193 = vand.u32 %v8192, 4294901760
    %8194 = vmatpush.msra.mxu0 %v8193
    %v8195 = vand.u32 %v3117, 4294901760
    %v8196 = vsub.f32 %v3117, %v8195
    %v8197 = vand.u32 %v8196, 4294901760
    %8198 = vmatpush.msra.mxu0 %v8197
    %v8199 = vand.u32 %v3115, 4294901760
    %v8200 = vsub.f32 %v3115, %v8199
    %v8201 = vand.u32 %v8200, 4294901760
    %8202 = vmatpush.msra.mxu0 %v8201
    %v8203 = vand.u32 %v3113, 4294901760
    %v8204 = vsub.f32 %v3113, %v8203
    %v8205 = vand.u32 %v8204, 4294901760
    %8206 = vmatpush.msra.mxu0 %v8205
    %v8207 = vand.u32 %v3111, 4294901760
    %v8208 = vsub.f32 %v3111, %v8207
    %v8209 = vand.u32 %v8208, 4294901760
    %8210 = vmatpush.msra.mxu0 %v8209
    %v8211 = vand.u32 %v3109, 4294901760
    %v8212 = vsub.f32 %v3109, %v8211
    %v8213 = vand.u32 %v8212, 4294901760
    %8214 = vmatpush.msra.mxu0 %v8213
    %v8215 = vand.u32 %v3107, 4294901760
    %v8216 = vsub.f32 %v3107, %v8215
    %v8217 = vand.u32 %v8216, 4294901760
    %8218 = vmatpush.msra.mxu0 %v8217
    %v8219 = vand.u32 %v3105, 4294901760
    %v8220 = vsub.f32 %v3105, %v8219
    %v8221 = vand.u32 %v8220, 4294901760
    %8222 = vmatpush.msra.mxu0 %v8221
    %v8223 = vand.u32 %v3103, 4294901760
    %v8224 = vsub.f32 %v3103, %v8223
    %v8225 = vand.u32 %v8224, 4294901760
    %8226 = vmatpush.msra.mxu0 %v8225
    %v8227 = vand.u32 %v3101, 4294901760
    %v8228 = vsub.f32 %v3101, %v8227
    %v8229 = vand.u32 %v8228, 4294901760
    %8230 = vmatpush.msra.mxu0 %v8229
    %v8231 = vand.u32 %v3099, 4294901760
    %v8232 = vsub.f32 %v3099, %v8231
    %v8233 = vand.u32 %v8232, 4294901760
    %8234 = vmatpush.msra.mxu0 %v8233
    %v8235 = vand.u32 %v2904, 4294901760
    %8236 = vmatmul.f32.gmra.mxu0 %v8235
    %v8237 = vpop.f32.mrf.mxu0
    %v8238 = vadd.f32 %v8169, %v8237
    %8239 = vdwg.mxu0
    %v8240 = vand.u32 %v3129, 4294901760
    %8241 = vmatpush.msra.mxu0 %v8240
    %v8242 = vand.u32 %v3127, 4294901760
    %8243 = vmatpush.msra.mxu0 %v8242
    %v8244 = vand.u32 %v3125, 4294901760
    %8245 = vmatpush.msra.mxu0 %v8244
    %v8246 = vand.u32 %v3123, 4294901760
    %8247 = vmatpush.msra.mxu0 %v8246
    %v8248 = vand.u32 %v3121, 4294901760
    %8249 = vmatpush.msra.mxu0 %v8248
    %v8250 = vand.u32 %v3119, 4294901760
    %8251 = vmatpush.msra.mxu0 %v8250
    %v8252 = vand.u32 %v3117, 4294901760
    %8253 = vmatpush.msra.mxu0 %v8252
    %v8254 = vand.u32 %v3115, 4294901760
    %8255 = vmatpush.msra.mxu0 %v8254
    %v8256 = vand.u32 %v3113, 4294901760
    %8257 = vmatpush.msra.mxu0 %v8256
    %v8258 = vand.u32 %v3111, 4294901760
    %8259 = vmatpush.msra.mxu0 %v8258
    %v8260 = vand.u32 %v3109, 4294901760
    %8261 = vmatpush.msra.mxu0 %v8260
    %v8262 = vand.u32 %v3107, 4294901760
    %8263 = vmatpush.msra.mxu0 %v8262
    %v8264 = vand.u32 %v3105, 4294901760
    %8265 = vmatpush.msra.mxu0 %v8264
    %v8266 = vand.u32 %v3103, 4294901760
    %8267 = vmatpush.msra.mxu0 %v8266
    %v8268 = vand.u32 %v3101, 4294901760
    %8269 = vmatpush.msra.mxu0 %v8268
    %v8270 = vand.u32 %v3099, 4294901760
    %8271 = vmatpush.msra.mxu0 %v8270
    %v8272 = vand.u32 %v2904, 4294901760
    %8273 = vmatmul.f32.gmra.mxu0 %v8272
    %v8274 = vpop.f32.mrf.mxu0
    %v8275 = vadd.f32 %v8238, %v8274
    %8276 = vdwg.mxu0
    %v8277 = vand.u32 %v3161, 4294901760
    %8278 = vmatpush.msra.mxu0 %v8277
    %v8279 = vand.u32 %v3159, 4294901760
    %8280 = vmatpush.msra.mxu0 %v8279
    %v8281 = vand.u32 %v3157, 4294901760
    %8282 = vmatpush.msra.mxu0 %v8281
    %v8283 = vand.u32 %v3155, 4294901760
    %8284 = vmatpush.msra.mxu0 %v8283
    %v8285 = vand.u32 %v3153, 4294901760
    %8286 = vmatpush.msra.mxu0 %v8285
    %v8287 = vand.u32 %v3151, 4294901760
    %8288 = vmatpush.msra.mxu0 %v8287
    %v8289 = vand.u32 %v3149, 4294901760
    %8290 = vmatpush.msra.mxu0 %v8289
    %v8291 = vand.u32 %v3147, 4294901760
    %8292 = vmatpush.msra.mxu0 %v8291
    %v8293 = vand.u32 %v3145, 4294901760
    %8294 = vmatpush.msra.mxu0 %v8293
    %v8295 = vand.u32 %v3143, 4294901760
    %8296 = vmatpush.msra.mxu0 %v8295
    %v8297 = vand.u32 %v3141, 4294901760
    %8298 = vmatpush.msra.mxu0 %v8297
    %v8299 = vand.u32 %v3139, 4294901760
    %8300 = vmatpush.msra.mxu0 %v8299
    %v8301 = vand.u32 %v3137, 4294901760
    %8302 = vmatpush.msra.mxu0 %v8301
    %v8303 = vand.u32 %v3135, 4294901760
    %8304 = vmatpush.msra.mxu0 %v8303
    %v8305 = vand.u32 %v3133, 4294901760
    %8306 = vmatpush.msra.mxu0 %v8305
    %v8307 = vand.u32 %v3131, 4294901760
    %8308 = vmatpush.msra.mxu0 %v8307
    %v8309 = vand.u32 %v2905, 4294901760
    %v8310 = vsub.f32 %v2905, %v8309
    %v8311 = vand.u32 %v8310, 4294901760
    %v8312 = vsub.f32 %v8310, %v8311
    %v8313 = vand.u32 %v8312, 4294901760
    %8314 = vmatmul.f32.gmra.mxu0 %v8313
    %v8315 = vpop.f32.mrf.mxu0
    %v8316 = vadd.f32 %v8275, %v8315
    %8317 = vdwg.mxu0
    %v8318 = vand.u32 %v3161, 4294901760
    %v8319 = vsub.f32 %v3161, %v8318
    %v8320 = vand.u32 %v8319, 4294901760
    %v8321 = vsub.f32 %v8319, %v8320
    %v8322 = vand.u32 %v8321, 4294901760
    %8323 = vmatpush.msra.mxu0 %v8322
    %v8324 = vand.u32 %v3159, 4294901760
    %v8325 = vsub.f32 %v3159, %v8324
    %v8326 = vand.u32 %v8325, 4294901760
    %v8327 = vsub.f32 %v8325, %v8326
    %v8328 = vand.u32 %v8327, 4294901760
    %8329 = vmatpush.msra.mxu0 %v8328
    %v8330 = vand.u32 %v3157, 4294901760
    %v8331 = vsub.f32 %v3157, %v8330
    %v8332 = vand.u32 %v8331, 4294901760
    %v8333 = vsub.f32 %v8331, %v8332
    %v8334 = vand.u32 %v8333, 4294901760
    %8335 = vmatpush.msra.mxu0 %v8334
    %v8336 = vand.u32 %v3155, 4294901760
    %v8337 = vsub.f32 %v3155, %v8336
    %v8338 = vand.u32 %v8337, 4294901760
    %v8339 = vsub.f32 %v8337, %v8338
    %v8340 = vand.u32 %v8339, 4294901760
    %8341 = vmatpush.msra.mxu0 %v8340
    %v8342 = vand.u32 %v3153, 4294901760
    %v8343 = vsub.f32 %v3153, %v8342
    %v8344 = vand.u32 %v8343, 4294901760
    %v8345 = vsub.f32 %v8343, %v8344
    %v8346 = vand.u32 %v8345, 4294901760
    %8347 = vmatpush.msra.mxu0 %v8346
    %v8348 = vand.u32 %v3151, 4294901760
    %v8349 = vsub.f32 %v3151, %v8348
    %v8350 = vand.u32 %v8349, 4294901760
    %v8351 = vsub.f32 %v8349, %v8350
    %v8352 = vand.u32 %v8351, 4294901760
    %8353 = vmatpush.msra.mxu0 %v8352
    %v8354 = vand.u32 %v3149, 4294901760
    %v8355 = vsub.f32 %v3149, %v8354
    %v8356 = vand.u32 %v8355, 4294901760
    %v8357 = vsub.f32 %v8355, %v8356
    %v8358 = vand.u32 %v8357, 4294901760
    %8359 = vmatpush.msra.mxu0 %v8358
    %v8360 = vand.u32 %v3147, 4294901760
    %v8361 = vsub.f32 %v3147, %v8360
    %v8362 = vand.u32 %v8361, 4294901760
    %v8363 = vsub.f32 %v8361, %v8362
    %v8364 = vand.u32 %v8363, 4294901760
    %8365 = vmatpush.msra.mxu0 %v8364
    %v8366 = vand.u32 %v3145, 4294901760
    %v8367 = vsub.f32 %v3145, %v8366
    %v8368 = vand.u32 %v8367, 4294901760
    %v8369 = vsub.f32 %v8367, %v8368
    %v8370 = vand.u32 %v8369, 4294901760
    %8371 = vmatpush.msra.mxu0 %v8370
    %v8372 = vand.u32 %v3143, 4294901760
    %v8373 = vsub.f32 %v3143, %v8372
    %v8374 = vand.u32 %v8373, 4294901760
    %v8375 = vsub.f32 %v8373, %v8374
    %v8376 = vand.u32 %v8375, 4294901760
    %8377 = vmatpush.msra.mxu0 %v8376
    %v8378 = vand.u32 %v3141, 4294901760
    %v8379 = vsub.f32 %v3141, %v8378
    %v8380 = vand.u32 %v8379, 4294901760
    %v8381 = vsub.f32 %v8379, %v8380
    %v8382 = vand.u32 %v8381, 4294901760
    %8383 = vmatpush.msra.mxu0 %v8382
    %v8384 = vand.u32 %v3139, 4294901760
    %v8385 = vsub.f32 %v3139, %v8384
    %v8386 = vand.u32 %v8385, 4294901760
    %v8387 = vsub.f32 %v8385, %v8386
    %v8388 = vand.u32 %v8387, 4294901760
    %8389 = vmatpush.msra.mxu0 %v8388
    %v8390 = vand.u32 %v3137, 4294901760
    %v8391 = vsub.f32 %v3137, %v8390
    %v8392 = vand.u32 %v8391, 4294901760
    %v8393 = vsub.f32 %v8391, %v8392
    %v8394 = vand.u32 %v8393, 4294901760
    %8395 = vmatpush.msra.mxu0 %v8394
    %v8396 = vand.u32 %v3135, 4294901760
    %v8397 = vsub.f32 %v3135, %v8396
    %v8398 = vand.u32 %v8397, 4294901760
    %v8399 = vsub.f32 %v8397, %v8398
    %v8400 = vand.u32 %v8399, 4294901760
    %8401 = vmatpush.msra.mxu0 %v8400
    %v8402 = vand.u32 %v3133, 4294901760
    %v8403 = vsub.f32 %v3133, %v8402
    %v8404 = vand.u32 %v8403, 4294901760
    %v8405 = vsub.f32 %v8403, %v8404
    %v8406 = vand.u32 %v8405, 4294901760
    %8407 = vmatpush.msra.mxu0 %v8406
    %v8408 = vand.u32 %v3131, 4294901760
    %v8409 = vsub.f32 %v3131, %v8408
    %v8410 = vand.u32 %v8409, 4294901760
    %v8411 = vsub.f32 %v8409, %v8410
    %v8412 = vand.u32 %v8411, 4294901760
    %8413 = vmatpush.msra.mxu0 %v8412
    %v8414 = vand.u32 %v2905, 4294901760
    %8415 = vmatmul.f32.gmra.mxu0 %v8414
    %v8416 = vpop.f32.mrf.mxu0
    %v8417 = vadd.f32 %v8316, %v8416
    %8418 = vdwg.mxu0
    %v8419 = vand.u32 %v3161, 4294901760
    %v8420 = vsub.f32 %v3161, %v8419
    %8421 = vmatpush.msra.mxu0 %v8420
    %v8422 = vand.u32 %v3159, 4294901760
    %v8423 = vsub.f32 %v3159, %v8422
    %8424 = vmatpush.msra.mxu0 %v8423
    %v8425 = vand.u32 %v3157, 4294901760
    %v8426 = vsub.f32 %v3157, %v8425
    %8427 = vmatpush.msra.mxu0 %v8426
    %v8428 = vand.u32 %v3155, 4294901760
    %v8429 = vsub.f32 %v3155, %v8428
    %8430 = vmatpush.msra.mxu0 %v8429
    %v8431 = vand.u32 %v3153, 4294901760
    %v8432 = vsub.f32 %v3153, %v8431
    %8433 = vmatpush.msra.mxu0 %v8432
    %v8434 = vand.u32 %v3151, 4294901760
    %v8435 = vsub.f32 %v3151, %v8434
    %8436 = vmatpush.msra.mxu0 %v8435
    %v8437 = vand.u32 %v3149, 4294901760
    %v8438 = vsub.f32 %v3149, %v8437
    %8439 = vmatpush.msra.mxu0 %v8438
    %v8440 = vand.u32 %v3147, 4294901760
    %v8441 = vsub.f32 %v3147, %v8440
    %8442 = vmatpush.msra.mxu0 %v8441
    %v8443 = vand.u32 %v3145, 4294901760
    %v8444 = vsub.f32 %v3145, %v8443
    %8445 = vmatpush.msra.mxu0 %v8444
    %v8446 = vand.u32 %v3143, 4294901760
    %v8447 = vsub.f32 %v3143, %v8446
    %8448 = vmatpush.msra.mxu0 %v8447
    %v8449 = vand.u32 %v3141, 4294901760
    %v8450 = vsub.f32 %v3141, %v8449
    %8451 = vmatpush.msra.mxu0 %v8450
    %v8452 = vand.u32 %v3139, 4294901760
    %v8453 = vsub.f32 %v3139, %v8452
    %8454 = vmatpush.msra.mxu0 %v8453
    %v8455 = vand.u32 %v3137, 4294901760
    %v8456 = vsub.f32 %v3137, %v8455
    %8457 = vmatpush.msra.mxu0 %v8456
    %v8458 = vand.u32 %v3135, 4294901760
    %v8459 = vsub.f32 %v3135, %v8458
    %8460 = vmatpush.msra.mxu0 %v8459
    %v8461 = vand.u32 %v3133, 4294901760
    %v8462 = vsub.f32 %v3133, %v8461
    %8463 = vmatpush.msra.mxu0 %v8462
    %v8464 = vand.u32 %v3131, 4294901760
    %v8465 = vsub.f32 %v3131, %v8464
    %8466 = vmatpush.msra.mxu0 %v8465
    %v8467 = vand.u32 %v2905, 4294901760
    %v8468 = vsub.f32 %v2905, %v8467
    %8469 = vmatmul.f32.gmra.mxu0 %v8468
    %v8470 = vpop.f32.mrf.mxu0
    %v8471 = vadd.f32 %v8417, %v8470
    %8472 = vdwg.mxu0
    %v8473 = vand.u32 %v3161, 4294901760
    %8474 = vmatpush.msra.mxu0 %v8473
    %v8475 = vand.u32 %v3159, 4294901760
    %8476 = vmatpush.msra.mxu0 %v8475
    %v8477 = vand.u32 %v3157, 4294901760
    %8478 = vmatpush.msra.mxu0 %v8477
    %v8479 = vand.u32 %v3155, 4294901760
    %8480 = vmatpush.msra.mxu0 %v8479
    %v8481 = vand.u32 %v3153, 4294901760
    %8482 = vmatpush.msra.mxu0 %v8481
    %v8483 = vand.u32 %v3151, 4294901760
    %8484 = vmatpush.msra.mxu0 %v8483
    %v8485 = vand.u32 %v3149, 4294901760
    %8486 = vmatpush.msra.mxu0 %v8485
    %v8487 = vand.u32 %v3147, 4294901760
    %8488 = vmatpush.msra.mxu0 %v8487
    %v8489 = vand.u32 %v3145, 4294901760
    %8490 = vmatpush.msra.mxu0 %v8489
    %v8491 = vand.u32 %v3143, 4294901760
    %8492 = vmatpush.msra.mxu0 %v8491
    %v8493 = vand.u32 %v3141, 4294901760
    %8494 = vmatpush.msra.mxu0 %v8493
    %v8495 = vand.u32 %v3139, 4294901760
    %8496 = vmatpush.msra.mxu0 %v8495
    %v8497 = vand.u32 %v3137, 4294901760
    %8498 = vmatpush.msra.mxu0 %v8497
    %v8499 = vand.u32 %v3135, 4294901760
    %8500 = vmatpush.msra.mxu0 %v8499
    %v8501 = vand.u32 %v3133, 4294901760
    %8502 = vmatpush.msra.mxu0 %v8501
    %v8503 = vand.u32 %v3131, 4294901760
    %8504 = vmatpush.msra.mxu0 %v8503
    %v8505 = vand.u32 %v2905, 4294901760
    %v8506 = vsub.f32 %v2905, %v8505
    %v8507 = vand.u32 %v8506, 4294901760
    %8508 = vmatmul.f32.gmra.mxu0 %v8507
    %v8509 = vpop.f32.mrf.mxu0
    %v8510 = vadd.f32 %v8471, %v8509
    %8511 = vdwg.mxu0
    %v8512 = vand.u32 %v3161, 4294901760
    %v8513 = vsub.f32 %v3161, %v8512
    %v8514 = vand.u32 %v8513, 4294901760
    %8515 = vmatpush.msra.mxu0 %v8514
    %v8516 = vand.u32 %v3159, 4294901760
    %v8517 = vsub.f32 %v3159, %v8516
    %v8518 = vand.u32 %v8517, 4294901760
    %8519 = vmatpush.msra.mxu0 %v8518
    %v8520 = vand.u32 %v3157, 4294901760
    %v8521 = vsub.f32 %v3157, %v8520
    %v8522 = vand.u32 %v8521, 4294901760
    %8523 = vmatpush.msra.mxu0 %v8522
    %v8524 = vand.u32 %v3155, 4294901760
    %v8525 = vsub.f32 %v3155, %v8524
    %v8526 = vand.u32 %v8525, 4294901760
    %8527 = vmatpush.msra.mxu0 %v8526
    %v8528 = vand.u32 %v3153, 4294901760
    %v8529 = vsub.f32 %v3153, %v8528
    %v8530 = vand.u32 %v8529, 4294901760
    %8531 = vmatpush.msra.mxu0 %v8530
    %v8532 = vand.u32 %v3151, 4294901760
    %v8533 = vsub.f32 %v3151, %v8532
    %v8534 = vand.u32 %v8533, 4294901760
    %8535 = vmatpush.msra.mxu0 %v8534
    %v8536 = vand.u32 %v3149, 4294901760
    %v8537 = vsub.f32 %v3149, %v8536
    %v8538 = vand.u32 %v8537, 4294901760
    %8539 = vmatpush.msra.mxu0 %v8538
    %v8540 = vand.u32 %v3147, 4294901760
    %v8541 = vsub.f32 %v3147, %v8540
    %v8542 = vand.u32 %v8541, 4294901760
    %8543 = vmatpush.msra.mxu0 %v8542
    %v8544 = vand.u32 %v3145, 4294901760
    %v8545 = vsub.f32 %v3145, %v8544
    %v8546 = vand.u32 %v8545, 4294901760
    %8547 = vmatpush.msra.mxu0 %v8546
    %v8548 = vand.u32 %v3143, 4294901760
    %v8549 = vsub.f32 %v3143, %v8548
    %v8550 = vand.u32 %v8549, 4294901760
    %8551 = vmatpush.msra.mxu0 %v8550
    %v8552 = vand.u32 %v3141, 4294901760
    %v8553 = vsub.f32 %v3141, %v8552
    %v8554 = vand.u32 %v8553, 4294901760
    %8555 = vmatpush.msra.mxu0 %v8554
    %v8556 = vand.u32 %v3139, 4294901760
    %v8557 = vsub.f32 %v3139, %v8556
    %v8558 = vand.u32 %v8557, 4294901760
    %8559 = vmatpush.msra.mxu0 %v8558
    %v8560 = vand.u32 %v3137, 4294901760
    %v8561 = vsub.f32 %v3137, %v8560
    %v8562 = vand.u32 %v8561, 4294901760
    %8563 = vmatpush.msra.mxu0 %v8562
    %v8564 = vand.u32 %v3135, 4294901760
    %v8565 = vsub.f32 %v3135, %v8564
    %v8566 = vand.u32 %v8565, 4294901760
    %8567 = vmatpush.msra.mxu0 %v8566
    %v8568 = vand.u32 %v3133, 4294901760
    %v8569 = vsub.f32 %v3133, %v8568
    %v8570 = vand.u32 %v8569, 4294901760
    %8571 = vmatpush.msra.mxu0 %v8570
    %v8572 = vand.u32 %v3131, 4294901760
    %v8573 = vsub.f32 %v3131, %v8572
    %v8574 = vand.u32 %v8573, 4294901760
    %8575 = vmatpush.msra.mxu0 %v8574
    %v8576 = vand.u32 %v2905, 4294901760
    %8577 = vmatmul.f32.gmra.mxu0 %v8576
    %v8578 = vpop.f32.mrf.mxu0
    %v8579 = vadd.f32 %v8510, %v8578
    %8580 = vdwg.mxu0
    %v8581 = vand.u32 %v3161, 4294901760
    %8582 = vmatpush.msra.mxu0 %v8581
    %v8583 = vand.u32 %v3159, 4294901760
    %8584 = vmatpush.msra.mxu0 %v8583
    %v8585 = vand.u32 %v3157, 4294901760
    %8586 = vmatpush.msra.mxu0 %v8585
    %v8587 = vand.u32 %v3155, 4294901760
    %8588 = vmatpush.msra.mxu0 %v8587
    %v8589 = vand.u32 %v3153, 4294901760
    %8590 = vmatpush.msra.mxu0 %v8589
    %v8591 = vand.u32 %v3151, 4294901760
    %8592 = vmatpush.msra.mxu0 %v8591
    %v8593 = vand.u32 %v3149, 4294901760
    %8594 = vmatpush.msra.mxu0 %v8593
    %v8595 = vand.u32 %v3147, 4294901760
    %8596 = vmatpush.msra.mxu0 %v8595
    %v8597 = vand.u32 %v3145, 4294901760
    %8598 = vmatpush.msra.mxu0 %v8597
    %v8599 = vand.u32 %v3143, 4294901760
    %8600 = vmatpush.msra.mxu0 %v8599
    %v8601 = vand.u32 %v3141, 4294901760
    %8602 = vmatpush.msra.mxu0 %v8601
    %v8603 = vand.u32 %v3139, 4294901760
    %8604 = vmatpush.msra.mxu0 %v8603
    %v8605 = vand.u32 %v3137, 4294901760
    %8606 = vmatpush.msra.mxu0 %v8605
    %v8607 = vand.u32 %v3135, 4294901760
    %8608 = vmatpush.msra.mxu0 %v8607
    %v8609 = vand.u32 %v3133, 4294901760
    %8610 = vmatpush.msra.mxu0 %v8609
    %v8611 = vand.u32 %v3131, 4294901760
    %8612 = vmatpush.msra.mxu0 %v8611
    %v8613 = vand.u32 %v2905, 4294901760
    %8614 = vmatmul.f32.gmra.mxu0 %v8613
    %v8615 = vpop.f32.mrf.mxu0
    %v8616 = vadd.f32 %v8579, %v8615
    %8617 = vdwg.mxu0
    %8618 = vst [vmem:[%s5] sm:$0xff] %v5888
    %8619 = vst [vmem:[%s5 + $0x8] sm:$0xff] %v8616
    // Predicated region
    $region38: #{ctx_encoder_forward.1} parent=1 // pred_check
      _
    $region39: #{ctx_encoder_forward.1} parent=1 // pred_check_branch
      %8621 = sbr.rel (0) target = $region41
    $region40: #{ctx_encoder_forward.1} parent=1 // pred_region
      _
    $region41: #{ctx_encoder_forward.1} parent=1 // pred_fallthru
      _
    // Predicated region
    $region42: #{ctx_encoder_forward.1} parent=1 // pred_check
      _
    $region43: #{ctx_encoder_forward.1} parent=1 // pred_check_branch
      %8623 = sbr.rel (0) target = $region45
    $region44: #{ctx_encoder_forward.1} parent=1 // pred_region
      _
    $region45: #{ctx_encoder_forward.1} parent=1 // pred_fallthru
      _
    %8624 = vsyncpa [#allocation3], 1
    %8625 = vsyncpa [#allocation5], 1
    %8626 = vsyncpa [#allocation8], 1

</llo_original>
